<compile_context>
chip_gen: v7x
topology: tpu7x:2x2x1
jax: 0.10.0
libtpu: 0.0.40
codegen_flags: <defaults>
</compile_context>

<pallas_src>
import jax
import jax.numpy as jnp
from jax import lax
from jax.experimental import pallas as pl
from jax.experimental.pallas import tpu as pltpu

Z_DIM = 64
BASE_CH = 16          # small stand-in for the default base_channels=128
BN_EPS = 1e-5
LEAKY_SLOPE = 0.2


# --------------------------------------------------------------------------
# Single fused Pallas kernel: the whole Generator forward
# --------------------------------------------------------------------------
def _generator_kernel(
    x_ref, z_ref, e0_ref, e1_ref, e2_ref,
    w0_ref, g0_ref, b0_ref,
    w1_ref, g1_ref, b1_ref,
    wu0_ref, gu0_ref, bu0_ref,
    wu1_ref, gu1_ref, bu1_ref,
    wu2_ref, gu2_ref, bu2_ref,
    wu3_ref, gu3_ref, bu3_ref,
    wo_ref, bo_ref,
    o_ref,
    feat_scr, s0_scr, s1_scr, s2_scr, s3_scr):
    B = x_ref.shape[0]
    zd = z_ref.shape[1]

    def mm(a, w):
        # default precision (bf16-native MXU passes), f32 accumulation
        return jnp.dot(a, w, preferred_element_type=jnp.float32)

    def embed(idx, table_ref):
        # nn.Embedding lookup as a one-hot matmul (idx: (B,1) int32)
        v = table_ref.shape[0]
        onehot = (lax.broadcasted_iota(jnp.int32, (B, v), 1) == idx)
        return mm(onehot.astype(jnp.float32), table_ref[...])

    def bn_lrelu(y, g_ref, b_ref):
        # training-mode BatchNorm (batch stats, biased var) + LeakyReLU(0.2)
        inv_n = 1.0 / y.shape[0]
        mean = jnp.sum(y, axis=0, keepdims=True) * inv_n
        var = jnp.sum(y * y, axis=0, keepdims=True) * inv_n - mean * mean
        scale = g_ref[...] * lax.rsqrt(var + BN_EPS)
        shift = b_ref[...] - mean * scale
        y = y * scale + shift
        return jnp.where(y >= 0.0, y, LEAKY_SLOPE * y)

    x_int = x_ref[...]
    xf = x_int.astype(jnp.float32) * (1.0 / 255.0)

    # Feature assembly (embedding gathers + scaled continuous columns) -> (B,16)
    feat_scr[:, 0:4] = embed(x_int[:, 0:1], e0_ref)
    feat_scr[:, 4:7] = xf[:, 1:4]
    feat_scr[:, 7:10] = embed(x_int[:, 4:5], e1_ref)
    feat_scr[:, 10:13] = embed(x_int[:, 5:6], e2_ref)
    feat_scr[:, 13:16] = xf[:, 6:9]

    # projection[0]: Linear(16, z_dim) + BN1d + LeakyReLU  (bias folded into BN)
    h = bn_lrelu(mm(feat_scr[...], w0_ref[...]), g0_ref, b0_ref)        # (B, Z)

    # projection[1]: Linear(2Z, 16*bc) on concat([h, z])  == split-weight sum
    h = bn_lrelu(mm(h, w1_ref[0:zd, :]) + mm(z_ref[...], w1_ref[zd:2 * zd, :]),
                 g1_ref, b1_ref)                                        # (B, 16*bc)

    # Up blocks: ConvTranspose2d(k=2,s=2) == 4 per-tap matmuls; tap outputs are
    # stacked as new rows (nested tap-major row order, deinterleaved at the end).
    def upblock(h, w_ref, g_ref, b_ref, scr):
        n = h.shape[0]
        for t in range(4):
            scr[t * n:(t + 1) * n, :] = mm(h, w_ref[t])
        return bn_lrelu(scr[...], g_ref, b_ref)

    h = upblock(h, wu0_ref, gu0_ref, bu0_ref, s0_scr)    # (4B,   8*bc)
    h = upblock(h, wu1_ref, gu1_ref, bu1_ref, s1_scr)    # (16B,  4*bc)
    h = upblock(h, wu2_ref, gu2_ref, bu2_ref, s2_scr)    # (64B,  2*bc)
    h = upblock(h, wu3_ref, gu3_ref, bu3_ref, s3_scr)    # (256B, bc)

    # output 1x1 conv (+bias) + tanh
    o_ref[...] = jnp.tanh(mm(h, wo_ref[...]) + bo_ref[...])             # (256B, 4)


def generator_forward(params, z, x_int):
    B = z.shape[0]
    bc = BASE_CH

    def gb(p):
        return (p["gamma"].reshape(1, -1), p["beta"].reshape(1, -1))

    args = [
        x_int, z,
        params["emb0"], params["emb1"], params["emb2"],
        params["proj0"]["w"], *gb(params["proj0"]),
        params["proj1"]["w"], *gb(params["proj1"]),
        params["up0"]["w"], *gb(params["up0"]),
        params["up1"]["w"], *gb(params["up1"]),
        params["up2"]["w"], *gb(params["up2"]),
        params["up3"]["w"], *gb(params["up3"]),
        params["out"]["w"], params["out"]["b"].reshape(1, -1),
    ]

    o = pl.pallas_call(
        _generator_kernel,
        out_shape=jax.ShapeDtypeStruct((256 * B, 4), jnp.float32),
        in_specs=[pl.BlockSpec(memory_space=pltpu.MemorySpace.VMEM)] * len(args),
        out_specs=pl.BlockSpec(memory_space=pltpu.MemorySpace.VMEM),
        scratch_shapes=[
            pltpu.VMEM((B, 16), jnp.float32),
            pltpu.VMEM((4 * B, 8 * bc), jnp.float32),
            pltpu.VMEM((16 * B, 4 * bc), jnp.float32),
            pltpu.VMEM((64 * B, 2 * bc), jnp.float32),
            pltpu.VMEM((256 * B, bc), jnp.float32),
        ],
    )(*args)

    # Kernel rows are ordered (ki3,kj3,ki2,kj2,ki1,kj1,ki0,kj0,b) with
    # y = 8*ki0+4*ki1+2*ki2+ki3 and x = 8*kj0+4*kj1+2*kj2+kj3.
    # Single 16 KiB view+transpose to NCHW.
    o = o.reshape(2, 2, 2, 2, 2, 2, 2, 2, B, 4)
    o = jnp.transpose(o, (8, 9, 6, 4, 2, 0, 7, 5, 3, 1))
    return o.reshape(B, 4, 16, 16)


# --------------------------------------------------------------------------
# Pure-JAX reference (keeps the redundant biases to verify the BN cancellation)
# --------------------------------------------------------------------------
def reference_forward(params, z, x_int):
    B = z.shape[0]
    xf = x_int.astype(jnp.float32)

    def bn_lrelu(y, gamma, beta, axes):
        m = jnp.mean(y, axis=axes, keepdims=True)
        v = jnp.mean(jnp.square(y - m), axis=axes, keepdims=True)
        y = (y - m) * lax.rsqrt(v + BN_EPS) * gamma + beta
        return jnp.where(y >= 0.0, y, LEAKY_SLOPE * y)

    y = jnp.concatenate([
        params["emb0"][x_int[:, 0]],
        xf[:, 1:4] / 255.0,
        params["emb1"][x_int[:, 4]],
        params["emb2"][x_int[:, 5]],
        xf[:, 6:9] / 255.0,
    ], axis=1)                                                          # (B, 16)

    p = params["proj0"]
    y = bn_lrelu(y @ p["w"] + p["b"], p["gamma"], p["beta"], (0,))
    y = jnp.concatenate([y, z], axis=1)
    p = params["proj1"]
    y = bn_lrelu(y @ p["w"] + p["b"], p["gamma"], p["beta"], (0,))

    h = y.reshape(B, 1, 1, 16 * BASE_CH)                                # NHWC
    for i in range(4):
        p = params[f"up{i}"]
        Bh, H, W, cin = h.shape
        cout = p["w"].shape[-1]
        yt = jnp.stack([h.reshape(-1, cin) @ p["w"][t] + p["b"]
                        for t in range(4)], axis=0)                     # (4,BHW,C)
        yt = bn_lrelu(yt, p["gamma"], p["beta"], (0, 1))
        yt = yt.reshape(2, 2, Bh, H, W, cout)                           # (ki,kj,b,i,j,c)
        yt = jnp.transpose(yt, (2, 3, 0, 4, 1, 5))                      # (b,i,ki,j,kj,c)
        h = yt.reshape(Bh, 2 * H, 2 * W, cout)

    p = params["out"]
    o = jnp.tanh(h.reshape(-1, BASE_CH) @ p["w"] + p["b"])
    o = o.reshape(B, 16, 16, 4)
    return jnp.transpose(o, (0, 3, 1, 2))                               # NCHW


# --------------------------------------------------------------------------
# Deterministic parameter construction (shapes from Generator.__init__)
# --------------------------------------------------------------------------
def init_params(key):
    ks = iter(jax.random.split(key, 40))

    def dense(shape, fan_in):
        return jax.random.normal(next(ks), shape, jnp.float32) / jnp.sqrt(fan_in)

    def bn(c):
        return {"gamma": 1.0 + 0.1 * jax.random.normal(next(ks), (c,), jnp.float32),
                "beta": 0.1 * jax.random.normal(next(ks), (c,), jnp.float32)}

    def linear(fin, fout):
        return {"w": dense((fin, fout), fin), "b": dense((fout,), fin), **bn(fout)}

    def upconv(cin, cout):
        # ConvTranspose2d weight (Cin, Cout, 2, 2) stored as (4, Cin, Cout);
        # tap index t = ki*2 + kj.
        return {"w": dense((4, cin, cout), cin), "b": dense((cout,), cin), **bn(cout)}

    bc = BASE_CH
    return {
        "emb0": jax.random.normal(next(ks), (8, 4), jnp.float32),
        "emb1": jax.random.normal(next(ks), (6, 3), jnp.float32),
        "emb2": jax.random.normal(next(ks), (7, 3), jnp.float32),
        "proj0": linear(16, Z_DIM),
        "proj1": linear(2 * Z_DIM, 16 * bc),
        "up0": upconv(16 * bc, 8 * bc),
        "up1": upconv(8 * bc, 4 * bc),
        "up2": upconv(4 * bc, 2 * bc),
        "up3": upconv(2 * bc, bc),
        "out": {"w": dense((bc, 4), bc), "b": dense((4,), bc)},
    }


# --------------------------------------------------------------------------
if __name__ == "__main__":
    key = jax.random.PRNGKey(0)
    kp, kz, kx = jax.random.split(key, 3)

    params = init_params(kp)

    B = 4
    z = jax.random.normal(kz, (B, Z_DIM), jnp.float32)
    highs = [8, 256, 256, 256, 6, 7, 256, 256, 256]   # valid ranges per column
    kxs = jax.random.split(kx, len(highs))
    x = jnp.stack(
        [jax.random.randint(kxs[i], (B,), 0, highs[i], dtype=jnp.int32)
         for i in range(len(highs))], axis=1)          # (B, 9)

    fwd = jax.jit(generator_forward)
    out = jax.block_until_ready(fwd(params, z, x))     # (B, 4, 16, 16)

    ref = reference_forward(params, z, x)

    assert out.shape == (B, 4, 16, 16), out.shape
    assert bool(jnp.all(jnp.isfinite(out)))
    err = float(jnp.max(jnp.abs(out - ref)))
    if err < 5e-2:
        print("KERNEL_OK")
    else:
        print(f"MISMATCH max_abs_err={err}")
</pallas_src>

<mosaic_0001>
module attributes {stable_mosaic.version = 11 : i64} {
  func.func @_generator_kernel(%arg0: memref<4x9xi32, #tpu.memory_space<vmem>>, %arg1: memref<4x64xf32, #tpu.memory_space<vmem>>, %arg2: memref<8x4xf32, #tpu.memory_space<vmem>>, %arg3: memref<6x3xf32, #tpu.memory_space<vmem>>, %arg4: memref<7x3xf32, #tpu.memory_space<vmem>>, %arg5: memref<16x64xf32, #tpu.memory_space<vmem>>, %arg6: memref<1x64xf32, #tpu.memory_space<vmem>>, %arg7: memref<1x64xf32, #tpu.memory_space<vmem>>, %arg8: memref<128x256xf32, #tpu.memory_space<vmem>>, %arg9: memref<1x256xf32, #tpu.memory_space<vmem>>, %arg10: memref<1x256xf32, #tpu.memory_space<vmem>>, %arg11: memref<4x256x128xf32, #tpu.memory_space<vmem>>, %arg12: memref<1x128xf32, #tpu.memory_space<vmem>>, %arg13: memref<1x128xf32, #tpu.memory_space<vmem>>, %arg14: memref<4x128x64xf32, #tpu.memory_space<vmem>>, %arg15: memref<1x64xf32, #tpu.memory_space<vmem>>, %arg16: memref<1x64xf32, #tpu.memory_space<vmem>>, %arg17: memref<4x64x32xf32, #tpu.memory_space<vmem>>, %arg18: memref<1x32xf32, #tpu.memory_space<vmem>>, %arg19: memref<1x32xf32, #tpu.memory_space<vmem>>, %arg20: memref<4x32x16xf32, #tpu.memory_space<vmem>>, %arg21: memref<1x16xf32, #tpu.memory_space<vmem>>, %arg22: memref<1x16xf32, #tpu.memory_space<vmem>>, %arg23: memref<16x4xf32, #tpu.memory_space<vmem>>, %arg24: memref<1x4xf32, #tpu.memory_space<vmem>>, %arg25: memref<1024x4xf32, #tpu.memory_space<vmem>>, %arg26: memref<4x16xf32, #tpu.memory_space<vmem>>, %arg27: memref<16x128xf32, #tpu.memory_space<vmem>>, %arg28: memref<64x64xf32, #tpu.memory_space<vmem>>, %arg29: memref<256x32xf32, #tpu.memory_space<vmem>>, %arg30: memref<1024x16xf32, #tpu.memory_space<vmem>>) attributes {dimension_semantics = [], scalar_prefetch = 0 : i64, scratch_operands = 5 : i64, tpu.core_type = #tpu.core_type<tc>} {
    %c0 = arith.constant 0 : index
    %c0_0 = arith.constant 0 : index
    %0 = vector.load %arg0[%c0, %c0_0] : memref<4x9xi32, #tpu.memory_space<vmem>>, vector<4x9xi32>
    %1 = arith.sitofp %0 : vector<4x9xi32> to vector<4x9xf32>
    %cst = arith.constant 0.00392156886 : f32
    %2 = vector.broadcast %cst : f32 to vector<4x9xf32>
    %3 = arith.mulf %1, %2 : vector<4x9xf32>
    %4 = vector.extract_strided_slice %0 {offsets = [0, 0], sizes = [4, 1], strides = [1, 1]} : vector<4x9xi32> to vector<4x1xi32>
    %5 = tpu.iota {dimensions = array<i32: 1>} : vector<4x8xi32>
    %6 = vector.broadcast %4 : vector<4x1xi32> to vector<4x8xi32>
    %7 = arith.cmpi eq, %5, %6 : vector<4x8xi32>
    %8 = arith.extui %7 : vector<4x8xi1> to vector<4x8xi32>
    %9 = arith.sitofp %8 : vector<4x8xi32> to vector<4x8xf32>
    %c0_1 = arith.constant 0 : index
    %c0_2 = arith.constant 0 : index
    %10 = vector.load %arg2[%c0_1, %c0_2] : memref<8x4xf32, #tpu.memory_space<vmem>>, vector<8x4xf32>
    %cst_3 = arith.constant dense<0.000000e+00> : vector<4x4xf32>
    %11 = tpu.matmul %9, %10, %cst_3 {dimension_numbers = #tpu.dot_dimension_numbers<[1], [0], [0], [1], [0, 0, 1, 1], [], []>} : vector<4x8xf32>, vector<8x4xf32>, vector<4x4xf32> -> vector<4x4xf32>
    %c0_4 = arith.constant 0 : index
    %c0_5 = arith.constant 0 : index
    %12 = vector.load %arg26[%c0_4, %c0_5] : memref<4x16xf32, #tpu.memory_space<vmem>>, vector<4x4xf32>
    tpu.vector_store %arg26[%c0_4, %c0_5], %11 {strides = array<i32>} : memref<4x16xf32, #tpu.memory_space<vmem>>, vector<4x4xf32>,
    %13 = vector.extract_strided_slice %3 {offsets = [0, 1], sizes = [4, 3], strides = [1, 1]} : vector<4x9xf32> to vector<4x3xf32>
    %c0_6 = arith.constant 0 : index
    %c4 = arith.constant 4 : index
    %14 = vector.load %arg26[%c0_6, %c4] : memref<4x16xf32, #tpu.memory_space<vmem>>, vector<4x3xf32>
    tpu.vector_store %arg26[%c0_6, %c4], %13 {strides = array<i32>} : memref<4x16xf32, #tpu.memory_space<vmem>>, vector<4x3xf32>,
    %15 = vector.extract_strided_slice %0 {offsets = [0, 4], sizes = [4, 1], strides = [1, 1]} : vector<4x9xi32> to vector<4x1xi32>
    %16 = tpu.iota {dimensions = array<i32: 1>} : vector<4x6xi32>
    %17 = vector.broadcast %15 : vector<4x1xi32> to vector<4x6xi32>
    %18 = arith.cmpi eq, %16, %17 : vector<4x6xi32>
    %19 = arith.extui %18 : vector<4x6xi1> to vector<4x6xi32>
    %20 = arith.sitofp %19 : vector<4x6xi32> to vector<4x6xf32>
    %c0_7 = arith.constant 0 : index
    %c0_8 = arith.constant 0 : index
    %21 = vector.load %arg3[%c0_7, %c0_8] : memref<6x3xf32, #tpu.memory_space<vmem>>, vector<6x3xf32>
    %cst_9 = arith.constant dense<0.000000e+00> : vector<4x3xf32>
    %22 = tpu.matmul %20, %21, %cst_9 {dimension_numbers = #tpu.dot_dimension_numbers<[1], [0], [0], [1], [0, 0, 1, 1], [], []>} : vector<4x6xf32>, vector<6x3xf32>, vector<4x3xf32> -> vector<4x3xf32>
    %c0_10 = arith.constant 0 : index
    %c7 = arith.constant 7 : index
    %23 = vector.load %arg26[%c0_10, %c7] : memref<4x16xf32, #tpu.memory_space<vmem>>, vector<4x3xf32>
    tpu.vector_store %arg26[%c0_10, %c7], %22 {strides = array<i32>} : memref<4x16xf32, #tpu.memory_space<vmem>>, vector<4x3xf32>,
    %24 = vector.extract_strided_slice %0 {offsets = [0, 5], sizes = [4, 1], strides = [1, 1]} : vector<4x9xi32> to vector<4x1xi32>
    %25 = tpu.iota {dimensions = array<i32: 1>} : vector<4x7xi32>
    %26 = vector.broadcast %24 : vector<4x1xi32> to vector<4x7xi32>
    %27 = arith.cmpi eq, %25, %26 : vector<4x7xi32>
    %28 = arith.extui %27 : vector<4x7xi1> to vector<4x7xi32>
    %29 = arith.sitofp %28 : vector<4x7xi32> to vector<4x7xf32>
    %c0_11 = arith.constant 0 : index
    %c0_12 = arith.constant 0 : index
    %30 = vector.load %arg4[%c0_11, %c0_12] : memref<7x3xf32, #tpu.memory_space<vmem>>, vector<7x3xf32>
    %cst_13 = arith.constant dense<0.000000e+00> : vector<4x3xf32>
    %31 = tpu.matmul %29, %30, %cst_13 {dimension_numbers = #tpu.dot_dimension_numbers<[1], [0], [0], [1], [0, 0, 1, 1], [], []>} : vector<4x7xf32>, vector<7x3xf32>, vector<4x3xf32> -> vector<4x3xf32>
    %c0_14 = arith.constant 0 : index
    %c10 = arith.constant 10 : index
    %32 = vector.load %arg26[%c0_14, %c10] : memref<4x16xf32, #tpu.memory_space<vmem>>, vector<4x3xf32>
    tpu.vector_store %arg26[%c0_14, %c10], %31 {strides = array<i32>} : memref<4x16xf32, #tpu.memory_space<vmem>>, vector<4x3xf32>,
    %33 = vector.extract_strided_slice %3 {offsets = [0, 6], sizes = [4, 3], strides = [1, 1]} : vector<4x9xf32> to vector<4x3xf32>
    %c0_15 = arith.constant 0 : index
    %c13 = arith.constant 13 : index
    %34 = vector.load %arg26[%c0_15, %c13] : memref<4x16xf32, #tpu.memory_space<vmem>>, vector<4x3xf32>
    tpu.vector_store %arg26[%c0_15, %c13], %33 {strides = array<i32>} : memref<4x16xf32, #tpu.memory_space<vmem>>, vector<4x3xf32>,
    %c0_16 = arith.constant 0 : index
    %c0_17 = arith.constant 0 : index
    %35 = vector.load %arg26[%c0_16, %c0_17] : memref<4x16xf32, #tpu.memory_space<vmem>>, vector<4x16xf32>
    %c0_18 = arith.constant 0 : index
    %c0_19 = arith.constant 0 : index
    %36 = vector.load %arg5[%c0_18, %c0_19] : memref<16x64xf32, #tpu.memory_space<vmem>>, vector<16x64xf32>
    %cst_20 = arith.constant dense<0.000000e+00> : vector<4x64xf32>
    %37 = tpu.matmul %35, %36, %cst_20 {dimension_numbers = #tpu.dot_dimension_numbers<[1], [0], [0], [1], [0, 0, 1, 1], [], []>} : vector<4x16xf32>, vector<16x64xf32>, vector<4x64xf32> -> vector<4x64xf32>
    %cst_21 = arith.constant dense<0.000000e+00> : vector<64xf32>
    %38 = vector.multi_reduction <add>, %37, %cst_21 [0] : vector<4x64xf32> to vector<64xf32>
    %39 = vector.shape_cast %38 : vector<64xf32> to vector<1x64xf32>
    %cst_22 = arith.constant 2.500000e-01 : f32
    %40 = vector.broadcast %cst_22 : f32 to vector<1x64xf32>
    %41 = arith.mulf %39, %40 : vector<1x64xf32>
    %42 = arith.mulf %37, %37 : vector<4x64xf32>
    %cst_23 = arith.constant dense<0.000000e+00> : vector<64xf32>
    %43 = vector.multi_reduction <add>, %42, %cst_23 [0] : vector<4x64xf32> to vector<64xf32>
    %44 = vector.shape_cast %43 : vector<64xf32> to vector<1x64xf32>
    %cst_24 = arith.constant 2.500000e-01 : f32
    %45 = vector.broadcast %cst_24 : f32 to vector<1x64xf32>
    %46 = arith.mulf %44, %45 : vector<1x64xf32>
    %47 = arith.mulf %41, %41 : vector<1x64xf32>
    %48 = arith.subf %46, %47 : vector<1x64xf32>
    %c0_25 = arith.constant 0 : index
    %c0_26 = arith.constant 0 : index
    %49 = vector.load %arg6[%c0_25, %c0_26] : memref<1x64xf32, #tpu.memory_space<vmem>>, vector<1x64xf32>
    %cst_27 = arith.constant 9.99999974E-6 : f32
    %50 = vector.broadcast %cst_27 : f32 to vector<1x64xf32>
    %51 = arith.addf %48, %50 : vector<1x64xf32>
    %52 = math.rsqrt %51 : vector<1x64xf32>
    %53 = arith.mulf %49, %52 : vector<1x64xf32>
    %c0_28 = arith.constant 0 : index
    %c0_29 = arith.constant 0 : index
    %54 = vector.load %arg7[%c0_28, %c0_29] : memref<1x64xf32, #tpu.memory_space<vmem>>, vector<1x64xf32>
    %55 = arith.mulf %41, %53 : vector<1x64xf32>
    %56 = arith.subf %54, %55 : vector<1x64xf32>
    %57 = vector.broadcast %53 : vector<1x64xf32> to vector<4x64xf32>
    %58 = arith.mulf %37, %57 : vector<4x64xf32>
    %59 = vector.broadcast %56 : vector<1x64xf32> to vector<4x64xf32>
    %60 = arith.addf %58, %59 : vector<4x64xf32>
    %cst_30 = arith.constant 0.000000e+00 : f32
    %61 = vector.broadcast %cst_30 : f32 to vector<4x64xf32>
    %62 = arith.cmpf oge, %60, %61 : vector<4x64xf32>
    %cst_31 = arith.constant 2.000000e-01 : f32
    %63 = vector.broadcast %cst_31 : f32 to vector<4x64xf32>
    %64 = arith.mulf %63, %60 : vector<4x64xf32>
    %65 = arith.select %62, %60, %64 : vector<4x64xi1>, vector<4x64xf32>
    %c0_32 = arith.constant 0 : index
    %c0_33 = arith.constant 0 : index
    %66 = vector.load %arg8[%c0_32, %c0_33] : memref<128x256xf32, #tpu.memory_space<vmem>>, vector<64x256xf32>
    %cst_34 = arith.constant dense<0.000000e+00> : vector<4x256xf32>
    %67 = tpu.matmul %65, %66, %cst_34 {dimension_numbers = #tpu.dot_dimension_numbers<[1], [0], [0], [1], [0, 0, 1, 1], [], []>} : vector<4x64xf32>, vector<64x256xf32>, vector<4x256xf32> -> vector<4x256xf32>
    %c0_35 = arith.constant 0 : index
    %c0_36 = arith.constant 0 : index
    %68 = vector.load %arg1[%c0_35, %c0_36] : memref<4x64xf32, #tpu.memory_space<vmem>>, vector<4x64xf32>
    %c64 = arith.constant 64 : index
    %c0_37 = arith.constant 0 : index
    %69 = vector.load %arg8[%c64, %c0_37] : memref<128x256xf32, #tpu.memory_space<vmem>>, vector<64x256xf32>
    %cst_38 = arith.constant dense<0.000000e+00> : vector<4x256xf32>
    %70 = tpu.matmul %68, %69, %cst_38 {dimension_numbers = #tpu.dot_dimension_numbers<[1], [0], [0], [1], [0, 0, 1, 1], [], []>} : vector<4x64xf32>, vector<64x256xf32>, vector<4x256xf32> -> vector<4x256xf32>
    %71 = arith.addf %67, %70 : vector<4x256xf32>
    %cst_39 = arith.constant dense<0.000000e+00> : vector<256xf32>
    %72 = vector.multi_reduction <add>, %71, %cst_39 [0] : vector<4x256xf32> to vector<256xf32>
    %73 = vector.shape_cast %72 : vector<256xf32> to vector<1x256xf32>
    %cst_40 = arith.constant 2.500000e-01 : f32
    %74 = vector.broadcast %cst_40 : f32 to vector<1x256xf32>
    %75 = arith.mulf %73, %74 : vector<1x256xf32>
    %76 = arith.mulf %71, %71 : vector<4x256xf32>
    %cst_41 = arith.constant dense<0.000000e+00> : vector<256xf32>
    %77 = vector.multi_reduction <add>, %76, %cst_41 [0] : vector<4x256xf32> to vector<256xf32>
    %78 = vector.shape_cast %77 : vector<256xf32> to vector<1x256xf32>
    %cst_42 = arith.constant 2.500000e-01 : f32
    %79 = vector.broadcast %cst_42 : f32 to vector<1x256xf32>
    %80 = arith.mulf %78, %79 : vector<1x256xf32>
    %81 = arith.mulf %75, %75 : vector<1x256xf32>
    %82 = arith.subf %80, %81 : vector<1x256xf32>
    %c0_43 = arith.constant 0 : index
    %c0_44 = arith.constant 0 : index
    %83 = vector.load %arg9[%c0_43, %c0_44] : memref<1x256xf32, #tpu.memory_space<vmem>>, vector<1x256xf32>
    %cst_45 = arith.constant 9.99999974E-6 : f32
    %84 = vector.broadcast %cst_45 : f32 to vector<1x256xf32>
    %85 = arith.addf %82, %84 : vector<1x256xf32>
    %86 = math.rsqrt %85 : vector<1x256xf32>
    %87 = arith.mulf %83, %86 : vector<1x256xf32>
    %c0_46 = arith.constant 0 : index
    %c0_47 = arith.constant 0 : index
    %88 = vector.load %arg10[%c0_46, %c0_47] : memref<1x256xf32, #tpu.memory_space<vmem>>, vector<1x256xf32>
    %89 = arith.mulf %75, %87 : vector<1x256xf32>
    %90 = arith.subf %88, %89 : vector<1x256xf32>
    %91 = vector.broadcast %87 : vector<1x256xf32> to vector<4x256xf32>
    %92 = arith.mulf %71, %91 : vector<4x256xf32>
    %93 = vector.broadcast %90 : vector<1x256xf32> to vector<4x256xf32>
    %94 = arith.addf %92, %93 : vector<4x256xf32>
    %cst_48 = arith.constant 0.000000e+00 : f32
    %95 = vector.broadcast %cst_48 : f32 to vector<4x256xf32>
    %96 = arith.cmpf oge, %94, %95 : vector<4x256xf32>
    %cst_49 = arith.constant 2.000000e-01 : f32
    %97 = vector.broadcast %cst_49 : f32 to vector<4x256xf32>
    %98 = arith.mulf %97, %94 : vector<4x256xf32>
    %99 = arith.select %96, %94, %98 : vector<4x256xi1>, vector<4x256xf32>
    %c0_50 = arith.constant 0 : index
    %c0_51 = arith.constant 0 : index
    %c0_52 = arith.constant 0 : index
    %100 = vector.load %arg11[%c0_50, %c0_51, %c0_52] : memref<4x256x128xf32, #tpu.memory_space<vmem>>, vector<1x256x128xf32>
    %101 = vector.shape_cast %100 : vector<1x256x128xf32> to vector<256x128xf32>
    %cst_53 = arith.constant dense<0.000000e+00> : vector<4x128xf32>
    %102 = tpu.matmul %99, %101, %cst_53 {dimension_numbers = #tpu.dot_dimension_numbers<[1], [0], [0], [1], [0, 0, 1, 1], [], []>} : vector<4x256xf32>, vector<256x128xf32>, vector<4x128xf32> -> vector<4x128xf32>
    %c0_54 = arith.constant 0 : index
    %c0_55 = arith.constant 0 : index
    %103 = vector.load %arg27[%c0_54, %c0_55] : memref<16x128xf32, #tpu.memory_space<vmem>>, vector<4x128xf32>
    tpu.vector_store %arg27[%c0_54, %c0_55], %102 {strides = array<i32>} : memref<16x128xf32, #tpu.memory_space<vmem>>, vector<4x128xf32>,
    %c1 = arith.constant 1 : index
    %c0_56 = arith.constant 0 : index
    %c0_57 = arith.constant 0 : index
    %104 = vector.load %arg11[%c1, %c0_56, %c0_57] : memref<4x256x128xf32, #tpu.memory_space<vmem>>, vector<1x256x128xf32>
    %105 = vector.shape_cast %104 : vector<1x256x128xf32> to vector<256x128xf32>
    %cst_58 = arith.constant dense<0.000000e+00> : vector<4x128xf32>
    %106 = tpu.matmul %99, %105, %cst_58 {dimension_numbers = #tpu.dot_dimension_numbers<[1], [0], [0], [1], [0, 0, 1, 1], [], []>} : vector<4x256xf32>, vector<256x128xf32>, vector<4x128xf32> -> vector<4x128xf32>
    %c4_59 = arith.constant 4 : index
    %c0_60 = arith.constant 0 : index
    %107 = vector.load %arg27[%c4_59, %c0_60] : memref<16x128xf32, #tpu.memory_space<vmem>>, vector<4x128xf32>
    tpu.vector_store %arg27[%c4_59, %c0_60], %106 {strides = array<i32>} : memref<16x128xf32, #tpu.memory_space<vmem>>, vector<4x128xf32>,
    %c2 = arith.constant 2 : index
    %c0_61 = arith.constant 0 : index
    %c0_62 = arith.constant 0 : index
    %108 = vector.load %arg11[%c2, %c0_61, %c0_62] : memref<4x256x128xf32, #tpu.memory_space<vmem>>, vector<1x256x128xf32>
    %109 = vector.shape_cast %108 : vector<1x256x128xf32> to vector<256x128xf32>
    %cst_63 = arith.constant dense<0.000000e+00> : vector<4x128xf32>
    %110 = tpu.matmul %99, %109, %cst_63 {dimension_numbers = #tpu.dot_dimension_numbers<[1], [0], [0], [1], [0, 0, 1, 1], [], []>} : vector<4x256xf32>, vector<256x128xf32>, vector<4x128xf32> -> vector<4x128xf32>
    %c8 = arith.constant 8 : index
    %c0_64 = arith.constant 0 : index
    %111 = vector.load %arg27[%c8, %c0_64] : memref<16x128xf32, #tpu.memory_space<vmem>>, vector<4x128xf32>
    tpu.vector_store %arg27[%c8, %c0_64], %110 {strides = array<i32>} : memref<16x128xf32, #tpu.memory_space<vmem>>, vector<4x128xf32>,
    %c3 = arith.constant 3 : index
    %c0_65 = arith.constant 0 : index
    %c0_66 = arith.constant 0 : index
    %112 = vector.load %arg11[%c3, %c0_65, %c0_66] : memref<4x256x128xf32, #tpu.memory_space<vmem>>, vector<1x256x128xf32>
    %113 = vector.shape_cast %112 : vector<1x256x128xf32> to vector<256x128xf32>
    %cst_67 = arith.constant dense<0.000000e+00> : vector<4x128xf32>
    %114 = tpu.matmul %99, %113, %cst_67 {dimension_numbers = #tpu.dot_dimension_numbers<[1], [0], [0], [1], [0, 0, 1, 1], [], []>} : vector<4x256xf32>, vector<256x128xf32>, vector<4x128xf32> -> vector<4x128xf32>
    %c12 = arith.constant 12 : index
    %c0_68 = arith.constant 0 : index
    %115 = vector.load %arg27[%c12, %c0_68] : memref<16x128xf32, #tpu.memory_space<vmem>>, vector<4x128xf32>
    tpu.vector_store %arg27[%c12, %c0_68], %114 {strides = array<i32>} : memref<16x128xf32, #tpu.memory_space<vmem>>, vector<4x128xf32>,
    %c0_69 = arith.constant 0 : index
    %c0_70 = arith.constant 0 : index
    %116 = vector.load %arg27[%c0_69, %c0_70] : memref<16x128xf32, #tpu.memory_space<vmem>>, vector<16x128xf32>
    %cst_71 = arith.constant dense<0.000000e+00> : vector<128xf32>
    %117 = vector.multi_reduction <add>, %116, %cst_71 [0] : vector<16x128xf32> to vector<128xf32>
    %118 = vector.shape_cast %117 : vector<128xf32> to vector<1x128xf32>
    %cst_72 = arith.constant 6.250000e-02 : f32
    %119 = vector.broadcast %cst_72 : f32 to vector<1x128xf32>
    %120 = arith.mulf %118, %119 : vector<1x128xf32>
    %121 = arith.mulf %116, %116 : vector<16x128xf32>
    %cst_73 = arith.constant dense<0.000000e+00> : vector<128xf32>
    %122 = vector.multi_reduction <add>, %121, %cst_73 [0] : vector<16x128xf32> to vector<128xf32>
    %123 = vector.shape_cast %122 : vector<128xf32> to vector<1x128xf32>
    %cst_74 = arith.constant 6.250000e-02 : f32
    %124 = vector.broadcast %cst_74 : f32 to vector<1x128xf32>
    %125 = arith.mulf %123, %124 : vector<1x128xf32>
    %126 = arith.mulf %120, %120 : vector<1x128xf32>
    %127 = arith.subf %125, %126 : vector<1x128xf32>
    %c0_75 = arith.constant 0 : index
    %c0_76 = arith.constant 0 : index
    %128 = vector.load %arg12[%c0_75, %c0_76] : memref<1x128xf32, #tpu.memory_space<vmem>>, vector<1x128xf32>
    %cst_77 = arith.constant 9.99999974E-6 : f32
    %129 = vector.broadcast %cst_77 : f32 to vector<1x128xf32>
    %130 = arith.addf %127, %129 : vector<1x128xf32>
    %131 = math.rsqrt %130 : vector<1x128xf32>
    %132 = arith.mulf %128, %131 : vector<1x128xf32>
    %c0_78 = arith.constant 0 : index
    %c0_79 = arith.constant 0 : index
    %133 = vector.load %arg13[%c0_78, %c0_79] : memref<1x128xf32, #tpu.memory_space<vmem>>, vector<1x128xf32>
    %134 = arith.mulf %120, %132 : vector<1x128xf32>
    %135 = arith.subf %133, %134 : vector<1x128xf32>
    %136 = vector.broadcast %132 : vector<1x128xf32> to vector<16x128xf32>
    %137 = arith.mulf %116, %136 : vector<16x128xf32>
    %138 = vector.broadcast %135 : vector<1x128xf32> to vector<16x128xf32>
    %139 = arith.addf %137, %138 : vector<16x128xf32>
    %cst_80 = arith.constant 0.000000e+00 : f32
    %140 = vector.broadcast %cst_80 : f32 to vector<16x128xf32>
    %141 = arith.cmpf oge, %139, %140 : vector<16x128xf32>
    %cst_81 = arith.constant 2.000000e-01 : f32
    %142 = vector.broadcast %cst_81 : f32 to vector<16x128xf32>
    %143 = arith.mulf %142, %139 : vector<16x128xf32>
    %144 = arith.select %141, %139, %143 : vector<16x128xi1>, vector<16x128xf32>
    %c0_82 = arith.constant 0 : index
    %c0_83 = arith.constant 0 : index
    %c0_84 = arith.constant 0 : index
    %145 = vector.load %arg14[%c0_82, %c0_83, %c0_84] : memref<4x128x64xf32, #tpu.memory_space<vmem>>, vector<1x128x64xf32>
    %146 = vector.shape_cast %145 : vector<1x128x64xf32> to vector<128x64xf32>
    %cst_85 = arith.constant dense<0.000000e+00> : vector<16x64xf32>
    %147 = tpu.matmul %144, %146, %cst_85 {dimension_numbers = #tpu.dot_dimension_numbers<[1], [0], [0], [1], [0, 0, 1, 1], [], []>} : vector<16x128xf32>, vector<128x64xf32>, vector<16x64xf32> -> vector<16x64xf32>
    %c0_86 = arith.constant 0 : index
    %c0_87 = arith.constant 0 : index
    %148 = vector.load %arg28[%c0_86, %c0_87] : memref<64x64xf32, #tpu.memory_space<vmem>>, vector<16x64xf32>
    tpu.vector_store %arg28[%c0_86, %c0_87], %147 {strides = array<i32>} : memref<64x64xf32, #tpu.memory_space<vmem>>, vector<16x64xf32>,
    %c1_88 = arith.constant 1 : index
    %c0_89 = arith.constant 0 : index
    %c0_90 = arith.constant 0 : index
    %149 = vector.load %arg14[%c1_88, %c0_89, %c0_90] : memref<4x128x64xf32, #tpu.memory_space<vmem>>, vector<1x128x64xf32>
    %150 = vector.shape_cast %149 : vector<1x128x64xf32> to vector<128x64xf32>
    %cst_91 = arith.constant dense<0.000000e+00> : vector<16x64xf32>
    %151 = tpu.matmul %144, %150, %cst_91 {dimension_numbers = #tpu.dot_dimension_numbers<[1], [0], [0], [1], [0, 0, 1, 1], [], []>} : vector<16x128xf32>, vector<128x64xf32>, vector<16x64xf32> -> vector<16x64xf32>
    %c16 = arith.constant 16 : index
    %c0_92 = arith.constant 0 : index
    %152 = vector.load %arg28[%c16, %c0_92] : memref<64x64xf32, #tpu.memory_space<vmem>>, vector<16x64xf32>
    tpu.vector_store %arg28[%c16, %c0_92], %151 {strides = array<i32>} : memref<64x64xf32, #tpu.memory_space<vmem>>, vector<16x64xf32>,
    %c2_93 = arith.constant 2 : index
    %c0_94 = arith.constant 0 : index
    %c0_95 = arith.constant 0 : index
    %153 = vector.load %arg14[%c2_93, %c0_94, %c0_95] : memref<4x128x64xf32, #tpu.memory_space<vmem>>, vector<1x128x64xf32>
    %154 = vector.shape_cast %153 : vector<1x128x64xf32> to vector<128x64xf32>
    %cst_96 = arith.constant dense<0.000000e+00> : vector<16x64xf32>
    %155 = tpu.matmul %144, %154, %cst_96 {dimension_numbers = #tpu.dot_dimension_numbers<[1], [0], [0], [1], [0, 0, 1, 1], [], []>} : vector<16x128xf32>, vector<128x64xf32>, vector<16x64xf32> -> vector<16x64xf32>
    %c32 = arith.constant 32 : index
    %c0_97 = arith.constant 0 : index
    %156 = vector.load %arg28[%c32, %c0_97] : memref<64x64xf32, #tpu.memory_space<vmem>>, vector<16x64xf32>
    tpu.vector_store %arg28[%c32, %c0_97], %155 {strides = array<i32>} : memref<64x64xf32, #tpu.memory_space<vmem>>, vector<16x64xf32>,
    %c3_98 = arith.constant 3 : index
    %c0_99 = arith.constant 0 : index
    %c0_100 = arith.constant 0 : index
    %157 = vector.load %arg14[%c3_98, %c0_99, %c0_100] : memref<4x128x64xf32, #tpu.memory_space<vmem>>, vector<1x128x64xf32>
    %158 = vector.shape_cast %157 : vector<1x128x64xf32> to vector<128x64xf32>
    %cst_101 = arith.constant dense<0.000000e+00> : vector<16x64xf32>
    %159 = tpu.matmul %144, %158, %cst_101 {dimension_numbers = #tpu.dot_dimension_numbers<[1], [0], [0], [1], [0, 0, 1, 1], [], []>} : vector<16x128xf32>, vector<128x64xf32>, vector<16x64xf32> -> vector<16x64xf32>
    %c48 = arith.constant 48 : index
    %c0_102 = arith.constant 0 : index
    %160 = vector.load %arg28[%c48, %c0_102] : memref<64x64xf32, #tpu.memory_space<vmem>>, vector<16x64xf32>
    tpu.vector_store %arg28[%c48, %c0_102], %159 {strides = array<i32>} : memref<64x64xf32, #tpu.memory_space<vmem>>, vector<16x64xf32>,
    %c0_103 = arith.constant 0 : index
    %c0_104 = arith.constant 0 : index
    %161 = vector.load %arg28[%c0_103, %c0_104] : memref<64x64xf32, #tpu.memory_space<vmem>>, vector<64x64xf32>
    %cst_105 = arith.constant dense<0.000000e+00> : vector<64xf32>
    %162 = vector.multi_reduction <add>, %161, %cst_105 [0] : vector<64x64xf32> to vector<64xf32>
    %163 = vector.shape_cast %162 : vector<64xf32> to vector<1x64xf32>
    %cst_106 = arith.constant 1.562500e-02 : f32
    %164 = vector.broadcast %cst_106 : f32 to vector<1x64xf32>
    %165 = arith.mulf %163, %164 : vector<1x64xf32>
    %166 = arith.mulf %161, %161 : vector<64x64xf32>
    %cst_107 = arith.constant dense<0.000000e+00> : vector<64xf32>
    %167 = vector.multi_reduction <add>, %166, %cst_107 [0] : vector<64x64xf32> to vector<64xf32>
    %168 = vector.shape_cast %167 : vector<64xf32> to vector<1x64xf32>
    %cst_108 = arith.constant 1.562500e-02 : f32
    %169 = vector.broadcast %cst_108 : f32 to vector<1x64xf32>
    %170 = arith.mulf %168, %169 : vector<1x64xf32>
    %171 = arith.mulf %165, %165 : vector<1x64xf32>
    %172 = arith.subf %170, %171 : vector<1x64xf32>
    %c0_109 = arith.constant 0 : index
    %c0_110 = arith.constant 0 : index
    %173 = vector.load %arg15[%c0_109, %c0_110] : memref<1x64xf32, #tpu.memory_space<vmem>>, vector<1x64xf32>
    %cst_111 = arith.constant 9.99999974E-6 : f32
    %174 = vector.broadcast %cst_111 : f32 to vector<1x64xf32>
    %175 = arith.addf %172, %174 : vector<1x64xf32>
    %176 = math.rsqrt %175 : vector<1x64xf32>
    %177 = arith.mulf %173, %176 : vector<1x64xf32>
    %c0_112 = arith.constant 0 : index
    %c0_113 = arith.constant 0 : index
    %178 = vector.load %arg16[%c0_112, %c0_113] : memref<1x64xf32, #tpu.memory_space<vmem>>, vector<1x64xf32>
    %179 = arith.mulf %165, %177 : vector<1x64xf32>
    %180 = arith.subf %178, %179 : vector<1x64xf32>
    %181 = vector.broadcast %177 : vector<1x64xf32> to vector<64x64xf32>
    %182 = arith.mulf %161, %181 : vector<64x64xf32>
    %183 = vector.broadcast %180 : vector<1x64xf32> to vector<64x64xf32>
    %184 = arith.addf %182, %183 : vector<64x64xf32>
    %cst_114 = arith.constant 0.000000e+00 : f32
    %185 = vector.broadcast %cst_114 : f32 to vector<64x64xf32>
    %186 = arith.cmpf oge, %184, %185 : vector<64x64xf32>
    %cst_115 = arith.constant 2.000000e-01 : f32
    %187 = vector.broadcast %cst_115 : f32 to vector<64x64xf32>
    %188 = arith.mulf %187, %184 : vector<64x64xf32>
    %189 = arith.select %186, %184, %188 : vector<64x64xi1>, vector<64x64xf32>
    %c0_116 = arith.constant 0 : index
    %c0_117 = arith.constant 0 : index
    %c0_118 = arith.constant 0 : index
    %190 = vector.load %arg17[%c0_116, %c0_117, %c0_118] : memref<4x64x32xf32, #tpu.memory_space<vmem>>, vector<1x64x32xf32>
    %191 = vector.shape_cast %190 : vector<1x64x32xf32> to vector<64x32xf32>
    %cst_119 = arith.constant dense<0.000000e+00> : vector<64x32xf32>
    %192 = tpu.matmul %189, %191, %cst_119 {dimension_numbers = #tpu.dot_dimension_numbers<[1], [0], [0], [1], [0, 0, 1, 1], [], []>} : vector<64x64xf32>, vector<64x32xf32>, vector<64x32xf32> -> vector<64x32xf32>
    %c0_120 = arith.constant 0 : index
    %c0_121 = arith.constant 0 : index
    %193 = vector.load %arg29[%c0_120, %c0_121] : memref<256x32xf32, #tpu.memory_space<vmem>>, vector<64x32xf32>
    tpu.vector_store %arg29[%c0_120, %c0_121], %192 {strides = array<i32>} : memref<256x32xf32, #tpu.memory_space<vmem>>, vector<64x32xf32>,
    %c1_122 = arith.constant 1 : index
    %c0_123 = arith.constant 0 : index
    %c0_124 = arith.constant 0 : index
    %194 = vector.load %arg17[%c1_122, %c0_123, %c0_124] : memref<4x64x32xf32, #tpu.memory_space<vmem>>, vector<1x64x32xf32>
    %195 = vector.shape_cast %194 : vector<1x64x32xf32> to vector<64x32xf32>
    %cst_125 = arith.constant dense<0.000000e+00> : vector<64x32xf32>
    %196 = tpu.matmul %189, %195, %cst_125 {dimension_numbers = #tpu.dot_dimension_numbers<[1], [0], [0], [1], [0, 0, 1, 1], [], []>} : vector<64x64xf32>, vector<64x32xf32>, vector<64x32xf32> -> vector<64x32xf32>
    %c64_126 = arith.constant 64 : index
    %c0_127 = arith.constant 0 : index
    %197 = vector.load %arg29[%c64_126, %c0_127] : memref<256x32xf32, #tpu.memory_space<vmem>>, vector<64x32xf32>
    tpu.vector_store %arg29[%c64_126, %c0_127], %196 {strides = array<i32>} : memref<256x32xf32, #tpu.memory_space<vmem>>, vector<64x32xf32>,
    %c2_128 = arith.constant 2 : index
    %c0_129 = arith.constant 0 : index
    %c0_130 = arith.constant 0 : index
    %198 = vector.load %arg17[%c2_128, %c0_129, %c0_130] : memref<4x64x32xf32, #tpu.memory_space<vmem>>, vector<1x64x32xf32>
    %199 = vector.shape_cast %198 : vector<1x64x32xf32> to vector<64x32xf32>
    %cst_131 = arith.constant dense<0.000000e+00> : vector<64x32xf32>
    %200 = tpu.matmul %189, %199, %cst_131 {dimension_numbers = #tpu.dot_dimension_numbers<[1], [0], [0], [1], [0, 0, 1, 1], [], []>} : vector<64x64xf32>, vector<64x32xf32>, vector<64x32xf32> -> vector<64x32xf32>
    %c128 = arith.constant 128 : index
    %c0_132 = arith.constant 0 : index
    %201 = vector.load %arg29[%c128, %c0_132] : memref<256x32xf32, #tpu.memory_space<vmem>>, vector<64x32xf32>
    tpu.vector_store %arg29[%c128, %c0_132], %200 {strides = array<i32>} : memref<256x32xf32, #tpu.memory_space<vmem>>, vector<64x32xf32>,
    %c3_133 = arith.constant 3 : index
    %c0_134 = arith.constant 0 : index
    %c0_135 = arith.constant 0 : index
    %202 = vector.load %arg17[%c3_133, %c0_134, %c0_135] : memref<4x64x32xf32, #tpu.memory_space<vmem>>, vector<1x64x32xf32>
    %203 = vector.shape_cast %202 : vector<1x64x32xf32> to vector<64x32xf32>
    %cst_136 = arith.constant dense<0.000000e+00> : vector<64x32xf32>
    %204 = tpu.matmul %189, %203, %cst_136 {dimension_numbers = #tpu.dot_dimension_numbers<[1], [0], [0], [1], [0, 0, 1, 1], [], []>} : vector<64x64xf32>, vector<64x32xf32>, vector<64x32xf32> -> vector<64x32xf32>
    %c192 = arith.constant 192 : index
    %c0_137 = arith.constant 0 : index
    %205 = vector.load %arg29[%c192, %c0_137] : memref<256x32xf32, #tpu.memory_space<vmem>>, vector<64x32xf32>
    tpu.vector_store %arg29[%c192, %c0_137], %204 {strides = array<i32>} : memref<256x32xf32, #tpu.memory_space<vmem>>, vector<64x32xf32>,
    %c0_138 = arith.constant 0 : index
    %c0_139 = arith.constant 0 : index
    %206 = vector.load %arg29[%c0_138, %c0_139] : memref<256x32xf32, #tpu.memory_space<vmem>>, vector<256x32xf32>
    %cst_140 = arith.constant dense<0.000000e+00> : vector<32xf32>
    %207 = vector.multi_reduction <add>, %206, %cst_140 [0] : vector<256x32xf32> to vector<32xf32>
    %208 = vector.shape_cast %207 : vector<32xf32> to vector<1x32xf32>
    %cst_141 = arith.constant 3.906250e-03 : f32
    %209 = vector.broadcast %cst_141 : f32 to vector<1x32xf32>
    %210 = arith.mulf %208, %209 : vector<1x32xf32>
    %211 = arith.mulf %206, %206 : vector<256x32xf32>
    %cst_142 = arith.constant dense<0.000000e+00> : vector<32xf32>
    %212 = vector.multi_reduction <add>, %211, %cst_142 [0] : vector<256x32xf32> to vector<32xf32>
    %213 = vector.shape_cast %212 : vector<32xf32> to vector<1x32xf32>
    %cst_143 = arith.constant 3.906250e-03 : f32
    %214 = vector.broadcast %cst_143 : f32 to vector<1x32xf32>
    %215 = arith.mulf %213, %214 : vector<1x32xf32>
    %216 = arith.mulf %210, %210 : vector<1x32xf32>
    %217 = arith.subf %215, %216 : vector<1x32xf32>
    %c0_144 = arith.constant 0 : index
    %c0_145 = arith.constant 0 : index
    %218 = vector.load %arg18[%c0_144, %c0_145] : memref<1x32xf32, #tpu.memory_space<vmem>>, vector<1x32xf32>
    %cst_146 = arith.constant 9.99999974E-6 : f32
    %219 = vector.broadcast %cst_146 : f32 to vector<1x32xf32>
    %220 = arith.addf %217, %219 : vector<1x32xf32>
    %221 = math.rsqrt %220 : vector<1x32xf32>
    %222 = arith.mulf %218, %221 : vector<1x32xf32>
    %c0_147 = arith.constant 0 : index
    %c0_148 = arith.constant 0 : index
    %223 = vector.load %arg19[%c0_147, %c0_148] : memref<1x32xf32, #tpu.memory_space<vmem>>, vector<1x32xf32>
    %224 = arith.mulf %210, %222 : vector<1x32xf32>
    %225 = arith.subf %223, %224 : vector<1x32xf32>
    %226 = vector.broadcast %222 : vector<1x32xf32> to vector<256x32xf32>
    %227 = arith.mulf %206, %226 : vector<256x32xf32>
    %228 = vector.broadcast %225 : vector<1x32xf32> to vector<256x32xf32>
    %229 = arith.addf %227, %228 : vector<256x32xf32>
    %cst_149 = arith.constant 0.000000e+00 : f32
    %230 = vector.broadcast %cst_149 : f32 to vector<256x32xf32>
    %231 = arith.cmpf oge, %229, %230 : vector<256x32xf32>
    %cst_150 = arith.constant 2.000000e-01 : f32
    %232 = vector.broadcast %cst_150 : f32 to vector<256x32xf32>
    %233 = arith.mulf %232, %229 : vector<256x32xf32>
    %234 = arith.select %231, %229, %233 : vector<256x32xi1>, vector<256x32xf32>
    %c0_151 = arith.constant 0 : index
    %c0_152 = arith.constant 0 : index
    %c0_153 = arith.constant 0 : index
    %235 = vector.load %arg20[%c0_151, %c0_152, %c0_153] : memref<4x32x16xf32, #tpu.memory_space<vmem>>, vector<1x32x16xf32>
    %236 = vector.shape_cast %235 : vector<1x32x16xf32> to vector<32x16xf32>
    %cst_154 = arith.constant dense<0.000000e+00> : vector<256x16xf32>
    %237 = tpu.matmul %234, %236, %cst_154 {dimension_numbers = #tpu.dot_dimension_numbers<[1], [0], [0], [1], [0, 0, 1, 1], [], []>} : vector<256x32xf32>, vector<32x16xf32>, vector<256x16xf32> -> vector<256x16xf32>
    %c0_155 = arith.constant 0 : index
    %c0_156 = arith.constant 0 : index
    %238 = vector.load %arg30[%c0_155, %c0_156] : memref<1024x16xf32, #tpu.memory_space<vmem>>, vector<256x16xf32>
    tpu.vector_store %arg30[%c0_155, %c0_156], %237 {strides = array<i32>} : memref<1024x16xf32, #tpu.memory_space<vmem>>, vector<256x16xf32>,
    %c1_157 = arith.constant 1 : index
    %c0_158 = arith.constant 0 : index
    %c0_159 = arith.constant 0 : index
    %239 = vector.load %arg20[%c1_157, %c0_158, %c0_159] : memref<4x32x16xf32, #tpu.memory_space<vmem>>, vector<1x32x16xf32>
    %240 = vector.shape_cast %239 : vector<1x32x16xf32> to vector<32x16xf32>
    %cst_160 = arith.constant dense<0.000000e+00> : vector<256x16xf32>
    %241 = tpu.matmul %234, %240, %cst_160 {dimension_numbers = #tpu.dot_dimension_numbers<[1], [0], [0], [1], [0, 0, 1, 1], [], []>} : vector<256x32xf32>, vector<32x16xf32>, vector<256x16xf32> -> vector<256x16xf32>
    %c256 = arith.constant 256 : index
    %c0_161 = arith.constant 0 : index
    %242 = vector.load %arg30[%c256, %c0_161] : memref<1024x16xf32, #tpu.memory_space<vmem>>, vector<256x16xf32>
    tpu.vector_store %arg30[%c256, %c0_161], %241 {strides = array<i32>} : memref<1024x16xf32, #tpu.memory_space<vmem>>, vector<256x16xf32>,
    %c2_162 = arith.constant 2 : index
    %c0_163 = arith.constant 0 : index
    %c0_164 = arith.constant 0 : index
    %243 = vector.load %arg20[%c2_162, %c0_163, %c0_164] : memref<4x32x16xf32, #tpu.memory_space<vmem>>, vector<1x32x16xf32>
    %244 = vector.shape_cast %243 : vector<1x32x16xf32> to vector<32x16xf32>
    %cst_165 = arith.constant dense<0.000000e+00> : vector<256x16xf32>
    %245 = tpu.matmul %234, %244, %cst_165 {dimension_numbers = #tpu.dot_dimension_numbers<[1], [0], [0], [1], [0, 0, 1, 1], [], []>} : vector<256x32xf32>, vector<32x16xf32>, vector<256x16xf32> -> vector<256x16xf32>
    %c512 = arith.constant 512 : index
    %c0_166 = arith.constant 0 : index
    %246 = vector.load %arg30[%c512, %c0_166] : memref<1024x16xf32, #tpu.memory_space<vmem>>, vector<256x16xf32>
    tpu.vector_store %arg30[%c512, %c0_166], %245 {strides = array<i32>} : memref<1024x16xf32, #tpu.memory_space<vmem>>, vector<256x16xf32>,
    %c3_167 = arith.constant 3 : index
    %c0_168 = arith.constant 0 : index
    %c0_169 = arith.constant 0 : index
    %247 = vector.load %arg20[%c3_167, %c0_168, %c0_169] : memref<4x32x16xf32, #tpu.memory_space<vmem>>, vector<1x32x16xf32>
    %248 = vector.shape_cast %247 : vector<1x32x16xf32> to vector<32x16xf32>
    %cst_170 = arith.constant dense<0.000000e+00> : vector<256x16xf32>
    %249 = tpu.matmul %234, %248, %cst_170 {dimension_numbers = #tpu.dot_dimension_numbers<[1], [0], [0], [1], [0, 0, 1, 1], [], []>} : vector<256x32xf32>, vector<32x16xf32>, vector<256x16xf32> -> vector<256x16xf32>
    %c768 = arith.constant 768 : index
    %c0_171 = arith.constant 0 : index
    %250 = vector.load %arg30[%c768, %c0_171] : memref<1024x16xf32, #tpu.memory_space<vmem>>, vector<256x16xf32>
    tpu.vector_store %arg30[%c768, %c0_171], %249 {strides = array<i32>} : memref<1024x16xf32, #tpu.memory_space<vmem>>, vector<256x16xf32>,
    %c0_172 = arith.constant 0 : index
    %c0_173 = arith.constant 0 : index
    %251 = vector.load %arg30[%c0_172, %c0_173] : memref<1024x16xf32, #tpu.memory_space<vmem>>, vector<1024x16xf32>
    %cst_174 = arith.constant dense<0.000000e+00> : vector<16xf32>
    %252 = vector.multi_reduction <add>, %251, %cst_174 [0] : vector<1024x16xf32> to vector<16xf32>
    %253 = vector.shape_cast %252 : vector<16xf32> to vector<1x16xf32>
    %cst_175 = arith.constant 9.765625E-4 : f32
    %254 = vector.broadcast %cst_175 : f32 to vector<1x16xf32>
    %255 = arith.mulf %253, %254 : vector<1x16xf32>
    %256 = arith.mulf %251, %251 : vector<1024x16xf32>
    %cst_176 = arith.constant dense<0.000000e+00> : vector<16xf32>
    %257 = vector.multi_reduction <add>, %256, %cst_176 [0] : vector<1024x16xf32> to vector<16xf32>
    %258 = vector.shape_cast %257 : vector<16xf32> to vector<1x16xf32>
    %cst_177 = arith.constant 9.765625E-4 : f32
    %259 = vector.broadcast %cst_177 : f32 to vector<1x16xf32>
    %260 = arith.mulf %258, %259 : vector<1x16xf32>
    %261 = arith.mulf %255, %255 : vector<1x16xf32>
    %262 = arith.subf %260, %261 : vector<1x16xf32>
    %c0_178 = arith.constant 0 : index
    %c0_179 = arith.constant 0 : index
    %263 = vector.load %arg21[%c0_178, %c0_179] : memref<1x16xf32, #tpu.memory_space<vmem>>, vector<1x16xf32>
    %cst_180 = arith.constant 9.99999974E-6 : f32
    %264 = vector.broadcast %cst_180 : f32 to vector<1x16xf32>
    %265 = arith.addf %262, %264 : vector<1x16xf32>
    %266 = math.rsqrt %265 : vector<1x16xf32>
    %267 = arith.mulf %263, %266 : vector<1x16xf32>
    %c0_181 = arith.constant 0 : index
    %c0_182 = arith.constant 0 : index
    %268 = vector.load %arg22[%c0_181, %c0_182] : memref<1x16xf32, #tpu.memory_space<vmem>>, vector<1x16xf32>
    %269 = arith.mulf %255, %267 : vector<1x16xf32>
    %270 = arith.subf %268, %269 : vector<1x16xf32>
    %271 = vector.broadcast %267 : vector<1x16xf32> to vector<1024x16xf32>
    %272 = arith.mulf %251, %271 : vector<1024x16xf32>
    %273 = vector.broadcast %270 : vector<1x16xf32> to vector<1024x16xf32>
    %274 = arith.addf %272, %273 : vector<1024x16xf32>
    %cst_183 = arith.constant 0.000000e+00 : f32
    %275 = vector.broadcast %cst_183 : f32 to vector<1024x16xf32>
    %276 = arith.cmpf oge, %274, %275 : vector<1024x16xf32>
    %cst_184 = arith.constant 2.000000e-01 : f32
    %277 = vector.broadcast %cst_184 : f32 to vector<1024x16xf32>
    %278 = arith.mulf %277, %274 : vector<1024x16xf32>
    %279 = arith.select %276, %274, %278 : vector<1024x16xi1>, vector<1024x16xf32>
    %c0_185 = arith.constant 0 : index
    %c0_186 = arith.constant 0 : index
    %280 = vector.load %arg23[%c0_185, %c0_186] : memref<16x4xf32, #tpu.memory_space<vmem>>, vector<16x4xf32>
    %cst_187 = arith.constant dense<0.000000e+00> : vector<1024x4xf32>
    %281 = tpu.matmul %279, %280, %cst_187 {dimension_numbers = #tpu.dot_dimension_numbers<[1], [0], [0], [1], [0, 0, 1, 1], [], []>} : vector<1024x16xf32>, vector<16x4xf32>, vector<1024x4xf32> -> vector<1024x4xf32>
    %c0_188 = arith.constant 0 : index
    %c0_189 = arith.constant 0 : index
    %282 = vector.load %arg24[%c0_188, %c0_189] : memref<1x4xf32, #tpu.memory_space<vmem>>, vector<1x4xf32>
    %283 = vector.broadcast %282 : vector<1x4xf32> to vector<1024x4xf32>
    %284 = arith.addf %281, %283 : vector<1024x4xf32>
    %285 = math.tanh %284 : vector<1024x4xf32>
    %c0_190 = arith.constant 0 : index
    %c0_191 = arith.constant 0 : index
    %286 = vector.load %arg25[%c0_190, %c0_191] : memref<1024x4xf32, #tpu.memory_space<vmem>>, vector<1024x4xf32>
    tpu.vector_store %arg25[%c0_190, %c0_191], %285 {strides = array<i32>} : memref<1024x4xf32, #tpu.memory_space<vmem>>, vector<1024x4xf32>,
    return
  }
}

</mosaic_0001>

<llo_original>
// kernel: generator_forward.1
$region0: #{generator_forward.1}
  #allocation0 [shape = 'u32[]', space=smem, size = 0x4, offset = 0x4, fixed_abs, tag = 'smem constant byte address 0x4 - core index']
  #allocation1 [shape = 'u32[144,128]{1,0:T(1,128)}', space=vmem, size = 0x12000, scoped, tag = 'internal scratch']
  #allocation2 [shape = 'f32[4,16]{1,0:T(4,128)}', space=vmem, size = 0x800, scoped, tag = 'scratch operand']
  #allocation3 [shape = 'f32[16,128]{1,0:T(8,128)}', space=vmem, size = 0x2000, scoped, tag = 'scratch operand']
  #allocation4 [shape = 'f32[64,64]{1,0:T(8,128)}', space=vmem, size = 0x8000, scoped, tag = 'scratch operand']
  #allocation5 [shape = 'f32[256,32]{1,0:T(8,128)}', space=vmem, size = 0x20000, scoped, tag = 'scratch operand']
  #allocation6 [shape = 'f32[1024,16]{1,0:T(8,128)}', space=vmem, size = 0x80000, scoped, tag = 'scratch operand']
  %s0 = inlined_call_operand.vmem [shape: s32[4,9], index: 0, kind: input, shape index: {}]
  %s1 = inlined_call_operand.vmem [shape: f32[4,64], index: 1, kind: input, shape index: {}]
  %s2 = inlined_call_operand.vmem [shape: f32[8,4], index: 2, kind: input, shape index: {}]
  %s3 = inlined_call_operand.vmem [shape: f32[6,3], index: 3, kind: input, shape index: {}]
  %s4 = inlined_call_operand.vmem [shape: f32[7,3], index: 4, kind: input, shape index: {}]
  %s5 = inlined_call_operand.vmem [shape: f32[16,64], index: 5, kind: input, shape index: {}]
  %s6 = inlined_call_operand.vmem [shape: f32[1,64], index: 6, kind: input, shape index: {}]
  %s7 = inlined_call_operand.vmem [shape: f32[1,64], index: 7, kind: input, shape index: {}]
  %s8 = inlined_call_operand.hbm [shape: f32[128,256], index: 8, kind: input, shape index: {}]
  %s9 = inlined_call_operand.vmem [shape: f32[1,256], index: 9, kind: input, shape index: {}]
  %s10 = inlined_call_operand.vmem [shape: f32[1,256], index: 10, kind: input, shape index: {}]
  %s11 = inlined_call_operand.vmem [shape: f32[4,256,128], index: 11, kind: input, shape index: {}]
  %s12 = inlined_call_operand.vmem [shape: f32[1,128], index: 12, kind: input, shape index: {}]
  %s13 = inlined_call_operand.vmem [shape: f32[1,128], index: 13, kind: input, shape index: {}]
  %s14 = inlined_call_operand.vmem [shape: f32[4,128,64], index: 14, kind: input, shape index: {}]
  %s15 = inlined_call_operand.vmem [shape: f32[1,64], index: 15, kind: input, shape index: {}]
  %s16 = inlined_call_operand.vmem [shape: f32[1,64], index: 16, kind: input, shape index: {}]
  %s17 = inlined_call_operand.vmem [shape: f32[4,64,32], index: 17, kind: input, shape index: {}]
  %s18 = inlined_call_operand.vmem [shape: f32[1,32], index: 18, kind: input, shape index: {}]
  %s19 = inlined_call_operand.vmem [shape: f32[1,32], index: 19, kind: input, shape index: {}]
  %s20 = inlined_call_operand.vmem [shape: f32[4,32,16], index: 20, kind: input, shape index: {}]
  %s21 = inlined_call_operand.vmem [shape: f32[1,16], index: 21, kind: input, shape index: {}]
  %s22 = inlined_call_operand.vmem [shape: f32[1,16], index: 22, kind: input, shape index: {}]
  %s23 = inlined_call_operand.vmem [shape: f32[16,4], index: 23, kind: input, shape index: {}]
  %s24 = inlined_call_operand.vmem [shape: f32[1,4], index: 24, kind: input, shape index: {}]
  %s25 = inlined_call_operand.vmem [shape: f32[1024,4], index: 25, kind: output, shape index: {}]
  %s26 = sld [smem:[#allocation0]]
  $region114: #{generator_forward.1} parent=0
    _
  %s28 = ssub.s32 1, %s26
  %s29 = scalar_select 0, %s28, %s26
  $region1: #{generator_forward.1} parent=0
    #allocation7 [shape = 'u8[131072]{0}', space=vmem, size = 0x20000, scoped, tag = 'input window, operand 8, single buffered']
    #allocation8 [shape = 's32[1]{0}', space=sflag, size = 0x4, scoped, tag = 'scoped memory for generator_forward.1']
    %30 = vsyncpa [#allocation8], 0
    // Predicated region
    $region2: #{generator_forward.1} parent=1 // pred_check
      _
    $region3: #{generator_forward.1} parent=1 // pred_check_branch
      %32 = sbr.rel (0) target = $region5
    $region4: #{generator_forward.1} parent=1 // pred_region
      _
    $region5: #{generator_forward.1} parent=1 // pred_fallthru
      _
    // Predicated region
    $region6: #{generator_forward.1} parent=1 // pred_check
      _
    $region7: #{generator_forward.1} parent=1 // pred_check_branch
      %34 = sbr.rel (0) target = $region9
    $region8: #{generator_forward.1} parent=1 // pred_region
      _
    $region9: #{generator_forward.1} parent=1 // pred_fallthru
      _
    // Predicated region
    $region10: #{generator_forward.1} parent=1 // pred_check
      _
    $region11: #{generator_forward.1} parent=1 // pred_check_branch
      %36 = sbr.rel (0) target = $region13
    $region12: #{generator_forward.1} parent=1 // pred_region
      _
    $region13: #{generator_forward.1} parent=1 // pred_fallthru
      _
    // Predicated region
    $region14: #{generator_forward.1} parent=1 // pred_check
      _
    $region15: #{generator_forward.1} parent=1 // pred_check_branch
      %38 = sbr.rel (0) target = $region17
    $region16: #{generator_forward.1} parent=1 // pred_region
      _
    $region17: #{generator_forward.1} parent=1 // pred_fallthru
      _
    // Predicated region
    $region18: #{generator_forward.1} parent=1 // pred_check
      _
    $region19: #{generator_forward.1} parent=1 // pred_check_branch
      %40 = sbr.rel (0) target = $region21
    $region20: #{generator_forward.1} parent=1 // pred_region
      _
    $region21: #{generator_forward.1} parent=1 // pred_fallthru
      _
    // Predicated region
    $region22: #{generator_forward.1} parent=1 // pred_check
      _
    $region23: #{generator_forward.1} parent=1 // pred_check_branch
      %42 = sbr.rel (0) target = $region25
    $region24: #{generator_forward.1} parent=1 // pred_region
      _
    $region25: #{generator_forward.1} parent=1 // pred_fallthru
      _
    // Predicated region
    $region26: #{generator_forward.1} parent=1 // pred_check
      _
    $region27: #{generator_forward.1} parent=1 // pred_check_branch
      %44 = sbr.rel (0) target = $region29
    $region28: #{generator_forward.1} parent=1 // pred_region
      _
    $region29: #{generator_forward.1} parent=1 // pred_fallthru
      _
    // Predicated region
    $region30: #{generator_forward.1} parent=1 // pred_check
      _
    $region31: #{generator_forward.1} parent=1 // pred_check_branch
      %46 = sbr.rel (0) target = $region33
    $region32: #{generator_forward.1} parent=1 // pred_region
      _
    $region33: #{generator_forward.1} parent=1 // pred_fallthru
      _
    // Predicated region
    $region34: #{generator_forward.1} parent=1 // pred_check
      _
    $region35: #{generator_forward.1} parent=1 // pred_check_branch
      %48 = sbr.rel (0) target = $region37
    $region36: #{generator_forward.1} parent=1 // pred_region
      %s50 = ssub.s32 4096, 4096
      %51 = vsyncadd [#allocation8], %s50
      %s52 = sshll.u32 [#allocation7], 4
      %s53 = int_to_ptr.vmem [resolvable:$true] %s52
      %58 = dma.hbm_to_vmem [thread:$0]  %s8, 4096, %s53, [#allocation8], 256, 256, 16
    $region37: #{generator_forward.1} parent=1 // pred_fallthru
      _
    // Predicated region
    $region38: #{generator_forward.1} parent=1 // pred_check
      _
    $region39: #{generator_forward.1} parent=1 // pred_check_branch
      %60 = sbr.rel (0) target = $region41
    $region40: #{generator_forward.1} parent=1 // pred_region
      _
    $region41: #{generator_forward.1} parent=1 // pred_fallthru
      _
    // Predicated region
    $region42: #{generator_forward.1} parent=1 // pred_check
      _
    $region43: #{generator_forward.1} parent=1 // pred_check_branch
      %62 = sbr.rel (0) target = $region45
    $region44: #{generator_forward.1} parent=1 // pred_region
      _
    $region45: #{generator_forward.1} parent=1 // pred_fallthru
      _
    // Predicated region
    $region46: #{generator_forward.1} parent=1 // pred_check
      _
    $region47: #{generator_forward.1} parent=1 // pred_check_branch
      %64 = sbr.rel (0) target = $region49
    $region48: #{generator_forward.1} parent=1 // pred_region
      _
    $region49: #{generator_forward.1} parent=1 // pred_fallthru
      _
    // Predicated region
    $region50: #{generator_forward.1} parent=1 // pred_check
      _
    $region51: #{generator_forward.1} parent=1 // pred_check_branch
      %66 = sbr.rel (0) target = $region53
    $region52: #{generator_forward.1} parent=1 // pred_region
      _
    $region53: #{generator_forward.1} parent=1 // pred_fallthru
      _
    // Predicated region
    $region54: #{generator_forward.1} parent=1 // pred_check
      _
    $region55: #{generator_forward.1} parent=1 // pred_check_branch
      %68 = sbr.rel (0) target = $region57
    $region56: #{generator_forward.1} parent=1 // pred_region
      _
    $region57: #{generator_forward.1} parent=1 // pred_fallthru
      _
    // Predicated region
    $region58: #{generator_forward.1} parent=1 // pred_check
      _
    $region59: #{generator_forward.1} parent=1 // pred_check_branch
      %70 = sbr.rel (0) target = $region61
    $region60: #{generator_forward.1} parent=1 // pred_region
      _
    $region61: #{generator_forward.1} parent=1 // pred_fallthru
      _
    // Predicated region
    $region62: #{generator_forward.1} parent=1 // pred_check
      _
    $region63: #{generator_forward.1} parent=1 // pred_check_branch
      %72 = sbr.rel (0) target = $region65
    $region64: #{generator_forward.1} parent=1 // pred_region
      _
    $region65: #{generator_forward.1} parent=1 // pred_fallthru
      _
    // Predicated region
    $region66: #{generator_forward.1} parent=1 // pred_check
      _
    $region67: #{generator_forward.1} parent=1 // pred_check_branch
      %74 = sbr.rel (0) target = $region69
    $region68: #{generator_forward.1} parent=1 // pred_region
      _
    $region69: #{generator_forward.1} parent=1 // pred_fallthru
      _
    // Predicated region
    $region70: #{generator_forward.1} parent=1 // pred_check
      _
    $region71: #{generator_forward.1} parent=1 // pred_check_branch
      %76 = sbr.rel (0) target = $region73
    $region72: #{generator_forward.1} parent=1 // pred_region
      _
    $region73: #{generator_forward.1} parent=1 // pred_fallthru
      _
    // Predicated region
    $region74: #{generator_forward.1} parent=1 // pred_check
      _
    $region75: #{generator_forward.1} parent=1 // pred_check_branch
      %78 = sbr.rel (0) target = $region77
    $region76: #{generator_forward.1} parent=1 // pred_region
      _
    $region77: #{generator_forward.1} parent=1 // pred_fallthru
      _
    // Predicated region
    $region78: #{generator_forward.1} parent=1 // pred_check
      _
    $region79: #{generator_forward.1} parent=1 // pred_check_branch
      %80 = sbr.rel (0) target = $region81
    $region80: #{generator_forward.1} parent=1 // pred_region
      _
    $region81: #{generator_forward.1} parent=1 // pred_fallthru
      _
    // Predicated region
    $region82: #{generator_forward.1} parent=1 // pred_check
      _
    $region83: #{generator_forward.1} parent=1 // pred_check_branch
      %82 = sbr.rel (0) target = $region85
    $region84: #{generator_forward.1} parent=1 // pred_region
      _
    $region85: #{generator_forward.1} parent=1 // pred_fallthru
      _
    // Predicated region
    $region86: #{generator_forward.1} parent=1 // pred_check
      _
    $region87: #{generator_forward.1} parent=1 // pred_check_branch
      %84 = sbr.rel (0) target = $region89
    $region88: #{generator_forward.1} parent=1 // pred_region
      _
    $region89: #{generator_forward.1} parent=1 // pred_fallthru
      _
    // Predicated region
    $region90: #{generator_forward.1} parent=1 // pred_check
      _
    $region91: #{generator_forward.1} parent=1 // pred_check_branch
      %86 = sbr.rel (0) target = $region93
    $region92: #{generator_forward.1} parent=1 // pred_region
      _
    $region93: #{generator_forward.1} parent=1 // pred_fallthru
      _
    // Predicated region
    $region94: #{generator_forward.1} parent=1 // pred_check
      _
    $region95: #{generator_forward.1} parent=1 // pred_check_branch
      %88 = sbr.rel (0) target = $region97
    $region96: #{generator_forward.1} parent=1 // pred_region
      _
    $region97: #{generator_forward.1} parent=1 // pred_fallthru
      _
    // Predicated region
    $region98: #{generator_forward.1} parent=1 // pred_check
      _
    $region99: #{generator_forward.1} parent=1 // pred_check_branch
      %90 = sbr.rel (0) target = $region101
    $region100: #{generator_forward.1} parent=1 // pred_region
      _
    $region101: #{generator_forward.1} parent=1 // pred_fallthru
      _
    // Predicated region
    $region102: #{generator_forward.1} parent=1 // pred_check
      _
    $region103: #{generator_forward.1} parent=1 // pred_check_branch
      %92 = sbr.rel (0) target = $region105
    $region104: #{generator_forward.1} parent=1 // pred_region
      %93 = dma.done [#allocation8], 4096
    $region105: #{generator_forward.1} parent=1 // pred_fallthru
      _
    %v94 = vld [vmem:[%s0] sm:$0xf]
    %v95 = vcvt.s32.f32 %v94
    %v96 = vmul.f32 %v95, 0.003921569
    %v97 = vlaneseq
    %v98 = vand.u32 %v97, 127
    %99 = vset.pattern.permute.xlu0 0
    %100 = vperm.xlu0 %99, %v94
    %v101 = vpop.permute.xlu0 %100
    %vm102 = vcmp.eq.s32.totalorder %v98, %v101
    %v103 = vsel %vm102, 1, 0
    %v104 = vcvt.s32.f32 %v103
    %v105 = vld [vmem:[%s2] sm:$0xff]
    %vm106 = vcmask 64512
    %v108 = vsel %vm106, %v104, 0
    %110 = vmatprep.subr.mxu0 0.0
    %111 = vmatpush1.msra.mxu0 %v105
    %112 = vmatprep.subr.mxu0 0.0
    %113 = vmatpush1.msra.mxu0 0.0
    %114 = vmatprep.subr.mxu0 0.0
    %115 = vmatpush1.msra.mxu0 0.0
    %116 = vmatprep.subr.mxu0 0.0
    %117 = vmatpush1.msra.mxu0 0.0
    %118 = vmatprep.subr.mxu0 0.0
    %119 = vmatpush1.msra.mxu0 0.0
    %120 = vmatprep.subr.mxu0 0.0
    %121 = vmatpush1.msra.mxu0 0.0
    %122 = vmatprep.subr.mxu0 0.0
    %123 = vmatpush1.msra.mxu0 0.0
    %124 = vmatprep.subr.mxu0 0.0
    %125 = vmatpush1.msra.mxu0 0.0
    %126 = vmatprep.subr.mxu0 0.0
    %127 = vmatpush1.msra.mxu0 0.0
    %128 = vmatprep.subr.mxu0 0.0
    %129 = vmatpush1.msra.mxu0 0.0
    %130 = vmatprep.subr.mxu0 0.0
    %131 = vmatpush1.msra.mxu0 0.0
    %132 = vmatprep.subr.mxu0 0.0
    %133 = vmatpush1.msra.mxu0 0.0
    %134 = vmatprep.subr.mxu0 0.0
    %135 = vmatpush1.msra.mxu0 0.0
    %136 = vmatprep.subr.mxu0 0.0
    %137 = vmatpush1.msra.mxu0 0.0
    %138 = vmatprep.subr.mxu0 0.0
    %139 = vmatpush1.msra.mxu0 0.0
    %140 = vmatprep.subr.mxu0 0.0
    %141 = vmatpush1.msra.mxu0 0.0
    %142 = vmatprep.subr.mxu0 0.0
    %143 = vmatpush1.msra.mxu0 0.0
    %144 = vmatprep.subr.mxu0 0.0
    %145 = vmatpush1.msra.mxu0 0.0
    %146 = vmatprep.subr.mxu0 0.0
    %147 = vmatpush1.msra.mxu0 0.0
    %148 = vmatprep.subr.mxu0 0.0
    %149 = vmatpush1.msra.mxu0 0.0
    %150 = vmatprep.subr.mxu0 0.0
    %151 = vmatpush1.msra.mxu0 0.0
    %152 = vmatprep.subr.mxu0 0.0
    %153 = vmatpush1.msra.mxu0 0.0
    %154 = vmatprep.subr.mxu0 0.0
    %155 = vmatpush1.msra.mxu0 0.0
    %156 = vmatprep.subr.mxu0 0.0
    %157 = vmatpush1.msra.mxu0 0.0
    %158 = vmatprep.subr.mxu0 0.0
    %159 = vmatpush1.msra.mxu0 0.0
    %160 = vmatprep.subr.mxu0 0.0
    %161 = vmatpush1.msra.mxu0 0.0
    %162 = vmatprep.subr.mxu0 0.0
    %163 = vmatpush1.msra.mxu0 0.0
    %164 = vmatprep.subr.mxu0 0.0
    %165 = vmatpush1.msra.mxu0 0.0
    %166 = vmatprep.subr.mxu0 0.0
    %167 = vmatpush1.msra.mxu0 0.0
    %168 = vmatprep.subr.mxu0 0.0
    %169 = vmatpush1.msra.mxu0 0.0
    %170 = vmatprep.subr.mxu0 0.0
    %171 = vmatpush1.msra.mxu0 0.0
    %172 = vmatprep.subr.mxu0 0.0
    %173 = vmatpush1.msra.mxu0 0.0
    %174 = vmatprep.mubr.f32.mxu0 0.0
    %175 = vmatmul.mubr.f32.gmra.mrb[0].mxu0 %v108
    %v176 = vpop.f32.mrb[0].mxu0
    %v177 = vadd.f32 0.0, %v176
    %v178 = vpop.f32.mrb[0].mxu0
    %179 = vdwg.mxu0
    %vm180 = vcmask 27648
    %181 = vst.msk [vmem:[#allocation2] sm:$0xf] %vm180, %v177
    %183 = vrot.lane.b32.xlu0 %v96, 3
    %v184 = vpop.permute.xlu0 %183
    %vm186 = vcmask 52256
    %187 = vst.msk [vmem:[#allocation2] sm:$0xf] %vm186, %v184
    %188 = vset.pattern.permute.xlu0 4
    %189 = vperm.xlu0 %188, %v94
    %v190 = vpop.permute.xlu0 %189
    %vm191 = vcmp.eq.s32.totalorder %v98, %v190
    %v192 = vsel %vm191, 1, 0
    %v193 = vcvt.s32.f32 %v192
    %v194 = vld [vmem:[%s3] sm:$0x3f]
    %vm195 = vcmask 48128
    %v197 = vsel %vm195, %v193, 0
    %vm199 = vcmask 1045504
    %v201 = vsel %vm199, %v194, 0
    %203 = vmatprep.subr.mxu0 0.0
    %204 = vmatpush1.msra.mxu0 %v201
    %205 = vmatprep.subr.mxu0 0.0
    %206 = vmatpush1.msra.mxu0 0.0
    %207 = vmatprep.subr.mxu0 0.0
    %208 = vmatpush1.msra.mxu0 0.0
    %209 = vmatprep.subr.mxu0 0.0
    %210 = vmatpush1.msra.mxu0 0.0
    %211 = vmatprep.subr.mxu0 0.0
    %212 = vmatpush1.msra.mxu0 0.0
    %213 = vmatprep.subr.mxu0 0.0
    %214 = vmatpush1.msra.mxu0 0.0
    %215 = vmatprep.subr.mxu0 0.0
    %216 = vmatpush1.msra.mxu0 0.0
    %217 = vmatprep.subr.mxu0 0.0
    %218 = vmatpush1.msra.mxu0 0.0
    %219 = vmatprep.subr.mxu0 0.0
    %220 = vmatpush1.msra.mxu0 0.0
    %221 = vmatprep.subr.mxu0 0.0
    %222 = vmatpush1.msra.mxu0 0.0
    %223 = vmatprep.subr.mxu0 0.0
    %224 = vmatpush1.msra.mxu0 0.0
    %225 = vmatprep.subr.mxu0 0.0
    %226 = vmatpush1.msra.mxu0 0.0
    %227 = vmatprep.subr.mxu0 0.0
    %228 = vmatpush1.msra.mxu0 0.0
    %229 = vmatprep.subr.mxu0 0.0
    %230 = vmatpush1.msra.mxu0 0.0
    %231 = vmatprep.subr.mxu0 0.0
    %232 = vmatpush1.msra.mxu0 0.0
    %233 = vmatprep.subr.mxu0 0.0
    %234 = vmatpush1.msra.mxu0 0.0
    %235 = vmatprep.subr.mxu0 0.0
    %236 = vmatpush1.msra.mxu0 0.0
    %237 = vmatprep.subr.mxu0 0.0
    %238 = vmatpush1.msra.mxu0 0.0
    %239 = vmatprep.subr.mxu0 0.0
    %240 = vmatpush1.msra.mxu0 0.0
    %241 = vmatprep.subr.mxu0 0.0
    %242 = vmatpush1.msra.mxu0 0.0
    %243 = vmatprep.subr.mxu0 0.0
    %244 = vmatpush1.msra.mxu0 0.0
    %245 = vmatprep.subr.mxu0 0.0
    %246 = vmatpush1.msra.mxu0 0.0
    %247 = vmatprep.subr.mxu0 0.0
    %248 = vmatpush1.msra.mxu0 0.0
    %249 = vmatprep.subr.mxu0 0.0
    %250 = vmatpush1.msra.mxu0 0.0
    %251 = vmatprep.subr.mxu0 0.0
    %252 = vmatpush1.msra.mxu0 0.0
    %253 = vmatprep.subr.mxu0 0.0
    %254 = vmatpush1.msra.mxu0 0.0
    %255 = vmatprep.subr.mxu0 0.0
    %256 = vmatpush1.msra.mxu0 0.0
    %257 = vmatprep.subr.mxu0 0.0
    %258 = vmatpush1.msra.mxu0 0.0
    %259 = vmatprep.subr.mxu0 0.0
    %260 = vmatpush1.msra.mxu0 0.0
    %261 = vmatprep.subr.mxu0 0.0
    %262 = vmatpush1.msra.mxu0 0.0
    %263 = vmatprep.subr.mxu0 0.0
    %264 = vmatpush1.msra.mxu0 0.0
    %265 = vmatprep.subr.mxu0 0.0
    %266 = vmatpush1.msra.mxu0 0.0
    %267 = vmatprep.mubr.f32.mxu0 0.0
    %268 = vmatmul.mubr.f32.gmra.mrb[0].mxu0 %v197
    %v269 = vpop.f32.mrb[0].mxu0
    %v270 = vadd.f32 0.0, %v269
    %v271 = vpop.f32.mrb[0].mxu0
    %272 = vdwg.mxu0
    %274 = vrot.lane.b32.xlu0 %v270, 7
    %v275 = vpop.permute.xlu0 %274
    %vm277 = vcmask 76856
    %278 = vst.msk [vmem:[#allocation2] sm:$0xf] %vm277, %v275
    %279 = vset.pattern.permute.xlu0 5
    %280 = vperm.xlu0 %279, %v94
    %v281 = vpop.permute.xlu0 %280
    %vm282 = vcmp.eq.s32.totalorder %v98, %v281
    %v283 = vsel %vm282, 1, 0
    %v284 = vcvt.s32.f32 %v283
    %v285 = vld [vmem:[%s4] sm:$0x7f]
    %vm286 = vcmask 56320
    %v288 = vsel %vm286, %v284, 0
    %vm290 = vcmask 1046528
    %v292 = vsel %vm290, %v285, 0
    %294 = vmatprep.subr.mxu0 0.0
    %295 = vmatpush1.msra.mxu0 %v292
    %296 = vmatprep.subr.mxu0 0.0
    %297 = vmatpush1.msra.mxu0 0.0
    %298 = vmatprep.subr.mxu0 0.0
    %299 = vmatpush1.msra.mxu0 0.0
    %300 = vmatprep.subr.mxu0 0.0
    %301 = vmatpush1.msra.mxu0 0.0
    %302 = vmatprep.subr.mxu0 0.0
    %303 = vmatpush1.msra.mxu0 0.0
    %304 = vmatprep.subr.mxu0 0.0
    %305 = vmatpush1.msra.mxu0 0.0
    %306 = vmatprep.subr.mxu0 0.0
    %307 = vmatpush1.msra.mxu0 0.0
    %308 = vmatprep.subr.mxu0 0.0
    %309 = vmatpush1.msra.mxu0 0.0
    %310 = vmatprep.subr.mxu0 0.0
    %311 = vmatpush1.msra.mxu0 0.0
    %312 = vmatprep.subr.mxu0 0.0
    %313 = vmatpush1.msra.mxu0 0.0
    %314 = vmatprep.subr.mxu0 0.0
    %315 = vmatpush1.msra.mxu0 0.0
    %316 = vmatprep.subr.mxu0 0.0
    %317 = vmatpush1.msra.mxu0 0.0
    %318 = vmatprep.subr.mxu0 0.0
    %319 = vmatpush1.msra.mxu0 0.0
    %320 = vmatprep.subr.mxu0 0.0
    %321 = vmatpush1.msra.mxu0 0.0
    %322 = vmatprep.subr.mxu0 0.0
    %323 = vmatpush1.msra.mxu0 0.0
    %324 = vmatprep.subr.mxu0 0.0
    %325 = vmatpush1.msra.mxu0 0.0
    %326 = vmatprep.subr.mxu0 0.0
    %327 = vmatpush1.msra.mxu0 0.0
    %328 = vmatprep.subr.mxu0 0.0
    %329 = vmatpush1.msra.mxu0 0.0
    %330 = vmatprep.subr.mxu0 0.0
    %331 = vmatpush1.msra.mxu0 0.0
    %332 = vmatprep.subr.mxu0 0.0
    %333 = vmatpush1.msra.mxu0 0.0
    %334 = vmatprep.subr.mxu0 0.0
    %335 = vmatpush1.msra.mxu0 0.0
    %336 = vmatprep.subr.mxu0 0.0
    %337 = vmatpush1.msra.mxu0 0.0
    %338 = vmatprep.subr.mxu0 0.0
    %339 = vmatpush1.msra.mxu0 0.0
    %340 = vmatprep.subr.mxu0 0.0
    %341 = vmatpush1.msra.mxu0 0.0
    %342 = vmatprep.subr.mxu0 0.0
    %343 = vmatpush1.msra.mxu0 0.0
    %344 = vmatprep.subr.mxu0 0.0
    %345 = vmatpush1.msra.mxu0 0.0
    %346 = vmatprep.subr.mxu0 0.0
    %347 = vmatpush1.msra.mxu0 0.0
    %348 = vmatprep.subr.mxu0 0.0
    %349 = vmatpush1.msra.mxu0 0.0
    %350 = vmatprep.subr.mxu0 0.0
    %351 = vmatpush1.msra.mxu0 0.0
    %352 = vmatprep.subr.mxu0 0.0
    %353 = vmatpush1.msra.mxu0 0.0
    %354 = vmatprep.subr.mxu0 0.0
    %355 = vmatpush1.msra.mxu0 0.0
    %356 = vmatprep.subr.mxu0 0.0
    %357 = vmatpush1.msra.mxu0 0.0
    %358 = vmatprep.mubr.f32.mxu0 0.0
    %359 = vmatmul.mubr.f32.gmra.mrb[0].mxu0 %v288
    %v360 = vpop.f32.mrb[0].mxu0
    %v361 = vadd.f32 0.0, %v360
    %v362 = vpop.f32.mrb[0].mxu0
    %363 = vdwg.mxu0
    %365 = vrot.lane.b32.xlu0 %v361, 10
    %v366 = vpop.permute.xlu0 %365
    %vm368 = vcmask 101456
    %369 = vst.msk [vmem:[#allocation2] sm:$0xf] %vm368, %v366
    %370 = vrot.lane.b32.xlu0 %v96, 7
    %v371 = vpop.permute.xlu0 %370
    %vm373 = vcmask 126056
    %374 = vst.msk [vmem:[#allocation2] sm:$0xf] %vm373, %v371
    %v375 = vld [vmem:[#allocation2] sm:$0xf]
    %v376 = vld [vmem:[%s5] sm:$0xff]
    %v377 = vld [vmem:[%s5 + $0x8] sm:$0xff]
    %vm378 = vcmask 130048
    %v380 = vsel %vm378, %v375, 0
    %382 = vmatprep.subr.mxu0 0.0
    %383 = vmatpush1.msra.mxu0 %v376
    %384 = vmatprep.subr.mxu0 0.0
    %385 = vmatpush1.msra.mxu0 %v377
    %386 = vmatprep.subr.mxu0 0.0
    %387 = vmatpush1.msra.mxu0 0.0
    %388 = vmatprep.subr.mxu0 0.0
    %389 = vmatpush1.msra.mxu0 0.0
    %390 = vmatprep.subr.mxu0 0.0
    %391 = vmatpush1.msra.mxu0 0.0
    %392 = vmatprep.subr.mxu0 0.0
    %393 = vmatpush1.msra.mxu0 0.0
    %394 = vmatprep.subr.mxu0 0.0
    %395 = vmatpush1.msra.mxu0 0.0
    %396 = vmatprep.subr.mxu0 0.0
    %397 = vmatpush1.msra.mxu0 0.0
    %398 = vmatprep.subr.mxu0 0.0
    %399 = vmatpush1.msra.mxu0 0.0
    %400 = vmatprep.subr.mxu0 0.0
    %401 = vmatpush1.msra.mxu0 0.0
    %402 = vmatprep.subr.mxu0 0.0
    %403 = vmatpush1.msra.mxu0 0.0
    %404 = vmatprep.subr.mxu0 0.0
    %405 = vmatpush1.msra.mxu0 0.0
    %406 = vmatprep.subr.mxu0 0.0
    %407 = vmatpush1.msra.mxu0 0.0
    %408 = vmatprep.subr.mxu0 0.0
    %409 = vmatpush1.msra.mxu0 0.0
    %410 = vmatprep.subr.mxu0 0.0
    %411 = vmatpush1.msra.mxu0 0.0
    %412 = vmatprep.subr.mxu0 0.0
    %413 = vmatpush1.msra.mxu0 0.0
    %414 = vmatprep.subr.mxu0 0.0
    %415 = vmatpush1.msra.mxu0 0.0
    %416 = vmatprep.subr.mxu0 0.0
    %417 = vmatpush1.msra.mxu0 0.0
    %418 = vmatprep.subr.mxu0 0.0
    %419 = vmatpush1.msra.mxu0 0.0
    %420 = vmatprep.subr.mxu0 0.0
    %421 = vmatpush1.msra.mxu0 0.0
    %422 = vmatprep.subr.mxu0 0.0
    %423 = vmatpush1.msra.mxu0 0.0
    %424 = vmatprep.subr.mxu0 0.0
    %425 = vmatpush1.msra.mxu0 0.0
    %426 = vmatprep.subr.mxu0 0.0
    %427 = vmatpush1.msra.mxu0 0.0
    %428 = vmatprep.subr.mxu0 0.0
    %429 = vmatpush1.msra.mxu0 0.0
    %430 = vmatprep.subr.mxu0 0.0
    %431 = vmatpush1.msra.mxu0 0.0
    %432 = vmatprep.subr.mxu0 0.0
    %433 = vmatpush1.msra.mxu0 0.0
    %434 = vmatprep.subr.mxu0 0.0
    %435 = vmatpush1.msra.mxu0 0.0
    %436 = vmatprep.subr.mxu0 0.0
    %437 = vmatpush1.msra.mxu0 0.0
    %438 = vmatprep.subr.mxu0 0.0
    %439 = vmatpush1.msra.mxu0 0.0
    %440 = vmatprep.subr.mxu0 0.0
    %441 = vmatpush1.msra.mxu0 0.0
    %442 = vmatprep.subr.mxu0 0.0
    %443 = vmatpush1.msra.mxu0 0.0
    %444 = vmatprep.subr.mxu0 0.0
    %445 = vmatpush1.msra.mxu0 0.0
    %446 = vmatprep.mubr.f32.mxu0 0.0
    %447 = vmatmul.mubr.f32.gmra.mrb[0].mxu0 %v380
    %v448 = vpop.f32.mrb[0].mxu0
    %v449 = vadd.f32 0.0, %v448
    %v450 = vpop.f32.mrb[0].mxu0
    %451 = vdwg.mxu0
    %vm452 = vcmask 519168
    %v453 = vsel %vm452, %v449, 0.0
    %v454 = vrot.slane %v453, 4
    %v455 = vadd.f32 %v453, %v454
    %v456 = vrot.slane %v455, 2
    %v457 = vadd.f32 %v455, %v456
    %v458 = vrot.slane %v457, 1
    %v459 = vadd.f32 %v457, %v458
    %v460 = vmul.f32 %v459, 0.25
    %v461 = vmul.f32 %v449, %v449
    %v462 = vsel %vm452, %v461, 0.0
    %v463 = vrot.slane %v462, 4
    %v464 = vadd.f32 %v462, %v463
    %v465 = vrot.slane %v464, 2
    %v466 = vadd.f32 %v464, %v465
    %v467 = vrot.slane %v466, 1
    %v468 = vadd.f32 %v466, %v467
    %v469 = vmul.f32 %v468, 0.25
    %v470 = vmul.f32 %v460, %v460
    %v471 = vsub.f32 %v469, %v470
    %v472 = vld [vmem:[%s6] sm:$0x1]
    %v473 = vadd.f32 %v471, 1e-05
    %v474 = vrsqrt.pop %v473
    %v475 = vmul.f32 %v472, %v474
    %v476 = vld [vmem:[%s7] sm:$0x1]
    %v477 = vmul.f32 %v460, %v475
    %v478 = vsub.f32 %v476, %v477
    %v480 = vlaneseq
    %v481 = vshrl.u32 %v480, 7
    %v482 = vsub.s32 0, %v481
    %v483 = vrot.slane %v475, %v482
    %v485 = vmul.f32 %v449, %v483
    %v487 = vlaneseq
    %v488 = vshrl.u32 %v487, 7
    %v489 = vsub.s32 0, %v488
    %v490 = vrot.slane %v478, %v489
    %v492 = vadd.f32 %v485, %v490
    %vm493 = vcmp.ge.f32.partialorder %v492, 0.0
    %v494 = vmul.f32 %v492, 0.2
    %v495 = vsel %vm493, %v492, %v494
    %v496 = vld [vmem:[#allocation7] sm:$0xff]
    %v497 = vld [vmem:[#allocation7 + $0x8] sm:$0xff]
    %v498 = vld [vmem:[#allocation7 + $0x10] sm:$0xff]
    %v499 = vld [vmem:[#allocation7 + $0x18] sm:$0xff]
    %v500 = vld [vmem:[#allocation7 + $0x20] sm:$0xff]
    %v501 = vld [vmem:[#allocation7 + $0x28] sm:$0xff]
    %v502 = vld [vmem:[#allocation7 + $0x30] sm:$0xff]
    %v503 = vld [vmem:[#allocation7 + $0x38] sm:$0xff]
    %v504 = vld [vmem:[#allocation7 + $0x40] sm:$0xff]
    %v505 = vld [vmem:[#allocation7 + $0x48] sm:$0xff]
    %v506 = vld [vmem:[#allocation7 + $0x50] sm:$0xff]
    %v507 = vld [vmem:[#allocation7 + $0x58] sm:$0xff]
    %v508 = vld [vmem:[#allocation7 + $0x60] sm:$0xff]
    %v509 = vld [vmem:[#allocation7 + $0x68] sm:$0xff]
    %v510 = vld [vmem:[#allocation7 + $0x70] sm:$0xff]
    %v511 = vld [vmem:[#allocation7 + $0x78] sm:$0xff]
    %v512 = vld [vmem:[%s1] sm:$0xf]
    %v513 = vld [vmem:[#allocation7 + $0x80] sm:$0xff]
    %v514 = vld [vmem:[#allocation7 + $0x88] sm:$0xff]
    %v515 = vld [vmem:[#allocation7 + $0x90] sm:$0xff]
    %v516 = vld [vmem:[#allocation7 + $0x98] sm:$0xff]
    %v517 = vld [vmem:[#allocation7 + $0xa0] sm:$0xff]
    %v518 = vld [vmem:[#allocation7 + $0xa8] sm:$0xff]
    %v519 = vld [vmem:[#allocation7 + $0xb0] sm:$0xff]
    %v520 = vld [vmem:[#allocation7 + $0xb8] sm:$0xff]
    %v521 = vld [vmem:[#allocation7 + $0xc0] sm:$0xff]
    %v522 = vld [vmem:[#allocation7 + $0xc8] sm:$0xff]
    %v523 = vld [vmem:[#allocation7 + $0xd0] sm:$0xff]
    %v524 = vld [vmem:[#allocation7 + $0xd8] sm:$0xff]
    %v525 = vld [vmem:[#allocation7 + $0xe0] sm:$0xff]
    %v526 = vld [vmem:[#allocation7 + $0xe8] sm:$0xff]
    %v527 = vld [vmem:[#allocation7 + $0xf0] sm:$0xff]
    %v528 = vld [vmem:[#allocation7 + $0xf8] sm:$0xff]
    %vm529 = vcmask 523264
    %v531 = vsel %vm529, %v512, 0
    %533 = vmatprep.subr.mxu0 %v514
    %534 = vmatpush1.msra.mxu0 %v513
    %535 = vmatprep.subr.mxu0 %v516
    %536 = vmatpush1.msra.mxu0 %v515
    %537 = vmatprep.subr.mxu0 %v518
    %538 = vmatpush1.msra.mxu0 %v517
    %539 = vmatprep.subr.mxu0 %v520
    %540 = vmatpush1.msra.mxu0 %v519
    %541 = vmatprep.subr.mxu0 %v522
    %542 = vmatpush1.msra.mxu0 %v521
    %543 = vmatprep.subr.mxu0 %v524
    %544 = vmatpush1.msra.mxu0 %v523
    %545 = vmatprep.subr.mxu0 %v526
    %546 = vmatpush1.msra.mxu0 %v525
    %547 = vmatprep.subr.mxu0 %v528
    %548 = vmatpush1.msra.mxu0 %v527
    %549 = vmatprep.subr.mxu0 0.0
    %550 = vmatpush1.msra.mxu0 0.0
    %551 = vmatprep.subr.mxu0 0.0
    %552 = vmatpush1.msra.mxu0 0.0
    %553 = vmatprep.subr.mxu0 0.0
    %554 = vmatpush1.msra.mxu0 0.0
    %555 = vmatprep.subr.mxu0 0.0
    %556 = vmatpush1.msra.mxu0 0.0
    %557 = vmatprep.subr.mxu0 0.0
    %558 = vmatpush1.msra.mxu0 0.0
    %559 = vmatprep.subr.mxu0 0.0
    %560 = vmatpush1.msra.mxu0 0.0
    %561 = vmatprep.subr.mxu0 0.0
    %562 = vmatpush1.msra.mxu0 0.0
    %563 = vmatprep.subr.mxu0 0.0
    %564 = vmatpush1.msra.mxu0 0.0
    %565 = vmatprep.subr.mxu0 0.0
    %566 = vmatpush1.msra.mxu0 0.0
    %567 = vmatprep.subr.mxu0 0.0
    %568 = vmatpush1.msra.mxu0 0.0
    %569 = vmatprep.subr.mxu0 0.0
    %570 = vmatpush1.msra.mxu0 0.0
    %571 = vmatprep.subr.mxu0 0.0
    %572 = vmatpush1.msra.mxu0 0.0
    %573 = vmatprep.subr.mxu0 0.0
    %574 = vmatpush1.msra.mxu0 0.0
    %575 = vmatprep.subr.mxu0 0.0
    %576 = vmatpush1.msra.mxu0 0.0
    %577 = vmatprep.subr.mxu0 0.0
    %578 = vmatpush1.msra.mxu0 0.0
    %579 = vmatprep.subr.mxu0 0.0
    %580 = vmatpush1.msra.mxu0 0.0
    %581 = vmatprep.subr.mxu0 0.0
    %582 = vmatpush1.msra.mxu0 0.0
    %583 = vmatprep.subr.mxu0 0.0
    %584 = vmatpush1.msra.mxu0 0.0
    %585 = vmatprep.subr.mxu0 0.0
    %586 = vmatpush1.msra.mxu0 0.0
    %587 = vmatprep.subr.mxu0 0.0
    %588 = vmatpush1.msra.mxu0 0.0
    %589 = vmatprep.subr.mxu0 0.0
    %590 = vmatpush1.msra.mxu0 0.0
    %591 = vmatprep.subr.mxu0 0.0
    %592 = vmatpush1.msra.mxu0 0.0
    %593 = vmatprep.subr.mxu0 0.0
    %594 = vmatpush1.msra.mxu0 0.0
    %595 = vmatprep.subr.mxu0 0.0
    %596 = vmatpush1.msra.mxu0 0.0
    %597 = vmatprep.mubr.f32.mxu0 0.0
    %598 = vmatmul.mubr.f32.gmra.mrb[0].mxu0 %v531
    %v599 = vpop.f32.mrb[0].mxu0
    %v600 = vadd.f32 0.0, %v599
    %v601 = vpop.f32.mrb[0].mxu0
    %v602 = vadd.f32 0.0, %v601
    %603 = vdwg.mxu0
    %v605 = vsel %vm529, %v495, 0
    %607 = vmatprep.subr.mxu0 %v497
    %608 = vmatpush1.msra.mxu0 %v496
    %609 = vmatprep.subr.mxu0 %v499
    %610 = vmatpush1.msra.mxu0 %v498
    %611 = vmatprep.subr.mxu0 %v501
    %612 = vmatpush1.msra.mxu0 %v500
    %613 = vmatprep.subr.mxu0 %v503
    %614 = vmatpush1.msra.mxu0 %v502
    %615 = vmatprep.subr.mxu0 %v505
    %616 = vmatpush1.msra.mxu0 %v504
    %617 = vmatprep.subr.mxu0 %v507
    %618 = vmatpush1.msra.mxu0 %v506
    %619 = vmatprep.subr.mxu0 %v509
    %620 = vmatpush1.msra.mxu0 %v508
    %621 = vmatprep.subr.mxu0 %v511
    %622 = vmatpush1.msra.mxu0 %v510
    %623 = vmatprep.subr.mxu0 0.0
    %624 = vmatpush1.msra.mxu0 0.0
    %625 = vmatprep.subr.mxu0 0.0
    %626 = vmatpush1.msra.mxu0 0.0
    %627 = vmatprep.subr.mxu0 0.0
    %628 = vmatpush1.msra.mxu0 0.0
    %629 = vmatprep.subr.mxu0 0.0
    %630 = vmatpush1.msra.mxu0 0.0
    %631 = vmatprep.subr.mxu0 0.0
    %632 = vmatpush1.msra.mxu0 0.0
    %633 = vmatprep.subr.mxu0 0.0
    %634 = vmatpush1.msra.mxu0 0.0
    %635 = vmatprep.subr.mxu0 0.0
    %636 = vmatpush1.msra.mxu0 0.0
    %637 = vmatprep.subr.mxu0 0.0
    %638 = vmatpush1.msra.mxu0 0.0
    %639 = vmatprep.subr.mxu0 0.0
    %640 = vmatpush1.msra.mxu0 0.0
    %641 = vmatprep.subr.mxu0 0.0
    %642 = vmatpush1.msra.mxu0 0.0
    %643 = vmatprep.subr.mxu0 0.0
    %644 = vmatpush1.msra.mxu0 0.0
    %645 = vmatprep.subr.mxu0 0.0
    %646 = vmatpush1.msra.mxu0 0.0
    %647 = vmatprep.subr.mxu0 0.0
    %648 = vmatpush1.msra.mxu0 0.0
    %649 = vmatprep.subr.mxu0 0.0
    %650 = vmatpush1.msra.mxu0 0.0
    %651 = vmatprep.subr.mxu0 0.0
    %652 = vmatpush1.msra.mxu0 0.0
    %653 = vmatprep.subr.mxu0 0.0
    %654 = vmatpush1.msra.mxu0 0.0
    %655 = vmatprep.subr.mxu0 0.0
    %656 = vmatpush1.msra.mxu0 0.0
    %657 = vmatprep.subr.mxu0 0.0
    %658 = vmatpush1.msra.mxu0 0.0
    %659 = vmatprep.subr.mxu0 0.0
    %660 = vmatpush1.msra.mxu0 0.0
    %661 = vmatprep.subr.mxu0 0.0
    %662 = vmatpush1.msra.mxu0 0.0
    %663 = vmatprep.subr.mxu0 0.0
    %664 = vmatpush1.msra.mxu0 0.0
    %665 = vmatprep.subr.mxu0 0.0
    %666 = vmatpush1.msra.mxu0 0.0
    %667 = vmatprep.subr.mxu0 0.0
    %668 = vmatpush1.msra.mxu0 0.0
    %669 = vmatprep.subr.mxu0 0.0
    %670 = vmatpush1.msra.mxu0 0.0
    %671 = vmatprep.mubr.f32.mxu0 0.0
    %672 = vmatmul.mubr.f32.gmra.mrb[0].mxu0 %v605
    %v673 = vpop.f32.mrb[0].mxu0
    %v674 = vadd.f32 %v600, %v673
    %v675 = vpop.f32.mrb[0].mxu0
    %v676 = vadd.f32 %v602, %v675
    %677 = vdwg.mxu0
    %vm678 = vcmask 1043456
    %v679 = vsel %vm678, %v674, 0.0
    %v680 = vrot.slane %v679, 4
    %v681 = vadd.f32 %v679, %v680
    %v682 = vrot.slane %v681, 2
    %v683 = vadd.f32 %v681, %v682
    %v684 = vrot.slane %v683, 1
    %v685 = vadd.f32 %v683, %v684
    %v686 = vsel %vm678, %v676, 0.0
    %v687 = vrot.slane %v686, 4
    %v688 = vadd.f32 %v686, %v687
    %v689 = vrot.slane %v688, 2
    %v690 = vadd.f32 %v688, %v689
    %v691 = vrot.slane %v690, 1
    %v692 = vadd.f32 %v690, %v691
    %v693 = vmul.f32 %v685, 0.25
    %v694 = vmul.f32 %v692, 0.25
    %v695 = vmul.f32 %v674, %v674
    %v696 = vmul.f32 %v676, %v676
    %v697 = vsel %vm678, %v695, 0.0
    %v698 = vrot.slane %v697, 4
    %v699 = vadd.f32 %v697, %v698
    %v700 = vrot.slane %v699, 2
    %v701 = vadd.f32 %v699, %v700
    %v702 = vrot.slane %v701, 1
    %v703 = vadd.f32 %v701, %v702
    %v704 = vsel %vm678, %v696, 0.0
    %v705 = vrot.slane %v704, 4
    %v706 = vadd.f32 %v704, %v705
    %v707 = vrot.slane %v706, 2
    %v708 = vadd.f32 %v706, %v707
    %v709 = vrot.slane %v708, 1
    %v710 = vadd.f32 %v708, %v709
    %v711 = vmul.f32 %v703, 0.25
    %v712 = vmul.f32 %v710, 0.25
    %v713 = vmul.f32 %v693, %v693
    %v714 = vmul.f32 %v694, %v694
    %v715 = vsub.f32 %v711, %v713
    %v716 = vsub.f32 %v712, %v714
    %v717 = vld [vmem:[%s9] sm:$0x3]
    %v718 = vadd.f32 %v715, 1e-05
    %v719 = vadd.f32 %v716, 1e-05
    %v720 = vrsqrt.pop %v718
    %v721 = vrsqrt.pop %v719
    %v724 = vcombine.low %v720, %v721
    %v726 = vunpack.c.l.s4 1966171168
    %v727 = vunpack.c.0.s8 %v726
    %v728 = vlaneseq
    %v729 = vshrl.u32 %v728, 7
    %v730 = vsub.s32 %v727, %v729
    %v731 = vrot.slane %v724, %v730
    %v733 = vunpack.c.l.s4 1966171168
    %v734 = vunpack.c.0.s8 %v733
    %v735 = vlaneseq
    %v736 = vshrl.u32 %v735, 7
    %v737 = vsub.s32 %v734, %v736
    %v738 = vrot.slane %v731, %v737
    %v740 = vmul.f32 %v717, %v738
    %v741 = vld [vmem:[%s10] sm:$0x3]
    %v743 = vlaneseq
    %v744 = vshrl.u32 %v743, 7
    %v745 = vsub.s32 0, %v744
    %v746 = vrot.slane %v740, %v745
    %v747 = vlaneseq
    %v748 = vshrl.u32 %v747, 7
    %v749 = vsub.s32 1, %v748
    %v750 = vrot.slane %v740, %v749
    %v753 = vmul.f32 %v693, %v746
    %v754 = vmul.f32 %v694, %v750
    %v757 = vcombine.low %v753, %v754
    %v759 = vunpack.c.l.s4 1966171168
    %v760 = vunpack.c.0.s8 %v759
    %v761 = vlaneseq
    %v762 = vshrl.u32 %v761, 7
    %v763 = vsub.s32 %v760, %v762
    %v764 = vrot.slane %v757, %v763
    %v766 = vunpack.c.l.s4 1966171168
    %v767 = vunpack.c.0.s8 %v766
    %v768 = vlaneseq
    %v769 = vshrl.u32 %v768, 7
    %v770 = vsub.s32 %v767, %v769
    %v771 = vrot.slane %v764, %v770
    %v773 = vsub.f32 %v741, %v771
    %v774 = vmul.f32 %v674, %v746
    %v775 = vmul.f32 %v676, %v750
    %v777 = vlaneseq
    %v778 = vshrl.u32 %v777, 7
    %v779 = vsub.s32 0, %v778
    %v780 = vrot.slane %v773, %v779
    %v781 = vlaneseq
    %v782 = vshrl.u32 %v781, 7
    %v783 = vsub.s32 1, %v782
    %v784 = vrot.slane %v773, %v783
    %v787 = vadd.f32 %v774, %v780
    %v788 = vadd.f32 %v775, %v784
    %vm789 = vcmp.ge.f32.partialorder %v787, 0.0
    %vm790 = vcmp.ge.f32.partialorder %v788, 0.0
    %v791 = vmul.f32 %v787, 0.2
    %v792 = vmul.f32 %v788, 0.2
    %v793 = vsel %vm789, %v787, %v791
    %v794 = vsel %vm790, %v788, %v792
    %v795 = vld [vmem:[%s11] sm:$0xff]
    %v796 = vld [vmem:[%s11 + $0x8] sm:$0xff]
    %v797 = vld [vmem:[%s11 + $0x10] sm:$0xff]
    %v798 = vld [vmem:[%s11 + $0x18] sm:$0xff]
    %v799 = vld [vmem:[%s11 + $0x20] sm:$0xff]
    %v800 = vld [vmem:[%s11 + $0x28] sm:$0xff]
    %v801 = vld [vmem:[%s11 + $0x30] sm:$0xff]
    %v802 = vld [vmem:[%s11 + $0x38] sm:$0xff]
    %v803 = vld [vmem:[%s11 + $0x40] sm:$0xff]
    %v804 = vld [vmem:[%s11 + $0x48] sm:$0xff]
    %v805 = vld [vmem:[%s11 + $0x50] sm:$0xff]
    %v806 = vld [vmem:[%s11 + $0x58] sm:$0xff]
    %v807 = vld [vmem:[%s11 + $0x60] sm:$0xff]
    %v808 = vld [vmem:[%s11 + $0x68] sm:$0xff]
    %v809 = vld [vmem:[%s11 + $0x70] sm:$0xff]
    %v810 = vld [vmem:[%s11 + $0x78] sm:$0xff]
    %v811 = vld [vmem:[%s11 + $0x80] sm:$0xff]
    %v812 = vld [vmem:[%s11 + $0x88] sm:$0xff]
    %v813 = vld [vmem:[%s11 + $0x90] sm:$0xff]
    %v814 = vld [vmem:[%s11 + $0x98] sm:$0xff]
    %v815 = vld [vmem:[%s11 + $0xa0] sm:$0xff]
    %v816 = vld [vmem:[%s11 + $0xa8] sm:$0xff]
    %v817 = vld [vmem:[%s11 + $0xb0] sm:$0xff]
    %v818 = vld [vmem:[%s11 + $0xb8] sm:$0xff]
    %v819 = vld [vmem:[%s11 + $0xc0] sm:$0xff]
    %v820 = vld [vmem:[%s11 + $0xc8] sm:$0xff]
    %v821 = vld [vmem:[%s11 + $0xd0] sm:$0xff]
    %v822 = vld [vmem:[%s11 + $0xd8] sm:$0xff]
    %v823 = vld [vmem:[%s11 + $0xe0] sm:$0xff]
    %v824 = vld [vmem:[%s11 + $0xe8] sm:$0xff]
    %v825 = vld [vmem:[%s11 + $0xf0] sm:$0xff]
    %v826 = vld [vmem:[%s11 + $0xf8] sm:$0xff]
    %827 = vmatprep.subr.mxu0 0.0
    %828 = vmatpush1.msra.mxu0 %v795
    %829 = vmatprep.subr.mxu0 0.0
    %830 = vmatpush1.msra.mxu0 %v796
    %831 = vmatprep.subr.mxu0 0.0
    %832 = vmatpush1.msra.mxu0 %v797
    %833 = vmatprep.subr.mxu0 0.0
    %834 = vmatpush1.msra.mxu0 %v798
    %835 = vmatprep.subr.mxu0 0.0
    %836 = vmatpush1.msra.mxu0 %v799
    %837 = vmatprep.subr.mxu0 0.0
    %838 = vmatpush1.msra.mxu0 %v800
    %839 = vmatprep.subr.mxu0 0.0
    %840 = vmatpush1.msra.mxu0 %v801
    %841 = vmatprep.subr.mxu0 0.0
    %842 = vmatpush1.msra.mxu0 %v802
    %843 = vmatprep.subr.mxu0 0.0
    %844 = vmatpush1.msra.mxu0 %v803
    %845 = vmatprep.subr.mxu0 0.0
    %846 = vmatpush1.msra.mxu0 %v804
    %847 = vmatprep.subr.mxu0 0.0
    %848 = vmatpush1.msra.mxu0 %v805
    %849 = vmatprep.subr.mxu0 0.0
    %850 = vmatpush1.msra.mxu0 %v806
    %851 = vmatprep.subr.mxu0 0.0
    %852 = vmatpush1.msra.mxu0 %v807
    %853 = vmatprep.subr.mxu0 0.0
    %854 = vmatpush1.msra.mxu0 %v808
    %855 = vmatprep.subr.mxu0 0.0
    %856 = vmatpush1.msra.mxu0 %v809
    %857 = vmatprep.subr.mxu0 0.0
    %858 = vmatpush1.msra.mxu0 %v810
    %859 = vmatprep.subr.mxu0 0.0
    %860 = vmatpush1.msra.mxu0 %v811
    %861 = vmatprep.subr.mxu0 0.0
    %862 = vmatpush1.msra.mxu0 %v812
    %863 = vmatprep.subr.mxu0 0.0
    %864 = vmatpush1.msra.mxu0 %v813
    %865 = vmatprep.subr.mxu0 0.0
    %866 = vmatpush1.msra.mxu0 %v814
    %867 = vmatprep.subr.mxu0 0.0
    %868 = vmatpush1.msra.mxu0 %v815
    %869 = vmatprep.subr.mxu0 0.0
    %870 = vmatpush1.msra.mxu0 %v816
    %871 = vmatprep.subr.mxu0 0.0
    %872 = vmatpush1.msra.mxu0 %v817
    %873 = vmatprep.subr.mxu0 0.0
    %874 = vmatpush1.msra.mxu0 %v818
    %875 = vmatprep.subr.mxu0 0.0
    %876 = vmatpush1.msra.mxu0 %v819
    %877 = vmatprep.subr.mxu0 0.0
    %878 = vmatpush1.msra.mxu0 %v820
    %879 = vmatprep.subr.mxu0 0.0
    %880 = vmatpush1.msra.mxu0 %v821
    %881 = vmatprep.subr.mxu0 0.0
    %882 = vmatpush1.msra.mxu0 %v822
    %883 = vmatprep.subr.mxu0 0.0
    %884 = vmatpush1.msra.mxu0 %v823
    %885 = vmatprep.subr.mxu0 0.0
    %886 = vmatpush1.msra.mxu0 %v824
    %887 = vmatprep.subr.mxu0 0.0
    %888 = vmatpush1.msra.mxu0 %v825
    %889 = vmatprep.subr.mxu0 0.0
    %890 = vmatpush1.msra.mxu0 %v826
    %891 = vmatprep.mubr.f32.mxu0 %v794
    %892 = vmatmul.mubr.f32.gmra.mrb[0].mxu0 %v793
    %v893 = vpop.f32.mrb[0].mxu0
    %v894 = vadd.f32 0.0, %v893
    %v895 = vpop.f32.mrb[0].mxu0
    %896 = vdwg.mxu0
    %897 = vst [vmem:[#allocation3] sm:$0xf] %v894
    %s898 = scalar_lea.vmem %s11, 256
    %v899 = vld [vmem:[%s898] sm:$0xff]
    %v900 = vld [vmem:[%s898 + $0x8] sm:$0xff]
    %v901 = vld [vmem:[%s898 + $0x10] sm:$0xff]
    %v902 = vld [vmem:[%s898 + $0x18] sm:$0xff]
    %v903 = vld [vmem:[%s898 + $0x20] sm:$0xff]
    %v904 = vld [vmem:[%s898 + $0x28] sm:$0xff]
    %v905 = vld [vmem:[%s898 + $0x30] sm:$0xff]
    %v906 = vld [vmem:[%s898 + $0x38] sm:$0xff]
    %v907 = vld [vmem:[%s898 + $0x40] sm:$0xff]
    %v908 = vld [vmem:[%s898 + $0x48] sm:$0xff]
    %v909 = vld [vmem:[%s898 + $0x50] sm:$0xff]
    %v910 = vld [vmem:[%s898 + $0x58] sm:$0xff]
    %v911 = vld [vmem:[%s898 + $0x60] sm:$0xff]
    %v912 = vld [vmem:[%s898 + $0x68] sm:$0xff]
    %v913 = vld [vmem:[%s898 + $0x70] sm:$0xff]
    %v914 = vld [vmem:[%s898 + $0x78] sm:$0xff]
    %v915 = vld [vmem:[%s898 + $0x80] sm:$0xff]
    %v916 = vld [vmem:[%s898 + $0x88] sm:$0xff]
    %v917 = vld [vmem:[%s898 + $0x90] sm:$0xff]
    %v918 = vld [vmem:[%s898 + $0x98] sm:$0xff]
    %v919 = vld [vmem:[%s898 + $0xa0] sm:$0xff]
    %v920 = vld [vmem:[%s898 + $0xa8] sm:$0xff]
    %v921 = vld [vmem:[%s898 + $0xb0] sm:$0xff]
    %v922 = vld [vmem:[%s898 + $0xb8] sm:$0xff]
    %v923 = vld [vmem:[%s898 + $0xc0] sm:$0xff]
    %v924 = vld [vmem:[%s898 + $0xc8] sm:$0xff]
    %v925 = vld [vmem:[%s898 + $0xd0] sm:$0xff]
    %v926 = vld [vmem:[%s898 + $0xd8] sm:$0xff]
    %v927 = vld [vmem:[%s898 + $0xe0] sm:$0xff]
    %v928 = vld [vmem:[%s898 + $0xe8] sm:$0xff]
    %v929 = vld [vmem:[%s898 + $0xf0] sm:$0xff]
    %v930 = vld [vmem:[%s898 + $0xf8] sm:$0xff]
    %931 = vmatprep.subr.mxu0 0.0
    %932 = vmatpush1.msra.mxu0 %v899
    %933 = vmatprep.subr.mxu0 0.0
    %934 = vmatpush1.msra.mxu0 %v900
    %935 = vmatprep.subr.mxu0 0.0
    %936 = vmatpush1.msra.mxu0 %v901
    %937 = vmatprep.subr.mxu0 0.0
    %938 = vmatpush1.msra.mxu0 %v902
    %939 = vmatprep.subr.mxu0 0.0
    %940 = vmatpush1.msra.mxu0 %v903
    %941 = vmatprep.subr.mxu0 0.0
    %942 = vmatpush1.msra.mxu0 %v904
    %943 = vmatprep.subr.mxu0 0.0
    %944 = vmatpush1.msra.mxu0 %v905
    %945 = vmatprep.subr.mxu0 0.0
    %946 = vmatpush1.msra.mxu0 %v906
    %947 = vmatprep.subr.mxu0 0.0
    %948 = vmatpush1.msra.mxu0 %v907
    %949 = vmatprep.subr.mxu0 0.0
    %950 = vmatpush1.msra.mxu0 %v908
    %951 = vmatprep.subr.mxu0 0.0
    %952 = vmatpush1.msra.mxu0 %v909
    %953 = vmatprep.subr.mxu0 0.0
    %954 = vmatpush1.msra.mxu0 %v910
    %955 = vmatprep.subr.mxu0 0.0
    %956 = vmatpush1.msra.mxu0 %v911
    %957 = vmatprep.subr.mxu0 0.0
    %958 = vmatpush1.msra.mxu0 %v912
    %959 = vmatprep.subr.mxu0 0.0
    %960 = vmatpush1.msra.mxu0 %v913
    %961 = vmatprep.subr.mxu0 0.0
    %962 = vmatpush1.msra.mxu0 %v914
    %963 = vmatprep.subr.mxu0 0.0
    %964 = vmatpush1.msra.mxu0 %v915
    %965 = vmatprep.subr.mxu0 0.0
    %966 = vmatpush1.msra.mxu0 %v916
    %967 = vmatprep.subr.mxu0 0.0
    %968 = vmatpush1.msra.mxu0 %v917
    %969 = vmatprep.subr.mxu0 0.0
    %970 = vmatpush1.msra.mxu0 %v918
    %971 = vmatprep.subr.mxu0 0.0
    %972 = vmatpush1.msra.mxu0 %v919
    %973 = vmatprep.subr.mxu0 0.0
    %974 = vmatpush1.msra.mxu0 %v920
    %975 = vmatprep.subr.mxu0 0.0
    %976 = vmatpush1.msra.mxu0 %v921
    %977 = vmatprep.subr.mxu0 0.0
    %978 = vmatpush1.msra.mxu0 %v922
    %979 = vmatprep.subr.mxu0 0.0
    %980 = vmatpush1.msra.mxu0 %v923
    %981 = vmatprep.subr.mxu0 0.0
    %982 = vmatpush1.msra.mxu0 %v924
    %983 = vmatprep.subr.mxu0 0.0
    %984 = vmatpush1.msra.mxu0 %v925
    %985 = vmatprep.subr.mxu0 0.0
    %986 = vmatpush1.msra.mxu0 %v926
    %987 = vmatprep.subr.mxu0 0.0
    %988 = vmatpush1.msra.mxu0 %v927
    %989 = vmatprep.subr.mxu0 0.0
    %990 = vmatpush1.msra.mxu0 %v928
    %991 = vmatprep.subr.mxu0 0.0
    %992 = vmatpush1.msra.mxu0 %v929
    %993 = vmatprep.subr.mxu0 0.0
    %994 = vmatpush1.msra.mxu0 %v930
    %995 = vmatprep.mubr.f32.mxu0 %v794
    %996 = vmatmul.mubr.f32.gmra.mrb[0].mxu0 %v793
    %v997 = vpop.f32.mrb[0].mxu0
    %v998 = vadd.f32 0.0, %v997
    %v999 = vpop.f32.mrb[0].mxu0
    %1000 = vdwg.mxu0
    %1001 = vst [vmem:[#allocation3 + $0x4] sm:$0xf] %v998
    %s1002 = scalar_lea.vmem %s11, 512
    %v1003 = vld [vmem:[%s1002] sm:$0xff]
    %v1004 = vld [vmem:[%s1002 + $0x8] sm:$0xff]
    %v1005 = vld [vmem:[%s1002 + $0x10] sm:$0xff]
    %v1006 = vld [vmem:[%s1002 + $0x18] sm:$0xff]
    %v1007 = vld [vmem:[%s1002 + $0x20] sm:$0xff]
    %v1008 = vld [vmem:[%s1002 + $0x28] sm:$0xff]
    %v1009 = vld [vmem:[%s1002 + $0x30] sm:$0xff]
    %v1010 = vld [vmem:[%s1002 + $0x38] sm:$0xff]
    %v1011 = vld [vmem:[%s1002 + $0x40] sm:$0xff]
    %v1012 = vld [vmem:[%s1002 + $0x48] sm:$0xff]
    %v1013 = vld [vmem:[%s1002 + $0x50] sm:$0xff]
    %v1014 = vld [vmem:[%s1002 + $0x58] sm:$0xff]
    %v1015 = vld [vmem:[%s1002 + $0x60] sm:$0xff]
    %v1016 = vld [vmem:[%s1002 + $0x68] sm:$0xff]
    %v1017 = vld [vmem:[%s1002 + $0x70] sm:$0xff]
    %v1018 = vld [vmem:[%s1002 + $0x78] sm:$0xff]
    %v1019 = vld [vmem:[%s1002 + $0x80] sm:$0xff]
    %v1020 = vld [vmem:[%s1002 + $0x88] sm:$0xff]
    %v1021 = vld [vmem:[%s1002 + $0x90] sm:$0xff]
    %v1022 = vld [vmem:[%s1002 + $0x98] sm:$0xff]
    %v1023 = vld [vmem:[%s1002 + $0xa0] sm:$0xff]
    %v1024 = vld [vmem:[%s1002 + $0xa8] sm:$0xff]
    %v1025 = vld [vmem:[%s1002 + $0xb0] sm:$0xff]
    %v1026 = vld [vmem:[%s1002 + $0xb8] sm:$0xff]
    %v1027 = vld [vmem:[%s1002 + $0xc0] sm:$0xff]
    %v1028 = vld [vmem:[%s1002 + $0xc8] sm:$0xff]
    %v1029 = vld [vmem:[%s1002 + $0xd0] sm:$0xff]
    %v1030 = vld [vmem:[%s1002 + $0xd8] sm:$0xff]
    %v1031 = vld [vmem:[%s1002 + $0xe0] sm:$0xff]
    %v1032 = vld [vmem:[%s1002 + $0xe8] sm:$0xff]
    %v1033 = vld [vmem:[%s1002 + $0xf0] sm:$0xff]
    %v1034 = vld [vmem:[%s1002 + $0xf8] sm:$0xff]
    %1035 = vmatprep.subr.mxu0 0.0
    %1036 = vmatpush1.msra.mxu0 %v1003
    %1037 = vmatprep.subr.mxu0 0.0
    %1038 = vmatpush1.msra.mxu0 %v1004
    %1039 = vmatprep.subr.mxu0 0.0
    %1040 = vmatpush1.msra.mxu0 %v1005
    %1041 = vmatprep.subr.mxu0 0.0
    %1042 = vmatpush1.msra.mxu0 %v1006
    %1043 = vmatprep.subr.mxu0 0.0
    %1044 = vmatpush1.msra.mxu0 %v1007
    %1045 = vmatprep.subr.mxu0 0.0
    %1046 = vmatpush1.msra.mxu0 %v1008
    %1047 = vmatprep.subr.mxu0 0.0
    %1048 = vmatpush1.msra.mxu0 %v1009
    %1049 = vmatprep.subr.mxu0 0.0
    %1050 = vmatpush1.msra.mxu0 %v1010
    %1051 = vmatprep.subr.mxu0 0.0
    %1052 = vmatpush1.msra.mxu0 %v1011
    %1053 = vmatprep.subr.mxu0 0.0
    %1054 = vmatpush1.msra.mxu0 %v1012
    %1055 = vmatprep.subr.mxu0 0.0
    %1056 = vmatpush1.msra.mxu0 %v1013
    %1057 = vmatprep.subr.mxu0 0.0
    %1058 = vmatpush1.msra.mxu0 %v1014
    %1059 = vmatprep.subr.mxu0 0.0
    %1060 = vmatpush1.msra.mxu0 %v1015
    %1061 = vmatprep.subr.mxu0 0.0
    %1062 = vmatpush1.msra.mxu0 %v1016
    %1063 = vmatprep.subr.mxu0 0.0
    %1064 = vmatpush1.msra.mxu0 %v1017
    %1065 = vmatprep.subr.mxu0 0.0
    %1066 = vmatpush1.msra.mxu0 %v1018
    %1067 = vmatprep.subr.mxu0 0.0
    %1068 = vmatpush1.msra.mxu0 %v1019
    %1069 = vmatprep.subr.mxu0 0.0
    %1070 = vmatpush1.msra.mxu0 %v1020
    %1071 = vmatprep.subr.mxu0 0.0
    %1072 = vmatpush1.msra.mxu0 %v1021
    %1073 = vmatprep.subr.mxu0 0.0
    %1074 = vmatpush1.msra.mxu0 %v1022
    %1075 = vmatprep.subr.mxu0 0.0
    %1076 = vmatpush1.msra.mxu0 %v1023
    %1077 = vmatprep.subr.mxu0 0.0
    %1078 = vmatpush1.msra.mxu0 %v1024
    %1079 = vmatprep.subr.mxu0 0.0
    %1080 = vmatpush1.msra.mxu0 %v1025
    %1081 = vmatprep.subr.mxu0 0.0
    %1082 = vmatpush1.msra.mxu0 %v1026
    %1083 = vmatprep.subr.mxu0 0.0
    %1084 = vmatpush1.msra.mxu0 %v1027
    %1085 = vmatprep.subr.mxu0 0.0
    %1086 = vmatpush1.msra.mxu0 %v1028
    %1087 = vmatprep.subr.mxu0 0.0
    %1088 = vmatpush1.msra.mxu0 %v1029
    %1089 = vmatprep.subr.mxu0 0.0
    %1090 = vmatpush1.msra.mxu0 %v1030
    %1091 = vmatprep.subr.mxu0 0.0
    %1092 = vmatpush1.msra.mxu0 %v1031
    %1093 = vmatprep.subr.mxu0 0.0
    %1094 = vmatpush1.msra.mxu0 %v1032
    %1095 = vmatprep.subr.mxu0 0.0
    %1096 = vmatpush1.msra.mxu0 %v1033
    %1097 = vmatprep.subr.mxu0 0.0
    %1098 = vmatpush1.msra.mxu0 %v1034
    %1099 = vmatprep.mubr.f32.mxu0 %v794
    %1100 = vmatmul.mubr.f32.gmra.mrb[0].mxu0 %v793
    %v1101 = vpop.f32.mrb[0].mxu0
    %v1102 = vadd.f32 0.0, %v1101
    %v1103 = vpop.f32.mrb[0].mxu0
    %1104 = vdwg.mxu0
    %1105 = vst [vmem:[#allocation3 + $0x8] sm:$0xf] %v1102
    %s1106 = scalar_lea.vmem %s11, 768
    %v1107 = vld [vmem:[%s1106] sm:$0xff]
    %v1108 = vld [vmem:[%s1106 + $0x8] sm:$0xff]
    %v1109 = vld [vmem:[%s1106 + $0x10] sm:$0xff]
    %v1110 = vld [vmem:[%s1106 + $0x18] sm:$0xff]
    %v1111 = vld [vmem:[%s1106 + $0x20] sm:$0xff]
    %v1112 = vld [vmem:[%s1106 + $0x28] sm:$0xff]
    %v1113 = vld [vmem:[%s1106 + $0x30] sm:$0xff]
    %v1114 = vld [vmem:[%s1106 + $0x38] sm:$0xff]
    %v1115 = vld [vmem:[%s1106 + $0x40] sm:$0xff]
    %v1116 = vld [vmem:[%s1106 + $0x48] sm:$0xff]
    %v1117 = vld [vmem:[%s1106 + $0x50] sm:$0xff]
    %v1118 = vld [vmem:[%s1106 + $0x58] sm:$0xff]
    %v1119 = vld [vmem:[%s1106 + $0x60] sm:$0xff]
    %v1120 = vld [vmem:[%s1106 + $0x68] sm:$0xff]
    %v1121 = vld [vmem:[%s1106 + $0x70] sm:$0xff]
    %v1122 = vld [vmem:[%s1106 + $0x78] sm:$0xff]
    %v1123 = vld [vmem:[%s1106 + $0x80] sm:$0xff]
    %v1124 = vld [vmem:[%s1106 + $0x88] sm:$0xff]
    %v1125 = vld [vmem:[%s1106 + $0x90] sm:$0xff]
    %v1126 = vld [vmem:[%s1106 + $0x98] sm:$0xff]
    %v1127 = vld [vmem:[%s1106 + $0xa0] sm:$0xff]
    %v1128 = vld [vmem:[%s1106 + $0xa8] sm:$0xff]
    %v1129 = vld [vmem:[%s1106 + $0xb0] sm:$0xff]
    %v1130 = vld [vmem:[%s1106 + $0xb8] sm:$0xff]
    %v1131 = vld [vmem:[%s1106 + $0xc0] sm:$0xff]
    %v1132 = vld [vmem:[%s1106 + $0xc8] sm:$0xff]
    %v1133 = vld [vmem:[%s1106 + $0xd0] sm:$0xff]
    %v1134 = vld [vmem:[%s1106 + $0xd8] sm:$0xff]
    %v1135 = vld [vmem:[%s1106 + $0xe0] sm:$0xff]
    %v1136 = vld [vmem:[%s1106 + $0xe8] sm:$0xff]
    %v1137 = vld [vmem:[%s1106 + $0xf0] sm:$0xff]
    %v1138 = vld [vmem:[%s1106 + $0xf8] sm:$0xff]
    %1139 = vmatprep.subr.mxu0 0.0
    %1140 = vmatpush1.msra.mxu0 %v1107
    %1141 = vmatprep.subr.mxu0 0.0
    %1142 = vmatpush1.msra.mxu0 %v1108
    %1143 = vmatprep.subr.mxu0 0.0
    %1144 = vmatpush1.msra.mxu0 %v1109
    %1145 = vmatprep.subr.mxu0 0.0
    %1146 = vmatpush1.msra.mxu0 %v1110
    %1147 = vmatprep.subr.mxu0 0.0
    %1148 = vmatpush1.msra.mxu0 %v1111
    %1149 = vmatprep.subr.mxu0 0.0
    %1150 = vmatpush1.msra.mxu0 %v1112
    %1151 = vmatprep.subr.mxu0 0.0
    %1152 = vmatpush1.msra.mxu0 %v1113
    %1153 = vmatprep.subr.mxu0 0.0
    %1154 = vmatpush1.msra.mxu0 %v1114
    %1155 = vmatprep.subr.mxu0 0.0
    %1156 = vmatpush1.msra.mxu0 %v1115
    %1157 = vmatprep.subr.mxu0 0.0
    %1158 = vmatpush1.msra.mxu0 %v1116
    %1159 = vmatprep.subr.mxu0 0.0
    %1160 = vmatpush1.msra.mxu0 %v1117
    %1161 = vmatprep.subr.mxu0 0.0
    %1162 = vmatpush1.msra.mxu0 %v1118
    %1163 = vmatprep.subr.mxu0 0.0
    %1164 = vmatpush1.msra.mxu0 %v1119
    %1165 = vmatprep.subr.mxu0 0.0
    %1166 = vmatpush1.msra.mxu0 %v1120
    %1167 = vmatprep.subr.mxu0 0.0
    %1168 = vmatpush1.msra.mxu0 %v1121
    %1169 = vmatprep.subr.mxu0 0.0
    %1170 = vmatpush1.msra.mxu0 %v1122
    %1171 = vmatprep.subr.mxu0 0.0
    %1172 = vmatpush1.msra.mxu0 %v1123
    %1173 = vmatprep.subr.mxu0 0.0
    %1174 = vmatpush1.msra.mxu0 %v1124
    %1175 = vmatprep.subr.mxu0 0.0
    %1176 = vmatpush1.msra.mxu0 %v1125
    %1177 = vmatprep.subr.mxu0 0.0
    %1178 = vmatpush1.msra.mxu0 %v1126
    %1179 = vmatprep.subr.mxu0 0.0
    %1180 = vmatpush1.msra.mxu0 %v1127
    %1181 = vmatprep.subr.mxu0 0.0
    %1182 = vmatpush1.msra.mxu0 %v1128
    %1183 = vmatprep.subr.mxu0 0.0
    %1184 = vmatpush1.msra.mxu0 %v1129
    %1185 = vmatprep.subr.mxu0 0.0
    %1186 = vmatpush1.msra.mxu0 %v1130
    %1187 = vmatprep.subr.mxu0 0.0
    %1188 = vmatpush1.msra.mxu0 %v1131
    %1189 = vmatprep.subr.mxu0 0.0
    %1190 = vmatpush1.msra.mxu0 %v1132
    %1191 = vmatprep.subr.mxu0 0.0
    %1192 = vmatpush1.msra.mxu0 %v1133
    %1193 = vmatprep.subr.mxu0 0.0
    %1194 = vmatpush1.msra.mxu0 %v1134
    %1195 = vmatprep.subr.mxu0 0.0
    %1196 = vmatpush1.msra.mxu0 %v1135
    %1197 = vmatprep.subr.mxu0 0.0
    %1198 = vmatpush1.msra.mxu0 %v1136
    %1199 = vmatprep.subr.mxu0 0.0
    %1200 = vmatpush1.msra.mxu0 %v1137
    %1201 = vmatprep.subr.mxu0 0.0
    %1202 = vmatpush1.msra.mxu0 %v1138
    %1203 = vmatprep.mubr.f32.mxu0 %v794
    %1204 = vmatmul.mubr.f32.gmra.mrb[0].mxu0 %v793
    %v1205 = vpop.f32.mrb[0].mxu0
    %v1206 = vadd.f32 0.0, %v1205
    %v1207 = vpop.f32.mrb[0].mxu0
    %1208 = vdwg.mxu0
    %1209 = vst [vmem:[#allocation3 + $0xc] sm:$0xf] %v1206
    %v1210 = vld [vmem:[#allocation3] sm:$0xff]
    %v1211 = vld [vmem:[#allocation3 + $0x8] sm:$0xff]
    %v1212 = vadd.f32 %v1210, %v1211
    %v1213 = vrot.slane %v1212, 4
    %v1214 = vadd.f32 %v1212, %v1213
    %v1215 = vrot.slane %v1214, 2
    %v1216 = vadd.f32 %v1214, %v1215
    %v1217 = vrot.slane %v1216, 1
    %v1218 = vadd.f32 %v1216, %v1217
    %v1219 = vmul.f32 %v1218, 0.0625
    %v1220 = vmul.f32 %v1210, %v1210
    %v1221 = vmul.f32 %v1211, %v1211
    %v1222 = vadd.f32 %v1220, %v1221
    %v1223 = vrot.slane %v1222, 4
    %v1224 = vadd.f32 %v1222, %v1223
    %v1225 = vrot.slane %v1224, 2
    %v1226 = vadd.f32 %v1224, %v1225
    %v1227 = vrot.slane %v1226, 1
    %v1228 = vadd.f32 %v1226, %v1227
    %v1229 = vmul.f32 %v1228, 0.0625
    %v1230 = vmul.f32 %v1219, %v1219
    %v1231 = vsub.f32 %v1229, %v1230
    %v1232 = vld [vmem:[%s12] sm:$0x1]
    %v1233 = vadd.f32 %v1231, 1e-05
    %v1234 = vrsqrt.pop %v1233
    %v1235 = vmul.f32 %v1232, %v1234
    %v1236 = vld [vmem:[%s13] sm:$0x1]
    %v1237 = vmul.f32 %v1219, %v1235
    %v1238 = vsub.f32 %v1236, %v1237
    %v1240 = vlaneseq
    %v1241 = vshrl.u32 %v1240, 7
    %v1242 = vsub.s32 0, %v1241
    %v1243 = vrot.slane %v1235, %v1242
    %v1245 = vmul.f32 %v1210, %v1243
    %v1246 = vmul.f32 %v1211, %v1243
    %v1248 = vlaneseq
    %v1249 = vshrl.u32 %v1248, 7
    %v1250 = vsub.s32 0, %v1249
    %v1251 = vrot.slane %v1238, %v1250
    %v1253 = vadd.f32 %v1245, %v1251
    %v1254 = vadd.f32 %v1246, %v1251
    %vm1255 = vcmp.ge.f32.partialorder %v1253, 0.0
    %vm1256 = vcmp.ge.f32.partialorder %v1254, 0.0
    %v1257 = vmul.f32 %v1253, 0.2
    %v1258 = vmul.f32 %v1254, 0.2
    %v1259 = vsel %vm1255, %v1253, %v1257
    %v1260 = vsel %vm1256, %v1254, %v1258
    %v1261 = vld [vmem:[%s14] sm:$0xff]
    %v1262 = vld [vmem:[%s14 + $0x8] sm:$0xff]
    %v1263 = vld [vmem:[%s14 + $0x10] sm:$0xff]
    %v1264 = vld [vmem:[%s14 + $0x18] sm:$0xff]
    %v1265 = vld [vmem:[%s14 + $0x20] sm:$0xff]
    %v1266 = vld [vmem:[%s14 + $0x28] sm:$0xff]
    %v1267 = vld [vmem:[%s14 + $0x30] sm:$0xff]
    %v1268 = vld [vmem:[%s14 + $0x38] sm:$0xff]
    %v1269 = vld [vmem:[%s14 + $0x40] sm:$0xff]
    %v1270 = vld [vmem:[%s14 + $0x48] sm:$0xff]
    %v1271 = vld [vmem:[%s14 + $0x50] sm:$0xff]
    %v1272 = vld [vmem:[%s14 + $0x58] sm:$0xff]
    %v1273 = vld [vmem:[%s14 + $0x60] sm:$0xff]
    %v1274 = vld [vmem:[%s14 + $0x68] sm:$0xff]
    %v1275 = vld [vmem:[%s14 + $0x70] sm:$0xff]
    %v1276 = vld [vmem:[%s14 + $0x78] sm:$0xff]
    %1277 = vmatprep.subr.mxu0 0.0
    %1278 = vmatpush1.msra.mxu0 %v1261
    %1279 = vmatprep.subr.mxu0 0.0
    %1280 = vmatpush1.msra.mxu0 %v1262
    %1281 = vmatprep.subr.mxu0 0.0
    %1282 = vmatpush1.msra.mxu0 %v1263
    %1283 = vmatprep.subr.mxu0 0.0
    %1284 = vmatpush1.msra.mxu0 %v1264
    %1285 = vmatprep.subr.mxu0 0.0
    %1286 = vmatpush1.msra.mxu0 %v1265
    %1287 = vmatprep.subr.mxu0 0.0
    %1288 = vmatpush1.msra.mxu0 %v1266
    %1289 = vmatprep.subr.mxu0 0.0
    %1290 = vmatpush1.msra.mxu0 %v1267
    %1291 = vmatprep.subr.mxu0 0.0
    %1292 = vmatpush1.msra.mxu0 %v1268
    %1293 = vmatprep.subr.mxu0 0.0
    %1294 = vmatpush1.msra.mxu0 %v1269
    %1295 = vmatprep.subr.mxu0 0.0
    %1296 = vmatpush1.msra.mxu0 %v1270
    %1297 = vmatprep.subr.mxu0 0.0
    %1298 = vmatpush1.msra.mxu0 %v1271
    %1299 = vmatprep.subr.mxu0 0.0
    %1300 = vmatpush1.msra.mxu0 %v1272
    %1301 = vmatprep.subr.mxu0 0.0
    %1302 = vmatpush1.msra.mxu0 %v1273
    %1303 = vmatprep.subr.mxu0 0.0
    %1304 = vmatpush1.msra.mxu0 %v1274
    %1305 = vmatprep.subr.mxu0 0.0
    %1306 = vmatpush1.msra.mxu0 %v1275
    %1307 = vmatprep.subr.mxu0 0.0
    %1308 = vmatpush1.msra.mxu0 %v1276
    %1309 = vmatprep.subr.mxu0 0.0
    %1310 = vmatpush1.msra.mxu0 0.0
    %1311 = vmatprep.subr.mxu0 0.0
    %1312 = vmatpush1.msra.mxu0 0.0
    %1313 = vmatprep.subr.mxu0 0.0
    %1314 = vmatpush1.msra.mxu0 0.0
    %1315 = vmatprep.subr.mxu0 0.0
    %1316 = vmatpush1.msra.mxu0 0.0
    %1317 = vmatprep.subr.mxu0 0.0
    %1318 = vmatpush1.msra.mxu0 0.0
    %1319 = vmatprep.subr.mxu0 0.0
    %1320 = vmatpush1.msra.mxu0 0.0
    %1321 = vmatprep.subr.mxu0 0.0
    %1322 = vmatpush1.msra.mxu0 0.0
    %1323 = vmatprep.subr.mxu0 0.0
    %1324 = vmatpush1.msra.mxu0 0.0
    %1325 = vmatprep.subr.mxu0 0.0
    %1326 = vmatpush1.msra.mxu0 0.0
    %1327 = vmatprep.subr.mxu0 0.0
    %1328 = vmatpush1.msra.mxu0 0.0
    %1329 = vmatprep.subr.mxu0 0.0
    %1330 = vmatpush1.msra.mxu0 0.0
    %1331 = vmatprep.subr.mxu0 0.0
    %1332 = vmatpush1.msra.mxu0 0.0
    %1333 = vmatprep.subr.mxu0 0.0
    %1334 = vmatpush1.msra.mxu0 0.0
    %1335 = vmatprep.subr.mxu0 0.0
    %1336 = vmatpush1.msra.mxu0 0.0
    %1337 = vmatprep.subr.mxu0 0.0
    %1338 = vmatpush1.msra.mxu0 0.0
    %1339 = vmatprep.subr.mxu0 0.0
    %1340 = vmatpush1.msra.mxu0 0.0
    %1341 = vmatprep.mubr.f32.mxu0 0.0
    %1342 = vmatmul.mubr.f32.gmra.mrb[0].mxu0 %v1259
    %v1343 = vpop.f32.mrb[0].mxu0
    %v1344 = vadd.f32 0.0, %v1343
    %v1345 = vpop.f32.mrb[0].mxu0
    %1346 = vmatprep.mubr.f32.mxu0 0.0
    %1347 = vmatmul.mubr.f32.gmra.mrb[0].mxu0 %v1260
    %v1348 = vpop.f32.mrb[0].mxu0
    %v1349 = vadd.f32 0.0, %v1348
    %v1350 = vpop.f32.mrb[0].mxu0
    %1351 = vdwg.mxu0
    %1352 = vst.msk [vmem:[#allocation4] sm:$0xff] %vm529, %v1344
    %1353 = vst.msk [vmem:[#allocation4 + $0x8] sm:$0xff] %vm529, %v1349
    %s1354 = scalar_lea.vmem %s14, 128
    %v1355 = vld [vmem:[%s1354] sm:$0xff]
    %v1356 = vld [vmem:[%s1354 + $0x8] sm:$0xff]
    %v1357 = vld [vmem:[%s1354 + $0x10] sm:$0xff]
    %v1358 = vld [vmem:[%s1354 + $0x18] sm:$0xff]
    %v1359 = vld [vmem:[%s1354 + $0x20] sm:$0xff]
    %v1360 = vld [vmem:[%s1354 + $0x28] sm:$0xff]
    %v1361 = vld [vmem:[%s1354 + $0x30] sm:$0xff]
    %v1362 = vld [vmem:[%s1354 + $0x38] sm:$0xff]
    %v1363 = vld [vmem:[%s1354 + $0x40] sm:$0xff]
    %v1364 = vld [vmem:[%s1354 + $0x48] sm:$0xff]
    %v1365 = vld [vmem:[%s1354 + $0x50] sm:$0xff]
    %v1366 = vld [vmem:[%s1354 + $0x58] sm:$0xff]
    %v1367 = vld [vmem:[%s1354 + $0x60] sm:$0xff]
    %v1368 = vld [vmem:[%s1354 + $0x68] sm:$0xff]
    %v1369 = vld [vmem:[%s1354 + $0x70] sm:$0xff]
    %v1370 = vld [vmem:[%s1354 + $0x78] sm:$0xff]
    %1371 = vmatprep.subr.mxu0 0.0
    %1372 = vmatpush1.msra.mxu0 %v1355
    %1373 = vmatprep.subr.mxu0 0.0
    %1374 = vmatpush1.msra.mxu0 %v1356
    %1375 = vmatprep.subr.mxu0 0.0
    %1376 = vmatpush1.msra.mxu0 %v1357
    %1377 = vmatprep.subr.mxu0 0.0
    %1378 = vmatpush1.msra.mxu0 %v1358
    %1379 = vmatprep.subr.mxu0 0.0
    %1380 = vmatpush1.msra.mxu0 %v1359
    %1381 = vmatprep.subr.mxu0 0.0
    %1382 = vmatpush1.msra.mxu0 %v1360
    %1383 = vmatprep.subr.mxu0 0.0
    %1384 = vmatpush1.msra.mxu0 %v1361
    %1385 = vmatprep.subr.mxu0 0.0
    %1386 = vmatpush1.msra.mxu0 %v1362
    %1387 = vmatprep.subr.mxu0 0.0
    %1388 = vmatpush1.msra.mxu0 %v1363
    %1389 = vmatprep.subr.mxu0 0.0
    %1390 = vmatpush1.msra.mxu0 %v1364
    %1391 = vmatprep.subr.mxu0 0.0
    %1392 = vmatpush1.msra.mxu0 %v1365
    %1393 = vmatprep.subr.mxu0 0.0
    %1394 = vmatpush1.msra.mxu0 %v1366
    %1395 = vmatprep.subr.mxu0 0.0
    %1396 = vmatpush1.msra.mxu0 %v1367
    %1397 = vmatprep.subr.mxu0 0.0
    %1398 = vmatpush1.msra.mxu0 %v1368
    %1399 = vmatprep.subr.mxu0 0.0
    %1400 = vmatpush1.msra.mxu0 %v1369
    %1401 = vmatprep.subr.mxu0 0.0
    %1402 = vmatpush1.msra.mxu0 %v1370
    %1403 = vmatprep.subr.mxu0 0.0
    %1404 = vmatpush1.msra.mxu0 0.0
    %1405 = vmatprep.subr.mxu0 0.0
    %1406 = vmatpush1.msra.mxu0 0.0
    %1407 = vmatprep.subr.mxu0 0.0
    %1408 = vmatpush1.msra.mxu0 0.0
    %1409 = vmatprep.subr.mxu0 0.0
    %1410 = vmatpush1.msra.mxu0 0.0
    %1411 = vmatprep.subr.mxu0 0.0
    %1412 = vmatpush1.msra.mxu0 0.0
    %1413 = vmatprep.subr.mxu0 0.0
    %1414 = vmatpush1.msra.mxu0 0.0
    %1415 = vmatprep.subr.mxu0 0.0
    %1416 = vmatpush1.msra.mxu0 0.0
    %1417 = vmatprep.subr.mxu0 0.0
    %1418 = vmatpush1.msra.mxu0 0.0
    %1419 = vmatprep.subr.mxu0 0.0
    %1420 = vmatpush1.msra.mxu0 0.0
    %1421 = vmatprep.subr.mxu0 0.0
    %1422 = vmatpush1.msra.mxu0 0.0
    %1423 = vmatprep.subr.mxu0 0.0
    %1424 = vmatpush1.msra.mxu0 0.0
    %1425 = vmatprep.subr.mxu0 0.0
    %1426 = vmatpush1.msra.mxu0 0.0
    %1427 = vmatprep.subr.mxu0 0.0
    %1428 = vmatpush1.msra.mxu0 0.0
    %1429 = vmatprep.subr.mxu0 0.0
    %1430 = vmatpush1.msra.mxu0 0.0
    %1431 = vmatprep.subr.mxu0 0.0
    %1432 = vmatpush1.msra.mxu0 0.0
    %1433 = vmatprep.subr.mxu0 0.0
    %1434 = vmatpush1.msra.mxu0 0.0
    %1435 = vmatprep.mubr.f32.mxu0 0.0
    %1436 = vmatmul.mubr.f32.gmra.mrb[0].mxu0 %v1259
    %v1437 = vpop.f32.mrb[0].mxu0
    %v1438 = vadd.f32 0.0, %v1437
    %v1439 = vpop.f32.mrb[0].mxu0
    %1440 = vmatprep.mubr.f32.mxu0 0.0
    %1441 = vmatmul.mubr.f32.gmra.mrb[0].mxu0 %v1260
    %v1442 = vpop.f32.mrb[0].mxu0
    %v1443 = vadd.f32 0.0, %v1442
    %v1444 = vpop.f32.mrb[0].mxu0
    %1445 = vdwg.mxu0
    %1446 = vst.msk [vmem:[#allocation4 + $0x10] sm:$0xff] %vm529, %v1438
    %1447 = vst.msk [vmem:[#allocation4 + $0x18] sm:$0xff] %vm529, %v1443
    %s1448 = scalar_lea.vmem %s14, 256
    %v1449 = vld [vmem:[%s1448] sm:$0xff]
    %v1450 = vld [vmem:[%s1448 + $0x8] sm:$0xff]
    %v1451 = vld [vmem:[%s1448 + $0x10] sm:$0xff]
    %v1452 = vld [vmem:[%s1448 + $0x18] sm:$0xff]
    %v1453 = vld [vmem:[%s1448 + $0x20] sm:$0xff]
    %v1454 = vld [vmem:[%s1448 + $0x28] sm:$0xff]
    %v1455 = vld [vmem:[%s1448 + $0x30] sm:$0xff]
    %v1456 = vld [vmem:[%s1448 + $0x38] sm:$0xff]
    %v1457 = vld [vmem:[%s1448 + $0x40] sm:$0xff]
    %v1458 = vld [vmem:[%s1448 + $0x48] sm:$0xff]
    %v1459 = vld [vmem:[%s1448 + $0x50] sm:$0xff]
    %v1460 = vld [vmem:[%s1448 + $0x58] sm:$0xff]
    %v1461 = vld [vmem:[%s1448 + $0x60] sm:$0xff]
    %v1462 = vld [vmem:[%s1448 + $0x68] sm:$0xff]
    %v1463 = vld [vmem:[%s1448 + $0x70] sm:$0xff]
    %v1464 = vld [vmem:[%s1448 + $0x78] sm:$0xff]
    %1465 = vmatprep.subr.mxu0 0.0
    %1466 = vmatpush1.msra.mxu0 %v1449
    %1467 = vmatprep.subr.mxu0 0.0
    %1468 = vmatpush1.msra.mxu0 %v1450
    %1469 = vmatprep.subr.mxu0 0.0
    %1470 = vmatpush1.msra.mxu0 %v1451
    %1471 = vmatprep.subr.mxu0 0.0
    %1472 = vmatpush1.msra.mxu0 %v1452
    %1473 = vmatprep.subr.mxu0 0.0
    %1474 = vmatpush1.msra.mxu0 %v1453
    %1475 = vmatprep.subr.mxu0 0.0
    %1476 = vmatpush1.msra.mxu0 %v1454
    %1477 = vmatprep.subr.mxu0 0.0
    %1478 = vmatpush1.msra.mxu0 %v1455
    %1479 = vmatprep.subr.mxu0 0.0
    %1480 = vmatpush1.msra.mxu0 %v1456
    %1481 = vmatprep.subr.mxu0 0.0
    %1482 = vmatpush1.msra.mxu0 %v1457
    %1483 = vmatprep.subr.mxu0 0.0
    %1484 = vmatpush1.msra.mxu0 %v1458
    %1485 = vmatprep.subr.mxu0 0.0
    %1486 = vmatpush1.msra.mxu0 %v1459
    %1487 = vmatprep.subr.mxu0 0.0
    %1488 = vmatpush1.msra.mxu0 %v1460
    %1489 = vmatprep.subr.mxu0 0.0
    %1490 = vmatpush1.msra.mxu0 %v1461
    %1491 = vmatprep.subr.mxu0 0.0
    %1492 = vmatpush1.msra.mxu0 %v1462
    %1493 = vmatprep.subr.mxu0 0.0
    %1494 = vmatpush1.msra.mxu0 %v1463
    %1495 = vmatprep.subr.mxu0 0.0
    %1496 = vmatpush1.msra.mxu0 %v1464
    %1497 = vmatprep.subr.mxu0 0.0
    %1498 = vmatpush1.msra.mxu0 0.0
    %1499 = vmatprep.subr.mxu0 0.0
    %1500 = vmatpush1.msra.mxu0 0.0
    %1501 = vmatprep.subr.mxu0 0.0
    %1502 = vmatpush1.msra.mxu0 0.0
    %1503 = vmatprep.subr.mxu0 0.0
    %1504 = vmatpush1.msra.mxu0 0.0
    %1505 = vmatprep.subr.mxu0 0.0
    %1506 = vmatpush1.msra.mxu0 0.0
    %1507 = vmatprep.subr.mxu0 0.0
    %1508 = vmatpush1.msra.mxu0 0.0
    %1509 = vmatprep.subr.mxu0 0.0
    %1510 = vmatpush1.msra.mxu0 0.0
    %1511 = vmatprep.subr.mxu0 0.0
    %1512 = vmatpush1.msra.mxu0 0.0
    %1513 = vmatprep.subr.mxu0 0.0
    %1514 = vmatpush1.msra.mxu0 0.0
    %1515 = vmatprep.subr.mxu0 0.0
    %1516 = vmatpush1.msra.mxu0 0.0
    %1517 = vmatprep.subr.mxu0 0.0
    %1518 = vmatpush1.msra.mxu0 0.0
    %1519 = vmatprep.subr.mxu0 0.0
    %1520 = vmatpush1.msra.mxu0 0.0
    %1521 = vmatprep.subr.mxu0 0.0
    %1522 = vmatpush1.msra.mxu0 0.0
    %1523 = vmatprep.subr.mxu0 0.0
    %1524 = vmatpush1.msra.mxu0 0.0
    %1525 = vmatprep.subr.mxu0 0.0
    %1526 = vmatpush1.msra.mxu0 0.0
    %1527 = vmatprep.subr.mxu0 0.0
    %1528 = vmatpush1.msra.mxu0 0.0
    %1529 = vmatprep.mubr.f32.mxu0 0.0
    %1530 = vmatmul.mubr.f32.gmra.mrb[0].mxu0 %v1259
    %v1531 = vpop.f32.mrb[0].mxu0
    %v1532 = vadd.f32 0.0, %v1531
    %v1533 = vpop.f32.mrb[0].mxu0
    %1534 = vmatprep.mubr.f32.mxu0 0.0
    %1535 = vmatmul.mubr.f32.gmra.mrb[0].mxu0 %v1260
    %v1536 = vpop.f32.mrb[0].mxu0
    %v1537 = vadd.f32 0.0, %v1536
    %v1538 = vpop.f32.mrb[0].mxu0
    %1539 = vdwg.mxu0
    %1540 = vst.msk [vmem:[#allocation4 + $0x20] sm:$0xff] %vm529, %v1532
    %1541 = vst.msk [vmem:[#allocation4 + $0x28] sm:$0xff] %vm529, %v1537
    %s1542 = scalar_lea.vmem %s14, 384
    %v1543 = vld [vmem:[%s1542] sm:$0xff]
    %v1544 = vld [vmem:[%s1542 + $0x8] sm:$0xff]
    %v1545 = vld [vmem:[%s1542 + $0x10] sm:$0xff]
    %v1546 = vld [vmem:[%s1542 + $0x18] sm:$0xff]
    %v1547 = vld [vmem:[%s1542 + $0x20] sm:$0xff]
    %v1548 = vld [vmem:[%s1542 + $0x28] sm:$0xff]
    %v1549 = vld [vmem:[%s1542 + $0x30] sm:$0xff]
    %v1550 = vld [vmem:[%s1542 + $0x38] sm:$0xff]
    %v1551 = vld [vmem:[%s1542 + $0x40] sm:$0xff]
    %v1552 = vld [vmem:[%s1542 + $0x48] sm:$0xff]
    %v1553 = vld [vmem:[%s1542 + $0x50] sm:$0xff]
    %v1554 = vld [vmem:[%s1542 + $0x58] sm:$0xff]
    %v1555 = vld [vmem:[%s1542 + $0x60] sm:$0xff]
    %v1556 = vld [vmem:[%s1542 + $0x68] sm:$0xff]
    %v1557 = vld [vmem:[%s1542 + $0x70] sm:$0xff]
    %v1558 = vld [vmem:[%s1542 + $0x78] sm:$0xff]
    %1559 = vmatprep.subr.mxu0 0.0
    %1560 = vmatpush1.msra.mxu0 %v1543
    %1561 = vmatprep.subr.mxu0 0.0
    %1562 = vmatpush1.msra.mxu0 %v1544
    %1563 = vmatprep.subr.mxu0 0.0
    %1564 = vmatpush1.msra.mxu0 %v1545
    %1565 = vmatprep.subr.mxu0 0.0
    %1566 = vmatpush1.msra.mxu0 %v1546
    %1567 = vmatprep.subr.mxu0 0.0
    %1568 = vmatpush1.msra.mxu0 %v1547
    %1569 = vmatprep.subr.mxu0 0.0
    %1570 = vmatpush1.msra.mxu0 %v1548
    %1571 = vmatprep.subr.mxu0 0.0
    %1572 = vmatpush1.msra.mxu0 %v1549
    %1573 = vmatprep.subr.mxu0 0.0
    %1574 = vmatpush1.msra.mxu0 %v1550
    %1575 = vmatprep.subr.mxu0 0.0
    %1576 = vmatpush1.msra.mxu0 %v1551
    %1577 = vmatprep.subr.mxu0 0.0
    %1578 = vmatpush1.msra.mxu0 %v1552
    %1579 = vmatprep.subr.mxu0 0.0
    %1580 = vmatpush1.msra.mxu0 %v1553
    %1581 = vmatprep.subr.mxu0 0.0
    %1582 = vmatpush1.msra.mxu0 %v1554
    %1583 = vmatprep.subr.mxu0 0.0
    %1584 = vmatpush1.msra.mxu0 %v1555
    %1585 = vmatprep.subr.mxu0 0.0
    %1586 = vmatpush1.msra.mxu0 %v1556
    %1587 = vmatprep.subr.mxu0 0.0
    %1588 = vmatpush1.msra.mxu0 %v1557
    %1589 = vmatprep.subr.mxu0 0.0
    %1590 = vmatpush1.msra.mxu0 %v1558
    %1591 = vmatprep.subr.mxu0 0.0
    %1592 = vmatpush1.msra.mxu0 0.0
    %1593 = vmatprep.subr.mxu0 0.0
    %1594 = vmatpush1.msra.mxu0 0.0
    %1595 = vmatprep.subr.mxu0 0.0
    %1596 = vmatpush1.msra.mxu0 0.0
    %1597 = vmatprep.subr.mxu0 0.0
    %1598 = vmatpush1.msra.mxu0 0.0
    %1599 = vmatprep.subr.mxu0 0.0
    %1600 = vmatpush1.msra.mxu0 0.0
    %1601 = vmatprep.subr.mxu0 0.0
    %1602 = vmatpush1.msra.mxu0 0.0
    %1603 = vmatprep.subr.mxu0 0.0
    %1604 = vmatpush1.msra.mxu0 0.0
    %1605 = vmatprep.subr.mxu0 0.0
    %1606 = vmatpush1.msra.mxu0 0.0
    %1607 = vmatprep.subr.mxu0 0.0
    %1608 = vmatpush1.msra.mxu0 0.0
    %1609 = vmatprep.subr.mxu0 0.0
    %1610 = vmatpush1.msra.mxu0 0.0
    %1611 = vmatprep.subr.mxu0 0.0
    %1612 = vmatpush1.msra.mxu0 0.0
    %1613 = vmatprep.subr.mxu0 0.0
    %1614 = vmatpush1.msra.mxu0 0.0
    %1615 = vmatprep.subr.mxu0 0.0
    %1616 = vmatpush1.msra.mxu0 0.0
    %1617 = vmatprep.subr.mxu0 0.0
    %1618 = vmatpush1.msra.mxu0 0.0
    %1619 = vmatprep.subr.mxu0 0.0
    %1620 = vmatpush1.msra.mxu0 0.0
    %1621 = vmatprep.subr.mxu0 0.0
    %1622 = vmatpush1.msra.mxu0 0.0
    %1623 = vmatprep.mubr.f32.mxu0 0.0
    %1624 = vmatmul.mubr.f32.gmra.mrb[0].mxu0 %v1259
    %v1625 = vpop.f32.mrb[0].mxu0
    %v1626 = vadd.f32 0.0, %v1625
    %v1627 = vpop.f32.mrb[0].mxu0
    %1628 = vmatprep.mubr.f32.mxu0 0.0
    %1629 = vmatmul.mubr.f32.gmra.mrb[0].mxu0 %v1260
    %v1630 = vpop.f32.mrb[0].mxu0
    %v1631 = vadd.f32 0.0, %v1630
    %v1632 = vpop.f32.mrb[0].mxu0
    %1633 = vdwg.mxu0
    %1634 = vst.msk [vmem:[#allocation4 + $0x30] sm:$0xff] %vm529, %v1626
    %1635 = vst.msk [vmem:[#allocation4 + $0x38] sm:$0xff] %vm529, %v1631
    %v1636 = vld [vmem:[#allocation4] sm:$0xff]
    %v1637 = vld [vmem:[#allocation4 + $0x8] sm:$0xff]
    %v1638 = vld [vmem:[#allocation4 + $0x10] sm:$0xff]
    %v1639 = vld [vmem:[#allocation4 + $0x18] sm:$0xff]
    %v1640 = vld [vmem:[#allocation4 + $0x20] sm:$0xff]
    %v1641 = vld [vmem:[#allocation4 + $0x28] sm:$0xff]
    %v1642 = vld [vmem:[#allocation4 + $0x30] sm:$0xff]
    %v1643 = vld [vmem:[#allocation4 + $0x38] sm:$0xff]
    %v1644 = vsel %vm529, %v1636, 0.0
    %v1645 = vsel %vm529, %v1637, 0.0
    %v1646 = vadd.f32 %v1644, %v1645
    %v1647 = vsel %vm529, %v1638, 0.0
    %v1648 = vadd.f32 %v1646, %v1647
    %v1649 = vsel %vm529, %v1639, 0.0
    %v1650 = vadd.f32 %v1648, %v1649
    %v1651 = vsel %vm529, %v1640, 0.0
    %v1652 = vadd.f32 %v1650, %v1651
    %v1653 = vsel %vm529, %v1641, 0.0
    %v1654 = vadd.f32 %v1652, %v1653
    %v1655 = vsel %vm529, %v1642, 0.0
    %v1656 = vadd.f32 %v1654, %v1655
    %v1657 = vsel %vm529, %v1643, 0.0
    %v1658 = vadd.f32 %v1656, %v1657
    %v1659 = vrot.slane %v1658, 4
    %v1660 = vadd.f32 %v1658, %v1659
    %v1661 = vrot.slane %v1660, 2
    %v1662 = vadd.f32 %v1660, %v1661
    %v1663 = vrot.slane %v1662, 1
    %v1664 = vadd.f32 %v1662, %v1663
    %v1665 = vmul.f32 %v1664, 0.015625
    %v1666 = vmul.f32 %v1636, %v1636
    %v1667 = vmul.f32 %v1637, %v1637
    %v1668 = vmul.f32 %v1638, %v1638
    %v1669 = vmul.f32 %v1639, %v1639
    %v1670 = vmul.f32 %v1640, %v1640
    %v1671 = vmul.f32 %v1641, %v1641
    %v1672 = vmul.f32 %v1642, %v1642
    %v1673 = vmul.f32 %v1643, %v1643
    %v1674 = vsel %vm529, %v1666, 0.0
    %v1675 = vsel %vm529, %v1667, 0.0
    %v1676 = vadd.f32 %v1674, %v1675
    %v1677 = vsel %vm529, %v1668, 0.0
    %v1678 = vadd.f32 %v1676, %v1677
    %v1679 = vsel %vm529, %v1669, 0.0
    %v1680 = vadd.f32 %v1678, %v1679
    %v1681 = vsel %vm529, %v1670, 0.0
    %v1682 = vadd.f32 %v1680, %v1681
    %v1683 = vsel %vm529, %v1671, 0.0
    %v1684 = vadd.f32 %v1682, %v1683
    %v1685 = vsel %vm529, %v1672, 0.0
    %v1686 = vadd.f32 %v1684, %v1685
    %v1687 = vsel %vm529, %v1673, 0.0
    %v1688 = vadd.f32 %v1686, %v1687
    %v1689 = vrot.slane %v1688, 4
    %v1690 = vadd.f32 %v1688, %v1689
    %v1691 = vrot.slane %v1690, 2
    %v1692 = vadd.f32 %v1690, %v1691
    %v1693 = vrot.slane %v1692, 1
    %v1694 = vadd.f32 %v1692, %v1693
    %v1695 = vmul.f32 %v1694, 0.015625
    %v1696 = vmul.f32 %v1665, %v1665
    %v1697 = vsub.f32 %v1695, %v1696
    %v1698 = vld [vmem:[%s15] sm:$0x1]
    %v1699 = vadd.f32 %v1697, 1e-05
    %v1700 = vrsqrt.pop %v1699
    %v1701 = vmul.f32 %v1698, %v1700
    %v1702 = vld [vmem:[%s16] sm:$0x1]
    %v1703 = vmul.f32 %v1665, %v1701
    %v1704 = vsub.f32 %v1702, %v1703
    %v1706 = vlaneseq
    %v1707 = vshrl.u32 %v1706, 7
    %v1708 = vsub.s32 0, %v1707
    %v1709 = vrot.slane %v1701, %v1708
    %v1711 = vmul.f32 %v1636, %v1709
    %v1712 = vmul.f32 %v1637, %v1709
    %v1713 = vmul.f32 %v1638, %v1709
    %v1714 = vmul.f32 %v1639, %v1709
    %v1715 = vmul.f32 %v1640, %v1709
    %v1716 = vmul.f32 %v1641, %v1709
    %v1717 = vmul.f32 %v1642, %v1709
    %v1718 = vmul.f32 %v1643, %v1709
    %v1720 = vlaneseq
    %v1721 = vshrl.u32 %v1720, 7
    %v1722 = vsub.s32 0, %v1721
    %v1723 = vrot.slane %v1704, %v1722
    %v1725 = vadd.f32 %v1711, %v1723
    %v1726 = vadd.f32 %v1712, %v1723
    %v1727 = vadd.f32 %v1713, %v1723
    %v1728 = vadd.f32 %v1714, %v1723
    %v1729 = vadd.f32 %v1715, %v1723
    %v1730 = vadd.f32 %v1716, %v1723
    %v1731 = vadd.f32 %v1717, %v1723
    %v1732 = vadd.f32 %v1718, %v1723
    %vm1733 = vcmp.ge.f32.partialorder %v1725, 0.0
    %vm1734 = vcmp.ge.f32.partialorder %v1726, 0.0
    %vm1735 = vcmp.ge.f32.partialorder %v1727, 0.0
    %vm1736 = vcmp.ge.f32.partialorder %v1728, 0.0
    %vm1737 = vcmp.ge.f32.partialorder %v1729, 0.0
    %vm1738 = vcmp.ge.f32.partialorder %v1730, 0.0
    %vm1739 = vcmp.ge.f32.partialorder %v1731, 0.0
    %vm1740 = vcmp.ge.f32.partialorder %v1732, 0.0
    %v1741 = vmul.f32 %v1725, 0.2
    %v1742 = vmul.f32 %v1726, 0.2
    %v1743 = vmul.f32 %v1727, 0.2
    %v1744 = vmul.f32 %v1728, 0.2
    %v1745 = vmul.f32 %v1729, 0.2
    %v1746 = vmul.f32 %v1730, 0.2
    %v1747 = vmul.f32 %v1731, 0.2
    %v1748 = vmul.f32 %v1732, 0.2
    %v1749 = vsel %vm1733, %v1725, %v1741
    %v1750 = vsel %vm1734, %v1726, %v1742
    %v1751 = vsel %vm1735, %v1727, %v1743
    %v1752 = vsel %vm1736, %v1728, %v1744
    %v1753 = vsel %vm1737, %v1729, %v1745
    %v1754 = vsel %vm1738, %v1730, %v1746
    %v1755 = vsel %vm1739, %v1731, %v1747
    %v1756 = vsel %vm1740, %v1732, %v1748
    %v1757 = vld [vmem:[%s17] sm:$0xff]
    %v1758 = vld [vmem:[%s17 + $0x8] sm:$0xff]
    %v1759 = vld [vmem:[%s17 + $0x10] sm:$0xff]
    %v1760 = vld [vmem:[%s17 + $0x18] sm:$0xff]
    %v1761 = vld [vmem:[%s17 + $0x20] sm:$0xff]
    %v1762 = vld [vmem:[%s17 + $0x28] sm:$0xff]
    %v1763 = vld [vmem:[%s17 + $0x30] sm:$0xff]
    %v1764 = vld [vmem:[%s17 + $0x38] sm:$0xff]
    %v1766 = vsel %vm529, %v1749, 0
    %v1769 = vsel %vm529, %v1750, 0
    %v1772 = vsel %vm529, %v1751, 0
    %v1775 = vsel %vm529, %v1752, 0
    %v1778 = vsel %vm529, %v1753, 0
    %v1781 = vsel %vm529, %v1754, 0
    %v1784 = vsel %vm529, %v1755, 0
    %v1787 = vsel %vm529, %v1756, 0
    %1789 = vmatprep.subr.mxu0 0.0
    %1790 = vmatpush1.msra.mxu0 %v1757
    %1791 = vmatprep.subr.mxu0 0.0
    %1792 = vmatpush1.msra.mxu0 %v1758
    %1793 = vmatprep.subr.mxu0 0.0
    %1794 = vmatpush1.msra.mxu0 %v1759
    %1795 = vmatprep.subr.mxu0 0.0
    %1796 = vmatpush1.msra.mxu0 %v1760
    %1797 = vmatprep.subr.mxu0 0.0
    %1798 = vmatpush1.msra.mxu0 %v1761
    %1799 = vmatprep.subr.mxu0 0.0
    %1800 = vmatpush1.msra.mxu0 %v1762
    %1801 = vmatprep.subr.mxu0 0.0
    %1802 = vmatpush1.msra.mxu0 %v1763
    %1803 = vmatprep.subr.mxu0 0.0
    %1804 = vmatpush1.msra.mxu0 %v1764
    %1805 = vmatprep.subr.mxu0 0.0
    %1806 = vmatpush1.msra.mxu0 0.0
    %1807 = vmatprep.subr.mxu0 0.0
    %1808 = vmatpush1.msra.mxu0 0.0
    %1809 = vmatprep.subr.mxu0 0.0
    %1810 = vmatpush1.msra.mxu0 0.0
    %1811 = vmatprep.subr.mxu0 0.0
    %1812 = vmatpush1.msra.mxu0 0.0
    %1813 = vmatprep.subr.mxu0 0.0
    %1814 = vmatpush1.msra.mxu0 0.0
    %1815 = vmatprep.subr.mxu0 0.0
    %1816 = vmatpush1.msra.mxu0 0.0
    %1817 = vmatprep.subr.mxu0 0.0
    %1818 = vmatpush1.msra.mxu0 0.0
    %1819 = vmatprep.subr.mxu0 0.0
    %1820 = vmatpush1.msra.mxu0 0.0
    %1821 = vmatprep.subr.mxu0 0.0
    %1822 = vmatpush1.msra.mxu0 0.0
    %1823 = vmatprep.subr.mxu0 0.0
    %1824 = vmatpush1.msra.mxu0 0.0
    %1825 = vmatprep.subr.mxu0 0.0
    %1826 = vmatpush1.msra.mxu0 0.0
    %1827 = vmatprep.subr.mxu0 0.0
    %1828 = vmatpush1.msra.mxu0 0.0
    %1829 = vmatprep.subr.mxu0 0.0
    %1830 = vmatpush1.msra.mxu0 0.0
    %1831 = vmatprep.subr.mxu0 0.0
    %1832 = vmatpush1.msra.mxu0 0.0
    %1833 = vmatprep.subr.mxu0 0.0
    %1834 = vmatpush1.msra.mxu0 0.0
    %1835 = vmatprep.subr.mxu0 0.0
    %1836 = vmatpush1.msra.mxu0 0.0
    %1837 = vmatprep.subr.mxu0 0.0
    %1838 = vmatpush1.msra.mxu0 0.0
    %1839 = vmatprep.subr.mxu0 0.0
    %1840 = vmatpush1.msra.mxu0 0.0
    %1841 = vmatprep.subr.mxu0 0.0
    %1842 = vmatpush1.msra.mxu0 0.0
    %1843 = vmatprep.subr.mxu0 0.0
    %1844 = vmatpush1.msra.mxu0 0.0
    %1845 = vmatprep.subr.mxu0 0.0
    %1846 = vmatpush1.msra.mxu0 0.0
    %1847 = vmatprep.subr.mxu0 0.0
    %1848 = vmatpush1.msra.mxu0 0.0
    %1849 = vmatprep.subr.mxu0 0.0
    %1850 = vmatpush1.msra.mxu0 0.0
    %1851 = vmatprep.subr.mxu0 0.0
    %1852 = vmatpush1.msra.mxu0 0.0
    %1853 = vmatprep.mubr.f32.mxu0 0.0
    %1854 = vmatmul.mubr.f32.gmra.mrb[0].mxu0 %v1766
    %v1855 = vpop.f32.mrb[0].mxu0
    %v1856 = vadd.f32 0.0, %v1855
    %v1857 = vpop.f32.mrb[0].mxu0
    %1858 = vmatprep.mubr.f32.mxu0 0.0
    %1859 = vmatmul.mubr.f32.gmra.mrb[0].mxu0 %v1769
    %v1860 = vpop.f32.mrb[0].mxu0
    %v1861 = vadd.f32 0.0, %v1860
    %v1862 = vpop.f32.mrb[0].mxu0
    %1863 = vmatprep.mubr.f32.mxu0 0.0
    %1864 = vmatmul.mubr.f32.gmra.mrb[0].mxu0 %v1772
    %v1865 = vpop.f32.mrb[0].mxu0
    %v1866 = vadd.f32 0.0, %v1865
    %v1867 = vpop.f32.mrb[0].mxu0
    %1868 = vmatprep.mubr.f32.mxu0 0.0
    %1869 = vmatmul.mubr.f32.gmra.mrb[0].mxu0 %v1775
    %v1870 = vpop.f32.mrb[0].mxu0
    %v1871 = vadd.f32 0.0, %v1870
    %v1872 = vpop.f32.mrb[0].mxu0
    %1873 = vmatprep.mubr.f32.mxu0 0.0
    %1874 = vmatmul.mubr.f32.gmra.mrb[0].mxu0 %v1778
    %v1875 = vpop.f32.mrb[0].mxu0
    %v1876 = vadd.f32 0.0, %v1875
    %v1877 = vpop.f32.mrb[0].mxu0
    %1878 = vmatprep.mubr.f32.mxu0 0.0
    %1879 = vmatmul.mubr.f32.gmra.mrb[0].mxu0 %v1781
    %v1880 = vpop.f32.mrb[0].mxu0
    %v1881 = vadd.f32 0.0, %v1880
    %v1882 = vpop.f32.mrb[0].mxu0
    %1883 = vmatprep.mubr.f32.mxu0 0.0
    %1884 = vmatmul.mubr.f32.gmra.mrb[0].mxu0 %v1784
    %v1885 = vpop.f32.mrb[0].mxu0
    %v1886 = vadd.f32 0.0, %v1885
    %v1887 = vpop.f32.mrb[0].mxu0
    %1888 = vmatprep.mubr.f32.mxu0 0.0
    %1889 = vmatmul.mubr.f32.gmra.mrb[0].mxu0 %v1787
    %v1890 = vpop.f32.mrb[0].mxu0
    %v1891 = vadd.f32 0.0, %v1890
    %v1892 = vpop.f32.mrb[0].mxu0
    %1893 = vdwg.mxu0
    %vm1894 = vcmask 261120
    %1895 = vst.msk [vmem:[#allocation5] sm:$0xff] %vm1894, %v1856
    %1896 = vst.msk [vmem:[#allocation5 + $0x8] sm:$0xff] %vm1894, %v1861
    %1897 = vst.msk [vmem:[#allocation5 + $0x10] sm:$0xff] %vm1894, %v1866
    %1898 = vst.msk [vmem:[#allocation5 + $0x18] sm:$0xff] %vm1894, %v1871
    %1899 = vst.msk [vmem:[#allocation5 + $0x20] sm:$0xff] %vm1894, %v1876
    %1900 = vst.msk [vmem:[#allocation5 + $0x28] sm:$0xff] %vm1894, %v1881
    %1901 = vst.msk [vmem:[#allocation5 + $0x30] sm:$0xff] %vm1894, %v1886
    %1902 = vst.msk [vmem:[#allocation5 + $0x38] sm:$0xff] %vm1894, %v1891
    %s1903 = scalar_lea.vmem %s17, 64
    %v1904 = vld [vmem:[%s1903] sm:$0xff]
    %v1905 = vld [vmem:[%s1903 + $0x8] sm:$0xff]
    %v1906 = vld [vmem:[%s1903 + $0x10] sm:$0xff]
    %v1907 = vld [vmem:[%s1903 + $0x18] sm:$0xff]
    %v1908 = vld [vmem:[%s1903 + $0x20] sm:$0xff]
    %v1909 = vld [vmem:[%s1903 + $0x28] sm:$0xff]
    %v1910 = vld [vmem:[%s1903 + $0x30] sm:$0xff]
    %v1911 = vld [vmem:[%s1903 + $0x38] sm:$0xff]
    %1912 = vmatprep.subr.mxu0 0.0
    %1913 = vmatpush1.msra.mxu0 %v1904
    %1914 = vmatprep.subr.mxu0 0.0
    %1915 = vmatpush1.msra.mxu0 %v1905
    %1916 = vmatprep.subr.mxu0 0.0
    %1917 = vmatpush1.msra.mxu0 %v1906
    %1918 = vmatprep.subr.mxu0 0.0
    %1919 = vmatpush1.msra.mxu0 %v1907
    %1920 = vmatprep.subr.mxu0 0.0
    %1921 = vmatpush1.msra.mxu0 %v1908
    %1922 = vmatprep.subr.mxu0 0.0
    %1923 = vmatpush1.msra.mxu0 %v1909
    %1924 = vmatprep.subr.mxu0 0.0
    %1925 = vmatpush1.msra.mxu0 %v1910
    %1926 = vmatprep.subr.mxu0 0.0
    %1927 = vmatpush1.msra.mxu0 %v1911
    %1928 = vmatprep.subr.mxu0 0.0
    %1929 = vmatpush1.msra.mxu0 0.0
    %1930 = vmatprep.subr.mxu0 0.0
    %1931 = vmatpush1.msra.mxu0 0.0
    %1932 = vmatprep.subr.mxu0 0.0
    %1933 = vmatpush1.msra.mxu0 0.0
    %1934 = vmatprep.subr.mxu0 0.0
    %1935 = vmatpush1.msra.mxu0 0.0
    %1936 = vmatprep.subr.mxu0 0.0
    %1937 = vmatpush1.msra.mxu0 0.0
    %1938 = vmatprep.subr.mxu0 0.0
    %1939 = vmatpush1.msra.mxu0 0.0
    %1940 = vmatprep.subr.mxu0 0.0
    %1941 = vmatpush1.msra.mxu0 0.0
    %1942 = vmatprep.subr.mxu0 0.0
    %1943 = vmatpush1.msra.mxu0 0.0
    %1944 = vmatprep.subr.mxu0 0.0
    %1945 = vmatpush1.msra.mxu0 0.0
    %1946 = vmatprep.subr.mxu0 0.0
    %1947 = vmatpush1.msra.mxu0 0.0
    %1948 = vmatprep.subr.mxu0 0.0
    %1949 = vmatpush1.msra.mxu0 0.0
    %1950 = vmatprep.subr.mxu0 0.0
    %1951 = vmatpush1.msra.mxu0 0.0
    %1952 = vmatprep.subr.mxu0 0.0
    %1953 = vmatpush1.msra.mxu0 0.0
    %1954 = vmatprep.subr.mxu0 0.0
    %1955 = vmatpush1.msra.mxu0 0.0
    %1956 = vmatprep.subr.mxu0 0.0
    %1957 = vmatpush1.msra.mxu0 0.0
    %1958 = vmatprep.subr.mxu0 0.0
    %1959 = vmatpush1.msra.mxu0 0.0
    %1960 = vmatprep.subr.mxu0 0.0
    %1961 = vmatpush1.msra.mxu0 0.0
    %1962 = vmatprep.subr.mxu0 0.0
    %1963 = vmatpush1.msra.mxu0 0.0
    %1964 = vmatprep.subr.mxu0 0.0
    %1965 = vmatpush1.msra.mxu0 0.0
    %1966 = vmatprep.subr.mxu0 0.0
    %1967 = vmatpush1.msra.mxu0 0.0
    %1968 = vmatprep.subr.mxu0 0.0
    %1969 = vmatpush1.msra.mxu0 0.0
    %1970 = vmatprep.subr.mxu0 0.0
    %1971 = vmatpush1.msra.mxu0 0.0
    %1972 = vmatprep.subr.mxu0 0.0
    %1973 = vmatpush1.msra.mxu0 0.0
    %1974 = vmatprep.subr.mxu0 0.0
    %1975 = vmatpush1.msra.mxu0 0.0
    %1976 = vmatprep.mubr.f32.mxu0 0.0
    %1977 = vmatmul.mubr.f32.gmra.mrb[0].mxu0 %v1766
    %v1978 = vpop.f32.mrb[0].mxu0
    %v1979 = vadd.f32 0.0, %v1978
    %v1980 = vpop.f32.mrb[0].mxu0
    %1981 = vmatprep.mubr.f32.mxu0 0.0
    %1982 = vmatmul.mubr.f32.gmra.mrb[0].mxu0 %v1769
    %v1983 = vpop.f32.mrb[0].mxu0
    %v1984 = vadd.f32 0.0, %v1983
    %v1985 = vpop.f32.mrb[0].mxu0
    %1986 = vmatprep.mubr.f32.mxu0 0.0
    %1987 = vmatmul.mubr.f32.gmra.mrb[0].mxu0 %v1772
    %v1988 = vpop.f32.mrb[0].mxu0
    %v1989 = vadd.f32 0.0, %v1988
    %v1990 = vpop.f32.mrb[0].mxu0
    %1991 = vmatprep.mubr.f32.mxu0 0.0
    %1992 = vmatmul.mubr.f32.gmra.mrb[0].mxu0 %v1775
    %v1993 = vpop.f32.mrb[0].mxu0
    %v1994 = vadd.f32 0.0, %v1993
    %v1995 = vpop.f32.mrb[0].mxu0
    %1996 = vmatprep.mubr.f32.mxu0 0.0
    %1997 = vmatmul.mubr.f32.gmra.mrb[0].mxu0 %v1778
    %v1998 = vpop.f32.mrb[0].mxu0
    %v1999 = vadd.f32 0.0, %v1998
    %v2000 = vpop.f32.mrb[0].mxu0
    %2001 = vmatprep.mubr.f32.mxu0 0.0
    %2002 = vmatmul.mubr.f32.gmra.mrb[0].mxu0 %v1781
    %v2003 = vpop.f32.mrb[0].mxu0
    %v2004 = vadd.f32 0.0, %v2003
    %v2005 = vpop.f32.mrb[0].mxu0
    %2006 = vmatprep.mubr.f32.mxu0 0.0
    %2007 = vmatmul.mubr.f32.gmra.mrb[0].mxu0 %v1784
    %v2008 = vpop.f32.mrb[0].mxu0
    %v2009 = vadd.f32 0.0, %v2008
    %v2010 = vpop.f32.mrb[0].mxu0
    %2011 = vmatprep.mubr.f32.mxu0 0.0
    %2012 = vmatmul.mubr.f32.gmra.mrb[0].mxu0 %v1787
    %v2013 = vpop.f32.mrb[0].mxu0
    %v2014 = vadd.f32 0.0, %v2013
    %v2015 = vpop.f32.mrb[0].mxu0
    %2016 = vdwg.mxu0
    %2017 = vst.msk [vmem:[#allocation5 + $0x40] sm:$0xff] %vm1894, %v1979
    %2018 = vst.msk [vmem:[#allocation5 + $0x48] sm:$0xff] %vm1894, %v1984
    %2019 = vst.msk [vmem:[#allocation5 + $0x50] sm:$0xff] %vm1894, %v1989
    %2020 = vst.msk [vmem:[#allocation5 + $0x58] sm:$0xff] %vm1894, %v1994
    %2021 = vst.msk [vmem:[#allocation5 + $0x60] sm:$0xff] %vm1894, %v1999
    %2022 = vst.msk [vmem:[#allocation5 + $0x68] sm:$0xff] %vm1894, %v2004
    %2023 = vst.msk [vmem:[#allocation5 + $0x70] sm:$0xff] %vm1894, %v2009
    %2024 = vst.msk [vmem:[#allocation5 + $0x78] sm:$0xff] %vm1894, %v2014
    %s2025 = scalar_lea.vmem %s17, 128
    %v2026 = vld [vmem:[%s2025] sm:$0xff]
    %v2027 = vld [vmem:[%s2025 + $0x8] sm:$0xff]
    %v2028 = vld [vmem:[%s2025 + $0x10] sm:$0xff]
    %v2029 = vld [vmem:[%s2025 + $0x18] sm:$0xff]
    %v2030 = vld [vmem:[%s2025 + $0x20] sm:$0xff]
    %v2031 = vld [vmem:[%s2025 + $0x28] sm:$0xff]
    %v2032 = vld [vmem:[%s2025 + $0x30] sm:$0xff]
    %v2033 = vld [vmem:[%s2025 + $0x38] sm:$0xff]
    %2034 = vmatprep.subr.mxu0 0.0
    %2035 = vmatpush1.msra.mxu0 %v2026
    %2036 = vmatprep.subr.mxu0 0.0
    %2037 = vmatpush1.msra.mxu0 %v2027
    %2038 = vmatprep.subr.mxu0 0.0
    %2039 = vmatpush1.msra.mxu0 %v2028
    %2040 = vmatprep.subr.mxu0 0.0
    %2041 = vmatpush1.msra.mxu0 %v2029
    %2042 = vmatprep.subr.mxu0 0.0
    %2043 = vmatpush1.msra.mxu0 %v2030
    %2044 = vmatprep.subr.mxu0 0.0
    %2045 = vmatpush1.msra.mxu0 %v2031
    %2046 = vmatprep.subr.mxu0 0.0
    %2047 = vmatpush1.msra.mxu0 %v2032
    %2048 = vmatprep.subr.mxu0 0.0
    %2049 = vmatpush1.msra.mxu0 %v2033
    %2050 = vmatprep.subr.mxu0 0.0
    %2051 = vmatpush1.msra.mxu0 0.0
    %2052 = vmatprep.subr.mxu0 0.0
    %2053 = vmatpush1.msra.mxu0 0.0
    %2054 = vmatprep.subr.mxu0 0.0
    %2055 = vmatpush1.msra.mxu0 0.0
    %2056 = vmatprep.subr.mxu0 0.0
    %2057 = vmatpush1.msra.mxu0 0.0
    %2058 = vmatprep.subr.mxu0 0.0
    %2059 = vmatpush1.msra.mxu0 0.0
    %2060 = vmatprep.subr.mxu0 0.0
    %2061 = vmatpush1.msra.mxu0 0.0
    %2062 = vmatprep.subr.mxu0 0.0
    %2063 = vmatpush1.msra.mxu0 0.0
    %2064 = vmatprep.subr.mxu0 0.0
    %2065 = vmatpush1.msra.mxu0 0.0
    %2066 = vmatprep.subr.mxu0 0.0
    %2067 = vmatpush1.msra.mxu0 0.0
    %2068 = vmatprep.subr.mxu0 0.0
    %2069 = vmatpush1.msra.mxu0 0.0
    %2070 = vmatprep.subr.mxu0 0.0
    %2071 = vmatpush1.msra.mxu0 0.0
    %2072 = vmatprep.subr.mxu0 0.0
    %2073 = vmatpush1.msra.mxu0 0.0
    %2074 = vmatprep.subr.mxu0 0.0
    %2075 = vmatpush1.msra.mxu0 0.0
    %2076 = vmatprep.subr.mxu0 0.0
    %2077 = vmatpush1.msra.mxu0 0.0
    %2078 = vmatprep.subr.mxu0 0.0
    %2079 = vmatpush1.msra.mxu0 0.0
    %2080 = vmatprep.subr.mxu0 0.0
    %2081 = vmatpush1.msra.mxu0 0.0
    %2082 = vmatprep.subr.mxu0 0.0
    %2083 = vmatpush1.msra.mxu0 0.0
    %2084 = vmatprep.subr.mxu0 0.0
    %2085 = vmatpush1.msra.mxu0 0.0
    %2086 = vmatprep.subr.mxu0 0.0
    %2087 = vmatpush1.msra.mxu0 0.0
    %2088 = vmatprep.subr.mxu0 0.0
    %2089 = vmatpush1.msra.mxu0 0.0
    %2090 = vmatprep.subr.mxu0 0.0
    %2091 = vmatpush1.msra.mxu0 0.0
    %2092 = vmatprep.subr.mxu0 0.0
    %2093 = vmatpush1.msra.mxu0 0.0
    %2094 = vmatprep.subr.mxu0 0.0
    %2095 = vmatpush1.msra.mxu0 0.0
    %2096 = vmatprep.subr.mxu0 0.0
    %2097 = vmatpush1.msra.mxu0 0.0
    %2098 = vmatprep.mubr.f32.mxu0 0.0
    %2099 = vmatmul.mubr.f32.gmra.mrb[0].mxu0 %v1766
    %v2100 = vpop.f32.mrb[0].mxu0
    %v2101 = vadd.f32 0.0, %v2100
    %v2102 = vpop.f32.mrb[0].mxu0
    %2103 = vmatprep.mubr.f32.mxu0 0.0
    %2104 = vmatmul.mubr.f32.gmra.mrb[0].mxu0 %v1769
    %v2105 = vpop.f32.mrb[0].mxu0
    %v2106 = vadd.f32 0.0, %v2105
    %v2107 = vpop.f32.mrb[0].mxu0
    %2108 = vmatprep.mubr.f32.mxu0 0.0
    %2109 = vmatmul.mubr.f32.gmra.mrb[0].mxu0 %v1772
    %v2110 = vpop.f32.mrb[0].mxu0
    %v2111 = vadd.f32 0.0, %v2110
    %v2112 = vpop.f32.mrb[0].mxu0
    %2113 = vmatprep.mubr.f32.mxu0 0.0
    %2114 = vmatmul.mubr.f32.gmra.mrb[0].mxu0 %v1775
    %v2115 = vpop.f32.mrb[0].mxu0
    %v2116 = vadd.f32 0.0, %v2115
    %v2117 = vpop.f32.mrb[0].mxu0
    %2118 = vmatprep.mubr.f32.mxu0 0.0
    %2119 = vmatmul.mubr.f32.gmra.mrb[0].mxu0 %v1778
    %v2120 = vpop.f32.mrb[0].mxu0
    %v2121 = vadd.f32 0.0, %v2120
    %v2122 = vpop.f32.mrb[0].mxu0
    %2123 = vmatprep.mubr.f32.mxu0 0.0
    %2124 = vmatmul.mubr.f32.gmra.mrb[0].mxu0 %v1781
    %v2125 = vpop.f32.mrb[0].mxu0
    %v2126 = vadd.f32 0.0, %v2125
    %v2127 = vpop.f32.mrb[0].mxu0
    %2128 = vmatprep.mubr.f32.mxu0 0.0
    %2129 = vmatmul.mubr.f32.gmra.mrb[0].mxu0 %v1784
    %v2130 = vpop.f32.mrb[0].mxu0
    %v2131 = vadd.f32 0.0, %v2130
    %v2132 = vpop.f32.mrb[0].mxu0
    %2133 = vmatprep.mubr.f32.mxu0 0.0
    %2134 = vmatmul.mubr.f32.gmra.mrb[0].mxu0 %v1787
    %v2135 = vpop.f32.mrb[0].mxu0
    %v2136 = vadd.f32 0.0, %v2135
    %v2137 = vpop.f32.mrb[0].mxu0
    %2138 = vdwg.mxu0
    %2139 = vst.msk [vmem:[#allocation5 + $0x80] sm:$0xff] %vm1894, %v2101
    %2140 = vst.msk [vmem:[#allocation5 + $0x88] sm:$0xff] %vm1894, %v2106
    %2141 = vst.msk [vmem:[#allocation5 + $0x90] sm:$0xff] %vm1894, %v2111
    %2142 = vst.msk [vmem:[#allocation5 + $0x98] sm:$0xff] %vm1894, %v2116
    %2143 = vst.msk [vmem:[#allocation5 + $0xa0] sm:$0xff] %vm1894, %v2121
    %2144 = vst.msk [vmem:[#allocation5 + $0xa8] sm:$0xff] %vm1894, %v2126
    %2145 = vst.msk [vmem:[#allocation5 + $0xb0] sm:$0xff] %vm1894, %v2131
    %2146 = vst.msk [vmem:[#allocation5 + $0xb8] sm:$0xff] %vm1894, %v2136
    %s2147 = scalar_lea.vmem %s17, 192
    %v2148 = vld [vmem:[%s2147] sm:$0xff]
    %v2149 = vld [vmem:[%s2147 + $0x8] sm:$0xff]
    %v2150 = vld [vmem:[%s2147 + $0x10] sm:$0xff]
    %v2151 = vld [vmem:[%s2147 + $0x18] sm:$0xff]
    %v2152 = vld [vmem:[%s2147 + $0x20] sm:$0xff]
    %v2153 = vld [vmem:[%s2147 + $0x28] sm:$0xff]
    %v2154 = vld [vmem:[%s2147 + $0x30] sm:$0xff]
    %v2155 = vld [vmem:[%s2147 + $0x38] sm:$0xff]
    %2156 = vmatprep.subr.mxu0 0.0
    %2157 = vmatpush1.msra.mxu0 %v2148
    %2158 = vmatprep.subr.mxu0 0.0
    %2159 = vmatpush1.msra.mxu0 %v2149
    %2160 = vmatprep.subr.mxu0 0.0
    %2161 = vmatpush1.msra.mxu0 %v2150
    %2162 = vmatprep.subr.mxu0 0.0
    %2163 = vmatpush1.msra.mxu0 %v2151
    %2164 = vmatprep.subr.mxu0 0.0
    %2165 = vmatpush1.msra.mxu0 %v2152
    %2166 = vmatprep.subr.mxu0 0.0
    %2167 = vmatpush1.msra.mxu0 %v2153
    %2168 = vmatprep.subr.mxu0 0.0
    %2169 = vmatpush1.msra.mxu0 %v2154
    %2170 = vmatprep.subr.mxu0 0.0
    %2171 = vmatpush1.msra.mxu0 %v2155
    %2172 = vmatprep.subr.mxu0 0.0
    %2173 = vmatpush1.msra.mxu0 0.0
    %2174 = vmatprep.subr.mxu0 0.0
    %2175 = vmatpush1.msra.mxu0 0.0
    %2176 = vmatprep.subr.mxu0 0.0
    %2177 = vmatpush1.msra.mxu0 0.0
    %2178 = vmatprep.subr.mxu0 0.0
    %2179 = vmatpush1.msra.mxu0 0.0
    %2180 = vmatprep.subr.mxu0 0.0
    %2181 = vmatpush1.msra.mxu0 0.0
    %2182 = vmatprep.subr.mxu0 0.0
    %2183 = vmatpush1.msra.mxu0 0.0
    %2184 = vmatprep.subr.mxu0 0.0
    %2185 = vmatpush1.msra.mxu0 0.0
    %2186 = vmatprep.subr.mxu0 0.0
    %2187 = vmatpush1.msra.mxu0 0.0
    %2188 = vmatprep.subr.mxu0 0.0
    %2189 = vmatpush1.msra.mxu0 0.0
    %2190 = vmatprep.subr.mxu0 0.0
    %2191 = vmatpush1.msra.mxu0 0.0
    %2192 = vmatprep.subr.mxu0 0.0
    %2193 = vmatpush1.msra.mxu0 0.0
    %2194 = vmatprep.subr.mxu0 0.0
    %2195 = vmatpush1.msra.mxu0 0.0
    %2196 = vmatprep.subr.mxu0 0.0
    %2197 = vmatpush1.msra.mxu0 0.0
    %2198 = vmatprep.subr.mxu0 0.0
    %2199 = vmatpush1.msra.mxu0 0.0
    %2200 = vmatprep.subr.mxu0 0.0
    %2201 = vmatpush1.msra.mxu0 0.0
    %2202 = vmatprep.subr.mxu0 0.0
    %2203 = vmatpush1.msra.mxu0 0.0
    %2204 = vmatprep.subr.mxu0 0.0
    %2205 = vmatpush1.msra.mxu0 0.0
    %2206 = vmatprep.subr.mxu0 0.0
    %2207 = vmatpush1.msra.mxu0 0.0
    %2208 = vmatprep.subr.mxu0 0.0
    %2209 = vmatpush1.msra.mxu0 0.0
    %2210 = vmatprep.subr.mxu0 0.0
    %2211 = vmatpush1.msra.mxu0 0.0
    %2212 = vmatprep.subr.mxu0 0.0
    %2213 = vmatpush1.msra.mxu0 0.0
    %2214 = vmatprep.subr.mxu0 0.0
    %2215 = vmatpush1.msra.mxu0 0.0
    %2216 = vmatprep.subr.mxu0 0.0
    %2217 = vmatpush1.msra.mxu0 0.0
    %2218 = vmatprep.subr.mxu0 0.0
    %2219 = vmatpush1.msra.mxu0 0.0
    %2220 = vmatprep.mubr.f32.mxu0 0.0
    %2221 = vmatmul.mubr.f32.gmra.mrb[0].mxu0 %v1766
    %v2222 = vpop.f32.mrb[0].mxu0
    %v2223 = vadd.f32 0.0, %v2222
    %v2224 = vpop.f32.mrb[0].mxu0
    %2225 = vmatprep.mubr.f32.mxu0 0.0
    %2226 = vmatmul.mubr.f32.gmra.mrb[0].mxu0 %v1769
    %v2227 = vpop.f32.mrb[0].mxu0
    %v2228 = vadd.f32 0.0, %v2227
    %v2229 = vpop.f32.mrb[0].mxu0
    %2230 = vmatprep.mubr.f32.mxu0 0.0
    %2231 = vmatmul.mubr.f32.gmra.mrb[0].mxu0 %v1772
    %v2232 = vpop.f32.mrb[0].mxu0
    %v2233 = vadd.f32 0.0, %v2232
    %v2234 = vpop.f32.mrb[0].mxu0
    %2235 = vmatprep.mubr.f32.mxu0 0.0
    %2236 = vmatmul.mubr.f32.gmra.mrb[0].mxu0 %v1775
    %v2237 = vpop.f32.mrb[0].mxu0
    %v2238 = vadd.f32 0.0, %v2237
    %v2239 = vpop.f32.mrb[0].mxu0
    %2240 = vmatprep.mubr.f32.mxu0 0.0
    %2241 = vmatmul.mubr.f32.gmra.mrb[0].mxu0 %v1778
    %v2242 = vpop.f32.mrb[0].mxu0
    %v2243 = vadd.f32 0.0, %v2242
    %v2244 = vpop.f32.mrb[0].mxu0
    %2245 = vmatprep.mubr.f32.mxu0 0.0
    %2246 = vmatmul.mubr.f32.gmra.mrb[0].mxu0 %v1781
    %v2247 = vpop.f32.mrb[0].mxu0
    %v2248 = vadd.f32 0.0, %v2247
    %v2249 = vpop.f32.mrb[0].mxu0
    %2250 = vmatprep.mubr.f32.mxu0 0.0
    %2251 = vmatmul.mubr.f32.gmra.mrb[0].mxu0 %v1784
    %v2252 = vpop.f32.mrb[0].mxu0
    %v2253 = vadd.f32 0.0, %v2252
    %v2254 = vpop.f32.mrb[0].mxu0
    %2255 = vmatprep.mubr.f32.mxu0 0.0
    %2256 = vmatmul.mubr.f32.gmra.mrb[0].mxu0 %v1787
    %v2257 = vpop.f32.mrb[0].mxu0
    %v2258 = vadd.f32 0.0, %v2257
    %v2259 = vpop.f32.mrb[0].mxu0
    %2260 = vdwg.mxu0
    %2261 = vst.msk [vmem:[#allocation5 + $0xc0] sm:$0xff] %vm1894, %v2223
    %2262 = vst.msk [vmem:[#allocation5 + $0xc8] sm:$0xff] %vm1894, %v2228
    %2263 = vst.msk [vmem:[#allocation5 + $0xd0] sm:$0xff] %vm1894, %v2233
    %2264 = vst.msk [vmem:[#allocation5 + $0xd8] sm:$0xff] %vm1894, %v2238
    %2265 = vst.msk [vmem:[#allocation5 + $0xe0] sm:$0xff] %vm1894, %v2243
    %2266 = vst.msk [vmem:[#allocation5 + $0xe8] sm:$0xff] %vm1894, %v2248
    %2267 = vst.msk [vmem:[#allocation5 + $0xf0] sm:$0xff] %vm1894, %v2253
    %2268 = vst.msk [vmem:[#allocation5 + $0xf8] sm:$0xff] %vm1894, %v2258
    %v2269 = vld [vmem:[#allocation5] sm:$0xff]
    %v2270 = vld [vmem:[#allocation5 + $0x8] sm:$0xff]
    %v2271 = vld [vmem:[#allocation5 + $0x10] sm:$0xff]
    %v2272 = vld [vmem:[#allocation5 + $0x18] sm:$0xff]
    %v2273 = vld [vmem:[#allocation5 + $0x20] sm:$0xff]
    %v2274 = vld [vmem:[#allocation5 + $0x28] sm:$0xff]
    %v2275 = vld [vmem:[#allocation5 + $0x30] sm:$0xff]
    %v2276 = vld [vmem:[#allocation5 + $0x38] sm:$0xff]
    %v2277 = vld [vmem:[#allocation5 + $0x40] sm:$0xff]
    %v2278 = vld [vmem:[#allocation5 + $0x48] sm:$0xff]
    %v2279 = vld [vmem:[#allocation5 + $0x50] sm:$0xff]
    %v2280 = vld [vmem:[#allocation5 + $0x58] sm:$0xff]
    %v2281 = vld [vmem:[#allocation5 + $0x60] sm:$0xff]
    %v2282 = vld [vmem:[#allocation5 + $0x68] sm:$0xff]
    %v2283 = vld [vmem:[#allocation5 + $0x70] sm:$0xff]
    %v2284 = vld [vmem:[#allocation5 + $0x78] sm:$0xff]
    %v2285 = vld [vmem:[#allocation5 + $0x80] sm:$0xff]
    %v2286 = vld [vmem:[#allocation5 + $0x88] sm:$0xff]
    %v2287 = vld [vmem:[#allocation5 + $0x90] sm:$0xff]
    %v2288 = vld [vmem:[#allocation5 + $0x98] sm:$0xff]
    %v2289 = vld [vmem:[#allocation5 + $0xa0] sm:$0xff]
    %v2290 = vld [vmem:[#allocation5 + $0xa8] sm:$0xff]
    %v2291 = vld [vmem:[#allocation5 + $0xb0] sm:$0xff]
    %v2292 = vld [vmem:[#allocation5 + $0xb8] sm:$0xff]
    %v2293 = vld [vmem:[#allocation5 + $0xc0] sm:$0xff]
    %v2294 = vld [vmem:[#allocation5 + $0xc8] sm:$0xff]
    %v2295 = vld [vmem:[#allocation5 + $0xd0] sm:$0xff]
    %v2296 = vld [vmem:[#allocation5 + $0xd8] sm:$0xff]
    %v2297 = vld [vmem:[#allocation5 + $0xe0] sm:$0xff]
    %v2298 = vld [vmem:[#allocation5 + $0xe8] sm:$0xff]
    %v2299 = vld [vmem:[#allocation5 + $0xf0] sm:$0xff]
    %v2300 = vld [vmem:[#allocation5 + $0xf8] sm:$0xff]
    %v2301 = vsel %vm1894, %v2269, 0.0
    %v2302 = vsel %vm1894, %v2270, 0.0
    %v2303 = vadd.f32 %v2301, %v2302
    %v2304 = vsel %vm1894, %v2271, 0.0
    %v2305 = vadd.f32 %v2303, %v2304
    %v2306 = vsel %vm1894, %v2272, 0.0
    %v2307 = vadd.f32 %v2305, %v2306
    %v2308 = vsel %vm1894, %v2273, 0.0
    %v2309 = vadd.f32 %v2307, %v2308
    %v2310 = vsel %vm1894, %v2274, 0.0
    %v2311 = vadd.f32 %v2309, %v2310
    %v2312 = vsel %vm1894, %v2275, 0.0
    %v2313 = vadd.f32 %v2311, %v2312
    %v2314 = vsel %vm1894, %v2276, 0.0
    %v2315 = vadd.f32 %v2313, %v2314
    %v2316 = vsel %vm1894, %v2277, 0.0
    %v2317 = vadd.f32 %v2315, %v2316
    %v2318 = vsel %vm1894, %v2278, 0.0
    %v2319 = vadd.f32 %v2317, %v2318
    %v2320 = vsel %vm1894, %v2279, 0.0
    %v2321 = vadd.f32 %v2319, %v2320
    %v2322 = vsel %vm1894, %v2280, 0.0
    %v2323 = vadd.f32 %v2321, %v2322
    %v2324 = vsel %vm1894, %v2281, 0.0
    %v2325 = vadd.f32 %v2323, %v2324
    %v2326 = vsel %vm1894, %v2282, 0.0
    %v2327 = vadd.f32 %v2325, %v2326
    %v2328 = vsel %vm1894, %v2283, 0.0
    %v2329 = vadd.f32 %v2327, %v2328
    %v2330 = vsel %vm1894, %v2284, 0.0
    %v2331 = vadd.f32 %v2329, %v2330
    %v2332 = vsel %vm1894, %v2285, 0.0
    %v2333 = vadd.f32 %v2331, %v2332
    %v2334 = vsel %vm1894, %v2286, 0.0
    %v2335 = vadd.f32 %v2333, %v2334
    %v2336 = vsel %vm1894, %v2287, 0.0
    %v2337 = vadd.f32 %v2335, %v2336
    %v2338 = vsel %vm1894, %v2288, 0.0
    %v2339 = vadd.f32 %v2337, %v2338
    %v2340 = vsel %vm1894, %v2289, 0.0
    %v2341 = vadd.f32 %v2339, %v2340
    %v2342 = vsel %vm1894, %v2290, 0.0
    %v2343 = vadd.f32 %v2341, %v2342
    %v2344 = vsel %vm1894, %v2291, 0.0
    %v2345 = vadd.f32 %v2343, %v2344
    %v2346 = vsel %vm1894, %v2292, 0.0
    %v2347 = vadd.f32 %v2345, %v2346
    %v2348 = vsel %vm1894, %v2293, 0.0
    %v2349 = vadd.f32 %v2347, %v2348
    %v2350 = vsel %vm1894, %v2294, 0.0
    %v2351 = vadd.f32 %v2349, %v2350
    %v2352 = vsel %vm1894, %v2295, 0.0
    %v2353 = vadd.f32 %v2351, %v2352
    %v2354 = vsel %vm1894, %v2296, 0.0
    %v2355 = vadd.f32 %v2353, %v2354
    %v2356 = vsel %vm1894, %v2297, 0.0
    %v2357 = vadd.f32 %v2355, %v2356
    %v2358 = vsel %vm1894, %v2298, 0.0
    %v2359 = vadd.f32 %v2357, %v2358
    %v2360 = vsel %vm1894, %v2299, 0.0
    %v2361 = vadd.f32 %v2359, %v2360
    %v2362 = vsel %vm1894, %v2300, 0.0
    %v2363 = vadd.f32 %v2361, %v2362
    %v2364 = vrot.slane %v2363, 4
    %v2365 = vadd.f32 %v2363, %v2364
    %v2366 = vrot.slane %v2365, 2
    %v2367 = vadd.f32 %v2365, %v2366
    %v2368 = vrot.slane %v2367, 1
    %v2369 = vadd.f32 %v2367, %v2368
    %v2370 = vmul.f32 %v2369, 0.00390625
    %v2371 = vmul.f32 %v2269, %v2269
    %v2372 = vmul.f32 %v2270, %v2270
    %v2373 = vmul.f32 %v2271, %v2271
    %v2374 = vmul.f32 %v2272, %v2272
    %v2375 = vmul.f32 %v2273, %v2273
    %v2376 = vmul.f32 %v2274, %v2274
    %v2377 = vmul.f32 %v2275, %v2275
    %v2378 = vmul.f32 %v2276, %v2276
    %v2379 = vmul.f32 %v2277, %v2277
    %v2380 = vmul.f32 %v2278, %v2278
    %v2381 = vmul.f32 %v2279, %v2279
    %v2382 = vmul.f32 %v2280, %v2280
    %v2383 = vmul.f32 %v2281, %v2281
    %v2384 = vmul.f32 %v2282, %v2282
    %v2385 = vmul.f32 %v2283, %v2283
    %v2386 = vmul.f32 %v2284, %v2284
    %v2387 = vmul.f32 %v2285, %v2285
    %v2388 = vmul.f32 %v2286, %v2286
    %v2389 = vmul.f32 %v2287, %v2287
    %v2390 = vmul.f32 %v2288, %v2288
    %v2391 = vmul.f32 %v2289, %v2289
    %v2392 = vmul.f32 %v2290, %v2290
    %v2393 = vmul.f32 %v2291, %v2291
    %v2394 = vmul.f32 %v2292, %v2292
    %v2395 = vmul.f32 %v2293, %v2293
    %v2396 = vmul.f32 %v2294, %v2294
    %v2397 = vmul.f32 %v2295, %v2295
    %v2398 = vmul.f32 %v2296, %v2296
    %v2399 = vmul.f32 %v2297, %v2297
    %v2400 = vmul.f32 %v2298, %v2298
    %v2401 = vmul.f32 %v2299, %v2299
    %v2402 = vmul.f32 %v2300, %v2300
    %v2403 = vsel %vm1894, %v2371, 0.0
    %v2404 = vsel %vm1894, %v2372, 0.0
    %v2405 = vadd.f32 %v2403, %v2404
    %v2406 = vsel %vm1894, %v2373, 0.0
    %v2407 = vadd.f32 %v2405, %v2406
    %v2408 = vsel %vm1894, %v2374, 0.0
    %v2409 = vadd.f32 %v2407, %v2408
    %v2410 = vsel %vm1894, %v2375, 0.0
    %v2411 = vadd.f32 %v2409, %v2410
    %v2412 = vsel %vm1894, %v2376, 0.0
    %v2413 = vadd.f32 %v2411, %v2412
    %v2414 = vsel %vm1894, %v2377, 0.0
    %v2415 = vadd.f32 %v2413, %v2414
    %v2416 = vsel %vm1894, %v2378, 0.0
    %v2417 = vadd.f32 %v2415, %v2416
    %v2418 = vsel %vm1894, %v2379, 0.0
    %v2419 = vadd.f32 %v2417, %v2418
    %v2420 = vsel %vm1894, %v2380, 0.0
    %v2421 = vadd.f32 %v2419, %v2420
    %v2422 = vsel %vm1894, %v2381, 0.0
    %v2423 = vadd.f32 %v2421, %v2422
    %v2424 = vsel %vm1894, %v2382, 0.0
    %v2425 = vadd.f32 %v2423, %v2424
    %v2426 = vsel %vm1894, %v2383, 0.0
    %v2427 = vadd.f32 %v2425, %v2426
    %v2428 = vsel %vm1894, %v2384, 0.0
    %v2429 = vadd.f32 %v2427, %v2428
    %v2430 = vsel %vm1894, %v2385, 0.0
    %v2431 = vadd.f32 %v2429, %v2430
    %v2432 = vsel %vm1894, %v2386, 0.0
    %v2433 = vadd.f32 %v2431, %v2432
    %v2434 = vsel %vm1894, %v2387, 0.0
    %v2435 = vadd.f32 %v2433, %v2434
    %v2436 = vsel %vm1894, %v2388, 0.0
    %v2437 = vadd.f32 %v2435, %v2436
    %v2438 = vsel %vm1894, %v2389, 0.0
    %v2439 = vadd.f32 %v2437, %v2438
    %v2440 = vsel %vm1894, %v2390, 0.0
    %v2441 = vadd.f32 %v2439, %v2440
    %v2442 = vsel %vm1894, %v2391, 0.0
    %v2443 = vadd.f32 %v2441, %v2442
    %v2444 = vsel %vm1894, %v2392, 0.0
    %v2445 = vadd.f32 %v2443, %v2444
    %v2446 = vsel %vm1894, %v2393, 0.0
    %v2447 = vadd.f32 %v2445, %v2446
    %v2448 = vsel %vm1894, %v2394, 0.0
    %v2449 = vadd.f32 %v2447, %v2448
    %v2450 = vsel %vm1894, %v2395, 0.0
    %v2451 = vadd.f32 %v2449, %v2450
    %v2452 = vsel %vm1894, %v2396, 0.0
    %v2453 = vadd.f32 %v2451, %v2452
    %v2454 = vsel %vm1894, %v2397, 0.0
    %v2455 = vadd.f32 %v2453, %v2454
    %v2456 = vsel %vm1894, %v2398, 0.0
    %v2457 = vadd.f32 %v2455, %v2456
    %v2458 = vsel %vm1894, %v2399, 0.0
    %v2459 = vadd.f32 %v2457, %v2458
    %v2460 = vsel %vm1894, %v2400, 0.0
    %v2461 = vadd.f32 %v2459, %v2460
    %v2462 = vsel %vm1894, %v2401, 0.0
    %v2463 = vadd.f32 %v2461, %v2462
    %v2464 = vsel %vm1894, %v2402, 0.0
    %v2465 = vadd.f32 %v2463, %v2464
    %v2466 = vrot.slane %v2465, 4
    %v2467 = vadd.f32 %v2465, %v2466
    %v2468 = vrot.slane %v2467, 2
    %v2469 = vadd.f32 %v2467, %v2468
    %v2470 = vrot.slane %v2469, 1
    %v2471 = vadd.f32 %v2469, %v2470
    %v2472 = vmul.f32 %v2471, 0.00390625
    %v2473 = vmul.f32 %v2370, %v2370
    %v2474 = vsub.f32 %v2472, %v2473
    %v2475 = vld [vmem:[%s18] sm:$0x1]
    %v2476 = vadd.f32 %v2474, 1e-05
    %v2477 = vrsqrt.pop %v2476
    %v2478 = vmul.f32 %v2475, %v2477
    %v2479 = vld [vmem:[%s19] sm:$0x1]
    %v2480 = vmul.f32 %v2370, %v2478
    %v2481 = vsub.f32 %v2479, %v2480
    %v2483 = vlaneseq
    %v2484 = vshrl.u32 %v2483, 7
    %v2485 = vsub.s32 0, %v2484
    %v2486 = vrot.slane %v2478, %v2485
    %v2488 = vmul.f32 %v2269, %v2486
    %v2489 = vmul.f32 %v2270, %v2486
    %v2490 = vmul.f32 %v2271, %v2486
    %v2491 = vmul.f32 %v2272, %v2486
    %v2492 = vmul.f32 %v2273, %v2486
    %v2493 = vmul.f32 %v2274, %v2486
    %v2494 = vmul.f32 %v2275, %v2486
    %v2495 = vmul.f32 %v2276, %v2486
    %v2496 = vmul.f32 %v2277, %v2486
    %v2497 = vmul.f32 %v2278, %v2486
    %v2498 = vmul.f32 %v2279, %v2486
    %v2499 = vmul.f32 %v2280, %v2486
    %v2500 = vmul.f32 %v2281, %v2486
    %v2501 = vmul.f32 %v2282, %v2486
    %v2502 = vmul.f32 %v2283, %v2486
    %v2503 = vmul.f32 %v2284, %v2486
    %v2504 = vmul.f32 %v2285, %v2486
    %v2505 = vmul.f32 %v2286, %v2486
    %v2506 = vmul.f32 %v2287, %v2486
    %v2507 = vmul.f32 %v2288, %v2486
    %v2508 = vmul.f32 %v2289, %v2486
    %v2509 = vmul.f32 %v2290, %v2486
    %v2510 = vmul.f32 %v2291, %v2486
    %v2511 = vmul.f32 %v2292, %v2486
    %v2512 = vmul.f32 %v2293, %v2486
    %v2513 = vmul.f32 %v2294, %v2486
    %v2514 = vmul.f32 %v2295, %v2486
    %v2515 = vmul.f32 %v2296, %v2486
    %v2516 = vmul.f32 %v2297, %v2486
    %v2517 = vmul.f32 %v2298, %v2486
    %v2518 = vmul.f32 %v2299, %v2486
    %v2519 = vmul.f32 %v2300, %v2486
    %v2521 = vlaneseq
    %v2522 = vshrl.u32 %v2521, 7
    %v2523 = vsub.s32 0, %v2522
    %v2524 = vrot.slane %v2481, %v2523
    %v2526 = vadd.f32 %v2488, %v2524
    %v2527 = vadd.f32 %v2489, %v2524
    %v2528 = vadd.f32 %v2490, %v2524
    %v2529 = vadd.f32 %v2491, %v2524
    %v2530 = vadd.f32 %v2492, %v2524
    %v2531 = vadd.f32 %v2493, %v2524
    %v2532 = vadd.f32 %v2494, %v2524
    %v2533 = vadd.f32 %v2495, %v2524
    %v2534 = vadd.f32 %v2496, %v2524
    %v2535 = vadd.f32 %v2497, %v2524
    %v2536 = vadd.f32 %v2498, %v2524
    %v2537 = vadd.f32 %v2499, %v2524
    %v2538 = vadd.f32 %v2500, %v2524
    %v2539 = vadd.f32 %v2501, %v2524
    %v2540 = vadd.f32 %v2502, %v2524
    %v2541 = vadd.f32 %v2503, %v2524
    %v2542 = vadd.f32 %v2504, %v2524
    %v2543 = vadd.f32 %v2505, %v2524
    %v2544 = vadd.f32 %v2506, %v2524
    %v2545 = vadd.f32 %v2507, %v2524
    %v2546 = vadd.f32 %v2508, %v2524
    %v2547 = vadd.f32 %v2509, %v2524
    %v2548 = vadd.f32 %v2510, %v2524
    %v2549 = vadd.f32 %v2511, %v2524
    %v2550 = vadd.f32 %v2512, %v2524
    %v2551 = vadd.f32 %v2513, %v2524
    %v2552 = vadd.f32 %v2514, %v2524
    %v2553 = vadd.f32 %v2515, %v2524
    %v2554 = vadd.f32 %v2516, %v2524
    %v2555 = vadd.f32 %v2517, %v2524
    %v2556 = vadd.f32 %v2518, %v2524
    %v2557 = vadd.f32 %v2519, %v2524
    %vm2558 = vcmp.ge.f32.partialorder %v2526, 0.0
    %vm2559 = vcmp.ge.f32.partialorder %v2527, 0.0
    %vm2560 = vcmp.ge.f32.partialorder %v2528, 0.0
    %vm2561 = vcmp.ge.f32.partialorder %v2529, 0.0
    %vm2562 = vcmp.ge.f32.partialorder %v2530, 0.0
    %vm2563 = vcmp.ge.f32.partialorder %v2531, 0.0
    %vm2564 = vcmp.ge.f32.partialorder %v2532, 0.0
    %vm2565 = vcmp.ge.f32.partialorder %v2533, 0.0
    %vm2566 = vcmp.ge.f32.partialorder %v2534, 0.0
    %vm2567 = vcmp.ge.f32.partialorder %v2535, 0.0
    %vm2568 = vcmp.ge.f32.partialorder %v2536, 0.0
    %vm2569 = vcmp.ge.f32.partialorder %v2537, 0.0
    %vm2570 = vcmp.ge.f32.partialorder %v2538, 0.0
    %vm2571 = vcmp.ge.f32.partialorder %v2539, 0.0
    %vm2572 = vcmp.ge.f32.partialorder %v2540, 0.0
    %vm2573 = vcmp.ge.f32.partialorder %v2541, 0.0
    %vm2574 = vcmp.ge.f32.partialorder %v2542, 0.0
    %vm2575 = vcmp.ge.f32.partialorder %v2543, 0.0
    %vm2576 = vcmp.ge.f32.partialorder %v2544, 0.0
    %vm2577 = vcmp.ge.f32.partialorder %v2545, 0.0
    %vm2578 = vcmp.ge.f32.partialorder %v2546, 0.0
    %vm2579 = vcmp.ge.f32.partialorder %v2547, 0.0
    %vm2580 = vcmp.ge.f32.partialorder %v2548, 0.0
    %vm2581 = vcmp.ge.f32.partialorder %v2549, 0.0
    %vm2582 = vcmp.ge.f32.partialorder %v2550, 0.0
    %vm2583 = vcmp.ge.f32.partialorder %v2551, 0.0
    %vm2584 = vcmp.ge.f32.partialorder %v2552, 0.0
    %vm2585 = vcmp.ge.f32.partialorder %v2553, 0.0
    %vm2586 = vcmp.ge.f32.partialorder %v2554, 0.0
    %vm2587 = vcmp.ge.f32.partialorder %v2555, 0.0
    %vm2588 = vcmp.ge.f32.partialorder %v2556, 0.0
    %vm2589 = vcmp.ge.f32.partialorder %v2557, 0.0
    %v2590 = vmul.f32 %v2526, 0.2
    %v2591 = vmul.f32 %v2527, 0.2
    %v2592 = vmul.f32 %v2528, 0.2
    %v2593 = vmul.f32 %v2529, 0.2
    %v2594 = vmul.f32 %v2530, 0.2
    %v2595 = vmul.f32 %v2531, 0.2
    %v2596 = vmul.f32 %v2532, 0.2
    %v2597 = vmul.f32 %v2533, 0.2
    %v2598 = vmul.f32 %v2534, 0.2
    %v2599 = vmul.f32 %v2535, 0.2
    %v2600 = vmul.f32 %v2536, 0.2
    %v2601 = vmul.f32 %v2537, 0.2
    %v2602 = vmul.f32 %v2538, 0.2
    %v2603 = vmul.f32 %v2539, 0.2
    %v2604 = vmul.f32 %v2540, 0.2
    %v2605 = vmul.f32 %v2541, 0.2
    %v2606 = vmul.f32 %v2542, 0.2
    %v2607 = vmul.f32 %v2543, 0.2
    %v2608 = vmul.f32 %v2544, 0.2
    %v2609 = vmul.f32 %v2545, 0.2
    %v2610 = vmul.f32 %v2546, 0.2
    %v2611 = vmul.f32 %v2547, 0.2
    %v2612 = vmul.f32 %v2548, 0.2
    %v2613 = vmul.f32 %v2549, 0.2
    %v2614 = vmul.f32 %v2550, 0.2
    %v2615 = vmul.f32 %v2551, 0.2
    %v2616 = vmul.f32 %v2552, 0.2
    %v2617 = vmul.f32 %v2553, 0.2
    %v2618 = vmul.f32 %v2554, 0.2
    %v2619 = vmul.f32 %v2555, 0.2
    %v2620 = vmul.f32 %v2556, 0.2
    %v2621 = vmul.f32 %v2557, 0.2
    %v2622 = vsel %vm2558, %v2526, %v2590
    %v2623 = vsel %vm2559, %v2527, %v2591
    %v2624 = vsel %vm2560, %v2528, %v2592
    %v2625 = vsel %vm2561, %v2529, %v2593
    %v2626 = vsel %vm2562, %v2530, %v2594
    %v2627 = vsel %vm2563, %v2531, %v2595
    %v2628 = vsel %vm2564, %v2532, %v2596
    %v2629 = vsel %vm2565, %v2533, %v2597
    %v2630 = vsel %vm2566, %v2534, %v2598
    %v2631 = vsel %vm2567, %v2535, %v2599
    %v2632 = vsel %vm2568, %v2536, %v2600
    %v2633 = vsel %vm2569, %v2537, %v2601
    %v2634 = vsel %vm2570, %v2538, %v2602
    %v2635 = vsel %vm2571, %v2539, %v2603
    %v2636 = vsel %vm2572, %v2540, %v2604
    %v2637 = vsel %vm2573, %v2541, %v2605
    %v2638 = vsel %vm2574, %v2542, %v2606
    %v2639 = vsel %vm2575, %v2543, %v2607
    %v2640 = vsel %vm2576, %v2544, %v2608
    %v2641 = vsel %vm2577, %v2545, %v2609
    %v2642 = vsel %vm2578, %v2546, %v2610
    %v2643 = vsel %vm2579, %v2547, %v2611
    %v2644 = vsel %vm2580, %v2548, %v2612
    %v2645 = vsel %vm2581, %v2549, %v2613
    %v2646 = vsel %vm2582, %v2550, %v2614
    %v2647 = vsel %vm2583, %v2551, %v2615
    %v2648 = vsel %vm2584, %v2552, %v2616
    %v2649 = vsel %vm2585, %v2553, %v2617
    %v2650 = vsel %vm2586, %v2554, %v2618
    %v2651 = vsel %vm2587, %v2555, %v2619
    %v2652 = vsel %vm2588, %v2556, %v2620
    %v2653 = vsel %vm2589, %v2557, %v2621
    %v2654 = vld [vmem:[%s20] sm:$0xff]
    %v2655 = vld [vmem:[%s20 + $0x8] sm:$0xff]
    %v2656 = vld [vmem:[%s20 + $0x10] sm:$0xff]
    %v2657 = vld [vmem:[%s20 + $0x18] sm:$0xff]
    %v2659 = vsel %vm1894, %v2622, 0
    %v2662 = vsel %vm1894, %v2623, 0
    %v2665 = vsel %vm1894, %v2624, 0
    %v2668 = vsel %vm1894, %v2625, 0
    %v2671 = vsel %vm1894, %v2626, 0
    %v2674 = vsel %vm1894, %v2627, 0
    %v2677 = vsel %vm1894, %v2628, 0
    %v2680 = vsel %vm1894, %v2629, 0
    %v2683 = vsel %vm1894, %v2630, 0
    %v2686 = vsel %vm1894, %v2631, 0
    %v2689 = vsel %vm1894, %v2632, 0
    %v2692 = vsel %vm1894, %v2633, 0
    %v2695 = vsel %vm1894, %v2634, 0
    %v2698 = vsel %vm1894, %v2635, 0
    %v2701 = vsel %vm1894, %v2636, 0
    %v2704 = vsel %vm1894, %v2637, 0
    %v2707 = vsel %vm1894, %v2638, 0
    %v2710 = vsel %vm1894, %v2639, 0
    %v2713 = vsel %vm1894, %v2640, 0
    %v2716 = vsel %vm1894, %v2641, 0
    %v2719 = vsel %vm1894, %v2642, 0
    %v2722 = vsel %vm1894, %v2643, 0
    %v2725 = vsel %vm1894, %v2644, 0
    %v2728 = vsel %vm1894, %v2645, 0
    %v2731 = vsel %vm1894, %v2646, 0
    %v2734 = vsel %vm1894, %v2647, 0
    %v2737 = vsel %vm1894, %v2648, 0
    %v2740 = vsel %vm1894, %v2649, 0
    %v2743 = vsel %vm1894, %v2650, 0
    %v2746 = vsel %vm1894, %v2651, 0
    %v2749 = vsel %vm1894, %v2652, 0
    %v2752 = vsel %vm1894, %v2653, 0
    %2754 = vmatprep.subr.mxu0 0.0
    %2755 = vmatpush1.msra.mxu0 %v2654
    %2756 = vmatprep.subr.mxu0 0.0
    %2757 = vmatpush1.msra.mxu0 %v2655
    %2758 = vmatprep.subr.mxu0 0.0
    %2759 = vmatpush1.msra.mxu0 %v2656
    %2760 = vmatprep.subr.mxu0 0.0
    %2761 = vmatpush1.msra.mxu0 %v2657
    %2762 = vmatprep.subr.mxu0 0.0
    %2763 = vmatpush1.msra.mxu0 0.0
    %2764 = vmatprep.subr.mxu0 0.0
    %2765 = vmatpush1.msra.mxu0 0.0
    %2766 = vmatprep.subr.mxu0 0.0
    %2767 = vmatpush1.msra.mxu0 0.0
    %2768 = vmatprep.subr.mxu0 0.0
    %2769 = vmatpush1.msra.mxu0 0.0
    %2770 = vmatprep.subr.mxu0 0.0
    %2771 = vmatpush1.msra.mxu0 0.0
    %2772 = vmatprep.subr.mxu0 0.0
    %2773 = vmatpush1.msra.mxu0 0.0
    %2774 = vmatprep.subr.mxu0 0.0
    %2775 = vmatpush1.msra.mxu0 0.0
    %2776 = vmatprep.subr.mxu0 0.0
    %2777 = vmatpush1.msra.mxu0 0.0
    %2778 = vmatprep.subr.mxu0 0.0
    %2779 = vmatpush1.msra.mxu0 0.0
    %2780 = vmatprep.subr.mxu0 0.0
    %2781 = vmatpush1.msra.mxu0 0.0
    %2782 = vmatprep.subr.mxu0 0.0
    %2783 = vmatpush1.msra.mxu0 0.0
    %2784 = vmatprep.subr.mxu0 0.0
    %2785 = vmatpush1.msra.mxu0 0.0
    %2786 = vmatprep.subr.mxu0 0.0
    %2787 = vmatpush1.msra.mxu0 0.0
    %2788 = vmatprep.subr.mxu0 0.0
    %2789 = vmatpush1.msra.mxu0 0.0
    %2790 = vmatprep.subr.mxu0 0.0
    %2791 = vmatpush1.msra.mxu0 0.0
    %2792 = vmatprep.subr.mxu0 0.0
    %2793 = vmatpush1.msra.mxu0 0.0
    %2794 = vmatprep.subr.mxu0 0.0
    %2795 = vmatpush1.msra.mxu0 0.0
    %2796 = vmatprep.subr.mxu0 0.0
    %2797 = vmatpush1.msra.mxu0 0.0
    %2798 = vmatprep.subr.mxu0 0.0
    %2799 = vmatpush1.msra.mxu0 0.0
    %2800 = vmatprep.subr.mxu0 0.0
    %2801 = vmatpush1.msra.mxu0 0.0
    %2802 = vmatprep.subr.mxu0 0.0
    %2803 = vmatpush1.msra.mxu0 0.0
    %2804 = vmatprep.subr.mxu0 0.0
    %2805 = vmatpush1.msra.mxu0 0.0
    %2806 = vmatprep.subr.mxu0 0.0
    %2807 = vmatpush1.msra.mxu0 0.0
    %2808 = vmatprep.subr.mxu0 0.0
    %2809 = vmatpush1.msra.mxu0 0.0
    %2810 = vmatprep.subr.mxu0 0.0
    %2811 = vmatpush1.msra.mxu0 0.0
    %2812 = vmatprep.subr.mxu0 0.0
    %2813 = vmatpush1.msra.mxu0 0.0
    %2814 = vmatprep.subr.mxu0 0.0
    %2815 = vmatpush1.msra.mxu0 0.0
    %2816 = vmatprep.subr.mxu0 0.0
    %2817 = vmatpush1.msra.mxu0 0.0
    %2818 = vmatprep.mubr.f32.mxu0 0.0
    %2819 = vmatmul.mubr.f32.gmra.mrb[0].mxu0 %v2659
    %v2820 = vpop.f32.mrb[0].mxu0
    %v2821 = vadd.f32 0.0, %v2820
    %v2822 = vpop.f32.mrb[0].mxu0
    %2823 = vmatprep.mubr.f32.mxu0 0.0
    %2824 = vmatmul.mubr.f32.gmra.mrb[0].mxu0 %v2662
    %v2825 = vpop.f32.mrb[0].mxu0
    %v2826 = vadd.f32 0.0, %v2825
    %v2827 = vpop.f32.mrb[0].mxu0
    %2828 = vmatprep.mubr.f32.mxu0 0.0
    %2829 = vmatmul.mubr.f32.gmra.mrb[0].mxu0 %v2665
    %v2830 = vpop.f32.mrb[0].mxu0
    %v2831 = vadd.f32 0.0, %v2830
    %v2832 = vpop.f32.mrb[0].mxu0
    %2833 = vmatprep.mubr.f32.mxu0 0.0
    %2834 = vmatmul.mubr.f32.gmra.mrb[0].mxu0 %v2668
    %v2835 = vpop.f32.mrb[0].mxu0
    %v2836 = vadd.f32 0.0, %v2835
    %v2837 = vpop.f32.mrb[0].mxu0
    %2838 = vmatprep.mubr.f32.mxu0 0.0
    %2839 = vmatmul.mubr.f32.gmra.mrb[0].mxu0 %v2671
    %v2840 = vpop.f32.mrb[0].mxu0
    %v2841 = vadd.f32 0.0, %v2840
    %v2842 = vpop.f32.mrb[0].mxu0
    %2843 = vmatprep.mubr.f32.mxu0 0.0
    %2844 = vmatmul.mubr.f32.gmra.mrb[0].mxu0 %v2674
    %v2845 = vpop.f32.mrb[0].mxu0
    %v2846 = vadd.f32 0.0, %v2845
    %v2847 = vpop.f32.mrb[0].mxu0
    %2848 = vmatprep.mubr.f32.mxu0 0.0
    %2849 = vmatmul.mubr.f32.gmra.mrb[0].mxu0 %v2677
    %v2850 = vpop.f32.mrb[0].mxu0
    %v2851 = vadd.f32 0.0, %v2850
    %v2852 = vpop.f32.mrb[0].mxu0
    %2853 = vmatprep.mubr.f32.mxu0 0.0
    %2854 = vmatmul.mubr.f32.gmra.mrb[0].mxu0 %v2680
    %v2855 = vpop.f32.mrb[0].mxu0
    %v2856 = vadd.f32 0.0, %v2855
    %v2857 = vpop.f32.mrb[0].mxu0
    %2858 = vmatprep.mubr.f32.mxu0 0.0
    %2859 = vmatmul.mubr.f32.gmra.mrb[0].mxu0 %v2683
    %v2860 = vpop.f32.mrb[0].mxu0
    %v2861 = vadd.f32 0.0, %v2860
    %v2862 = vpop.f32.mrb[0].mxu0
    %2863 = vmatprep.mubr.f32.mxu0 0.0
    %2864 = vmatmul.mubr.f32.gmra.mrb[0].mxu0 %v2686
    %v2865 = vpop.f32.mrb[0].mxu0
    %v2866 = vadd.f32 0.0, %v2865
    %v2867 = vpop.f32.mrb[0].mxu0
    %2868 = vmatprep.mubr.f32.mxu0 0.0
    %2869 = vmatmul.mubr.f32.gmra.mrb[0].mxu0 %v2689
    %v2870 = vpop.f32.mrb[0].mxu0
    %v2871 = vadd.f32 0.0, %v2870
    %v2872 = vpop.f32.mrb[0].mxu0
    %2873 = vmatprep.mubr.f32.mxu0 0.0
    %2874 = vmatmul.mubr.f32.gmra.mrb[0].mxu0 %v2692
    %v2875 = vpop.f32.mrb[0].mxu0
    %v2876 = vadd.f32 0.0, %v2875
    %v2877 = vpop.f32.mrb[0].mxu0
    %2878 = vmatprep.mubr.f32.mxu0 0.0
    %2879 = vmatmul.mubr.f32.gmra.mrb[0].mxu0 %v2695
    %v2880 = vpop.f32.mrb[0].mxu0
    %v2881 = vadd.f32 0.0, %v2880
    %v2882 = vpop.f32.mrb[0].mxu0
    %2883 = vmatprep.mubr.f32.mxu0 0.0
    %2884 = vmatmul.mubr.f32.gmra.mrb[0].mxu0 %v2698
    %v2885 = vpop.f32.mrb[0].mxu0
    %v2886 = vadd.f32 0.0, %v2885
    %v2887 = vpop.f32.mrb[0].mxu0
    %2888 = vmatprep.mubr.f32.mxu0 0.0
    %2889 = vmatmul.mubr.f32.gmra.mrb[0].mxu0 %v2701
    %v2890 = vpop.f32.mrb[0].mxu0
    %v2891 = vadd.f32 0.0, %v2890
    %v2892 = vpop.f32.mrb[0].mxu0
    %2893 = vmatprep.mubr.f32.mxu0 0.0
    %2894 = vmatmul.mubr.f32.gmra.mrb[0].mxu0 %v2704
    %v2895 = vpop.f32.mrb[0].mxu0
    %v2896 = vadd.f32 0.0, %v2895
    %v2897 = vpop.f32.mrb[0].mxu0
    %2898 = vmatprep.mubr.f32.mxu0 0.0
    %2899 = vmatmul.mubr.f32.gmra.mrb[0].mxu0 %v2707
    %v2900 = vpop.f32.mrb[0].mxu0
    %v2901 = vadd.f32 0.0, %v2900
    %v2902 = vpop.f32.mrb[0].mxu0
    %2903 = vmatprep.mubr.f32.mxu0 0.0
    %2904 = vmatmul.mubr.f32.gmra.mrb[0].mxu0 %v2710
    %v2905 = vpop.f32.mrb[0].mxu0
    %v2906 = vadd.f32 0.0, %v2905
    %v2907 = vpop.f32.mrb[0].mxu0
    %2908 = vmatprep.mubr.f32.mxu0 0.0
    %2909 = vmatmul.mubr.f32.gmra.mrb[0].mxu0 %v2713
    %v2910 = vpop.f32.mrb[0].mxu0
    %v2911 = vadd.f32 0.0, %v2910
    %v2912 = vpop.f32.mrb[0].mxu0
    %2913 = vmatprep.mubr.f32.mxu0 0.0
    %2914 = vmatmul.mubr.f32.gmra.mrb[0].mxu0 %v2716
    %v2915 = vpop.f32.mrb[0].mxu0
    %v2916 = vadd.f32 0.0, %v2915
    %v2917 = vpop.f32.mrb[0].mxu0
    %2918 = vmatprep.mubr.f32.mxu0 0.0
    %2919 = vmatmul.mubr.f32.gmra.mrb[0].mxu0 %v2719
    %v2920 = vpop.f32.mrb[0].mxu0
    %v2921 = vadd.f32 0.0, %v2920
    %v2922 = vpop.f32.mrb[0].mxu0
    %2923 = vmatprep.mubr.f32.mxu0 0.0
    %2924 = vmatmul.mubr.f32.gmra.mrb[0].mxu0 %v2722
    %v2925 = vpop.f32.mrb[0].mxu0
    %v2926 = vadd.f32 0.0, %v2925
    %v2927 = vpop.f32.mrb[0].mxu0
    %2928 = vmatprep.mubr.f32.mxu0 0.0
    %2929 = vmatmul.mubr.f32.gmra.mrb[0].mxu0 %v2725
    %v2930 = vpop.f32.mrb[0].mxu0
    %v2931 = vadd.f32 0.0, %v2930
    %v2932 = vpop.f32.mrb[0].mxu0
    %2933 = vmatprep.mubr.f32.mxu0 0.0
    %2934 = vmatmul.mubr.f32.gmra.mrb[0].mxu0 %v2728
    %v2935 = vpop.f32.mrb[0].mxu0
    %v2936 = vadd.f32 0.0, %v2935
    %v2937 = vpop.f32.mrb[0].mxu0
    %2938 = vmatprep.mubr.f32.mxu0 0.0
    %2939 = vmatmul.mubr.f32.gmra.mrb[0].mxu0 %v2731
    %v2940 = vpop.f32.mrb[0].mxu0
    %v2941 = vadd.f32 0.0, %v2940
    %v2942 = vpop.f32.mrb[0].mxu0
    %2943 = vmatprep.mubr.f32.mxu0 0.0
    %2944 = vmatmul.mubr.f32.gmra.mrb[0].mxu0 %v2734
    %v2945 = vpop.f32.mrb[0].mxu0
    %v2946 = vadd.f32 0.0, %v2945
    %v2947 = vpop.f32.mrb[0].mxu0
    %2948 = vmatprep.mubr.f32.mxu0 0.0
    %2949 = vmatmul.mubr.f32.gmra.mrb[0].mxu0 %v2737
    %v2950 = vpop.f32.mrb[0].mxu0
    %v2951 = vadd.f32 0.0, %v2950
    %v2952 = vpop.f32.mrb[0].mxu0
    %2953 = vmatprep.mubr.f32.mxu0 0.0
    %2954 = vmatmul.mubr.f32.gmra.mrb[0].mxu0 %v2740
    %v2955 = vpop.f32.mrb[0].mxu0
    %v2956 = vadd.f32 0.0, %v2955
    %v2957 = vpop.f32.mrb[0].mxu0
    %2958 = vmatprep.mubr.f32.mxu0 0.0
    %2959 = vmatmul.mubr.f32.gmra.mrb[0].mxu0 %v2743
    %v2960 = vpop.f32.mrb[0].mxu0
    %v2961 = vadd.f32 0.0, %v2960
    %v2962 = vpop.f32.mrb[0].mxu0
    %2963 = vmatprep.mubr.f32.mxu0 0.0
    %2964 = vmatmul.mubr.f32.gmra.mrb[0].mxu0 %v2746
    %v2965 = vpop.f32.mrb[0].mxu0
    %v2966 = vadd.f32 0.0, %v2965
    %v2967 = vpop.f32.mrb[0].mxu0
    %2968 = vmatprep.mubr.f32.mxu0 0.0
    %2969 = vmatmul.mubr.f32.gmra.mrb[0].mxu0 %v2749
    %v2970 = vpop.f32.mrb[0].mxu0
    %v2971 = vadd.f32 0.0, %v2970
    %v2972 = vpop.f32.mrb[0].mxu0
    %2973 = vmatprep.mubr.f32.mxu0 0.0
    %2974 = vmatmul.mubr.f32.gmra.mrb[0].mxu0 %v2752
    %v2975 = vpop.f32.mrb[0].mxu0
    %v2976 = vadd.f32 0.0, %v2975
    %v2977 = vpop.f32.mrb[0].mxu0
    %2978 = vdwg.mxu0
    %2979 = vst.msk [vmem:[#allocation6] sm:$0xff] %vm378, %v2821
    %2980 = vst.msk [vmem:[#allocation6 + $0x8] sm:$0xff] %vm378, %v2826
    %2981 = vst.msk [vmem:[#allocation6 + $0x10] sm:$0xff] %vm378, %v2831
    %2982 = vst.msk [vmem:[#allocation6 + $0x18] sm:$0xff] %vm378, %v2836
    %2983 = vst.msk [vmem:[#allocation6 + $0x20] sm:$0xff] %vm378, %v2841
    %2984 = vst.msk [vmem:[#allocation6 + $0x28] sm:$0xff] %vm378, %v2846
    %2985 = vst.msk [vmem:[#allocation6 + $0x30] sm:$0xff] %vm378, %v2851
    %2986 = vst.msk [vmem:[#allocation6 + $0x38] sm:$0xff] %vm378, %v2856
    %2987 = vst.msk [vmem:[#allocation6 + $0x40] sm:$0xff] %vm378, %v2861
    %2988 = vst.msk [vmem:[#allocation6 + $0x48] sm:$0xff] %vm378, %v2866
    %2989 = vst.msk [vmem:[#allocation6 + $0x50] sm:$0xff] %vm378, %v2871
    %2990 = vst.msk [vmem:[#allocation6 + $0x58] sm:$0xff] %vm378, %v2876
    %2991 = vst.msk [vmem:[#allocation6 + $0x60] sm:$0xff] %vm378, %v2881
    %2992 = vst.msk [vmem:[#allocation6 + $0x68] sm:$0xff] %vm378, %v2886
    %2993 = vst.msk [vmem:[#allocation6 + $0x70] sm:$0xff] %vm378, %v2891
    %2994 = vst.msk [vmem:[#allocation6 + $0x78] sm:$0xff] %vm378, %v2896
    %2995 = vst.msk [vmem:[#allocation6 + $0x80] sm:$0xff] %vm378, %v2901
    %2996 = vst.msk [vmem:[#allocation6 + $0x88] sm:$0xff] %vm378, %v2906
    %2997 = vst.msk [vmem:[#allocation6 + $0x90] sm:$0xff] %vm378, %v2911
    %2998 = vst.msk [vmem:[#allocation6 + $0x98] sm:$0xff] %vm378, %v2916
    %2999 = vst.msk [vmem:[#allocation6 + $0xa0] sm:$0xff] %vm378, %v2921
    %3000 = vst.msk [vmem:[#allocation6 + $0xa8] sm:$0xff] %vm378, %v2926
    %3001 = vst.msk [vmem:[#allocation6 + $0xb0] sm:$0xff] %vm378, %v2931
    %3002 = vst.msk [vmem:[#allocation6 + $0xb8] sm:$0xff] %vm378, %v2936
    %3003 = vst.msk [vmem:[#allocation6 + $0xc0] sm:$0xff] %vm378, %v2941
    %3004 = vst.msk [vmem:[#allocation6 + $0xc8] sm:$0xff] %vm378, %v2946
    %3005 = vst.msk [vmem:[#allocation6 + $0xd0] sm:$0xff] %vm378, %v2951
    %3006 = vst.msk [vmem:[#allocation6 + $0xd8] sm:$0xff] %vm378, %v2956
    %3007 = vst.msk [vmem:[#allocation6 + $0xe0] sm:$0xff] %vm378, %v2961
    %3008 = vst.msk [vmem:[#allocation6 + $0xe8] sm:$0xff] %vm378, %v2966
    %3009 = vst.msk [vmem:[#allocation6 + $0xf0] sm:$0xff] %vm378, %v2971
    %3010 = vst.msk [vmem:[#allocation6 + $0xf8] sm:$0xff] %vm378, %v2976
    %s3011 = scalar_lea.vmem %s20, 32
    %v3012 = vld [vmem:[%s3011] sm:$0xff]
    %v3013 = vld [vmem:[%s3011 + $0x8] sm:$0xff]
    %v3014 = vld [vmem:[%s3011 + $0x10] sm:$0xff]
    %v3015 = vld [vmem:[%s3011 + $0x18] sm:$0xff]
    %3016 = vmatprep.subr.mxu0 0.0
    %3017 = vmatpush1.msra.mxu0 %v3012
    %3018 = vmatprep.subr.mxu0 0.0
    %3019 = vmatpush1.msra.mxu0 %v3013
    %3020 = vmatprep.subr.mxu0 0.0
    %3021 = vmatpush1.msra.mxu0 %v3014
    %3022 = vmatprep.subr.mxu0 0.0
    %3023 = vmatpush1.msra.mxu0 %v3015
    %3024 = vmatprep.subr.mxu0 0.0
    %3025 = vmatpush1.msra.mxu0 0.0
    %3026 = vmatprep.subr.mxu0 0.0
    %3027 = vmatpush1.msra.mxu0 0.0
    %3028 = vmatprep.subr.mxu0 0.0
    %3029 = vmatpush1.msra.mxu0 0.0
    %3030 = vmatprep.subr.mxu0 0.0
    %3031 = vmatpush1.msra.mxu0 0.0
    %3032 = vmatprep.subr.mxu0 0.0
    %3033 = vmatpush1.msra.mxu0 0.0
    %3034 = vmatprep.subr.mxu0 0.0
    %3035 = vmatpush1.msra.mxu0 0.0
    %3036 = vmatprep.subr.mxu0 0.0
    %3037 = vmatpush1.msra.mxu0 0.0
    %3038 = vmatprep.subr.mxu0 0.0
    %3039 = vmatpush1.msra.mxu0 0.0
    %3040 = vmatprep.subr.mxu0 0.0
    %3041 = vmatpush1.msra.mxu0 0.0
    %3042 = vmatprep.subr.mxu0 0.0
    %3043 = vmatpush1.msra.mxu0 0.0
    %3044 = vmatprep.subr.mxu0 0.0
    %3045 = vmatpush1.msra.mxu0 0.0
    %3046 = vmatprep.subr.mxu0 0.0
    %3047 = vmatpush1.msra.mxu0 0.0
    %3048 = vmatprep.subr.mxu0 0.0
    %3049 = vmatpush1.msra.mxu0 0.0
    %3050 = vmatprep.subr.mxu0 0.0
    %3051 = vmatpush1.msra.mxu0 0.0
    %3052 = vmatprep.subr.mxu0 0.0
    %3053 = vmatpush1.msra.mxu0 0.0
    %3054 = vmatprep.subr.mxu0 0.0
    %3055 = vmatpush1.msra.mxu0 0.0
    %3056 = vmatprep.subr.mxu0 0.0
    %3057 = vmatpush1.msra.mxu0 0.0
    %3058 = vmatprep.subr.mxu0 0.0
    %3059 = vmatpush1.msra.mxu0 0.0
    %3060 = vmatprep.subr.mxu0 0.0
    %3061 = vmatpush1.msra.mxu0 0.0
    %3062 = vmatprep.subr.mxu0 0.0
    %3063 = vmatpush1.msra.mxu0 0.0
    %3064 = vmatprep.subr.mxu0 0.0
    %3065 = vmatpush1.msra.mxu0 0.0
    %3066 = vmatprep.subr.mxu0 0.0
    %3067 = vmatpush1.msra.mxu0 0.0
    %3068 = vmatprep.subr.mxu0 0.0
    %3069 = vmatpush1.msra.mxu0 0.0
    %3070 = vmatprep.subr.mxu0 0.0
    %3071 = vmatpush1.msra.mxu0 0.0
    %3072 = vmatprep.subr.mxu0 0.0
    %3073 = vmatpush1.msra.mxu0 0.0
    %3074 = vmatprep.subr.mxu0 0.0
    %3075 = vmatpush1.msra.mxu0 0.0
    %3076 = vmatprep.subr.mxu0 0.0
    %3077 = vmatpush1.msra.mxu0 0.0
    %3078 = vmatprep.subr.mxu0 0.0
    %3079 = vmatpush1.msra.mxu0 0.0
    %3080 = vmatprep.mubr.f32.mxu0 0.0
    %3081 = vmatmul.mubr.f32.gmra.mrb[0].mxu0 %v2659
    %v3082 = vpop.f32.mrb[0].mxu0
    %v3083 = vadd.f32 0.0, %v3082
    %v3084 = vpop.f32.mrb[0].mxu0
    %3085 = vmatprep.mubr.f32.mxu0 0.0
    %3086 = vmatmul.mubr.f32.gmra.mrb[0].mxu0 %v2662
    %v3087 = vpop.f32.mrb[0].mxu0
    %v3088 = vadd.f32 0.0, %v3087
    %v3089 = vpop.f32.mrb[0].mxu0
    %3090 = vmatprep.mubr.f32.mxu0 0.0
    %3091 = vmatmul.mubr.f32.gmra.mrb[0].mxu0 %v2665
    %v3092 = vpop.f32.mrb[0].mxu0
    %v3093 = vadd.f32 0.0, %v3092
    %v3094 = vpop.f32.mrb[0].mxu0
    %3095 = vmatprep.mubr.f32.mxu0 0.0
    %3096 = vmatmul.mubr.f32.gmra.mrb[0].mxu0 %v2668
    %v3097 = vpop.f32.mrb[0].mxu0
    %v3098 = vadd.f32 0.0, %v3097
    %v3099 = vpop.f32.mrb[0].mxu0
    %3100 = vmatprep.mubr.f32.mxu0 0.0
    %3101 = vmatmul.mubr.f32.gmra.mrb[0].mxu0 %v2671
    %v3102 = vpop.f32.mrb[0].mxu0
    %v3103 = vadd.f32 0.0, %v3102
    %v3104 = vpop.f32.mrb[0].mxu0
    %3105 = vmatprep.mubr.f32.mxu0 0.0
    %3106 = vmatmul.mubr.f32.gmra.mrb[0].mxu0 %v2674
    %v3107 = vpop.f32.mrb[0].mxu0
    %v3108 = vadd.f32 0.0, %v3107
    %v3109 = vpop.f32.mrb[0].mxu0
    %3110 = vmatprep.mubr.f32.mxu0 0.0
    %3111 = vmatmul.mubr.f32.gmra.mrb[0].mxu0 %v2677
    %v3112 = vpop.f32.mrb[0].mxu0
    %v3113 = vadd.f32 0.0, %v3112
    %v3114 = vpop.f32.mrb[0].mxu0
    %3115 = vmatprep.mubr.f32.mxu0 0.0
    %3116 = vmatmul.mubr.f32.gmra.mrb[0].mxu0 %v2680
    %v3117 = vpop.f32.mrb[0].mxu0
    %v3118 = vadd.f32 0.0, %v3117
    %v3119 = vpop.f32.mrb[0].mxu0
    %3120 = vmatprep.mubr.f32.mxu0 0.0
    %3121 = vmatmul.mubr.f32.gmra.mrb[0].mxu0 %v2683
    %v3122 = vpop.f32.mrb[0].mxu0
    %v3123 = vadd.f32 0.0, %v3122
    %v3124 = vpop.f32.mrb[0].mxu0
    %3125 = vmatprep.mubr.f32.mxu0 0.0
    %3126 = vmatmul.mubr.f32.gmra.mrb[0].mxu0 %v2686
    %v3127 = vpop.f32.mrb[0].mxu0
    %v3128 = vadd.f32 0.0, %v3127
    %v3129 = vpop.f32.mrb[0].mxu0
    %3130 = vmatprep.mubr.f32.mxu0 0.0
    %3131 = vmatmul.mubr.f32.gmra.mrb[0].mxu0 %v2689
    %v3132 = vpop.f32.mrb[0].mxu0
    %v3133 = vadd.f32 0.0, %v3132
    %v3134 = vpop.f32.mrb[0].mxu0
    %3135 = vmatprep.mubr.f32.mxu0 0.0
    %3136 = vmatmul.mubr.f32.gmra.mrb[0].mxu0 %v2692
    %v3137 = vpop.f32.mrb[0].mxu0
    %v3138 = vadd.f32 0.0, %v3137
    %v3139 = vpop.f32.mrb[0].mxu0
    %3140 = vmatprep.mubr.f32.mxu0 0.0
    %3141 = vmatmul.mubr.f32.gmra.mrb[0].mxu0 %v2695
    %v3142 = vpop.f32.mrb[0].mxu0
    %v3143 = vadd.f32 0.0, %v3142
    %v3144 = vpop.f32.mrb[0].mxu0
    %3145 = vmatprep.mubr.f32.mxu0 0.0
    %3146 = vmatmul.mubr.f32.gmra.mrb[0].mxu0 %v2698
    %v3147 = vpop.f32.mrb[0].mxu0
    %v3148 = vadd.f32 0.0, %v3147
    %v3149 = vpop.f32.mrb[0].mxu0
    %3150 = vmatprep.mubr.f32.mxu0 0.0
    %3151 = vmatmul.mubr.f32.gmra.mrb[0].mxu0 %v2701
    %v3152 = vpop.f32.mrb[0].mxu0
    %v3153 = vadd.f32 0.0, %v3152
    %v3154 = vpop.f32.mrb[0].mxu0
    %3155 = vmatprep.mubr.f32.mxu0 0.0
    %3156 = vmatmul.mubr.f32.gmra.mrb[0].mxu0 %v2704
    %v3157 = vpop.f32.mrb[0].mxu0
    %v3158 = vadd.f32 0.0, %v3157
    %v3159 = vpop.f32.mrb[0].mxu0
    %3160 = vmatprep.mubr.f32.mxu0 0.0
    %3161 = vmatmul.mubr.f32.gmra.mrb[0].mxu0 %v2707
    %v3162 = vpop.f32.mrb[0].mxu0
    %v3163 = vadd.f32 0.0, %v3162
    %v3164 = vpop.f32.mrb[0].mxu0
    %3165 = vmatprep.mubr.f32.mxu0 0.0
    %3166 = vmatmul.mubr.f32.gmra.mrb[0].mxu0 %v2710
    %v3167 = vpop.f32.mrb[0].mxu0
    %v3168 = vadd.f32 0.0, %v3167
    %v3169 = vpop.f32.mrb[0].mxu0
    %3170 = vmatprep.mubr.f32.mxu0 0.0
    %3171 = vmatmul.mubr.f32.gmra.mrb[0].mxu0 %v2713
    %v3172 = vpop.f32.mrb[0].mxu0
    %v3173 = vadd.f32 0.0, %v3172
    %v3174 = vpop.f32.mrb[0].mxu0
    %3175 = vmatprep.mubr.f32.mxu0 0.0
    %3176 = vmatmul.mubr.f32.gmra.mrb[0].mxu0 %v2716
    %v3177 = vpop.f32.mrb[0].mxu0
    %v3178 = vadd.f32 0.0, %v3177
    %v3179 = vpop.f32.mrb[0].mxu0
    %3180 = vmatprep.mubr.f32.mxu0 0.0
    %3181 = vmatmul.mubr.f32.gmra.mrb[0].mxu0 %v2719
    %v3182 = vpop.f32.mrb[0].mxu0
    %v3183 = vadd.f32 0.0, %v3182
    %v3184 = vpop.f32.mrb[0].mxu0
    %3185 = vmatprep.mubr.f32.mxu0 0.0
    %3186 = vmatmul.mubr.f32.gmra.mrb[0].mxu0 %v2722
    %v3187 = vpop.f32.mrb[0].mxu0
    %v3188 = vadd.f32 0.0, %v3187
    %v3189 = vpop.f32.mrb[0].mxu0
    %3190 = vmatprep.mubr.f32.mxu0 0.0
    %3191 = vmatmul.mubr.f32.gmra.mrb[0].mxu0 %v2725
    %v3192 = vpop.f32.mrb[0].mxu0
    %v3193 = vadd.f32 0.0, %v3192
    %v3194 = vpop.f32.mrb[0].mxu0
    %3195 = vmatprep.mubr.f32.mxu0 0.0
    %3196 = vmatmul.mubr.f32.gmra.mrb[0].mxu0 %v2728
    %v3197 = vpop.f32.mrb[0].mxu0
    %v3198 = vadd.f32 0.0, %v3197
    %v3199 = vpop.f32.mrb[0].mxu0
    %3200 = vmatprep.mubr.f32.mxu0 0.0
    %3201 = vmatmul.mubr.f32.gmra.mrb[0].mxu0 %v2731
    %v3202 = vpop.f32.mrb[0].mxu0
    %v3203 = vadd.f32 0.0, %v3202
    %v3204 = vpop.f32.mrb[0].mxu0
    %3205 = vmatprep.mubr.f32.mxu0 0.0
    %3206 = vmatmul.mubr.f32.gmra.mrb[0].mxu0 %v2734
    %v3207 = vpop.f32.mrb[0].mxu0
    %v3208 = vadd.f32 0.0, %v3207
    %v3209 = vpop.f32.mrb[0].mxu0
    %3210 = vmatprep.mubr.f32.mxu0 0.0
    %3211 = vmatmul.mubr.f32.gmra.mrb[0].mxu0 %v2737
    %v3212 = vpop.f32.mrb[0].mxu0
    %v3213 = vadd.f32 0.0, %v3212
    %v3214 = vpop.f32.mrb[0].mxu0
    %3215 = vmatprep.mubr.f32.mxu0 0.0
    %3216 = vmatmul.mubr.f32.gmra.mrb[0].mxu0 %v2740
    %v3217 = vpop.f32.mrb[0].mxu0
    %v3218 = vadd.f32 0.0, %v3217
    %v3219 = vpop.f32.mrb[0].mxu0
    %3220 = vmatprep.mubr.f32.mxu0 0.0
    %3221 = vmatmul.mubr.f32.gmra.mrb[0].mxu0 %v2743
    %v3222 = vpop.f32.mrb[0].mxu0
    %v3223 = vadd.f32 0.0, %v3222
    %v3224 = vpop.f32.mrb[0].mxu0
    %3225 = vmatprep.mubr.f32.mxu0 0.0
    %3226 = vmatmul.mubr.f32.gmra.mrb[0].mxu0 %v2746
    %v3227 = vpop.f32.mrb[0].mxu0
    %v3228 = vadd.f32 0.0, %v3227
    %v3229 = vpop.f32.mrb[0].mxu0
    %3230 = vmatprep.mubr.f32.mxu0 0.0
    %3231 = vmatmul.mubr.f32.gmra.mrb[0].mxu0 %v2749
    %v3232 = vpop.f32.mrb[0].mxu0
    %v3233 = vadd.f32 0.0, %v3232
    %v3234 = vpop.f32.mrb[0].mxu0
    %3235 = vmatprep.mubr.f32.mxu0 0.0
    %3236 = vmatmul.mubr.f32.gmra.mrb[0].mxu0 %v2752
    %v3237 = vpop.f32.mrb[0].mxu0
    %v3238 = vadd.f32 0.0, %v3237
    %v3239 = vpop.f32.mrb[0].mxu0
    %3240 = vdwg.mxu0
    %3241 = vst.msk [vmem:[#allocation6 + $0x100] sm:$0xff] %vm378, %v3083
    %3242 = vst.msk [vmem:[#allocation6 + $0x108] sm:$0xff] %vm378, %v3088
    %3243 = vst.msk [vmem:[#allocation6 + $0x110] sm:$0xff] %vm378, %v3093
    %3244 = vst.msk [vmem:[#allocation6 + $0x118] sm:$0xff] %vm378, %v3098
    %3245 = vst.msk [vmem:[#allocation6 + $0x120] sm:$0xff] %vm378, %v3103
    %3246 = vst.msk [vmem:[#allocation6 + $0x128] sm:$0xff] %vm378, %v3108
    %3247 = vst.msk [vmem:[#allocation6 + $0x130] sm:$0xff] %vm378, %v3113
    %3248 = vst.msk [vmem:[#allocation6 + $0x138] sm:$0xff] %vm378, %v3118
    %3249 = vst.msk [vmem:[#allocation6 + $0x140] sm:$0xff] %vm378, %v3123
    %3250 = vst.msk [vmem:[#allocation6 + $0x148] sm:$0xff] %vm378, %v3128
    %3251 = vst.msk [vmem:[#allocation6 + $0x150] sm:$0xff] %vm378, %v3133
    %3252 = vst.msk [vmem:[#allocation6 + $0x158] sm:$0xff] %vm378, %v3138
    %3253 = vst.msk [vmem:[#allocation6 + $0x160] sm:$0xff] %vm378, %v3143
    %3254 = vst.msk [vmem:[#allocation6 + $0x168] sm:$0xff] %vm378, %v3148
    %3255 = vst.msk [vmem:[#allocation6 + $0x170] sm:$0xff] %vm378, %v3153
    %3256 = vst.msk [vmem:[#allocation6 + $0x178] sm:$0xff] %vm378, %v3158
    %3257 = vst.msk [vmem:[#allocation6 + $0x180] sm:$0xff] %vm378, %v3163
    %3258 = vst.msk [vmem:[#allocation6 + $0x188] sm:$0xff] %vm378, %v3168
    %3259 = vst.msk [vmem:[#allocation6 + $0x190] sm:$0xff] %vm378, %v3173
    %3260 = vst.msk [vmem:[#allocation6 + $0x198] sm:$0xff] %vm378, %v3178
    %3261 = vst.msk [vmem:[#allocation6 + $0x1a0] sm:$0xff] %vm378, %v3183
    %3262 = vst.msk [vmem:[#allocation6 + $0x1a8] sm:$0xff] %vm378, %v3188
    %3263 = vst.msk [vmem:[#allocation6 + $0x1b0] sm:$0xff] %vm378, %v3193
    %3264 = vst.msk [vmem:[#allocation6 + $0x1b8] sm:$0xff] %vm378, %v3198
    %3265 = vst.msk [vmem:[#allocation6 + $0x1c0] sm:$0xff] %vm378, %v3203
    %3266 = vst.msk [vmem:[#allocation6 + $0x1c8] sm:$0xff] %vm378, %v3208
    %3267 = vst.msk [vmem:[#allocation6 + $0x1d0] sm:$0xff] %vm378, %v3213
    %3268 = vst.msk [vmem:[#allocation6 + $0x1d8] sm:$0xff] %vm378, %v3218
    %3269 = vst.msk [vmem:[#allocation6 + $0x1e0] sm:$0xff] %vm378, %v3223
    %3270 = vst.msk [vmem:[#allocation6 + $0x1e8] sm:$0xff] %vm378, %v3228
    %3271 = vst.msk [vmem:[#allocation6 + $0x1f0] sm:$0xff] %vm378, %v3233
    %3272 = vst.msk [vmem:[#allocation6 + $0x1f8] sm:$0xff] %vm378, %v3238
    %s3273 = scalar_lea.vmem %s20, 64
    %v3274 = vld [vmem:[%s3273] sm:$0xff]
    %v3275 = vld [vmem:[%s3273 + $0x8] sm:$0xff]
    %v3276 = vld [vmem:[%s3273 + $0x10] sm:$0xff]
    %v3277 = vld [vmem:[%s3273 + $0x18] sm:$0xff]
    %3278 = vmatprep.subr.mxu0 0.0
    %3279 = vmatpush1.msra.mxu0 %v3274
    %3280 = vmatprep.subr.mxu0 0.0
    %3281 = vmatpush1.msra.mxu0 %v3275
    %3282 = vmatprep.subr.mxu0 0.0
    %3283 = vmatpush1.msra.mxu0 %v3276
    %3284 = vmatprep.subr.mxu0 0.0
    %3285 = vmatpush1.msra.mxu0 %v3277
    %3286 = vmatprep.subr.mxu0 0.0
    %3287 = vmatpush1.msra.mxu0 0.0
    %3288 = vmatprep.subr.mxu0 0.0
    %3289 = vmatpush1.msra.mxu0 0.0
    %3290 = vmatprep.subr.mxu0 0.0
    %3291 = vmatpush1.msra.mxu0 0.0
    %3292 = vmatprep.subr.mxu0 0.0
    %3293 = vmatpush1.msra.mxu0 0.0
    %3294 = vmatprep.subr.mxu0 0.0
    %3295 = vmatpush1.msra.mxu0 0.0
    %3296 = vmatprep.subr.mxu0 0.0
    %3297 = vmatpush1.msra.mxu0 0.0
    %3298 = vmatprep.subr.mxu0 0.0
    %3299 = vmatpush1.msra.mxu0 0.0
    %3300 = vmatprep.subr.mxu0 0.0
    %3301 = vmatpush1.msra.mxu0 0.0
    %3302 = vmatprep.subr.mxu0 0.0
    %3303 = vmatpush1.msra.mxu0 0.0
    %3304 = vmatprep.subr.mxu0 0.0
    %3305 = vmatpush1.msra.mxu0 0.0
    %3306 = vmatprep.subr.mxu0 0.0
    %3307 = vmatpush1.msra.mxu0 0.0
    %3308 = vmatprep.subr.mxu0 0.0
    %3309 = vmatpush1.msra.mxu0 0.0
    %3310 = vmatprep.subr.mxu0 0.0
    %3311 = vmatpush1.msra.mxu0 0.0
    %3312 = vmatprep.subr.mxu0 0.0
    %3313 = vmatpush1.msra.mxu0 0.0
    %3314 = vmatprep.subr.mxu0 0.0
    %3315 = vmatpush1.msra.mxu0 0.0
    %3316 = vmatprep.subr.mxu0 0.0
    %3317 = vmatpush1.msra.mxu0 0.0
    %3318 = vmatprep.subr.mxu0 0.0
    %3319 = vmatpush1.msra.mxu0 0.0
    %3320 = vmatprep.subr.mxu0 0.0
    %3321 = vmatpush1.msra.mxu0 0.0
    %3322 = vmatprep.subr.mxu0 0.0
    %3323 = vmatpush1.msra.mxu0 0.0
    %3324 = vmatprep.subr.mxu0 0.0
    %3325 = vmatpush1.msra.mxu0 0.0
    %3326 = vmatprep.subr.mxu0 0.0
    %3327 = vmatpush1.msra.mxu0 0.0
    %3328 = vmatprep.subr.mxu0 0.0
    %3329 = vmatpush1.msra.mxu0 0.0
    %3330 = vmatprep.subr.mxu0 0.0
    %3331 = vmatpush1.msra.mxu0 0.0
    %3332 = vmatprep.subr.mxu0 0.0
    %3333 = vmatpush1.msra.mxu0 0.0
    %3334 = vmatprep.subr.mxu0 0.0
    %3335 = vmatpush1.msra.mxu0 0.0
    %3336 = vmatprep.subr.mxu0 0.0
    %3337 = vmatpush1.msra.mxu0 0.0
    %3338 = vmatprep.subr.mxu0 0.0
    %3339 = vmatpush1.msra.mxu0 0.0
    %3340 = vmatprep.subr.mxu0 0.0
    %3341 = vmatpush1.msra.mxu0 0.0
    %3342 = vmatprep.mubr.f32.mxu0 0.0
    %3343 = vmatmul.mubr.f32.gmra.mrb[0].mxu0 %v2659
    %v3344 = vpop.f32.mrb[0].mxu0
    %v3345 = vadd.f32 0.0, %v3344
    %v3346 = vpop.f32.mrb[0].mxu0
    %3347 = vmatprep.mubr.f32.mxu0 0.0
    %3348 = vmatmul.mubr.f32.gmra.mrb[0].mxu0 %v2662
    %v3349 = vpop.f32.mrb[0].mxu0
    %v3350 = vadd.f32 0.0, %v3349
    %v3351 = vpop.f32.mrb[0].mxu0
    %3352 = vmatprep.mubr.f32.mxu0 0.0
    %3353 = vmatmul.mubr.f32.gmra.mrb[0].mxu0 %v2665
    %v3354 = vpop.f32.mrb[0].mxu0
    %v3355 = vadd.f32 0.0, %v3354
    %v3356 = vpop.f32.mrb[0].mxu0
    %3357 = vmatprep.mubr.f32.mxu0 0.0
    %3358 = vmatmul.mubr.f32.gmra.mrb[0].mxu0 %v2668
    %v3359 = vpop.f32.mrb[0].mxu0
    %v3360 = vadd.f32 0.0, %v3359
    %v3361 = vpop.f32.mrb[0].mxu0
    %3362 = vmatprep.mubr.f32.mxu0 0.0
    %3363 = vmatmul.mubr.f32.gmra.mrb[0].mxu0 %v2671
    %v3364 = vpop.f32.mrb[0].mxu0
    %v3365 = vadd.f32 0.0, %v3364
    %v3366 = vpop.f32.mrb[0].mxu0
    %3367 = vmatprep.mubr.f32.mxu0 0.0
    %3368 = vmatmul.mubr.f32.gmra.mrb[0].mxu0 %v2674
    %v3369 = vpop.f32.mrb[0].mxu0
    %v3370 = vadd.f32 0.0, %v3369
    %v3371 = vpop.f32.mrb[0].mxu0
    %3372 = vmatprep.mubr.f32.mxu0 0.0
    %3373 = vmatmul.mubr.f32.gmra.mrb[0].mxu0 %v2677
    %v3374 = vpop.f32.mrb[0].mxu0
    %v3375 = vadd.f32 0.0, %v3374
    %v3376 = vpop.f32.mrb[0].mxu0
    %3377 = vmatprep.mubr.f32.mxu0 0.0
    %3378 = vmatmul.mubr.f32.gmra.mrb[0].mxu0 %v2680
    %v3379 = vpop.f32.mrb[0].mxu0
    %v3380 = vadd.f32 0.0, %v3379
    %v3381 = vpop.f32.mrb[0].mxu0
    %3382 = vmatprep.mubr.f32.mxu0 0.0
    %3383 = vmatmul.mubr.f32.gmra.mrb[0].mxu0 %v2683
    %v3384 = vpop.f32.mrb[0].mxu0
    %v3385 = vadd.f32 0.0, %v3384
    %v3386 = vpop.f32.mrb[0].mxu0
    %3387 = vmatprep.mubr.f32.mxu0 0.0
    %3388 = vmatmul.mubr.f32.gmra.mrb[0].mxu0 %v2686
    %v3389 = vpop.f32.mrb[0].mxu0
    %v3390 = vadd.f32 0.0, %v3389
    %v3391 = vpop.f32.mrb[0].mxu0
    %3392 = vmatprep.mubr.f32.mxu0 0.0
    %3393 = vmatmul.mubr.f32.gmra.mrb[0].mxu0 %v2689
    %v3394 = vpop.f32.mrb[0].mxu0
    %v3395 = vadd.f32 0.0, %v3394
    %v3396 = vpop.f32.mrb[0].mxu0
    %3397 = vmatprep.mubr.f32.mxu0 0.0
    %3398 = vmatmul.mubr.f32.gmra.mrb[0].mxu0 %v2692
    %v3399 = vpop.f32.mrb[0].mxu0
    %v3400 = vadd.f32 0.0, %v3399
    %v3401 = vpop.f32.mrb[0].mxu0
    %3402 = vmatprep.mubr.f32.mxu0 0.0
    %3403 = vmatmul.mubr.f32.gmra.mrb[0].mxu0 %v2695
    %v3404 = vpop.f32.mrb[0].mxu0
    %v3405 = vadd.f32 0.0, %v3404
    %v3406 = vpop.f32.mrb[0].mxu0
    %3407 = vmatprep.mubr.f32.mxu0 0.0
    %3408 = vmatmul.mubr.f32.gmra.mrb[0].mxu0 %v2698
    %v3409 = vpop.f32.mrb[0].mxu0
    %v3410 = vadd.f32 0.0, %v3409
    %v3411 = vpop.f32.mrb[0].mxu0
    %3412 = vmatprep.mubr.f32.mxu0 0.0
    %3413 = vmatmul.mubr.f32.gmra.mrb[0].mxu0 %v2701
    %v3414 = vpop.f32.mrb[0].mxu0
    %v3415 = vadd.f32 0.0, %v3414
    %v3416 = vpop.f32.mrb[0].mxu0
    %3417 = vmatprep.mubr.f32.mxu0 0.0
    %3418 = vmatmul.mubr.f32.gmra.mrb[0].mxu0 %v2704
    %v3419 = vpop.f32.mrb[0].mxu0
    %v3420 = vadd.f32 0.0, %v3419
    %v3421 = vpop.f32.mrb[0].mxu0
    %3422 = vmatprep.mubr.f32.mxu0 0.0
    %3423 = vmatmul.mubr.f32.gmra.mrb[0].mxu0 %v2707
    %v3424 = vpop.f32.mrb[0].mxu0
    %v3425 = vadd.f32 0.0, %v3424
    %v3426 = vpop.f32.mrb[0].mxu0
    %3427 = vmatprep.mubr.f32.mxu0 0.0
    %3428 = vmatmul.mubr.f32.gmra.mrb[0].mxu0 %v2710
    %v3429 = vpop.f32.mrb[0].mxu0
    %v3430 = vadd.f32 0.0, %v3429
    %v3431 = vpop.f32.mrb[0].mxu0
    %3432 = vmatprep.mubr.f32.mxu0 0.0
    %3433 = vmatmul.mubr.f32.gmra.mrb[0].mxu0 %v2713
    %v3434 = vpop.f32.mrb[0].mxu0
    %v3435 = vadd.f32 0.0, %v3434
    %v3436 = vpop.f32.mrb[0].mxu0
    %3437 = vmatprep.mubr.f32.mxu0 0.0
    %3438 = vmatmul.mubr.f32.gmra.mrb[0].mxu0 %v2716
    %v3439 = vpop.f32.mrb[0].mxu0
    %v3440 = vadd.f32 0.0, %v3439
    %v3441 = vpop.f32.mrb[0].mxu0
    %3442 = vmatprep.mubr.f32.mxu0 0.0
    %3443 = vmatmul.mubr.f32.gmra.mrb[0].mxu0 %v2719
    %v3444 = vpop.f32.mrb[0].mxu0
    %v3445 = vadd.f32 0.0, %v3444
    %v3446 = vpop.f32.mrb[0].mxu0
    %3447 = vmatprep.mubr.f32.mxu0 0.0
    %3448 = vmatmul.mubr.f32.gmra.mrb[0].mxu0 %v2722
    %v3449 = vpop.f32.mrb[0].mxu0
    %v3450 = vadd.f32 0.0, %v3449
    %v3451 = vpop.f32.mrb[0].mxu0
    %3452 = vmatprep.mubr.f32.mxu0 0.0
    %3453 = vmatmul.mubr.f32.gmra.mrb[0].mxu0 %v2725
    %v3454 = vpop.f32.mrb[0].mxu0
    %v3455 = vadd.f32 0.0, %v3454
    %v3456 = vpop.f32.mrb[0].mxu0
    %3457 = vmatprep.mubr.f32.mxu0 0.0
    %3458 = vmatmul.mubr.f32.gmra.mrb[0].mxu0 %v2728
    %v3459 = vpop.f32.mrb[0].mxu0
    %v3460 = vadd.f32 0.0, %v3459
    %v3461 = vpop.f32.mrb[0].mxu0
    %3462 = vmatprep.mubr.f32.mxu0 0.0
    %3463 = vmatmul.mubr.f32.gmra.mrb[0].mxu0 %v2731
    %v3464 = vpop.f32.mrb[0].mxu0
    %v3465 = vadd.f32 0.0, %v3464
    %v3466 = vpop.f32.mrb[0].mxu0
    %3467 = vmatprep.mubr.f32.mxu0 0.0
    %3468 = vmatmul.mubr.f32.gmra.mrb[0].mxu0 %v2734
    %v3469 = vpop.f32.mrb[0].mxu0
    %v3470 = vadd.f32 0.0, %v3469
    %v3471 = vpop.f32.mrb[0].mxu0
    %3472 = vmatprep.mubr.f32.mxu0 0.0
    %3473 = vmatmul.mubr.f32.gmra.mrb[0].mxu0 %v2737
    %v3474 = vpop.f32.mrb[0].mxu0
    %v3475 = vadd.f32 0.0, %v3474
    %v3476 = vpop.f32.mrb[0].mxu0
    %3477 = vmatprep.mubr.f32.mxu0 0.0
    %3478 = vmatmul.mubr.f32.gmra.mrb[0].mxu0 %v2740
    %v3479 = vpop.f32.mrb[0].mxu0
    %v3480 = vadd.f32 0.0, %v3479
    %v3481 = vpop.f32.mrb[0].mxu0
    %3482 = vmatprep.mubr.f32.mxu0 0.0
    %3483 = vmatmul.mubr.f32.gmra.mrb[0].mxu0 %v2743
    %v3484 = vpop.f32.mrb[0].mxu0
    %v3485 = vadd.f32 0.0, %v3484
    %v3486 = vpop.f32.mrb[0].mxu0
    %3487 = vmatprep.mubr.f32.mxu0 0.0
    %3488 = vmatmul.mubr.f32.gmra.mrb[0].mxu0 %v2746
    %v3489 = vpop.f32.mrb[0].mxu0
    %v3490 = vadd.f32 0.0, %v3489
    %v3491 = vpop.f32.mrb[0].mxu0
    %3492 = vmatprep.mubr.f32.mxu0 0.0
    %3493 = vmatmul.mubr.f32.gmra.mrb[0].mxu0 %v2749
    %v3494 = vpop.f32.mrb[0].mxu0
    %v3495 = vadd.f32 0.0, %v3494
    %v3496 = vpop.f32.mrb[0].mxu0
    %3497 = vmatprep.mubr.f32.mxu0 0.0
    %3498 = vmatmul.mubr.f32.gmra.mrb[0].mxu0 %v2752
    %v3499 = vpop.f32.mrb[0].mxu0
    %v3500 = vadd.f32 0.0, %v3499
    %v3501 = vpop.f32.mrb[0].mxu0
    %3502 = vdwg.mxu0
    %3503 = vst.msk [vmem:[#allocation6 + $0x200] sm:$0xff] %vm378, %v3345
    %3504 = vst.msk [vmem:[#allocation6 + $0x208] sm:$0xff] %vm378, %v3350
    %3505 = vst.msk [vmem:[#allocation6 + $0x210] sm:$0xff] %vm378, %v3355
    %3506 = vst.msk [vmem:[#allocation6 + $0x218] sm:$0xff] %vm378, %v3360
    %3507 = vst.msk [vmem:[#allocation6 + $0x220] sm:$0xff] %vm378, %v3365
    %3508 = vst.msk [vmem:[#allocation6 + $0x228] sm:$0xff] %vm378, %v3370
    %3509 = vst.msk [vmem:[#allocation6 + $0x230] sm:$0xff] %vm378, %v3375
    %3510 = vst.msk [vmem:[#allocation6 + $0x238] sm:$0xff] %vm378, %v3380
    %3511 = vst.msk [vmem:[#allocation6 + $0x240] sm:$0xff] %vm378, %v3385
    %3512 = vst.msk [vmem:[#allocation6 + $0x248] sm:$0xff] %vm378, %v3390
    %3513 = vst.msk [vmem:[#allocation6 + $0x250] sm:$0xff] %vm378, %v3395
    %3514 = vst.msk [vmem:[#allocation6 + $0x258] sm:$0xff] %vm378, %v3400
    %3515 = vst.msk [vmem:[#allocation6 + $0x260] sm:$0xff] %vm378, %v3405
    %3516 = vst.msk [vmem:[#allocation6 + $0x268] sm:$0xff] %vm378, %v3410
    %3517 = vst.msk [vmem:[#allocation6 + $0x270] sm:$0xff] %vm378, %v3415
    %3518 = vst.msk [vmem:[#allocation6 + $0x278] sm:$0xff] %vm378, %v3420
    %3519 = vst.msk [vmem:[#allocation6 + $0x280] sm:$0xff] %vm378, %v3425
    %3520 = vst.msk [vmem:[#allocation6 + $0x288] sm:$0xff] %vm378, %v3430
    %3521 = vst.msk [vmem:[#allocation6 + $0x290] sm:$0xff] %vm378, %v3435
    %3522 = vst.msk [vmem:[#allocation6 + $0x298] sm:$0xff] %vm378, %v3440
    %3523 = vst.msk [vmem:[#allocation6 + $0x2a0] sm:$0xff] %vm378, %v3445
    %3524 = vst.msk [vmem:[#allocation6 + $0x2a8] sm:$0xff] %vm378, %v3450
    %3525 = vst.msk [vmem:[#allocation6 + $0x2b0] sm:$0xff] %vm378, %v3455
    %3526 = vst.msk [vmem:[#allocation6 + $0x2b8] sm:$0xff] %vm378, %v3460
    %3527 = vst.msk [vmem:[#allocation6 + $0x2c0] sm:$0xff] %vm378, %v3465
    %3528 = vst.msk [vmem:[#allocation6 + $0x2c8] sm:$0xff] %vm378, %v3470
    %3529 = vst.msk [vmem:[#allocation6 + $0x2d0] sm:$0xff] %vm378, %v3475
    %3530 = vst.msk [vmem:[#allocation6 + $0x2d8] sm:$0xff] %vm378, %v3480
    %3531 = vst.msk [vmem:[#allocation6 + $0x2e0] sm:$0xff] %vm378, %v3485
    %3532 = vst.msk [vmem:[#allocation6 + $0x2e8] sm:$0xff] %vm378, %v3490
    %3533 = vst.msk [vmem:[#allocation6 + $0x2f0] sm:$0xff] %vm378, %v3495
    %3534 = vst.msk [vmem:[#allocation6 + $0x2f8] sm:$0xff] %vm378, %v3500
    %s3535 = scalar_lea.vmem %s20, 96
    %v3536 = vld [vmem:[%s3535] sm:$0xff]
    %v3537 = vld [vmem:[%s3535 + $0x8] sm:$0xff]
    %v3538 = vld [vmem:[%s3535 + $0x10] sm:$0xff]
    %v3539 = vld [vmem:[%s3535 + $0x18] sm:$0xff]
    %3540 = vmatprep.subr.mxu0 0.0
    %3541 = vmatpush1.msra.mxu0 %v3536
    %3542 = vmatprep.subr.mxu0 0.0
    %3543 = vmatpush1.msra.mxu0 %v3537
    %3544 = vmatprep.subr.mxu0 0.0
    %3545 = vmatpush1.msra.mxu0 %v3538
    %3546 = vmatprep.subr.mxu0 0.0
    %3547 = vmatpush1.msra.mxu0 %v3539
    %3548 = vmatprep.subr.mxu0 0.0
    %3549 = vmatpush1.msra.mxu0 0.0
    %3550 = vmatprep.subr.mxu0 0.0
    %3551 = vmatpush1.msra.mxu0 0.0
    %3552 = vmatprep.subr.mxu0 0.0
    %3553 = vmatpush1.msra.mxu0 0.0
    %3554 = vmatprep.subr.mxu0 0.0
    %3555 = vmatpush1.msra.mxu0 0.0
    %3556 = vmatprep.subr.mxu0 0.0
    %3557 = vmatpush1.msra.mxu0 0.0
    %3558 = vmatprep.subr.mxu0 0.0
    %3559 = vmatpush1.msra.mxu0 0.0
    %3560 = vmatprep.subr.mxu0 0.0
    %3561 = vmatpush1.msra.mxu0 0.0
    %3562 = vmatprep.subr.mxu0 0.0
    %3563 = vmatpush1.msra.mxu0 0.0
    %3564 = vmatprep.subr.mxu0 0.0
    %3565 = vmatpush1.msra.mxu0 0.0
    %3566 = vmatprep.subr.mxu0 0.0
    %3567 = vmatpush1.msra.mxu0 0.0
    %3568 = vmatprep.subr.mxu0 0.0
    %3569 = vmatpush1.msra.mxu0 0.0
    %3570 = vmatprep.subr.mxu0 0.0
    %3571 = vmatpush1.msra.mxu0 0.0
    %3572 = vmatprep.subr.mxu0 0.0
    %3573 = vmatpush1.msra.mxu0 0.0
    %3574 = vmatprep.subr.mxu0 0.0
    %3575 = vmatpush1.msra.mxu0 0.0
    %3576 = vmatprep.subr.mxu0 0.0
    %3577 = vmatpush1.msra.mxu0 0.0
    %3578 = vmatprep.subr.mxu0 0.0
    %3579 = vmatpush1.msra.mxu0 0.0
    %3580 = vmatprep.subr.mxu0 0.0
    %3581 = vmatpush1.msra.mxu0 0.0
    %3582 = vmatprep.subr.mxu0 0.0
    %3583 = vmatpush1.msra.mxu0 0.0
    %3584 = vmatprep.subr.mxu0 0.0
    %3585 = vmatpush1.msra.mxu0 0.0
    %3586 = vmatprep.subr.mxu0 0.0
    %3587 = vmatpush1.msra.mxu0 0.0
    %3588 = vmatprep.subr.mxu0 0.0
    %3589 = vmatpush1.msra.mxu0 0.0
    %3590 = vmatprep.subr.mxu0 0.0
    %3591 = vmatpush1.msra.mxu0 0.0
    %3592 = vmatprep.subr.mxu0 0.0
    %3593 = vmatpush1.msra.mxu0 0.0
    %3594 = vmatprep.subr.mxu0 0.0
    %3595 = vmatpush1.msra.mxu0 0.0
    %3596 = vmatprep.subr.mxu0 0.0
    %3597 = vmatpush1.msra.mxu0 0.0
    %3598 = vmatprep.subr.mxu0 0.0
    %3599 = vmatpush1.msra.mxu0 0.0
    %3600 = vmatprep.subr.mxu0 0.0
    %3601 = vmatpush1.msra.mxu0 0.0
    %3602 = vmatprep.subr.mxu0 0.0
    %3603 = vmatpush1.msra.mxu0 0.0
    %3604 = vmatprep.mubr.f32.mxu0 0.0
    %3605 = vmatmul.mubr.f32.gmra.mrb[0].mxu0 %v2659
    %v3606 = vpop.f32.mrb[0].mxu0
    %v3607 = vadd.f32 0.0, %v3606
    %v3608 = vpop.f32.mrb[0].mxu0
    %3609 = vmatprep.mubr.f32.mxu0 0.0
    %3610 = vmatmul.mubr.f32.gmra.mrb[0].mxu0 %v2662
    %v3611 = vpop.f32.mrb[0].mxu0
    %v3612 = vadd.f32 0.0, %v3611
    %v3613 = vpop.f32.mrb[0].mxu0
    %3614 = vmatprep.mubr.f32.mxu0 0.0
    %3615 = vmatmul.mubr.f32.gmra.mrb[0].mxu0 %v2665
    %v3616 = vpop.f32.mrb[0].mxu0
    %v3617 = vadd.f32 0.0, %v3616
    %v3618 = vpop.f32.mrb[0].mxu0
    %3619 = vmatprep.mubr.f32.mxu0 0.0
    %3620 = vmatmul.mubr.f32.gmra.mrb[0].mxu0 %v2668
    %v3621 = vpop.f32.mrb[0].mxu0
    %v3622 = vadd.f32 0.0, %v3621
    %v3623 = vpop.f32.mrb[0].mxu0
    %3624 = vmatprep.mubr.f32.mxu0 0.0
    %3625 = vmatmul.mubr.f32.gmra.mrb[0].mxu0 %v2671
    %v3626 = vpop.f32.mrb[0].mxu0
    %v3627 = vadd.f32 0.0, %v3626
    %v3628 = vpop.f32.mrb[0].mxu0
    %3629 = vmatprep.mubr.f32.mxu0 0.0
    %3630 = vmatmul.mubr.f32.gmra.mrb[0].mxu0 %v2674
    %v3631 = vpop.f32.mrb[0].mxu0
    %v3632 = vadd.f32 0.0, %v3631
    %v3633 = vpop.f32.mrb[0].mxu0
    %3634 = vmatprep.mubr.f32.mxu0 0.0
    %3635 = vmatmul.mubr.f32.gmra.mrb[0].mxu0 %v2677
    %v3636 = vpop.f32.mrb[0].mxu0
    %v3637 = vadd.f32 0.0, %v3636
    %v3638 = vpop.f32.mrb[0].mxu0
    %3639 = vmatprep.mubr.f32.mxu0 0.0
    %3640 = vmatmul.mubr.f32.gmra.mrb[0].mxu0 %v2680
    %v3641 = vpop.f32.mrb[0].mxu0
    %v3642 = vadd.f32 0.0, %v3641
    %v3643 = vpop.f32.mrb[0].mxu0
    %3644 = vmatprep.mubr.f32.mxu0 0.0
    %3645 = vmatmul.mubr.f32.gmra.mrb[0].mxu0 %v2683
    %v3646 = vpop.f32.mrb[0].mxu0
    %v3647 = vadd.f32 0.0, %v3646
    %v3648 = vpop.f32.mrb[0].mxu0
    %3649 = vmatprep.mubr.f32.mxu0 0.0
    %3650 = vmatmul.mubr.f32.gmra.mrb[0].mxu0 %v2686
    %v3651 = vpop.f32.mrb[0].mxu0
    %v3652 = vadd.f32 0.0, %v3651
    %v3653 = vpop.f32.mrb[0].mxu0
    %3654 = vmatprep.mubr.f32.mxu0 0.0
    %3655 = vmatmul.mubr.f32.gmra.mrb[0].mxu0 %v2689
    %v3656 = vpop.f32.mrb[0].mxu0
    %v3657 = vadd.f32 0.0, %v3656
    %v3658 = vpop.f32.mrb[0].mxu0
    %3659 = vmatprep.mubr.f32.mxu0 0.0
    %3660 = vmatmul.mubr.f32.gmra.mrb[0].mxu0 %v2692
    %v3661 = vpop.f32.mrb[0].mxu0
    %v3662 = vadd.f32 0.0, %v3661
    %v3663 = vpop.f32.mrb[0].mxu0
    %3664 = vmatprep.mubr.f32.mxu0 0.0
    %3665 = vmatmul.mubr.f32.gmra.mrb[0].mxu0 %v2695
    %v3666 = vpop.f32.mrb[0].mxu0
    %v3667 = vadd.f32 0.0, %v3666
    %v3668 = vpop.f32.mrb[0].mxu0
    %3669 = vmatprep.mubr.f32.mxu0 0.0
    %3670 = vmatmul.mubr.f32.gmra.mrb[0].mxu0 %v2698
    %v3671 = vpop.f32.mrb[0].mxu0
    %v3672 = vadd.f32 0.0, %v3671
    %v3673 = vpop.f32.mrb[0].mxu0
    %3674 = vmatprep.mubr.f32.mxu0 0.0
    %3675 = vmatmul.mubr.f32.gmra.mrb[0].mxu0 %v2701
    %v3676 = vpop.f32.mrb[0].mxu0
    %v3677 = vadd.f32 0.0, %v3676
    %v3678 = vpop.f32.mrb[0].mxu0
    %3679 = vmatprep.mubr.f32.mxu0 0.0
    %3680 = vmatmul.mubr.f32.gmra.mrb[0].mxu0 %v2704
    %v3681 = vpop.f32.mrb[0].mxu0
    %v3682 = vadd.f32 0.0, %v3681
    %v3683 = vpop.f32.mrb[0].mxu0
    %3684 = vmatprep.mubr.f32.mxu0 0.0
    %3685 = vmatmul.mubr.f32.gmra.mrb[0].mxu0 %v2707
    %v3686 = vpop.f32.mrb[0].mxu0
    %v3687 = vadd.f32 0.0, %v3686
    %v3688 = vpop.f32.mrb[0].mxu0
    %3689 = vmatprep.mubr.f32.mxu0 0.0
    %3690 = vmatmul.mubr.f32.gmra.mrb[0].mxu0 %v2710
    %v3691 = vpop.f32.mrb[0].mxu0
    %v3692 = vadd.f32 0.0, %v3691
    %v3693 = vpop.f32.mrb[0].mxu0
    %3694 = vmatprep.mubr.f32.mxu0 0.0
    %3695 = vmatmul.mubr.f32.gmra.mrb[0].mxu0 %v2713
    %v3696 = vpop.f32.mrb[0].mxu0
    %v3697 = vadd.f32 0.0, %v3696
    %v3698 = vpop.f32.mrb[0].mxu0
    %3699 = vmatprep.mubr.f32.mxu0 0.0
    %3700 = vmatmul.mubr.f32.gmra.mrb[0].mxu0 %v2716
    %v3701 = vpop.f32.mrb[0].mxu0
    %v3702 = vadd.f32 0.0, %v3701
    %v3703 = vpop.f32.mrb[0].mxu0
    %3704 = vmatprep.mubr.f32.mxu0 0.0
    %3705 = vmatmul.mubr.f32.gmra.mrb[0].mxu0 %v2719
    %v3706 = vpop.f32.mrb[0].mxu0
    %v3707 = vadd.f32 0.0, %v3706
    %v3708 = vpop.f32.mrb[0].mxu0
    %3709 = vmatprep.mubr.f32.mxu0 0.0
    %3710 = vmatmul.mubr.f32.gmra.mrb[0].mxu0 %v2722
    %v3711 = vpop.f32.mrb[0].mxu0
    %v3712 = vadd.f32 0.0, %v3711
    %v3713 = vpop.f32.mrb[0].mxu0
    %3714 = vmatprep.mubr.f32.mxu0 0.0
    %3715 = vmatmul.mubr.f32.gmra.mrb[0].mxu0 %v2725
    %v3716 = vpop.f32.mrb[0].mxu0
    %v3717 = vadd.f32 0.0, %v3716
    %v3718 = vpop.f32.mrb[0].mxu0
    %3719 = vmatprep.mubr.f32.mxu0 0.0
    %3720 = vmatmul.mubr.f32.gmra.mrb[0].mxu0 %v2728
    %v3721 = vpop.f32.mrb[0].mxu0
    %v3722 = vadd.f32 0.0, %v3721
    %v3723 = vpop.f32.mrb[0].mxu0
    %3724 = vmatprep.mubr.f32.mxu0 0.0
    %3725 = vmatmul.mubr.f32.gmra.mrb[0].mxu0 %v2731
    %v3726 = vpop.f32.mrb[0].mxu0
    %v3727 = vadd.f32 0.0, %v3726
    %v3728 = vpop.f32.mrb[0].mxu0
    %3729 = vmatprep.mubr.f32.mxu0 0.0
    %3730 = vmatmul.mubr.f32.gmra.mrb[0].mxu0 %v2734
    %v3731 = vpop.f32.mrb[0].mxu0
    %v3732 = vadd.f32 0.0, %v3731
    %v3733 = vpop.f32.mrb[0].mxu0
    %3734 = vmatprep.mubr.f32.mxu0 0.0
    %3735 = vmatmul.mubr.f32.gmra.mrb[0].mxu0 %v2737
    %v3736 = vpop.f32.mrb[0].mxu0
    %v3737 = vadd.f32 0.0, %v3736
    %v3738 = vpop.f32.mrb[0].mxu0
    %3739 = vmatprep.mubr.f32.mxu0 0.0
    %3740 = vmatmul.mubr.f32.gmra.mrb[0].mxu0 %v2740
    %v3741 = vpop.f32.mrb[0].mxu0
    %v3742 = vadd.f32 0.0, %v3741
    %v3743 = vpop.f32.mrb[0].mxu0
    %3744 = vmatprep.mubr.f32.mxu0 0.0
    %3745 = vmatmul.mubr.f32.gmra.mrb[0].mxu0 %v2743
    %v3746 = vpop.f32.mrb[0].mxu0
    %v3747 = vadd.f32 0.0, %v3746
    %v3748 = vpop.f32.mrb[0].mxu0
    %3749 = vmatprep.mubr.f32.mxu0 0.0
    %3750 = vmatmul.mubr.f32.gmra.mrb[0].mxu0 %v2746
    %v3751 = vpop.f32.mrb[0].mxu0
    %v3752 = vadd.f32 0.0, %v3751
    %v3753 = vpop.f32.mrb[0].mxu0
    %3754 = vmatprep.mubr.f32.mxu0 0.0
    %3755 = vmatmul.mubr.f32.gmra.mrb[0].mxu0 %v2749
    %v3756 = vpop.f32.mrb[0].mxu0
    %v3757 = vadd.f32 0.0, %v3756
    %v3758 = vpop.f32.mrb[0].mxu0
    %3759 = vmatprep.mubr.f32.mxu0 0.0
    %3760 = vmatmul.mubr.f32.gmra.mrb[0].mxu0 %v2752
    %v3761 = vpop.f32.mrb[0].mxu0
    %v3762 = vadd.f32 0.0, %v3761
    %v3763 = vpop.f32.mrb[0].mxu0
    %3764 = vdwg.mxu0
    %3765 = vst.msk [vmem:[#allocation6 + $0x300] sm:$0xff] %vm378, %v3607
    %3766 = vst.msk [vmem:[#allocation6 + $0x308] sm:$0xff] %vm378, %v3612
    %3767 = vst.msk [vmem:[#allocation6 + $0x310] sm:$0xff] %vm378, %v3617
    %3768 = vst.msk [vmem:[#allocation6 + $0x318] sm:$0xff] %vm378, %v3622
    %3769 = vst.msk [vmem:[#allocation6 + $0x320] sm:$0xff] %vm378, %v3627
    %3770 = vst.msk [vmem:[#allocation6 + $0x328] sm:$0xff] %vm378, %v3632
    %3771 = vst.msk [vmem:[#allocation6 + $0x330] sm:$0xff] %vm378, %v3637
    %3772 = vst.msk [vmem:[#allocation6 + $0x338] sm:$0xff] %vm378, %v3642
    %3773 = vst.msk [vmem:[#allocation6 + $0x340] sm:$0xff] %vm378, %v3647
    %3774 = vst.msk [vmem:[#allocation6 + $0x348] sm:$0xff] %vm378, %v3652
    %3775 = vst.msk [vmem:[#allocation6 + $0x350] sm:$0xff] %vm378, %v3657
    %3776 = vst.msk [vmem:[#allocation6 + $0x358] sm:$0xff] %vm378, %v3662
    %3777 = vst.msk [vmem:[#allocation6 + $0x360] sm:$0xff] %vm378, %v3667
    %3778 = vst.msk [vmem:[#allocation6 + $0x368] sm:$0xff] %vm378, %v3672
    %3779 = vst.msk [vmem:[#allocation6 + $0x370] sm:$0xff] %vm378, %v3677
    %3780 = vst.msk [vmem:[#allocation6 + $0x378] sm:$0xff] %vm378, %v3682
    %3781 = vst.msk [vmem:[#allocation6 + $0x380] sm:$0xff] %vm378, %v3687
    %3782 = vst.msk [vmem:[#allocation6 + $0x388] sm:$0xff] %vm378, %v3692
    %3783 = vst.msk [vmem:[#allocation6 + $0x390] sm:$0xff] %vm378, %v3697
    %3784 = vst.msk [vmem:[#allocation6 + $0x398] sm:$0xff] %vm378, %v3702
    %3785 = vst.msk [vmem:[#allocation6 + $0x3a0] sm:$0xff] %vm378, %v3707
    %3786 = vst.msk [vmem:[#allocation6 + $0x3a8] sm:$0xff] %vm378, %v3712
    %3787 = vst.msk [vmem:[#allocation6 + $0x3b0] sm:$0xff] %vm378, %v3717
    %3788 = vst.msk [vmem:[#allocation6 + $0x3b8] sm:$0xff] %vm378, %v3722
    %3789 = vst.msk [vmem:[#allocation6 + $0x3c0] sm:$0xff] %vm378, %v3727
    %3790 = vst.msk [vmem:[#allocation6 + $0x3c8] sm:$0xff] %vm378, %v3732
    %3791 = vst.msk [vmem:[#allocation6 + $0x3d0] sm:$0xff] %vm378, %v3737
    %3792 = vst.msk [vmem:[#allocation6 + $0x3d8] sm:$0xff] %vm378, %v3742
    %3793 = vst.msk [vmem:[#allocation6 + $0x3e0] sm:$0xff] %vm378, %v3747
    %3794 = vst.msk [vmem:[#allocation6 + $0x3e8] sm:$0xff] %vm378, %v3752
    %3795 = vst.msk [vmem:[#allocation6 + $0x3f0] sm:$0xff] %vm378, %v3757
    %3796 = vst.msk [vmem:[#allocation6 + $0x3f8] sm:$0xff] %vm378, %v3762
    %v3797 = vld [vmem:[#allocation6] sm:$0xff]
    %v3798 = vld [vmem:[#allocation6 + $0x8] sm:$0xff]
    %v3799 = vld [vmem:[#allocation6 + $0x10] sm:$0xff]
    %v3800 = vld [vmem:[#allocation6 + $0x18] sm:$0xff]
    %v3801 = vld [vmem:[#allocation6 + $0x20] sm:$0xff]
    %v3802 = vld [vmem:[#allocation6 + $0x28] sm:$0xff]
    %v3803 = vld [vmem:[#allocation6 + $0x30] sm:$0xff]
    %v3804 = vld [vmem:[#allocation6 + $0x38] sm:$0xff]
    %v3805 = vld [vmem:[#allocation6 + $0x40] sm:$0xff]
    %v3806 = vld [vmem:[#allocation6 + $0x48] sm:$0xff]
    %v3807 = vld [vmem:[#allocation6 + $0x50] sm:$0xff]
    %v3808 = vld [vmem:[#allocation6 + $0x58] sm:$0xff]
    %v3809 = vld [vmem:[#allocation6 + $0x60] sm:$0xff]
    %v3810 = vld [vmem:[#allocation6 + $0x68] sm:$0xff]
    %v3811 = vld [vmem:[#allocation6 + $0x70] sm:$0xff]
    %v3812 = vld [vmem:[#allocation6 + $0x78] sm:$0xff]
    %v3813 = vld [vmem:[#allocation6 + $0x80] sm:$0xff]
    %v3814 = vld [vmem:[#allocation6 + $0x88] sm:$0xff]
    %v3815 = vld [vmem:[#allocation6 + $0x90] sm:$0xff]
    %v3816 = vld [vmem:[#allocation6 + $0x98] sm:$0xff]
    %v3817 = vld [vmem:[#allocation6 + $0xa0] sm:$0xff]
    %v3818 = vld [vmem:[#allocation6 + $0xa8] sm:$0xff]
    %v3819 = vld [vmem:[#allocation6 + $0xb0] sm:$0xff]
    %v3820 = vld [vmem:[#allocation6 + $0xb8] sm:$0xff]
    %v3821 = vld [vmem:[#allocation6 + $0xc0] sm:$0xff]
    %v3822 = vld [vmem:[#allocation6 + $0xc8] sm:$0xff]
    %v3823 = vld [vmem:[#allocation6 + $0xd0] sm:$0xff]
    %v3824 = vld [vmem:[#allocation6 + $0xd8] sm:$0xff]
    %v3825 = vld [vmem:[#allocation6 + $0xe0] sm:$0xff]
    %v3826 = vld [vmem:[#allocation6 + $0xe8] sm:$0xff]
    %v3827 = vld [vmem:[#allocation6 + $0xf0] sm:$0xff]
    %v3828 = vld [vmem:[#allocation6 + $0xf8] sm:$0xff]
    %v3829 = vld [vmem:[#allocation6 + $0x100] sm:$0xff]
    %v3830 = vld [vmem:[#allocation6 + $0x108] sm:$0xff]
    %v3831 = vld [vmem:[#allocation6 + $0x110] sm:$0xff]
    %v3832 = vld [vmem:[#allocation6 + $0x118] sm:$0xff]
    %v3833 = vld [vmem:[#allocation6 + $0x120] sm:$0xff]
    %v3834 = vld [vmem:[#allocation6 + $0x128] sm:$0xff]
    %v3835 = vld [vmem:[#allocation6 + $0x130] sm:$0xff]
    %v3836 = vld [vmem:[#allocation6 + $0x138] sm:$0xff]
    %v3837 = vld [vmem:[#allocation6 + $0x140] sm:$0xff]
    %v3838 = vld [vmem:[#allocation6 + $0x148] sm:$0xff]
    %v3839 = vld [vmem:[#allocation6 + $0x150] sm:$0xff]
    %v3840 = vld [vmem:[#allocation6 + $0x158] sm:$0xff]
    %v3841 = vld [vmem:[#allocation6 + $0x160] sm:$0xff]
    %v3842 = vld [vmem:[#allocation6 + $0x168] sm:$0xff]
    %v3843 = vld [vmem:[#allocation6 + $0x170] sm:$0xff]
    %v3844 = vld [vmem:[#allocation6 + $0x178] sm:$0xff]
    %v3845 = vld [vmem:[#allocation6 + $0x180] sm:$0xff]
    %v3846 = vld [vmem:[#allocation6 + $0x188] sm:$0xff]
    %v3847 = vld [vmem:[#allocation6 + $0x190] sm:$0xff]
    %v3848 = vld [vmem:[#allocation6 + $0x198] sm:$0xff]
    %v3849 = vld [vmem:[#allocation6 + $0x1a0] sm:$0xff]
    %v3850 = vld [vmem:[#allocation6 + $0x1a8] sm:$0xff]
    %v3851 = vld [vmem:[#allocation6 + $0x1b0] sm:$0xff]
    %v3852 = vld [vmem:[#allocation6 + $0x1b8] sm:$0xff]
    %v3853 = vld [vmem:[#allocation6 + $0x1c0] sm:$0xff]
    %v3854 = vld [vmem:[#allocation6 + $0x1c8] sm:$0xff]
    %v3855 = vld [vmem:[#allocation6 + $0x1d0] sm:$0xff]
    %v3856 = vld [vmem:[#allocation6 + $0x1d8] sm:$0xff]
    %v3857 = vld [vmem:[#allocation6 + $0x1e0] sm:$0xff]
    %v3858 = vld [vmem:[#allocation6 + $0x1e8] sm:$0xff]
    %v3859 = vld [vmem:[#allocation6 + $0x1f0] sm:$0xff]
    %v3860 = vld [vmem:[#allocation6 + $0x1f8] sm:$0xff]
    %v3861 = vld [vmem:[#allocation6 + $0x200] sm:$0xff]
    %v3862 = vld [vmem:[#allocation6 + $0x208] sm:$0xff]
    %v3863 = vld [vmem:[#allocation6 + $0x210] sm:$0xff]
    %v3864 = vld [vmem:[#allocation6 + $0x218] sm:$0xff]
    %v3865 = vld [vmem:[#allocation6 + $0x220] sm:$0xff]
    %v3866 = vld [vmem:[#allocation6 + $0x228] sm:$0xff]
    %v3867 = vld [vmem:[#allocation6 + $0x230] sm:$0xff]
    %v3868 = vld [vmem:[#allocation6 + $0x238] sm:$0xff]
    %v3869 = vld [vmem:[#allocation6 + $0x240] sm:$0xff]
    %v3870 = vld [vmem:[#allocation6 + $0x248] sm:$0xff]
    %v3871 = vld [vmem:[#allocation6 + $0x250] sm:$0xff]
    %v3872 = vld [vmem:[#allocation6 + $0x258] sm:$0xff]
    %v3873 = vld [vmem:[#allocation6 + $0x260] sm:$0xff]
    %v3874 = vld [vmem:[#allocation6 + $0x268] sm:$0xff]
    %v3875 = vld [vmem:[#allocation6 + $0x270] sm:$0xff]
    %v3876 = vld [vmem:[#allocation6 + $0x278] sm:$0xff]
    %v3877 = vld [vmem:[#allocation6 + $0x280] sm:$0xff]
    %v3878 = vld [vmem:[#allocation6 + $0x288] sm:$0xff]
    %v3879 = vld [vmem:[#allocation6 + $0x290] sm:$0xff]
    %v3880 = vld [vmem:[#allocation6 + $0x298] sm:$0xff]
    %v3881 = vld [vmem:[#allocation6 + $0x2a0] sm:$0xff]
    %v3882 = vld [vmem:[#allocation6 + $0x2a8] sm:$0xff]
    %v3883 = vld [vmem:[#allocation6 + $0x2b0] sm:$0xff]
    %v3884 = vld [vmem:[#allocation6 + $0x2b8] sm:$0xff]
    %v3885 = vld [vmem:[#allocation6 + $0x2c0] sm:$0xff]
    %v3886 = vld [vmem:[#allocation6 + $0x2c8] sm:$0xff]
    %v3887 = vld [vmem:[#allocation6 + $0x2d0] sm:$0xff]
    %v3888 = vld [vmem:[#allocation6 + $0x2d8] sm:$0xff]
    %v3889 = vld [vmem:[#allocation6 + $0x2e0] sm:$0xff]
    %v3890 = vld [vmem:[#allocation6 + $0x2e8] sm:$0xff]
    %v3891 = vld [vmem:[#allocation6 + $0x2f0] sm:$0xff]
    %v3892 = vld [vmem:[#allocation6 + $0x2f8] sm:$0xff]
    %v3893 = vld [vmem:[#allocation6 + $0x300] sm:$0xff]
    %v3894 = vld [vmem:[#allocation6 + $0x308] sm:$0xff]
    %v3895 = vld [vmem:[#allocation6 + $0x310] sm:$0xff]
    %v3896 = vld [vmem:[#allocation6 + $0x318] sm:$0xff]
    %v3897 = vld [vmem:[#allocation6 + $0x320] sm:$0xff]
    %v3898 = vld [vmem:[#allocation6 + $0x328] sm:$0xff]
    %v3899 = vld [vmem:[#allocation6 + $0x330] sm:$0xff]
    %v3900 = vld [vmem:[#allocation6 + $0x338] sm:$0xff]
    %v3901 = vld [vmem:[#allocation6 + $0x340] sm:$0xff]
    %v3902 = vld [vmem:[#allocation6 + $0x348] sm:$0xff]
    %v3903 = vld [vmem:[#allocation6 + $0x350] sm:$0xff]
    %v3904 = vld [vmem:[#allocation6 + $0x358] sm:$0xff]
    %v3905 = vld [vmem:[#allocation6 + $0x360] sm:$0xff]
    %v3906 = vld [vmem:[#allocation6 + $0x368] sm:$0xff]
    %v3907 = vld [vmem:[#allocation6 + $0x370] sm:$0xff]
    %v3908 = vld [vmem:[#allocation6 + $0x378] sm:$0xff]
    %v3909 = vld [vmem:[#allocation6 + $0x380] sm:$0xff]
    %v3910 = vld [vmem:[#allocation6 + $0x388] sm:$0xff]
    %v3911 = vld [vmem:[#allocation6 + $0x390] sm:$0xff]
    %v3912 = vld [vmem:[#allocation6 + $0x398] sm:$0xff]
    %v3913 = vld [vmem:[#allocation6 + $0x3a0] sm:$0xff]
    %v3914 = vld [vmem:[#allocation6 + $0x3a8] sm:$0xff]
    %v3915 = vld [vmem:[#allocation6 + $0x3b0] sm:$0xff]
    %v3916 = vld [vmem:[#allocation6 + $0x3b8] sm:$0xff]
    %v3917 = vld [vmem:[#allocation6 + $0x3c0] sm:$0xff]
    %v3918 = vld [vmem:[#allocation6 + $0x3c8] sm:$0xff]
    %v3919 = vld [vmem:[#allocation6 + $0x3d0] sm:$0xff]
    %v3920 = vld [vmem:[#allocation6 + $0x3d8] sm:$0xff]
    %v3921 = vld [vmem:[#allocation6 + $0x3e0] sm:$0xff]
    %v3922 = vld [vmem:[#allocation6 + $0x3e8] sm:$0xff]
    %v3923 = vld [vmem:[#allocation6 + $0x3f0] sm:$0xff]
    %v3924 = vld [vmem:[#allocation6 + $0x3f8] sm:$0xff]
    %v3925 = vsel %vm378, %v3797, 0.0
    %v3926 = vsel %vm378, %v3798, 0.0
    %v3927 = vadd.f32 %v3925, %v3926
    %v3928 = vsel %vm378, %v3799, 0.0
    %v3929 = vadd.f32 %v3927, %v3928
    %v3930 = vsel %vm378, %v3800, 0.0
    %v3931 = vadd.f32 %v3929, %v3930
    %v3932 = vsel %vm378, %v3801, 0.0
    %v3933 = vadd.f32 %v3931, %v3932
    %v3934 = vsel %vm378, %v3802, 0.0
    %v3935 = vadd.f32 %v3933, %v3934
    %v3936 = vsel %vm378, %v3803, 0.0
    %v3937 = vadd.f32 %v3935, %v3936
    %v3938 = vsel %vm378, %v3804, 0.0
    %v3939 = vadd.f32 %v3937, %v3938
    %v3940 = vsel %vm378, %v3805, 0.0
    %v3941 = vadd.f32 %v3939, %v3940
    %v3942 = vsel %vm378, %v3806, 0.0
    %v3943 = vadd.f32 %v3941, %v3942
    %v3944 = vsel %vm378, %v3807, 0.0
    %v3945 = vadd.f32 %v3943, %v3944
    %v3946 = vsel %vm378, %v3808, 0.0
    %v3947 = vadd.f32 %v3945, %v3946
    %v3948 = vsel %vm378, %v3809, 0.0
    %v3949 = vadd.f32 %v3947, %v3948
    %v3950 = vsel %vm378, %v3810, 0.0
    %v3951 = vadd.f32 %v3949, %v3950
    %v3952 = vsel %vm378, %v3811, 0.0
    %v3953 = vadd.f32 %v3951, %v3952
    %v3954 = vsel %vm378, %v3812, 0.0
    %v3955 = vadd.f32 %v3953, %v3954
    %v3956 = vsel %vm378, %v3813, 0.0
    %v3957 = vadd.f32 %v3955, %v3956
    %v3958 = vsel %vm378, %v3814, 0.0
    %v3959 = vadd.f32 %v3957, %v3958
    %v3960 = vsel %vm378, %v3815, 0.0
    %v3961 = vadd.f32 %v3959, %v3960
    %v3962 = vsel %vm378, %v3816, 0.0
    %v3963 = vadd.f32 %v3961, %v3962
    %v3964 = vsel %vm378, %v3817, 0.0
    %v3965 = vadd.f32 %v3963, %v3964
    %v3966 = vsel %vm378, %v3818, 0.0
    %v3967 = vadd.f32 %v3965, %v3966
    %v3968 = vsel %vm378, %v3819, 0.0
    %v3969 = vadd.f32 %v3967, %v3968
    %v3970 = vsel %vm378, %v3820, 0.0
    %v3971 = vadd.f32 %v3969, %v3970
    %v3972 = vsel %vm378, %v3821, 0.0
    %v3973 = vadd.f32 %v3971, %v3972
    %v3974 = vsel %vm378, %v3822, 0.0
    %v3975 = vadd.f32 %v3973, %v3974
    %v3976 = vsel %vm378, %v3823, 0.0
    %v3977 = vadd.f32 %v3975, %v3976
    %v3978 = vsel %vm378, %v3824, 0.0
    %v3979 = vadd.f32 %v3977, %v3978
    %v3980 = vsel %vm378, %v3825, 0.0
    %v3981 = vadd.f32 %v3979, %v3980
    %v3982 = vsel %vm378, %v3826, 0.0
    %v3983 = vadd.f32 %v3981, %v3982
    %v3984 = vsel %vm378, %v3827, 0.0
    %v3985 = vadd.f32 %v3983, %v3984
    %v3986 = vsel %vm378, %v3828, 0.0
    %v3987 = vadd.f32 %v3985, %v3986
    %v3988 = vsel %vm378, %v3829, 0.0
    %v3989 = vadd.f32 %v3987, %v3988
    %v3990 = vsel %vm378, %v3830, 0.0
    %v3991 = vadd.f32 %v3989, %v3990
    %v3992 = vsel %vm378, %v3831, 0.0
    %v3993 = vadd.f32 %v3991, %v3992
    %v3994 = vsel %vm378, %v3832, 0.0
    %v3995 = vadd.f32 %v3993, %v3994
    %v3996 = vsel %vm378, %v3833, 0.0
    %v3997 = vadd.f32 %v3995, %v3996
    %v3998 = vsel %vm378, %v3834, 0.0
    %v3999 = vadd.f32 %v3997, %v3998
    %v4000 = vsel %vm378, %v3835, 0.0
    %v4001 = vadd.f32 %v3999, %v4000
    %v4002 = vsel %vm378, %v3836, 0.0
    %v4003 = vadd.f32 %v4001, %v4002
    %v4004 = vsel %vm378, %v3837, 0.0
    %v4005 = vadd.f32 %v4003, %v4004
    %v4006 = vsel %vm378, %v3838, 0.0
    %v4007 = vadd.f32 %v4005, %v4006
    %v4008 = vsel %vm378, %v3839, 0.0
    %v4009 = vadd.f32 %v4007, %v4008
    %v4010 = vsel %vm378, %v3840, 0.0
    %v4011 = vadd.f32 %v4009, %v4010
    %v4012 = vsel %vm378, %v3841, 0.0
    %v4013 = vadd.f32 %v4011, %v4012
    %v4014 = vsel %vm378, %v3842, 0.0
    %v4015 = vadd.f32 %v4013, %v4014
    %v4016 = vsel %vm378, %v3843, 0.0
    %v4017 = vadd.f32 %v4015, %v4016
    %v4018 = vsel %vm378, %v3844, 0.0
    %v4019 = vadd.f32 %v4017, %v4018
    %v4020 = vsel %vm378, %v3845, 0.0
    %v4021 = vadd.f32 %v4019, %v4020
    %v4022 = vsel %vm378, %v3846, 0.0
    %v4023 = vadd.f32 %v4021, %v4022
    %v4024 = vsel %vm378, %v3847, 0.0
    %v4025 = vadd.f32 %v4023, %v4024
    %v4026 = vsel %vm378, %v3848, 0.0
    %v4027 = vadd.f32 %v4025, %v4026
    %v4028 = vsel %vm378, %v3849, 0.0
    %v4029 = vadd.f32 %v4027, %v4028
    %v4030 = vsel %vm378, %v3850, 0.0
    %v4031 = vadd.f32 %v4029, %v4030
    %v4032 = vsel %vm378, %v3851, 0.0
    %v4033 = vadd.f32 %v4031, %v4032
    %v4034 = vsel %vm378, %v3852, 0.0
    %v4035 = vadd.f32 %v4033, %v4034
    %v4036 = vsel %vm378, %v3853, 0.0
    %v4037 = vadd.f32 %v4035, %v4036
    %v4038 = vsel %vm378, %v3854, 0.0
    %v4039 = vadd.f32 %v4037, %v4038
    %v4040 = vsel %vm378, %v3855, 0.0
    %v4041 = vadd.f32 %v4039, %v4040
    %v4042 = vsel %vm378, %v3856, 0.0
    %v4043 = vadd.f32 %v4041, %v4042
    %v4044 = vsel %vm378, %v3857, 0.0
    %v4045 = vadd.f32 %v4043, %v4044
    %v4046 = vsel %vm378, %v3858, 0.0
    %v4047 = vadd.f32 %v4045, %v4046
    %v4048 = vsel %vm378, %v3859, 0.0
    %v4049 = vadd.f32 %v4047, %v4048
    %v4050 = vsel %vm378, %v3860, 0.0
    %v4051 = vadd.f32 %v4049, %v4050
    %v4052 = vsel %vm378, %v3861, 0.0
    %v4053 = vadd.f32 %v4051, %v4052
    %v4054 = vsel %vm378, %v3862, 0.0
    %v4055 = vadd.f32 %v4053, %v4054
    %v4056 = vsel %vm378, %v3863, 0.0
    %v4057 = vadd.f32 %v4055, %v4056
    %v4058 = vsel %vm378, %v3864, 0.0
    %v4059 = vadd.f32 %v4057, %v4058
    %v4060 = vsel %vm378, %v3865, 0.0
    %v4061 = vadd.f32 %v4059, %v4060
    %v4062 = vsel %vm378, %v3866, 0.0
    %v4063 = vadd.f32 %v4061, %v4062
    %v4064 = vsel %vm378, %v3867, 0.0
    %v4065 = vadd.f32 %v4063, %v4064
    %v4066 = vsel %vm378, %v3868, 0.0
    %v4067 = vadd.f32 %v4065, %v4066
    %v4068 = vsel %vm378, %v3869, 0.0
    %v4069 = vadd.f32 %v4067, %v4068
    %v4070 = vsel %vm378, %v3870, 0.0
    %v4071 = vadd.f32 %v4069, %v4070
    %v4072 = vsel %vm378, %v3871, 0.0
    %v4073 = vadd.f32 %v4071, %v4072
    %v4074 = vsel %vm378, %v3872, 0.0
    %v4075 = vadd.f32 %v4073, %v4074
    %v4076 = vsel %vm378, %v3873, 0.0
    %v4077 = vadd.f32 %v4075, %v4076
    %v4078 = vsel %vm378, %v3874, 0.0
    %v4079 = vadd.f32 %v4077, %v4078
    %v4080 = vsel %vm378, %v3875, 0.0
    %v4081 = vadd.f32 %v4079, %v4080
    %v4082 = vsel %vm378, %v3876, 0.0
    %v4083 = vadd.f32 %v4081, %v4082
    %v4084 = vsel %vm378, %v3877, 0.0
    %v4085 = vadd.f32 %v4083, %v4084
    %v4086 = vsel %vm378, %v3878, 0.0
    %v4087 = vadd.f32 %v4085, %v4086
    %v4088 = vsel %vm378, %v3879, 0.0
    %v4089 = vadd.f32 %v4087, %v4088
    %v4090 = vsel %vm378, %v3880, 0.0
    %v4091 = vadd.f32 %v4089, %v4090
    %v4092 = vsel %vm378, %v3881, 0.0
    %v4093 = vadd.f32 %v4091, %v4092
    %v4094 = vsel %vm378, %v3882, 0.0
    %v4095 = vadd.f32 %v4093, %v4094
    %v4096 = vsel %vm378, %v3883, 0.0
    %v4097 = vadd.f32 %v4095, %v4096
    %v4098 = vsel %vm378, %v3884, 0.0
    %v4099 = vadd.f32 %v4097, %v4098
    %v4100 = vsel %vm378, %v3885, 0.0
    %v4101 = vadd.f32 %v4099, %v4100
    %v4102 = vsel %vm378, %v3886, 0.0
    %v4103 = vadd.f32 %v4101, %v4102
    %v4104 = vsel %vm378, %v3887, 0.0
    %v4105 = vadd.f32 %v4103, %v4104
    %v4106 = vsel %vm378, %v3888, 0.0
    %v4107 = vadd.f32 %v4105, %v4106
    %v4108 = vsel %vm378, %v3889, 0.0
    %v4109 = vadd.f32 %v4107, %v4108
    %v4110 = vsel %vm378, %v3890, 0.0
    %v4111 = vadd.f32 %v4109, %v4110
    %v4112 = vsel %vm378, %v3891, 0.0
    %v4113 = vadd.f32 %v4111, %v4112
    %v4114 = vsel %vm378, %v3892, 0.0
    %v4115 = vadd.f32 %v4113, %v4114
    %v4116 = vsel %vm378, %v3893, 0.0
    %v4117 = vadd.f32 %v4115, %v4116
    %v4118 = vsel %vm378, %v3894, 0.0
    %v4119 = vadd.f32 %v4117, %v4118
    %v4120 = vsel %vm378, %v3895, 0.0
    %v4121 = vadd.f32 %v4119, %v4120
    %v4122 = vsel %vm378, %v3896, 0.0
    %v4123 = vadd.f32 %v4121, %v4122
    %v4124 = vsel %vm378, %v3897, 0.0
    %v4125 = vadd.f32 %v4123, %v4124
    %v4126 = vsel %vm378, %v3898, 0.0
    %v4127 = vadd.f32 %v4125, %v4126
    %v4128 = vsel %vm378, %v3899, 0.0
    %v4129 = vadd.f32 %v4127, %v4128
    %v4130 = vsel %vm378, %v3900, 0.0
    %v4131 = vadd.f32 %v4129, %v4130
    %v4132 = vsel %vm378, %v3901, 0.0
    %v4133 = vadd.f32 %v4131, %v4132
    %v4134 = vsel %vm378, %v3902, 0.0
    %v4135 = vadd.f32 %v4133, %v4134
    %v4136 = vsel %vm378, %v3903, 0.0
    %v4137 = vadd.f32 %v4135, %v4136
    %v4138 = vsel %vm378, %v3904, 0.0
    %v4139 = vadd.f32 %v4137, %v4138
    %v4140 = vsel %vm378, %v3905, 0.0
    %v4141 = vadd.f32 %v4139, %v4140
    %v4142 = vsel %vm378, %v3906, 0.0
    %v4143 = vadd.f32 %v4141, %v4142
    %v4144 = vsel %vm378, %v3907, 0.0
    %v4145 = vadd.f32 %v4143, %v4144
    %v4146 = vsel %vm378, %v3908, 0.0
    %v4147 = vadd.f32 %v4145, %v4146
    %v4148 = vsel %vm378, %v3909, 0.0
    %v4149 = vadd.f32 %v4147, %v4148
    %v4150 = vsel %vm378, %v3910, 0.0
    %v4151 = vadd.f32 %v4149, %v4150
    %v4152 = vsel %vm378, %v3911, 0.0
    %v4153 = vadd.f32 %v4151, %v4152
    %v4154 = vsel %vm378, %v3912, 0.0
    %v4155 = vadd.f32 %v4153, %v4154
    %v4156 = vsel %vm378, %v3913, 0.0
    %v4157 = vadd.f32 %v4155, %v4156
    %v4158 = vsel %vm378, %v3914, 0.0
    %v4159 = vadd.f32 %v4157, %v4158
    %v4160 = vsel %vm378, %v3915, 0.0
    %v4161 = vadd.f32 %v4159, %v4160
    %v4162 = vsel %vm378, %v3916, 0.0
    %v4163 = vadd.f32 %v4161, %v4162
    %v4164 = vsel %vm378, %v3917, 0.0
    %v4165 = vadd.f32 %v4163, %v4164
    %v4166 = vsel %vm378, %v3918, 0.0
    %v4167 = vadd.f32 %v4165, %v4166
    %v4168 = vsel %vm378, %v3919, 0.0
    %v4169 = vadd.f32 %v4167, %v4168
    %v4170 = vsel %vm378, %v3920, 0.0
    %v4171 = vadd.f32 %v4169, %v4170
    %v4172 = vsel %vm378, %v3921, 0.0
    %v4173 = vadd.f32 %v4171, %v4172
    %v4174 = vsel %vm378, %v3922, 0.0
    %v4175 = vadd.f32 %v4173, %v4174
    %v4176 = vsel %vm378, %v3923, 0.0
    %v4177 = vadd.f32 %v4175, %v4176
    %v4178 = vsel %vm378, %v3924, 0.0
    %v4179 = vadd.f32 %v4177, %v4178
    %v4180 = vrot.slane %v4179, 4
    %v4181 = vadd.f32 %v4179, %v4180
    %v4182 = vrot.slane %v4181, 2
    %v4183 = vadd.f32 %v4181, %v4182
    %v4184 = vrot.slane %v4183, 1
    %v4185 = vadd.f32 %v4183, %v4184
    %v4186 = vmul.f32 %v4185, 0.0009765625
    %v4187 = vmul.f32 %v3797, %v3797
    %v4188 = vmul.f32 %v3798, %v3798
    %v4189 = vmul.f32 %v3799, %v3799
    %v4190 = vmul.f32 %v3800, %v3800
    %v4191 = vmul.f32 %v3801, %v3801
    %v4192 = vmul.f32 %v3802, %v3802
    %v4193 = vmul.f32 %v3803, %v3803
    %v4194 = vmul.f32 %v3804, %v3804
    %v4195 = vmul.f32 %v3805, %v3805
    %v4196 = vmul.f32 %v3806, %v3806
    %v4197 = vmul.f32 %v3807, %v3807
    %v4198 = vmul.f32 %v3808, %v3808
    %v4199 = vmul.f32 %v3809, %v3809
    %v4200 = vmul.f32 %v3810, %v3810
    %v4201 = vmul.f32 %v3811, %v3811
    %v4202 = vmul.f32 %v3812, %v3812
    %v4203 = vmul.f32 %v3813, %v3813
    %v4204 = vmul.f32 %v3814, %v3814
    %v4205 = vmul.f32 %v3815, %v3815
    %v4206 = vmul.f32 %v3816, %v3816
    %v4207 = vmul.f32 %v3817, %v3817
    %v4208 = vmul.f32 %v3818, %v3818
    %v4209 = vmul.f32 %v3819, %v3819
    %v4210 = vmul.f32 %v3820, %v3820
    %v4211 = vmul.f32 %v3821, %v3821
    %v4212 = vmul.f32 %v3822, %v3822
    %v4213 = vmul.f32 %v3823, %v3823
    %v4214 = vmul.f32 %v3824, %v3824
    %v4215 = vmul.f32 %v3825, %v3825
    %v4216 = vmul.f32 %v3826, %v3826
    %v4217 = vmul.f32 %v3827, %v3827
    %v4218 = vmul.f32 %v3828, %v3828
    %v4219 = vmul.f32 %v3829, %v3829
    %v4220 = vmul.f32 %v3830, %v3830
    %v4221 = vmul.f32 %v3831, %v3831
    %v4222 = vmul.f32 %v3832, %v3832
    %v4223 = vmul.f32 %v3833, %v3833
    %v4224 = vmul.f32 %v3834, %v3834
    %v4225 = vmul.f32 %v3835, %v3835
    %v4226 = vmul.f32 %v3836, %v3836
    %v4227 = vmul.f32 %v3837, %v3837
    %v4228 = vmul.f32 %v3838, %v3838
    %v4229 = vmul.f32 %v3839, %v3839
    %v4230 = vmul.f32 %v3840, %v3840
    %v4231 = vmul.f32 %v3841, %v3841
    %v4232 = vmul.f32 %v3842, %v3842
    %v4233 = vmul.f32 %v3843, %v3843
    %v4234 = vmul.f32 %v3844, %v3844
    %v4235 = vmul.f32 %v3845, %v3845
    %v4236 = vmul.f32 %v3846, %v3846
    %v4237 = vmul.f32 %v3847, %v3847
    %v4238 = vmul.f32 %v3848, %v3848
    %v4239 = vmul.f32 %v3849, %v3849
    %v4240 = vmul.f32 %v3850, %v3850
    %v4241 = vmul.f32 %v3851, %v3851
    %v4242 = vmul.f32 %v3852, %v3852
    %v4243 = vmul.f32 %v3853, %v3853
    %v4244 = vmul.f32 %v3854, %v3854
    %v4245 = vmul.f32 %v3855, %v3855
    %v4246 = vmul.f32 %v3856, %v3856
    %v4247 = vmul.f32 %v3857, %v3857
    %v4248 = vmul.f32 %v3858, %v3858
    %v4249 = vmul.f32 %v3859, %v3859
    %v4250 = vmul.f32 %v3860, %v3860
    %v4251 = vmul.f32 %v3861, %v3861
    %v4252 = vmul.f32 %v3862, %v3862
    %v4253 = vmul.f32 %v3863, %v3863
    %v4254 = vmul.f32 %v3864, %v3864
    %v4255 = vmul.f32 %v3865, %v3865
    %v4256 = vmul.f32 %v3866, %v3866
    %v4257 = vmul.f32 %v3867, %v3867
    %v4258 = vmul.f32 %v3868, %v3868
    %v4259 = vmul.f32 %v3869, %v3869
    %v4260 = vmul.f32 %v3870, %v3870
    %v4261 = vmul.f32 %v3871, %v3871
    %v4262 = vmul.f32 %v3872, %v3872
    %v4263 = vmul.f32 %v3873, %v3873
    %v4264 = vmul.f32 %v3874, %v3874
    %v4265 = vmul.f32 %v3875, %v3875
    %v4266 = vmul.f32 %v3876, %v3876
    %v4267 = vmul.f32 %v3877, %v3877
    %v4268 = vmul.f32 %v3878, %v3878
    %v4269 = vmul.f32 %v3879, %v3879
    %v4270 = vmul.f32 %v3880, %v3880
    %v4271 = vmul.f32 %v3881, %v3881
    %v4272 = vmul.f32 %v3882, %v3882
    %v4273 = vmul.f32 %v3883, %v3883
    %v4274 = vmul.f32 %v3884, %v3884
    %v4275 = vmul.f32 %v3885, %v3885
    %v4276 = vmul.f32 %v3886, %v3886
    %v4277 = vmul.f32 %v3887, %v3887
    %v4278 = vmul.f32 %v3888, %v3888
    %v4279 = vmul.f32 %v3889, %v3889
    %v4280 = vmul.f32 %v3890, %v3890
    %v4281 = vmul.f32 %v3891, %v3891
    %v4282 = vmul.f32 %v3892, %v3892
    %v4283 = vmul.f32 %v3893, %v3893
    %v4284 = vmul.f32 %v3894, %v3894
    %v4285 = vmul.f32 %v3895, %v3895
    %v4286 = vmul.f32 %v3896, %v3896
    %v4287 = vmul.f32 %v3897, %v3897
    %v4288 = vmul.f32 %v3898, %v3898
    %v4289 = vmul.f32 %v3899, %v3899
    %v4290 = vmul.f32 %v3900, %v3900
    %v4291 = vmul.f32 %v3901, %v3901
    %v4292 = vmul.f32 %v3902, %v3902
    %v4293 = vmul.f32 %v3903, %v3903
    %v4294 = vmul.f32 %v3904, %v3904
    %v4295 = vmul.f32 %v3905, %v3905
    %v4296 = vmul.f32 %v3906, %v3906
    %v4297 = vmul.f32 %v3907, %v3907
    %v4298 = vmul.f32 %v3908, %v3908
    %v4299 = vmul.f32 %v3909, %v3909
    %v4300 = vmul.f32 %v3910, %v3910
    %v4301 = vmul.f32 %v3911, %v3911
    %v4302 = vmul.f32 %v3912, %v3912
    %v4303 = vmul.f32 %v3913, %v3913
    %v4304 = vmul.f32 %v3914, %v3914
    %v4305 = vmul.f32 %v3915, %v3915
    %v4306 = vmul.f32 %v3916, %v3916
    %v4307 = vmul.f32 %v3917, %v3917
    %v4308 = vmul.f32 %v3918, %v3918
    %v4309 = vmul.f32 %v3919, %v3919
    %v4310 = vmul.f32 %v3920, %v3920
    %v4311 = vmul.f32 %v3921, %v3921
    %v4312 = vmul.f32 %v3922, %v3922
    %v4313 = vmul.f32 %v3923, %v3923
    %v4314 = vmul.f32 %v3924, %v3924
    %v4315 = vsel %vm378, %v4187, 0.0
    %v4316 = vsel %vm378, %v4188, 0.0
    %v4317 = vadd.f32 %v4315, %v4316
    %v4318 = vsel %vm378, %v4189, 0.0
    %v4319 = vadd.f32 %v4317, %v4318
    %v4320 = vsel %vm378, %v4190, 0.0
    %v4321 = vadd.f32 %v4319, %v4320
    %v4322 = vsel %vm378, %v4191, 0.0
    %v4323 = vadd.f32 %v4321, %v4322
    %v4324 = vsel %vm378, %v4192, 0.0
    %v4325 = vadd.f32 %v4323, %v4324
    %v4326 = vsel %vm378, %v4193, 0.0
    %v4327 = vadd.f32 %v4325, %v4326
    %v4328 = vsel %vm378, %v4194, 0.0
    %v4329 = vadd.f32 %v4327, %v4328
    %v4330 = vsel %vm378, %v4195, 0.0
    %v4331 = vadd.f32 %v4329, %v4330
    %v4332 = vsel %vm378, %v4196, 0.0
    %v4333 = vadd.f32 %v4331, %v4332
    %v4334 = vsel %vm378, %v4197, 0.0
    %v4335 = vadd.f32 %v4333, %v4334
    %v4336 = vsel %vm378, %v4198, 0.0
    %v4337 = vadd.f32 %v4335, %v4336
    %v4338 = vsel %vm378, %v4199, 0.0
    %v4339 = vadd.f32 %v4337, %v4338
    %v4340 = vsel %vm378, %v4200, 0.0
    %v4341 = vadd.f32 %v4339, %v4340
    %v4342 = vsel %vm378, %v4201, 0.0
    %v4343 = vadd.f32 %v4341, %v4342
    %v4344 = vsel %vm378, %v4202, 0.0
    %v4345 = vadd.f32 %v4343, %v4344
    %v4346 = vsel %vm378, %v4203, 0.0
    %v4347 = vadd.f32 %v4345, %v4346
    %v4348 = vsel %vm378, %v4204, 0.0
    %v4349 = vadd.f32 %v4347, %v4348
    %v4350 = vsel %vm378, %v4205, 0.0
    %v4351 = vadd.f32 %v4349, %v4350
    %v4352 = vsel %vm378, %v4206, 0.0
    %v4353 = vadd.f32 %v4351, %v4352
    %v4354 = vsel %vm378, %v4207, 0.0
    %v4355 = vadd.f32 %v4353, %v4354
    %v4356 = vsel %vm378, %v4208, 0.0
    %v4357 = vadd.f32 %v4355, %v4356
    %v4358 = vsel %vm378, %v4209, 0.0
    %v4359 = vadd.f32 %v4357, %v4358
    %v4360 = vsel %vm378, %v4210, 0.0
    %v4361 = vadd.f32 %v4359, %v4360
    %v4362 = vsel %vm378, %v4211, 0.0
    %v4363 = vadd.f32 %v4361, %v4362
    %v4364 = vsel %vm378, %v4212, 0.0
    %v4365 = vadd.f32 %v4363, %v4364
    %v4366 = vsel %vm378, %v4213, 0.0
    %v4367 = vadd.f32 %v4365, %v4366
    %v4368 = vsel %vm378, %v4214, 0.0
    %v4369 = vadd.f32 %v4367, %v4368
    %v4370 = vsel %vm378, %v4215, 0.0
    %v4371 = vadd.f32 %v4369, %v4370
    %v4372 = vsel %vm378, %v4216, 0.0
    %v4373 = vadd.f32 %v4371, %v4372
    %v4374 = vsel %vm378, %v4217, 0.0
    %v4375 = vadd.f32 %v4373, %v4374
    %v4376 = vsel %vm378, %v4218, 0.0
    %v4377 = vadd.f32 %v4375, %v4376
    %v4378 = vsel %vm378, %v4219, 0.0
    %v4379 = vadd.f32 %v4377, %v4378
    %v4380 = vsel %vm378, %v4220, 0.0
    %v4381 = vadd.f32 %v4379, %v4380
    %v4382 = vsel %vm378, %v4221, 0.0
    %v4383 = vadd.f32 %v4381, %v4382
    %v4384 = vsel %vm378, %v4222, 0.0
    %v4385 = vadd.f32 %v4383, %v4384
    %v4386 = vsel %vm378, %v4223, 0.0
    %v4387 = vadd.f32 %v4385, %v4386
    %v4388 = vsel %vm378, %v4224, 0.0
    %v4389 = vadd.f32 %v4387, %v4388
    %v4390 = vsel %vm378, %v4225, 0.0
    %v4391 = vadd.f32 %v4389, %v4390
    %v4392 = vsel %vm378, %v4226, 0.0
    %v4393 = vadd.f32 %v4391, %v4392
    %v4394 = vsel %vm378, %v4227, 0.0
    %v4395 = vadd.f32 %v4393, %v4394
    %v4396 = vsel %vm378, %v4228, 0.0
    %v4397 = vadd.f32 %v4395, %v4396
    %v4398 = vsel %vm378, %v4229, 0.0
    %v4399 = vadd.f32 %v4397, %v4398
    %v4400 = vsel %vm378, %v4230, 0.0
    %v4401 = vadd.f32 %v4399, %v4400
    %v4402 = vsel %vm378, %v4231, 0.0
    %v4403 = vadd.f32 %v4401, %v4402
    %v4404 = vsel %vm378, %v4232, 0.0
    %v4405 = vadd.f32 %v4403, %v4404
    %v4406 = vsel %vm378, %v4233, 0.0
    %v4407 = vadd.f32 %v4405, %v4406
    %v4408 = vsel %vm378, %v4234, 0.0
    %v4409 = vadd.f32 %v4407, %v4408
    %v4410 = vsel %vm378, %v4235, 0.0
    %v4411 = vadd.f32 %v4409, %v4410
    %v4412 = vsel %vm378, %v4236, 0.0
    %v4413 = vadd.f32 %v4411, %v4412
    %v4414 = vsel %vm378, %v4237, 0.0
    %v4415 = vadd.f32 %v4413, %v4414
    %v4416 = vsel %vm378, %v4238, 0.0
    %v4417 = vadd.f32 %v4415, %v4416
    %v4418 = vsel %vm378, %v4239, 0.0
    %v4419 = vadd.f32 %v4417, %v4418
    %v4420 = vsel %vm378, %v4240, 0.0
    %v4421 = vadd.f32 %v4419, %v4420
    %v4422 = vsel %vm378, %v4241, 0.0
    %v4423 = vadd.f32 %v4421, %v4422
    %v4424 = vsel %vm378, %v4242, 0.0
    %v4425 = vadd.f32 %v4423, %v4424
    %v4426 = vsel %vm378, %v4243, 0.0
    %v4427 = vadd.f32 %v4425, %v4426
    %v4428 = vsel %vm378, %v4244, 0.0
    %v4429 = vadd.f32 %v4427, %v4428
    %v4430 = vsel %vm378, %v4245, 0.0
    %v4431 = vadd.f32 %v4429, %v4430
    %v4432 = vsel %vm378, %v4246, 0.0
    %v4433 = vadd.f32 %v4431, %v4432
    %v4434 = vsel %vm378, %v4247, 0.0
    %v4435 = vadd.f32 %v4433, %v4434
    %v4436 = vsel %vm378, %v4248, 0.0
    %v4437 = vadd.f32 %v4435, %v4436
    %v4438 = vsel %vm378, %v4249, 0.0
    %v4439 = vadd.f32 %v4437, %v4438
    %v4440 = vsel %vm378, %v4250, 0.0
    %v4441 = vadd.f32 %v4439, %v4440
    %v4442 = vsel %vm378, %v4251, 0.0
    %v4443 = vadd.f32 %v4441, %v4442
    %v4444 = vsel %vm378, %v4252, 0.0
    %v4445 = vadd.f32 %v4443, %v4444
    %v4446 = vsel %vm378, %v4253, 0.0
    %v4447 = vadd.f32 %v4445, %v4446
    %v4448 = vsel %vm378, %v4254, 0.0
    %v4449 = vadd.f32 %v4447, %v4448
    %v4450 = vsel %vm378, %v4255, 0.0
    %v4451 = vadd.f32 %v4449, %v4450
    %v4452 = vsel %vm378, %v4256, 0.0
    %v4453 = vadd.f32 %v4451, %v4452
    %v4454 = vsel %vm378, %v4257, 0.0
    %v4455 = vadd.f32 %v4453, %v4454
    %v4456 = vsel %vm378, %v4258, 0.0
    %v4457 = vadd.f32 %v4455, %v4456
    %v4458 = vsel %vm378, %v4259, 0.0
    %v4459 = vadd.f32 %v4457, %v4458
    %v4460 = vsel %vm378, %v4260, 0.0
    %v4461 = vadd.f32 %v4459, %v4460
    %v4462 = vsel %vm378, %v4261, 0.0
    %v4463 = vadd.f32 %v4461, %v4462
    %v4464 = vsel %vm378, %v4262, 0.0
    %v4465 = vadd.f32 %v4463, %v4464
    %v4466 = vsel %vm378, %v4263, 0.0
    %v4467 = vadd.f32 %v4465, %v4466
    %v4468 = vsel %vm378, %v4264, 0.0
    %v4469 = vadd.f32 %v4467, %v4468
    %v4470 = vsel %vm378, %v4265, 0.0
    %v4471 = vadd.f32 %v4469, %v4470
    %v4472 = vsel %vm378, %v4266, 0.0
    %v4473 = vadd.f32 %v4471, %v4472
    %v4474 = vsel %vm378, %v4267, 0.0
    %v4475 = vadd.f32 %v4473, %v4474
    %v4476 = vsel %vm378, %v4268, 0.0
    %v4477 = vadd.f32 %v4475, %v4476
    %v4478 = vsel %vm378, %v4269, 0.0
    %v4479 = vadd.f32 %v4477, %v4478
    %v4480 = vsel %vm378, %v4270, 0.0
    %v4481 = vadd.f32 %v4479, %v4480
    %v4482 = vsel %vm378, %v4271, 0.0
    %v4483 = vadd.f32 %v4481, %v4482
    %v4484 = vsel %vm378, %v4272, 0.0
    %v4485 = vadd.f32 %v4483, %v4484
    %v4486 = vsel %vm378, %v4273, 0.0
    %v4487 = vadd.f32 %v4485, %v4486
    %v4488 = vsel %vm378, %v4274, 0.0
    %v4489 = vadd.f32 %v4487, %v4488
    %v4490 = vsel %vm378, %v4275, 0.0
    %v4491 = vadd.f32 %v4489, %v4490
    %v4492 = vsel %vm378, %v4276, 0.0
    %v4493 = vadd.f32 %v4491, %v4492
    %v4494 = vsel %vm378, %v4277, 0.0
    %v4495 = vadd.f32 %v4493, %v4494
    %v4496 = vsel %vm378, %v4278, 0.0
    %v4497 = vadd.f32 %v4495, %v4496
    %v4498 = vsel %vm378, %v4279, 0.0
    %v4499 = vadd.f32 %v4497, %v4498
    %v4500 = vsel %vm378, %v4280, 0.0
    %v4501 = vadd.f32 %v4499, %v4500
    %v4502 = vsel %vm378, %v4281, 0.0
    %v4503 = vadd.f32 %v4501, %v4502
    %v4504 = vsel %vm378, %v4282, 0.0
    %v4505 = vadd.f32 %v4503, %v4504
    %v4506 = vsel %vm378, %v4283, 0.0
    %v4507 = vadd.f32 %v4505, %v4506
    %v4508 = vsel %vm378, %v4284, 0.0
    %v4509 = vadd.f32 %v4507, %v4508
    %v4510 = vsel %vm378, %v4285, 0.0
    %v4511 = vadd.f32 %v4509, %v4510
    %v4512 = vsel %vm378, %v4286, 0.0
    %v4513 = vadd.f32 %v4511, %v4512
    %v4514 = vsel %vm378, %v4287, 0.0
    %v4515 = vadd.f32 %v4513, %v4514
    %v4516 = vsel %vm378, %v4288, 0.0
    %v4517 = vadd.f32 %v4515, %v4516
    %v4518 = vsel %vm378, %v4289, 0.0
    %v4519 = vadd.f32 %v4517, %v4518
    %v4520 = vsel %vm378, %v4290, 0.0
    %v4521 = vadd.f32 %v4519, %v4520
    %v4522 = vsel %vm378, %v4291, 0.0
    %v4523 = vadd.f32 %v4521, %v4522
    %v4524 = vsel %vm378, %v4292, 0.0
    %v4525 = vadd.f32 %v4523, %v4524
    %v4526 = vsel %vm378, %v4293, 0.0
    %v4527 = vadd.f32 %v4525, %v4526
    %v4528 = vsel %vm378, %v4294, 0.0
    %v4529 = vadd.f32 %v4527, %v4528
    %v4530 = vsel %vm378, %v4295, 0.0
    %v4531 = vadd.f32 %v4529, %v4530
    %v4532 = vsel %vm378, %v4296, 0.0
    %v4533 = vadd.f32 %v4531, %v4532
    %v4534 = vsel %vm378, %v4297, 0.0
    %v4535 = vadd.f32 %v4533, %v4534
    %v4536 = vsel %vm378, %v4298, 0.0
    %v4537 = vadd.f32 %v4535, %v4536
    %v4538 = vsel %vm378, %v4299, 0.0
    %v4539 = vadd.f32 %v4537, %v4538
    %v4540 = vsel %vm378, %v4300, 0.0
    %v4541 = vadd.f32 %v4539, %v4540
    %v4542 = vsel %vm378, %v4301, 0.0
    %v4543 = vadd.f32 %v4541, %v4542
    %v4544 = vsel %vm378, %v4302, 0.0
    %v4545 = vadd.f32 %v4543, %v4544
    %v4546 = vsel %vm378, %v4303, 0.0
    %v4547 = vadd.f32 %v4545, %v4546
    %v4548 = vsel %vm378, %v4304, 0.0
    %v4549 = vadd.f32 %v4547, %v4548
    %v4550 = vsel %vm378, %v4305, 0.0
    %v4551 = vadd.f32 %v4549, %v4550
    %v4552 = vsel %vm378, %v4306, 0.0
    %v4553 = vadd.f32 %v4551, %v4552
    %v4554 = vsel %vm378, %v4307, 0.0
    %v4555 = vadd.f32 %v4553, %v4554
    %v4556 = vsel %vm378, %v4308, 0.0
    %v4557 = vadd.f32 %v4555, %v4556
    %v4558 = vsel %vm378, %v4309, 0.0
    %v4559 = vadd.f32 %v4557, %v4558
    %v4560 = vsel %vm378, %v4310, 0.0
    %v4561 = vadd.f32 %v4559, %v4560
    %v4562 = vsel %vm378, %v4311, 0.0
    %v4563 = vadd.f32 %v4561, %v4562
    %v4564 = vsel %vm378, %v4312, 0.0
    %v4565 = vadd.f32 %v4563, %v4564
    %v4566 = vsel %vm378, %v4313, 0.0
    %v4567 = vadd.f32 %v4565, %v4566
    %v4568 = vsel %vm378, %v4314, 0.0
    %v4569 = vadd.f32 %v4567, %v4568
    %v4570 = vrot.slane %v4569, 4
    %v4571 = vadd.f32 %v4569, %v4570
    %v4572 = vrot.slane %v4571, 2
    %v4573 = vadd.f32 %v4571, %v4572
    %v4574 = vrot.slane %v4573, 1
    %v4575 = vadd.f32 %v4573, %v4574
    %v4576 = vmul.f32 %v4575, 0.0009765625
    %v4577 = vmul.f32 %v4186, %v4186
    %v4578 = vsub.f32 %v4576, %v4577
    %v4579 = vld [vmem:[%s21] sm:$0x1]
    %v4580 = vadd.f32 %v4578, 1e-05
    %v4581 = vrsqrt.pop %v4580
    %v4582 = vmul.f32 %v4579, %v4581
    %v4583 = vld [vmem:[%s22] sm:$0x1]
    %v4584 = vmul.f32 %v4186, %v4582
    %v4585 = vsub.f32 %v4583, %v4584
    %v4587 = vlaneseq
    %v4588 = vshrl.u32 %v4587, 7
    %v4589 = vsub.s32 0, %v4588
    %v4590 = vrot.slane %v4582, %v4589
    %v4592 = vmul.f32 %v3797, %v4590
    %v4593 = vmul.f32 %v3798, %v4590
    %v4594 = vmul.f32 %v3799, %v4590
    %v4595 = vmul.f32 %v3800, %v4590
    %v4596 = vmul.f32 %v3801, %v4590
    %v4597 = vmul.f32 %v3802, %v4590
    %v4598 = vmul.f32 %v3803, %v4590
    %v4599 = vmul.f32 %v3804, %v4590
    %v4600 = vmul.f32 %v3805, %v4590
    %v4601 = vmul.f32 %v3806, %v4590
    %v4602 = vmul.f32 %v3807, %v4590
    %v4603 = vmul.f32 %v3808, %v4590
    %v4604 = vmul.f32 %v3809, %v4590
    %v4605 = vmul.f32 %v3810, %v4590
    %v4606 = vmul.f32 %v3811, %v4590
    %v4607 = vmul.f32 %v3812, %v4590
    %v4608 = vmul.f32 %v3813, %v4590
    %v4609 = vmul.f32 %v3814, %v4590
    %v4610 = vmul.f32 %v3815, %v4590
    %v4611 = vmul.f32 %v3816, %v4590
    %v4612 = vmul.f32 %v3817, %v4590
    %v4613 = vmul.f32 %v3818, %v4590
    %v4614 = vmul.f32 %v3819, %v4590
    %v4615 = vmul.f32 %v3820, %v4590
    %v4616 = vmul.f32 %v3821, %v4590
    %v4617 = vmul.f32 %v3822, %v4590
    %v4618 = vmul.f32 %v3823, %v4590
    %v4619 = vmul.f32 %v3824, %v4590
    %v4620 = vmul.f32 %v3825, %v4590
    %v4621 = vmul.f32 %v3826, %v4590
    %v4622 = vmul.f32 %v3827, %v4590
    %v4623 = vmul.f32 %v3828, %v4590
    %v4624 = vmul.f32 %v3829, %v4590
    %v4625 = vmul.f32 %v3830, %v4590
    %v4626 = vmul.f32 %v3831, %v4590
    %v4627 = vmul.f32 %v3832, %v4590
    %v4628 = vmul.f32 %v3833, %v4590
    %v4629 = vmul.f32 %v3834, %v4590
    %v4630 = vmul.f32 %v3835, %v4590
    %v4631 = vmul.f32 %v3836, %v4590
    %v4632 = vmul.f32 %v3837, %v4590
    %v4633 = vmul.f32 %v3838, %v4590
    %v4634 = vmul.f32 %v3839, %v4590
    %v4635 = vmul.f32 %v3840, %v4590
    %v4636 = vmul.f32 %v3841, %v4590
    %v4637 = vmul.f32 %v3842, %v4590
    %v4638 = vmul.f32 %v3843, %v4590
    %v4639 = vmul.f32 %v3844, %v4590
    %v4640 = vmul.f32 %v3845, %v4590
    %v4641 = vmul.f32 %v3846, %v4590
    %v4642 = vmul.f32 %v3847, %v4590
    %v4643 = vmul.f32 %v3848, %v4590
    %v4644 = vmul.f32 %v3849, %v4590
    %v4645 = vmul.f32 %v3850, %v4590
    %v4646 = vmul.f32 %v3851, %v4590
    %v4647 = vmul.f32 %v3852, %v4590
    %v4648 = vmul.f32 %v3853, %v4590
    %v4649 = vmul.f32 %v3854, %v4590
    %v4650 = vmul.f32 %v3855, %v4590
    %v4651 = vmul.f32 %v3856, %v4590
    %v4652 = vmul.f32 %v3857, %v4590
    %v4653 = vmul.f32 %v3858, %v4590
    %v4654 = vmul.f32 %v3859, %v4590
    %v4655 = vmul.f32 %v3860, %v4590
    %v4656 = vmul.f32 %v3861, %v4590
    %v4657 = vmul.f32 %v3862, %v4590
    %v4658 = vmul.f32 %v3863, %v4590
    %v4659 = vmul.f32 %v3864, %v4590
    %v4660 = vmul.f32 %v3865, %v4590
    %v4661 = vmul.f32 %v3866, %v4590
    %v4662 = vmul.f32 %v3867, %v4590
    %v4663 = vmul.f32 %v3868, %v4590
    %v4664 = vmul.f32 %v3869, %v4590
    %v4665 = vmul.f32 %v3870, %v4590
    %v4666 = vmul.f32 %v3871, %v4590
    %v4667 = vmul.f32 %v3872, %v4590
    %v4668 = vmul.f32 %v3873, %v4590
    %v4669 = vmul.f32 %v3874, %v4590
    %v4670 = vmul.f32 %v3875, %v4590
    %v4671 = vmul.f32 %v3876, %v4590
    %v4672 = vmul.f32 %v3877, %v4590
    %v4673 = vmul.f32 %v3878, %v4590
    %v4674 = vmul.f32 %v3879, %v4590
    %v4675 = vmul.f32 %v3880, %v4590
    %v4676 = vmul.f32 %v3881, %v4590
    %v4677 = vmul.f32 %v3882, %v4590
    %v4678 = vmul.f32 %v3883, %v4590
    %v4679 = vmul.f32 %v3884, %v4590
    %v4680 = vmul.f32 %v3885, %v4590
    %v4681 = vmul.f32 %v3886, %v4590
    %v4682 = vmul.f32 %v3887, %v4590
    %v4683 = vmul.f32 %v3888, %v4590
    %v4684 = vmul.f32 %v3889, %v4590
    %v4685 = vmul.f32 %v3890, %v4590
    %v4686 = vmul.f32 %v3891, %v4590
    %v4687 = vmul.f32 %v3892, %v4590
    %v4688 = vmul.f32 %v3893, %v4590
    %v4689 = vmul.f32 %v3894, %v4590
    %v4690 = vmul.f32 %v3895, %v4590
    %v4691 = vmul.f32 %v3896, %v4590
    %v4692 = vmul.f32 %v3897, %v4590
    %v4693 = vmul.f32 %v3898, %v4590
    %v4694 = vmul.f32 %v3899, %v4590
    %v4695 = vmul.f32 %v3900, %v4590
    %v4696 = vmul.f32 %v3901, %v4590
    %v4697 = vmul.f32 %v3902, %v4590
    %v4698 = vmul.f32 %v3903, %v4590
    %v4699 = vmul.f32 %v3904, %v4590
    %v4700 = vmul.f32 %v3905, %v4590
    %v4701 = vmul.f32 %v3906, %v4590
    %v4702 = vmul.f32 %v3907, %v4590
    %v4703 = vmul.f32 %v3908, %v4590
    %v4704 = vmul.f32 %v3909, %v4590
    %v4705 = vmul.f32 %v3910, %v4590
    %v4706 = vmul.f32 %v3911, %v4590
    %v4707 = vmul.f32 %v3912, %v4590
    %v4708 = vmul.f32 %v3913, %v4590
    %v4709 = vmul.f32 %v3914, %v4590
    %v4710 = vmul.f32 %v3915, %v4590
    %v4711 = vmul.f32 %v3916, %v4590
    %v4712 = vmul.f32 %v3917, %v4590
    %v4713 = vmul.f32 %v3918, %v4590
    %v4714 = vmul.f32 %v3919, %v4590
    %v4715 = vmul.f32 %v3920, %v4590
    %v4716 = vmul.f32 %v3921, %v4590
    %v4717 = vmul.f32 %v3922, %v4590
    %v4718 = vmul.f32 %v3923, %v4590
    %v4719 = vmul.f32 %v3924, %v4590
    %v4721 = vlaneseq
    %v4722 = vshrl.u32 %v4721, 7
    %v4723 = vsub.s32 0, %v4722
    %v4724 = vrot.slane %v4585, %v4723
    %v4726 = vadd.f32 %v4592, %v4724
    %v4727 = vadd.f32 %v4593, %v4724
    %v4728 = vadd.f32 %v4594, %v4724
    %v4729 = vadd.f32 %v4595, %v4724
    %v4730 = vadd.f32 %v4596, %v4724
    %v4731 = vadd.f32 %v4597, %v4724
    %v4732 = vadd.f32 %v4598, %v4724
    %v4733 = vadd.f32 %v4599, %v4724
    %v4734 = vadd.f32 %v4600, %v4724
    %v4735 = vadd.f32 %v4601, %v4724
    %v4736 = vadd.f32 %v4602, %v4724
    %v4737 = vadd.f32 %v4603, %v4724
    %v4738 = vadd.f32 %v4604, %v4724
    %v4739 = vadd.f32 %v4605, %v4724
    %v4740 = vadd.f32 %v4606, %v4724
    %v4741 = vadd.f32 %v4607, %v4724
    %v4742 = vadd.f32 %v4608, %v4724
    %v4743 = vadd.f32 %v4609, %v4724
    %v4744 = vadd.f32 %v4610, %v4724
    %v4745 = vadd.f32 %v4611, %v4724
    %v4746 = vadd.f32 %v4612, %v4724
    %v4747 = vadd.f32 %v4613, %v4724
    %v4748 = vadd.f32 %v4614, %v4724
    %v4749 = vadd.f32 %v4615, %v4724
    %v4750 = vadd.f32 %v4616, %v4724
    %v4751 = vadd.f32 %v4617, %v4724
    %v4752 = vadd.f32 %v4618, %v4724
    %v4753 = vadd.f32 %v4619, %v4724
    %v4754 = vadd.f32 %v4620, %v4724
    %v4755 = vadd.f32 %v4621, %v4724
    %v4756 = vadd.f32 %v4622, %v4724
    %v4757 = vadd.f32 %v4623, %v4724
    %v4758 = vadd.f32 %v4624, %v4724
    %v4759 = vadd.f32 %v4625, %v4724
    %v4760 = vadd.f32 %v4626, %v4724
    %v4761 = vadd.f32 %v4627, %v4724
    %v4762 = vadd.f32 %v4628, %v4724
    %v4763 = vadd.f32 %v4629, %v4724
    %v4764 = vadd.f32 %v4630, %v4724
    %v4765 = vadd.f32 %v4631, %v4724
    %v4766 = vadd.f32 %v4632, %v4724
    %v4767 = vadd.f32 %v4633, %v4724
    %v4768 = vadd.f32 %v4634, %v4724
    %v4769 = vadd.f32 %v4635, %v4724
    %v4770 = vadd.f32 %v4636, %v4724
    %v4771 = vadd.f32 %v4637, %v4724
    %v4772 = vadd.f32 %v4638, %v4724
    %v4773 = vadd.f32 %v4639, %v4724
    %v4774 = vadd.f32 %v4640, %v4724
    %v4775 = vadd.f32 %v4641, %v4724
    %v4776 = vadd.f32 %v4642, %v4724
    %v4777 = vadd.f32 %v4643, %v4724
    %v4778 = vadd.f32 %v4644, %v4724
    %v4779 = vadd.f32 %v4645, %v4724
    %v4780 = vadd.f32 %v4646, %v4724
    %v4781 = vadd.f32 %v4647, %v4724
    %v4782 = vadd.f32 %v4648, %v4724
    %v4783 = vadd.f32 %v4649, %v4724
    %v4784 = vadd.f32 %v4650, %v4724
    %v4785 = vadd.f32 %v4651, %v4724
    %v4786 = vadd.f32 %v4652, %v4724
    %v4787 = vadd.f32 %v4653, %v4724
    %v4788 = vadd.f32 %v4654, %v4724
    %v4789 = vadd.f32 %v4655, %v4724
    %v4790 = vadd.f32 %v4656, %v4724
    %v4791 = vadd.f32 %v4657, %v4724
    %v4792 = vadd.f32 %v4658, %v4724
    %v4793 = vadd.f32 %v4659, %v4724
    %v4794 = vadd.f32 %v4660, %v4724
    %v4795 = vadd.f32 %v4661, %v4724
    %v4796 = vadd.f32 %v4662, %v4724
    %v4797 = vadd.f32 %v4663, %v4724
    %v4798 = vadd.f32 %v4664, %v4724
    %v4799 = vadd.f32 %v4665, %v4724
    %v4800 = vadd.f32 %v4666, %v4724
    %v4801 = vadd.f32 %v4667, %v4724
    %v4802 = vadd.f32 %v4668, %v4724
    %v4803 = vadd.f32 %v4669, %v4724
    %v4804 = vadd.f32 %v4670, %v4724
    %v4805 = vadd.f32 %v4671, %v4724
    %v4806 = vadd.f32 %v4672, %v4724
    %v4807 = vadd.f32 %v4673, %v4724
    %v4808 = vadd.f32 %v4674, %v4724
    %v4809 = vadd.f32 %v4675, %v4724
    %v4810 = vadd.f32 %v4676, %v4724
    %v4811 = vadd.f32 %v4677, %v4724
    %v4812 = vadd.f32 %v4678, %v4724
    %v4813 = vadd.f32 %v4679, %v4724
    %v4814 = vadd.f32 %v4680, %v4724
    %v4815 = vadd.f32 %v4681, %v4724
    %v4816 = vadd.f32 %v4682, %v4724
    %v4817 = vadd.f32 %v4683, %v4724
    %v4818 = vadd.f32 %v4684, %v4724
    %v4819 = vadd.f32 %v4685, %v4724
    %v4820 = vadd.f32 %v4686, %v4724
    %v4821 = vadd.f32 %v4687, %v4724
    %v4822 = vadd.f32 %v4688, %v4724
    %v4823 = vadd.f32 %v4689, %v4724
    %v4824 = vadd.f32 %v4690, %v4724
    %v4825 = vadd.f32 %v4691, %v4724
    %v4826 = vadd.f32 %v4692, %v4724
    %v4827 = vadd.f32 %v4693, %v4724
    %v4828 = vadd.f32 %v4694, %v4724
    %v4829 = vadd.f32 %v4695, %v4724
    %v4830 = vadd.f32 %v4696, %v4724
    %v4831 = vadd.f32 %v4697, %v4724
    %v4832 = vadd.f32 %v4698, %v4724
    %v4833 = vadd.f32 %v4699, %v4724
    %v4834 = vadd.f32 %v4700, %v4724
    %v4835 = vadd.f32 %v4701, %v4724
    %v4836 = vadd.f32 %v4702, %v4724
    %v4837 = vadd.f32 %v4703, %v4724
    %v4838 = vadd.f32 %v4704, %v4724
    %v4839 = vadd.f32 %v4705, %v4724
    %v4840 = vadd.f32 %v4706, %v4724
    %v4841 = vadd.f32 %v4707, %v4724
    %v4842 = vadd.f32 %v4708, %v4724
    %v4843 = vadd.f32 %v4709, %v4724
    %v4844 = vadd.f32 %v4710, %v4724
    %v4845 = vadd.f32 %v4711, %v4724
    %v4846 = vadd.f32 %v4712, %v4724
    %v4847 = vadd.f32 %v4713, %v4724
    %v4848 = vadd.f32 %v4714, %v4724
    %v4849 = vadd.f32 %v4715, %v4724
    %v4850 = vadd.f32 %v4716, %v4724
    %v4851 = vadd.f32 %v4717, %v4724
    %v4852 = vadd.f32 %v4718, %v4724
    %v4853 = vadd.f32 %v4719, %v4724
    %vm4854 = vcmp.ge.f32.partialorder %v4726, 0.0
    %vm4855 = vcmp.ge.f32.partialorder %v4727, 0.0
    %vm4856 = vcmp.ge.f32.partialorder %v4728, 0.0
    %vm4857 = vcmp.ge.f32.partialorder %v4729, 0.0
    %vm4858 = vcmp.ge.f32.partialorder %v4730, 0.0
    %vm4859 = vcmp.ge.f32.partialorder %v4731, 0.0
    %vm4860 = vcmp.ge.f32.partialorder %v4732, 0.0
    %vm4861 = vcmp.ge.f32.partialorder %v4733, 0.0
    %vm4862 = vcmp.ge.f32.partialorder %v4734, 0.0
    %vm4863 = vcmp.ge.f32.partialorder %v4735, 0.0
    %vm4864 = vcmp.ge.f32.partialorder %v4736, 0.0
    %vm4865 = vcmp.ge.f32.partialorder %v4737, 0.0
    %vm4866 = vcmp.ge.f32.partialorder %v4738, 0.0
    %vm4867 = vcmp.ge.f32.partialorder %v4739, 0.0
    %vm4868 = vcmp.ge.f32.partialorder %v4740, 0.0
    %vm4869 = vcmp.ge.f32.partialorder %v4741, 0.0
    %vm4870 = vcmp.ge.f32.partialorder %v4742, 0.0
    %vm4871 = vcmp.ge.f32.partialorder %v4743, 0.0
    %vm4872 = vcmp.ge.f32.partialorder %v4744, 0.0
    %vm4873 = vcmp.ge.f32.partialorder %v4745, 0.0
    %vm4874 = vcmp.ge.f32.partialorder %v4746, 0.0
    %vm4875 = vcmp.ge.f32.partialorder %v4747, 0.0
    %vm4876 = vcmp.ge.f32.partialorder %v4748, 0.0
    %vm4877 = vcmp.ge.f32.partialorder %v4749, 0.0
    %vm4878 = vcmp.ge.f32.partialorder %v4750, 0.0
    %vm4879 = vcmp.ge.f32.partialorder %v4751, 0.0
    %vm4880 = vcmp.ge.f32.partialorder %v4752, 0.0
    %vm4881 = vcmp.ge.f32.partialorder %v4753, 0.0
    %vm4882 = vcmp.ge.f32.partialorder %v4754, 0.0
    %vm4883 = vcmp.ge.f32.partialorder %v4755, 0.0
    %vm4884 = vcmp.ge.f32.partialorder %v4756, 0.0
    %vm4885 = vcmp.ge.f32.partialorder %v4757, 0.0
    %vm4886 = vcmp.ge.f32.partialorder %v4758, 0.0
    %vm4887 = vcmp.ge.f32.partialorder %v4759, 0.0
    %vm4888 = vcmp.ge.f32.partialorder %v4760, 0.0
    %vm4889 = vcmp.ge.f32.partialorder %v4761, 0.0
    %vm4890 = vcmp.ge.f32.partialorder %v4762, 0.0
    %vm4891 = vcmp.ge.f32.partialorder %v4763, 0.0
    %vm4892 = vcmp.ge.f32.partialorder %v4764, 0.0
    %vm4893 = vcmp.ge.f32.partialorder %v4765, 0.0
    %vm4894 = vcmp.ge.f32.partialorder %v4766, 0.0
    %vm4895 = vcmp.ge.f32.partialorder %v4767, 0.0
    %vm4896 = vcmp.ge.f32.partialorder %v4768, 0.0
    %vm4897 = vcmp.ge.f32.partialorder %v4769, 0.0
    %vm4898 = vcmp.ge.f32.partialorder %v4770, 0.0
    %vm4899 = vcmp.ge.f32.partialorder %v4771, 0.0
    %vm4900 = vcmp.ge.f32.partialorder %v4772, 0.0
    %vm4901 = vcmp.ge.f32.partialorder %v4773, 0.0
    %vm4902 = vcmp.ge.f32.partialorder %v4774, 0.0
    %vm4903 = vcmp.ge.f32.partialorder %v4775, 0.0
    %vm4904 = vcmp.ge.f32.partialorder %v4776, 0.0
    %vm4905 = vcmp.ge.f32.partialorder %v4777, 0.0
    %vm4906 = vcmp.ge.f32.partialorder %v4778, 0.0
    %vm4907 = vcmp.ge.f32.partialorder %v4779, 0.0
    %vm4908 = vcmp.ge.f32.partialorder %v4780, 0.0
    %vm4909 = vcmp.ge.f32.partialorder %v4781, 0.0
    %vm4910 = vcmp.ge.f32.partialorder %v4782, 0.0
    %vm4911 = vcmp.ge.f32.partialorder %v4783, 0.0
    %vm4912 = vcmp.ge.f32.partialorder %v4784, 0.0
    %vm4913 = vcmp.ge.f32.partialorder %v4785, 0.0
    %vm4914 = vcmp.ge.f32.partialorder %v4786, 0.0
    %vm4915 = vcmp.ge.f32.partialorder %v4787, 0.0
    %vm4916 = vcmp.ge.f32.partialorder %v4788, 0.0
    %vm4917 = vcmp.ge.f32.partialorder %v4789, 0.0
    %vm4918 = vcmp.ge.f32.partialorder %v4790, 0.0
    %vm4919 = vcmp.ge.f32.partialorder %v4791, 0.0
    %vm4920 = vcmp.ge.f32.partialorder %v4792, 0.0
    %vm4921 = vcmp.ge.f32.partialorder %v4793, 0.0
    %vm4922 = vcmp.ge.f32.partialorder %v4794, 0.0
    %vm4923 = vcmp.ge.f32.partialorder %v4795, 0.0
    %vm4924 = vcmp.ge.f32.partialorder %v4796, 0.0
    %vm4925 = vcmp.ge.f32.partialorder %v4797, 0.0
    %vm4926 = vcmp.ge.f32.partialorder %v4798, 0.0
    %vm4927 = vcmp.ge.f32.partialorder %v4799, 0.0
    %vm4928 = vcmp.ge.f32.partialorder %v4800, 0.0
    %vm4929 = vcmp.ge.f32.partialorder %v4801, 0.0
    %vm4930 = vcmp.ge.f32.partialorder %v4802, 0.0
    %vm4931 = vcmp.ge.f32.partialorder %v4803, 0.0
    %vm4932 = vcmp.ge.f32.partialorder %v4804, 0.0
    %vm4933 = vcmp.ge.f32.partialorder %v4805, 0.0
    %vm4934 = vcmp.ge.f32.partialorder %v4806, 0.0
    %vm4935 = vcmp.ge.f32.partialorder %v4807, 0.0
    %vm4936 = vcmp.ge.f32.partialorder %v4808, 0.0
    %vm4937 = vcmp.ge.f32.partialorder %v4809, 0.0
    %vm4938 = vcmp.ge.f32.partialorder %v4810, 0.0
    %vm4939 = vcmp.ge.f32.partialorder %v4811, 0.0
    %vm4940 = vcmp.ge.f32.partialorder %v4812, 0.0
    %vm4941 = vcmp.ge.f32.partialorder %v4813, 0.0
    %vm4942 = vcmp.ge.f32.partialorder %v4814, 0.0
    %vm4943 = vcmp.ge.f32.partialorder %v4815, 0.0
    %vm4944 = vcmp.ge.f32.partialorder %v4816, 0.0
    %vm4945 = vcmp.ge.f32.partialorder %v4817, 0.0
    %vm4946 = vcmp.ge.f32.partialorder %v4818, 0.0
    %vm4947 = vcmp.ge.f32.partialorder %v4819, 0.0
    %vm4948 = vcmp.ge.f32.partialorder %v4820, 0.0
    %vm4949 = vcmp.ge.f32.partialorder %v4821, 0.0
    %vm4950 = vcmp.ge.f32.partialorder %v4822, 0.0
    %vm4951 = vcmp.ge.f32.partialorder %v4823, 0.0
    %vm4952 = vcmp.ge.f32.partialorder %v4824, 0.0
    %vm4953 = vcmp.ge.f32.partialorder %v4825, 0.0
    %vm4954 = vcmp.ge.f32.partialorder %v4826, 0.0
    %vm4955 = vcmp.ge.f32.partialorder %v4827, 0.0
    %vm4956 = vcmp.ge.f32.partialorder %v4828, 0.0
    %vm4957 = vcmp.ge.f32.partialorder %v4829, 0.0
    %vm4958 = vcmp.ge.f32.partialorder %v4830, 0.0
    %vm4959 = vcmp.ge.f32.partialorder %v4831, 0.0
    %vm4960 = vcmp.ge.f32.partialorder %v4832, 0.0
    %vm4961 = vcmp.ge.f32.partialorder %v4833, 0.0
    %vm4962 = vcmp.ge.f32.partialorder %v4834, 0.0
    %vm4963 = vcmp.ge.f32.partialorder %v4835, 0.0
    %vm4964 = vcmp.ge.f32.partialorder %v4836, 0.0
    %vm4965 = vcmp.ge.f32.partialorder %v4837, 0.0
    %vm4966 = vcmp.ge.f32.partialorder %v4838, 0.0
    %vm4967 = vcmp.ge.f32.partialorder %v4839, 0.0
    %vm4968 = vcmp.ge.f32.partialorder %v4840, 0.0
    %vm4969 = vcmp.ge.f32.partialorder %v4841, 0.0
    %vm4970 = vcmp.ge.f32.partialorder %v4842, 0.0
    %vm4971 = vcmp.ge.f32.partialorder %v4843, 0.0
    %vm4972 = vcmp.ge.f32.partialorder %v4844, 0.0
    %vm4973 = vcmp.ge.f32.partialorder %v4845, 0.0
    %vm4974 = vcmp.ge.f32.partialorder %v4846, 0.0
    %vm4975 = vcmp.ge.f32.partialorder %v4847, 0.0
    %vm4976 = vcmp.ge.f32.partialorder %v4848, 0.0
    %vm4977 = vcmp.ge.f32.partialorder %v4849, 0.0
    %vm4978 = vcmp.ge.f32.partialorder %v4850, 0.0
    %vm4979 = vcmp.ge.f32.partialorder %v4851, 0.0
    %vm4980 = vcmp.ge.f32.partialorder %v4852, 0.0
    %vm4981 = vcmp.ge.f32.partialorder %v4853, 0.0
    %v4982 = vmul.f32 %v4726, 0.2
    %v4983 = vmul.f32 %v4727, 0.2
    %v4984 = vmul.f32 %v4728, 0.2
    %v4985 = vmul.f32 %v4729, 0.2
    %v4986 = vmul.f32 %v4730, 0.2
    %v4987 = vmul.f32 %v4731, 0.2
    %v4988 = vmul.f32 %v4732, 0.2
    %v4989 = vmul.f32 %v4733, 0.2
    %v4990 = vmul.f32 %v4734, 0.2
    %v4991 = vmul.f32 %v4735, 0.2
    %v4992 = vmul.f32 %v4736, 0.2
    %v4993 = vmul.f32 %v4737, 0.2
    %v4994 = vmul.f32 %v4738, 0.2
    %v4995 = vmul.f32 %v4739, 0.2
    %v4996 = vmul.f32 %v4740, 0.2
    %v4997 = vmul.f32 %v4741, 0.2
    %v4998 = vmul.f32 %v4742, 0.2
    %v4999 = vmul.f32 %v4743, 0.2
    %v5000 = vmul.f32 %v4744, 0.2
    %v5001 = vmul.f32 %v4745, 0.2
    %v5002 = vmul.f32 %v4746, 0.2
    %v5003 = vmul.f32 %v4747, 0.2
    %v5004 = vmul.f32 %v4748, 0.2
    %v5005 = vmul.f32 %v4749, 0.2
    %v5006 = vmul.f32 %v4750, 0.2
    %v5007 = vmul.f32 %v4751, 0.2
    %v5008 = vmul.f32 %v4752, 0.2
    %v5009 = vmul.f32 %v4753, 0.2
    %v5010 = vmul.f32 %v4754, 0.2
    %v5011 = vmul.f32 %v4755, 0.2
    %v5012 = vmul.f32 %v4756, 0.2
    %v5013 = vmul.f32 %v4757, 0.2
    %v5014 = vmul.f32 %v4758, 0.2
    %v5015 = vmul.f32 %v4759, 0.2
    %v5016 = vmul.f32 %v4760, 0.2
    %v5017 = vmul.f32 %v4761, 0.2
    %v5018 = vmul.f32 %v4762, 0.2
    %v5019 = vmul.f32 %v4763, 0.2
    %v5020 = vmul.f32 %v4764, 0.2
    %v5021 = vmul.f32 %v4765, 0.2
    %v5022 = vmul.f32 %v4766, 0.2
    %v5023 = vmul.f32 %v4767, 0.2
    %v5024 = vmul.f32 %v4768, 0.2
    %v5025 = vmul.f32 %v4769, 0.2
    %v5026 = vmul.f32 %v4770, 0.2
    %v5027 = vmul.f32 %v4771, 0.2
    %v5028 = vmul.f32 %v4772, 0.2
    %v5029 = vmul.f32 %v4773, 0.2
    %v5030 = vmul.f32 %v4774, 0.2
    %v5031 = vmul.f32 %v4775, 0.2
    %v5032 = vmul.f32 %v4776, 0.2
    %v5033 = vmul.f32 %v4777, 0.2
    %v5034 = vmul.f32 %v4778, 0.2
    %v5035 = vmul.f32 %v4779, 0.2
    %v5036 = vmul.f32 %v4780, 0.2
    %v5037 = vmul.f32 %v4781, 0.2
    %v5038 = vmul.f32 %v4782, 0.2
    %v5039 = vmul.f32 %v4783, 0.2
    %v5040 = vmul.f32 %v4784, 0.2
    %v5041 = vmul.f32 %v4785, 0.2
    %v5042 = vmul.f32 %v4786, 0.2
    %v5043 = vmul.f32 %v4787, 0.2
    %v5044 = vmul.f32 %v4788, 0.2
    %v5045 = vmul.f32 %v4789, 0.2
    %v5046 = vmul.f32 %v4790, 0.2
    %v5047 = vmul.f32 %v4791, 0.2
    %v5048 = vmul.f32 %v4792, 0.2
    %v5049 = vmul.f32 %v4793, 0.2
    %v5050 = vmul.f32 %v4794, 0.2
    %v5051 = vmul.f32 %v4795, 0.2
    %v5052 = vmul.f32 %v4796, 0.2
    %v5053 = vmul.f32 %v4797, 0.2
    %v5054 = vmul.f32 %v4798, 0.2
    %v5055 = vmul.f32 %v4799, 0.2
    %v5056 = vmul.f32 %v4800, 0.2
    %v5057 = vmul.f32 %v4801, 0.2
    %v5058 = vmul.f32 %v4802, 0.2
    %v5059 = vmul.f32 %v4803, 0.2
    %v5060 = vmul.f32 %v4804, 0.2
    %v5061 = vmul.f32 %v4805, 0.2
    %v5062 = vmul.f32 %v4806, 0.2
    %v5063 = vmul.f32 %v4807, 0.2
    %v5064 = vmul.f32 %v4808, 0.2
    %v5065 = vmul.f32 %v4809, 0.2
    %v5066 = vmul.f32 %v4810, 0.2
    %v5067 = vmul.f32 %v4811, 0.2
    %v5068 = vmul.f32 %v4812, 0.2
    %v5069 = vmul.f32 %v4813, 0.2
    %v5070 = vmul.f32 %v4814, 0.2
    %v5071 = vmul.f32 %v4815, 0.2
    %v5072 = vmul.f32 %v4816, 0.2
    %v5073 = vmul.f32 %v4817, 0.2
    %v5074 = vmul.f32 %v4818, 0.2
    %v5075 = vmul.f32 %v4819, 0.2
    %v5076 = vmul.f32 %v4820, 0.2
    %v5077 = vmul.f32 %v4821, 0.2
    %v5078 = vmul.f32 %v4822, 0.2
    %v5079 = vmul.f32 %v4823, 0.2
    %v5080 = vmul.f32 %v4824, 0.2
    %v5081 = vmul.f32 %v4825, 0.2
    %v5082 = vmul.f32 %v4826, 0.2
    %v5083 = vmul.f32 %v4827, 0.2
    %v5084 = vmul.f32 %v4828, 0.2
    %v5085 = vmul.f32 %v4829, 0.2
    %v5086 = vmul.f32 %v4830, 0.2
    %v5087 = vmul.f32 %v4831, 0.2
    %v5088 = vmul.f32 %v4832, 0.2
    %v5089 = vmul.f32 %v4833, 0.2
    %v5090 = vmul.f32 %v4834, 0.2
    %v5091 = vmul.f32 %v4835, 0.2
    %v5092 = vmul.f32 %v4836, 0.2
    %v5093 = vmul.f32 %v4837, 0.2
    %v5094 = vmul.f32 %v4838, 0.2
    %v5095 = vmul.f32 %v4839, 0.2
    %v5096 = vmul.f32 %v4840, 0.2
    %v5097 = vmul.f32 %v4841, 0.2
    %v5098 = vmul.f32 %v4842, 0.2
    %v5099 = vmul.f32 %v4843, 0.2
    %v5100 = vmul.f32 %v4844, 0.2
    %v5101 = vmul.f32 %v4845, 0.2
    %v5102 = vmul.f32 %v4846, 0.2
    %v5103 = vmul.f32 %v4847, 0.2
    %v5104 = vmul.f32 %v4848, 0.2
    %v5105 = vmul.f32 %v4849, 0.2
    %v5106 = vmul.f32 %v4850, 0.2
    %v5107 = vmul.f32 %v4851, 0.2
    %v5108 = vmul.f32 %v4852, 0.2
    %v5109 = vmul.f32 %v4853, 0.2
    %v5110 = vsel %vm4854, %v4726, %v4982
    %v5111 = vsel %vm4855, %v4727, %v4983
    %v5112 = vsel %vm4856, %v4728, %v4984
    %v5113 = vsel %vm4857, %v4729, %v4985
    %v5114 = vsel %vm4858, %v4730, %v4986
    %v5115 = vsel %vm4859, %v4731, %v4987
    %v5116 = vsel %vm4860, %v4732, %v4988
    %v5117 = vsel %vm4861, %v4733, %v4989
    %v5118 = vsel %vm4862, %v4734, %v4990
    %v5119 = vsel %vm4863, %v4735, %v4991
    %v5120 = vsel %vm4864, %v4736, %v4992
    %v5121 = vsel %vm4865, %v4737, %v4993
    %v5122 = vsel %vm4866, %v4738, %v4994
    %v5123 = vsel %vm4867, %v4739, %v4995
    %v5124 = vsel %vm4868, %v4740, %v4996
    %v5125 = vsel %vm4869, %v4741, %v4997
    %v5126 = vsel %vm4870, %v4742, %v4998
    %v5127 = vsel %vm4871, %v4743, %v4999
    %v5128 = vsel %vm4872, %v4744, %v5000
    %v5129 = vsel %vm4873, %v4745, %v5001
    %v5130 = vsel %vm4874, %v4746, %v5002
    %v5131 = vsel %vm4875, %v4747, %v5003
    %v5132 = vsel %vm4876, %v4748, %v5004
    %v5133 = vsel %vm4877, %v4749, %v5005
    %v5134 = vsel %vm4878, %v4750, %v5006
    %v5135 = vsel %vm4879, %v4751, %v5007
    %v5136 = vsel %vm4880, %v4752, %v5008
    %v5137 = vsel %vm4881, %v4753, %v5009
    %v5138 = vsel %vm4882, %v4754, %v5010
    %v5139 = vsel %vm4883, %v4755, %v5011
    %v5140 = vsel %vm4884, %v4756, %v5012
    %v5141 = vsel %vm4885, %v4757, %v5013
    %v5142 = vsel %vm4886, %v4758, %v5014
    %v5143 = vsel %vm4887, %v4759, %v5015
    %v5144 = vsel %vm4888, %v4760, %v5016
    %v5145 = vsel %vm4889, %v4761, %v5017
    %v5146 = vsel %vm4890, %v4762, %v5018
    %v5147 = vsel %vm4891, %v4763, %v5019
    %v5148 = vsel %vm4892, %v4764, %v5020
    %v5149 = vsel %vm4893, %v4765, %v5021
    %v5150 = vsel %vm4894, %v4766, %v5022
    %v5151 = vsel %vm4895, %v4767, %v5023
    %v5152 = vsel %vm4896, %v4768, %v5024
    %v5153 = vsel %vm4897, %v4769, %v5025
    %v5154 = vsel %vm4898, %v4770, %v5026
    %v5155 = vsel %vm4899, %v4771, %v5027
    %v5156 = vsel %vm4900, %v4772, %v5028
    %v5157 = vsel %vm4901, %v4773, %v5029
    %v5158 = vsel %vm4902, %v4774, %v5030
    %v5159 = vsel %vm4903, %v4775, %v5031
    %v5160 = vsel %vm4904, %v4776, %v5032
    %v5161 = vsel %vm4905, %v4777, %v5033
    %v5162 = vsel %vm4906, %v4778, %v5034
    %v5163 = vsel %vm4907, %v4779, %v5035
    %v5164 = vsel %vm4908, %v4780, %v5036
    %v5165 = vsel %vm4909, %v4781, %v5037
    %v5166 = vsel %vm4910, %v4782, %v5038
    %v5167 = vsel %vm4911, %v4783, %v5039
    %v5168 = vsel %vm4912, %v4784, %v5040
    %v5169 = vsel %vm4913, %v4785, %v5041
    %v5170 = vsel %vm4914, %v4786, %v5042
    %v5171 = vsel %vm4915, %v4787, %v5043
    %v5172 = vsel %vm4916, %v4788, %v5044
    %v5173 = vsel %vm4917, %v4789, %v5045
    %v5174 = vsel %vm4918, %v4790, %v5046
    %v5175 = vsel %vm4919, %v4791, %v5047
    %v5176 = vsel %vm4920, %v4792, %v5048
    %v5177 = vsel %vm4921, %v4793, %v5049
    %v5178 = vsel %vm4922, %v4794, %v5050
    %v5179 = vsel %vm4923, %v4795, %v5051
    %v5180 = vsel %vm4924, %v4796, %v5052
    %v5181 = vsel %vm4925, %v4797, %v5053
    %v5182 = vsel %vm4926, %v4798, %v5054
    %v5183 = vsel %vm4927, %v4799, %v5055
    %v5184 = vsel %vm4928, %v4800, %v5056
    %v5185 = vsel %vm4929, %v4801, %v5057
    %v5186 = vsel %vm4930, %v4802, %v5058
    %v5187 = vsel %vm4931, %v4803, %v5059
    %v5188 = vsel %vm4932, %v4804, %v5060
    %v5189 = vsel %vm4933, %v4805, %v5061
    %v5190 = vsel %vm4934, %v4806, %v5062
    %v5191 = vsel %vm4935, %v4807, %v5063
    %v5192 = vsel %vm4936, %v4808, %v5064
    %v5193 = vsel %vm4937, %v4809, %v5065
    %v5194 = vsel %vm4938, %v4810, %v5066
    %v5195 = vsel %vm4939, %v4811, %v5067
    %v5196 = vsel %vm4940, %v4812, %v5068
    %v5197 = vsel %vm4941, %v4813, %v5069
    %v5198 = vsel %vm4942, %v4814, %v5070
    %v5199 = vsel %vm4943, %v4815, %v5071
    %v5200 = vsel %vm4944, %v4816, %v5072
    %v5201 = vsel %vm4945, %v4817, %v5073
    %v5202 = vsel %vm4946, %v4818, %v5074
    %v5203 = vsel %vm4947, %v4819, %v5075
    %v5204 = vsel %vm4948, %v4820, %v5076
    %v5205 = vsel %vm4949, %v4821, %v5077
    %v5206 = vsel %vm4950, %v4822, %v5078
    %v5207 = vsel %vm4951, %v4823, %v5079
    %v5208 = vsel %vm4952, %v4824, %v5080
    %v5209 = vsel %vm4953, %v4825, %v5081
    %v5210 = vsel %vm4954, %v4826, %v5082
    %v5211 = vsel %vm4955, %v4827, %v5083
    %v5212 = vsel %vm4956, %v4828, %v5084
    %v5213 = vsel %vm4957, %v4829, %v5085
    %v5214 = vsel %vm4958, %v4830, %v5086
    %v5215 = vsel %vm4959, %v4831, %v5087
    %v5216 = vsel %vm4960, %v4832, %v5088
    %v5217 = vsel %vm4961, %v4833, %v5089
    %v5218 = vsel %vm4962, %v4834, %v5090
    %v5219 = vsel %vm4963, %v4835, %v5091
    %v5220 = vsel %vm4964, %v4836, %v5092
    %v5221 = vsel %vm4965, %v4837, %v5093
    %v5222 = vsel %vm4966, %v4838, %v5094
    %v5223 = vsel %vm4967, %v4839, %v5095
    %v5224 = vsel %vm4968, %v4840, %v5096
    %v5225 = vsel %vm4969, %v4841, %v5097
    %v5226 = vsel %vm4970, %v4842, %v5098
    %v5227 = vsel %vm4971, %v4843, %v5099
    %v5228 = vsel %vm4972, %v4844, %v5100
    %v5229 = vsel %vm4973, %v4845, %v5101
    %v5230 = vsel %vm4974, %v4846, %v5102
    %v5231 = vsel %vm4975, %v4847, %v5103
    %v5232 = vsel %vm4976, %v4848, %v5104
    %v5233 = vsel %vm4977, %v4849, %v5105
    %v5234 = vsel %vm4978, %v4850, %v5106
    %v5235 = vsel %vm4979, %v4851, %v5107
    %v5236 = vsel %vm4980, %v4852, %v5108
    %v5237 = vsel %vm4981, %v4853, %v5109
    %v5238 = vld [vmem:[%s23] sm:$0xff]
    %v5239 = vld [vmem:[%s23 + $0x8] sm:$0xff]
    %v5240 = vld [vmem:[%s24] sm:$0x1]
    %v5242 = vlaneseq
    %v5243 = vshrl.u32 %v5242, 7
    %v5244 = vsub.s32 0, %v5243
    %v5245 = vrot.slane %v5240, %v5244
    %v5248 = vsel %vm378, %v5110, 0
    %v5251 = vsel %vm378, %v5111, 0
    %v5254 = vsel %vm378, %v5112, 0
    %v5257 = vsel %vm378, %v5113, 0
    %v5260 = vsel %vm378, %v5114, 0
    %v5263 = vsel %vm378, %v5115, 0
    %v5266 = vsel %vm378, %v5116, 0
    %v5269 = vsel %vm378, %v5117, 0
    %v5272 = vsel %vm378, %v5118, 0
    %v5275 = vsel %vm378, %v5119, 0
    %v5278 = vsel %vm378, %v5120, 0
    %v5281 = vsel %vm378, %v5121, 0
    %v5284 = vsel %vm378, %v5122, 0
    %v5287 = vsel %vm378, %v5123, 0
    %v5290 = vsel %vm378, %v5124, 0
    %v5293 = vsel %vm378, %v5125, 0
    %v5296 = vsel %vm378, %v5126, 0
    %v5299 = vsel %vm378, %v5127, 0
    %v5302 = vsel %vm378, %v5128, 0
    %v5305 = vsel %vm378, %v5129, 0
    %v5308 = vsel %vm378, %v5130, 0
    %v5311 = vsel %vm378, %v5131, 0
    %v5314 = vsel %vm378, %v5132, 0
    %v5317 = vsel %vm378, %v5133, 0
    %v5320 = vsel %vm378, %v5134, 0
    %v5323 = vsel %vm378, %v5135, 0
    %v5326 = vsel %vm378, %v5136, 0
    %v5329 = vsel %vm378, %v5137, 0
    %v5332 = vsel %vm378, %v5138, 0
    %v5335 = vsel %vm378, %v5139, 0
    %v5338 = vsel %vm378, %v5140, 0
    %v5341 = vsel %vm378, %v5141, 0
    %v5344 = vsel %vm378, %v5142, 0
    %v5347 = vsel %vm378, %v5143, 0
    %v5350 = vsel %vm378, %v5144, 0
    %v5353 = vsel %vm378, %v5145, 0
    %v5356 = vsel %vm378, %v5146, 0
    %v5359 = vsel %vm378, %v5147, 0
    %v5362 = vsel %vm378, %v5148, 0
    %v5365 = vsel %vm378, %v5149, 0
    %v5368 = vsel %vm378, %v5150, 0
    %v5371 = vsel %vm378, %v5151, 0
    %v5374 = vsel %vm378, %v5152, 0
    %v5377 = vsel %vm378, %v5153, 0
    %v5380 = vsel %vm378, %v5154, 0
    %v5383 = vsel %vm378, %v5155, 0
    %v5386 = vsel %vm378, %v5156, 0
    %v5389 = vsel %vm378, %v5157, 0
    %v5392 = vsel %vm378, %v5158, 0
    %v5395 = vsel %vm378, %v5159, 0
    %v5398 = vsel %vm378, %v5160, 0
    %v5401 = vsel %vm378, %v5161, 0
    %v5404 = vsel %vm378, %v5162, 0
    %v5407 = vsel %vm378, %v5163, 0
    %v5410 = vsel %vm378, %v5164, 0
    %v5413 = vsel %vm378, %v5165, 0
    %v5416 = vsel %vm378, %v5166, 0
    %v5419 = vsel %vm378, %v5167, 0
    %v5422 = vsel %vm378, %v5168, 0
    %v5425 = vsel %vm378, %v5169, 0
    %v5428 = vsel %vm378, %v5170, 0
    %v5431 = vsel %vm378, %v5171, 0
    %v5434 = vsel %vm378, %v5172, 0
    %v5437 = vsel %vm378, %v5173, 0
    %v5440 = vsel %vm378, %v5174, 0
    %v5443 = vsel %vm378, %v5175, 0
    %v5446 = vsel %vm378, %v5176, 0
    %v5449 = vsel %vm378, %v5177, 0
    %v5452 = vsel %vm378, %v5178, 0
    %v5455 = vsel %vm378, %v5179, 0
    %v5458 = vsel %vm378, %v5180, 0
    %v5461 = vsel %vm378, %v5181, 0
    %v5464 = vsel %vm378, %v5182, 0
    %v5467 = vsel %vm378, %v5183, 0
    %v5470 = vsel %vm378, %v5184, 0
    %v5473 = vsel %vm378, %v5185, 0
    %v5476 = vsel %vm378, %v5186, 0
    %v5479 = vsel %vm378, %v5187, 0
    %v5482 = vsel %vm378, %v5188, 0
    %v5485 = vsel %vm378, %v5189, 0
    %v5488 = vsel %vm378, %v5190, 0
    %v5491 = vsel %vm378, %v5191, 0
    %v5494 = vsel %vm378, %v5192, 0
    %v5497 = vsel %vm378, %v5193, 0
    %v5500 = vsel %vm378, %v5194, 0
    %v5503 = vsel %vm378, %v5195, 0
    %v5506 = vsel %vm378, %v5196, 0
    %v5509 = vsel %vm378, %v5197, 0
    %v5512 = vsel %vm378, %v5198, 0
    %v5515 = vsel %vm378, %v5199, 0
    %v5518 = vsel %vm378, %v5200, 0
    %v5521 = vsel %vm378, %v5201, 0
    %v5524 = vsel %vm378, %v5202, 0
    %v5527 = vsel %vm378, %v5203, 0
    %v5530 = vsel %vm378, %v5204, 0
    %v5533 = vsel %vm378, %v5205, 0
    %v5536 = vsel %vm378, %v5206, 0
    %v5539 = vsel %vm378, %v5207, 0
    %v5542 = vsel %vm378, %v5208, 0
    %v5545 = vsel %vm378, %v5209, 0
    %v5548 = vsel %vm378, %v5210, 0
    %v5551 = vsel %vm378, %v5211, 0
    %v5554 = vsel %vm378, %v5212, 0
    %v5557 = vsel %vm378, %v5213, 0
    %v5560 = vsel %vm378, %v5214, 0
    %v5563 = vsel %vm378, %v5215, 0
    %v5566 = vsel %vm378, %v5216, 0
    %v5569 = vsel %vm378, %v5217, 0
    %v5572 = vsel %vm378, %v5218, 0
    %v5575 = vsel %vm378, %v5219, 0
    %v5578 = vsel %vm378, %v5220, 0
    %v5581 = vsel %vm378, %v5221, 0
    %v5584 = vsel %vm378, %v5222, 0
    %v5587 = vsel %vm378, %v5223, 0
    %v5590 = vsel %vm378, %v5224, 0
    %v5593 = vsel %vm378, %v5225, 0
    %v5596 = vsel %vm378, %v5226, 0
    %v5599 = vsel %vm378, %v5227, 0
    %v5602 = vsel %vm378, %v5228, 0
    %v5605 = vsel %vm378, %v5229, 0
    %v5608 = vsel %vm378, %v5230, 0
    %v5611 = vsel %vm378, %v5231, 0
    %v5614 = vsel %vm378, %v5232, 0
    %v5617 = vsel %vm378, %v5233, 0
    %v5620 = vsel %vm378, %v5234, 0
    %v5623 = vsel %vm378, %v5235, 0
    %v5626 = vsel %vm378, %v5236, 0
    %v5629 = vsel %vm378, %v5237, 0
    %5631 = vmatprep.subr.mxu0 0.0
    %5632 = vmatpush1.msra.mxu0 %v5238
    %5633 = vmatprep.subr.mxu0 0.0
    %5634 = vmatpush1.msra.mxu0 %v5239
    %5635 = vmatprep.subr.mxu0 0.0
    %5636 = vmatpush1.msra.mxu0 0.0
    %5637 = vmatprep.subr.mxu0 0.0
    %5638 = vmatpush1.msra.mxu0 0.0
    %5639 = vmatprep.subr.mxu0 0.0
    %5640 = vmatpush1.msra.mxu0 0.0
    %5641 = vmatprep.subr.mxu0 0.0
    %5642 = vmatpush1.msra.mxu0 0.0
    %5643 = vmatprep.subr.mxu0 0.0
    %5644 = vmatpush1.msra.mxu0 0.0
    %5645 = vmatprep.subr.mxu0 0.0
    %5646 = vmatpush1.msra.mxu0 0.0
    %5647 = vmatprep.subr.mxu0 0.0
    %5648 = vmatpush1.msra.mxu0 0.0
    %5649 = vmatprep.subr.mxu0 0.0
    %5650 = vmatpush1.msra.mxu0 0.0
    %5651 = vmatprep.subr.mxu0 0.0
    %5652 = vmatpush1.msra.mxu0 0.0
    %5653 = vmatprep.subr.mxu0 0.0
    %5654 = vmatpush1.msra.mxu0 0.0
    %5655 = vmatprep.subr.mxu0 0.0
    %5656 = vmatpush1.msra.mxu0 0.0
    %5657 = vmatprep.subr.mxu0 0.0
    %5658 = vmatpush1.msra.mxu0 0.0
    %5659 = vmatprep.subr.mxu0 0.0
    %5660 = vmatpush1.msra.mxu0 0.0
    %5661 = vmatprep.subr.mxu0 0.0
    %5662 = vmatpush1.msra.mxu0 0.0
    %5663 = vmatprep.subr.mxu0 0.0
    %5664 = vmatpush1.msra.mxu0 0.0
    %5665 = vmatprep.subr.mxu0 0.0
    %5666 = vmatpush1.msra.mxu0 0.0
    %5667 = vmatprep.subr.mxu0 0.0
    %5668 = vmatpush1.msra.mxu0 0.0
    %5669 = vmatprep.subr.mxu0 0.0
    %5670 = vmatpush1.msra.mxu0 0.0
    %5671 = vmatprep.subr.mxu0 0.0
    %5672 = vmatpush1.msra.mxu0 0.0
    %5673 = vmatprep.subr.mxu0 0.0
    %5674 = vmatpush1.msra.mxu0 0.0
    %5675 = vmatprep.subr.mxu0 0.0
    %5676 = vmatpush1.msra.mxu0 0.0
    %5677 = vmatprep.subr.mxu0 0.0
    %5678 = vmatpush1.msra.mxu0 0.0
    %5679 = vmatprep.subr.mxu0 0.0
    %5680 = vmatpush1.msra.mxu0 0.0
    %5681 = vmatprep.subr.mxu0 0.0
    %5682 = vmatpush1.msra.mxu0 0.0
    %5683 = vmatprep.subr.mxu0 0.0
    %5684 = vmatpush1.msra.mxu0 0.0
    %5685 = vmatprep.subr.mxu0 0.0
    %5686 = vmatpush1.msra.mxu0 0.0
    %5687 = vmatprep.subr.mxu0 0.0
    %5688 = vmatpush1.msra.mxu0 0.0
    %5689 = vmatprep.subr.mxu0 0.0
    %5690 = vmatpush1.msra.mxu0 0.0
    %5691 = vmatprep.subr.mxu0 0.0
    %5692 = vmatpush1.msra.mxu0 0.0
    %5693 = vmatprep.subr.mxu0 0.0
    %5694 = vmatpush1.msra.mxu0 0.0
    %5695 = vmatprep.mubr.f32.mxu0 0.0
    %5696 = vmatmul.mubr.f32.gmra.mrb[0].mxu0 %v5248
    %v5697 = vpop.f32.mrb[0].mxu0
    %v5698 = vadd.f32 %v5245, %v5697
    %v5699 = vpop.f32.mrb[0].mxu0
    %5700 = vmatprep.mubr.f32.mxu0 0.0
    %5701 = vmatmul.mubr.f32.gmra.mrb[0].mxu0 %v5251
    %v5702 = vpop.f32.mrb[0].mxu0
    %v5703 = vadd.f32 %v5245, %v5702
    %v5704 = vpop.f32.mrb[0].mxu0
    %5705 = vmatprep.mubr.f32.mxu0 0.0
    %5706 = vmatmul.mubr.f32.gmra.mrb[0].mxu0 %v5254
    %v5707 = vpop.f32.mrb[0].mxu0
    %v5708 = vadd.f32 %v5245, %v5707
    %v5709 = vpop.f32.mrb[0].mxu0
    %5710 = vmatprep.mubr.f32.mxu0 0.0
    %5711 = vmatmul.mubr.f32.gmra.mrb[0].mxu0 %v5257
    %v5712 = vpop.f32.mrb[0].mxu0
    %v5713 = vadd.f32 %v5245, %v5712
    %v5714 = vpop.f32.mrb[0].mxu0
    %5715 = vmatprep.mubr.f32.mxu0 0.0
    %5716 = vmatmul.mubr.f32.gmra.mrb[0].mxu0 %v5260
    %v5717 = vpop.f32.mrb[0].mxu0
    %v5718 = vadd.f32 %v5245, %v5717
    %v5719 = vpop.f32.mrb[0].mxu0
    %5720 = vmatprep.mubr.f32.mxu0 0.0
    %5721 = vmatmul.mubr.f32.gmra.mrb[0].mxu0 %v5263
    %v5722 = vpop.f32.mrb[0].mxu0
    %v5723 = vadd.f32 %v5245, %v5722
    %v5724 = vpop.f32.mrb[0].mxu0
    %5725 = vmatprep.mubr.f32.mxu0 0.0
    %5726 = vmatmul.mubr.f32.gmra.mrb[0].mxu0 %v5266
    %v5727 = vpop.f32.mrb[0].mxu0
    %v5728 = vadd.f32 %v5245, %v5727
    %v5729 = vpop.f32.mrb[0].mxu0
    %5730 = vmatprep.mubr.f32.mxu0 0.0
    %5731 = vmatmul.mubr.f32.gmra.mrb[0].mxu0 %v5269
    %v5732 = vpop.f32.mrb[0].mxu0
    %v5733 = vadd.f32 %v5245, %v5732
    %v5734 = vpop.f32.mrb[0].mxu0
    %5735 = vmatprep.mubr.f32.mxu0 0.0
    %5736 = vmatmul.mubr.f32.gmra.mrb[0].mxu0 %v5272
    %v5737 = vpop.f32.mrb[0].mxu0
    %v5738 = vadd.f32 %v5245, %v5737
    %v5739 = vpop.f32.mrb[0].mxu0
    %5740 = vmatprep.mubr.f32.mxu0 0.0
    %5741 = vmatmul.mubr.f32.gmra.mrb[0].mxu0 %v5275
    %v5742 = vpop.f32.mrb[0].mxu0
    %v5743 = vadd.f32 %v5245, %v5742
    %v5744 = vpop.f32.mrb[0].mxu0
    %5745 = vmatprep.mubr.f32.mxu0 0.0
    %5746 = vmatmul.mubr.f32.gmra.mrb[0].mxu0 %v5278
    %v5747 = vpop.f32.mrb[0].mxu0
    %v5748 = vadd.f32 %v5245, %v5747
    %v5749 = vpop.f32.mrb[0].mxu0
    %5750 = vmatprep.mubr.f32.mxu0 0.0
    %5751 = vmatmul.mubr.f32.gmra.mrb[0].mxu0 %v5281
    %v5752 = vpop.f32.mrb[0].mxu0
    %v5753 = vadd.f32 %v5245, %v5752
    %v5754 = vpop.f32.mrb[0].mxu0
    %5755 = vmatprep.mubr.f32.mxu0 0.0
    %5756 = vmatmul.mubr.f32.gmra.mrb[0].mxu0 %v5284
    %v5757 = vpop.f32.mrb[0].mxu0
    %v5758 = vadd.f32 %v5245, %v5757
    %v5759 = vpop.f32.mrb[0].mxu0
    %5760 = vmatprep.mubr.f32.mxu0 0.0
    %5761 = vmatmul.mubr.f32.gmra.mrb[0].mxu0 %v5287
    %v5762 = vpop.f32.mrb[0].mxu0
    %v5763 = vadd.f32 %v5245, %v5762
    %v5764 = vpop.f32.mrb[0].mxu0
    %5765 = vmatprep.mubr.f32.mxu0 0.0
    %5766 = vmatmul.mubr.f32.gmra.mrb[0].mxu0 %v5290
    %v5767 = vpop.f32.mrb[0].mxu0
    %v5768 = vadd.f32 %v5245, %v5767
    %v5769 = vpop.f32.mrb[0].mxu0
    %5770 = vmatprep.mubr.f32.mxu0 0.0
    %5771 = vmatmul.mubr.f32.gmra.mrb[0].mxu0 %v5293
    %v5772 = vpop.f32.mrb[0].mxu0
    %v5773 = vadd.f32 %v5245, %v5772
    %v5774 = vpop.f32.mrb[0].mxu0
    %5775 = vmatprep.mubr.f32.mxu0 0.0
    %5776 = vmatmul.mubr.f32.gmra.mrb[0].mxu0 %v5296
    %v5777 = vpop.f32.mrb[0].mxu0
    %v5778 = vadd.f32 %v5245, %v5777
    %v5779 = vpop.f32.mrb[0].mxu0
    %5780 = vmatprep.mubr.f32.mxu0 0.0
    %5781 = vmatmul.mubr.f32.gmra.mrb[0].mxu0 %v5299
    %v5782 = vpop.f32.mrb[0].mxu0
    %v5783 = vadd.f32 %v5245, %v5782
    %v5784 = vpop.f32.mrb[0].mxu0
    %5785 = vmatprep.mubr.f32.mxu0 0.0
    %5786 = vmatmul.mubr.f32.gmra.mrb[0].mxu0 %v5302
    %v5787 = vpop.f32.mrb[0].mxu0
    %v5788 = vadd.f32 %v5245, %v5787
    %v5789 = vpop.f32.mrb[0].mxu0
    %5790 = vmatprep.mubr.f32.mxu0 0.0
    %5791 = vmatmul.mubr.f32.gmra.mrb[0].mxu0 %v5305
    %v5792 = vpop.f32.mrb[0].mxu0
    %v5793 = vadd.f32 %v5245, %v5792
    %v5794 = vpop.f32.mrb[0].mxu0
    %5795 = vmatprep.mubr.f32.mxu0 0.0
    %5796 = vmatmul.mubr.f32.gmra.mrb[0].mxu0 %v5308
    %v5797 = vpop.f32.mrb[0].mxu0
    %v5798 = vadd.f32 %v5245, %v5797
    %v5799 = vpop.f32.mrb[0].mxu0
    %5800 = vmatprep.mubr.f32.mxu0 0.0
    %5801 = vmatmul.mubr.f32.gmra.mrb[0].mxu0 %v5311
    %v5802 = vpop.f32.mrb[0].mxu0
    %v5803 = vadd.f32 %v5245, %v5802
    %v5804 = vpop.f32.mrb[0].mxu0
    %5805 = vmatprep.mubr.f32.mxu0 0.0
    %5806 = vmatmul.mubr.f32.gmra.mrb[0].mxu0 %v5314
    %v5807 = vpop.f32.mrb[0].mxu0
    %v5808 = vadd.f32 %v5245, %v5807
    %v5809 = vpop.f32.mrb[0].mxu0
    %5810 = vmatprep.mubr.f32.mxu0 0.0
    %5811 = vmatmul.mubr.f32.gmra.mrb[0].mxu0 %v5317
    %v5812 = vpop.f32.mrb[0].mxu0
    %v5813 = vadd.f32 %v5245, %v5812
    %v5814 = vpop.f32.mrb[0].mxu0
    %5815 = vmatprep.mubr.f32.mxu0 0.0
    %5816 = vmatmul.mubr.f32.gmra.mrb[0].mxu0 %v5320
    %v5817 = vpop.f32.mrb[0].mxu0
    %v5818 = vadd.f32 %v5245, %v5817
    %v5819 = vpop.f32.mrb[0].mxu0
    %5820 = vmatprep.mubr.f32.mxu0 0.0
    %5821 = vmatmul.mubr.f32.gmra.mrb[0].mxu0 %v5323
    %v5822 = vpop.f32.mrb[0].mxu0
    %v5823 = vadd.f32 %v5245, %v5822
    %v5824 = vpop.f32.mrb[0].mxu0
    %5825 = vmatprep.mubr.f32.mxu0 0.0
    %5826 = vmatmul.mubr.f32.gmra.mrb[0].mxu0 %v5326
    %v5827 = vpop.f32.mrb[0].mxu0
    %v5828 = vadd.f32 %v5245, %v5827
    %v5829 = vpop.f32.mrb[0].mxu0
    %5830 = vmatprep.mubr.f32.mxu0 0.0
    %5831 = vmatmul.mubr.f32.gmra.mrb[0].mxu0 %v5329
    %v5832 = vpop.f32.mrb[0].mxu0
    %v5833 = vadd.f32 %v5245, %v5832
    %v5834 = vpop.f32.mrb[0].mxu0
    %5835 = vmatprep.mubr.f32.mxu0 0.0
    %5836 = vmatmul.mubr.f32.gmra.mrb[0].mxu0 %v5332
    %v5837 = vpop.f32.mrb[0].mxu0
    %v5838 = vadd.f32 %v5245, %v5837
    %v5839 = vpop.f32.mrb[0].mxu0
    %5840 = vmatprep.mubr.f32.mxu0 0.0
    %5841 = vmatmul.mubr.f32.gmra.mrb[0].mxu0 %v5335
    %v5842 = vpop.f32.mrb[0].mxu0
    %v5843 = vadd.f32 %v5245, %v5842
    %v5844 = vpop.f32.mrb[0].mxu0
    %5845 = vmatprep.mubr.f32.mxu0 0.0
    %5846 = vmatmul.mubr.f32.gmra.mrb[0].mxu0 %v5338
    %v5847 = vpop.f32.mrb[0].mxu0
    %v5848 = vadd.f32 %v5245, %v5847
    %v5849 = vpop.f32.mrb[0].mxu0
    %5850 = vmatprep.mubr.f32.mxu0 0.0
    %5851 = vmatmul.mubr.f32.gmra.mrb[0].mxu0 %v5341
    %v5852 = vpop.f32.mrb[0].mxu0
    %v5853 = vadd.f32 %v5245, %v5852
    %v5854 = vpop.f32.mrb[0].mxu0
    %5855 = vmatprep.mubr.f32.mxu0 0.0
    %5856 = vmatmul.mubr.f32.gmra.mrb[0].mxu0 %v5344
    %v5857 = vpop.f32.mrb[0].mxu0
    %v5858 = vadd.f32 %v5245, %v5857
    %v5859 = vpop.f32.mrb[0].mxu0
    %5860 = vmatprep.mubr.f32.mxu0 0.0
    %5861 = vmatmul.mubr.f32.gmra.mrb[0].mxu0 %v5347
    %v5862 = vpop.f32.mrb[0].mxu0
    %v5863 = vadd.f32 %v5245, %v5862
    %v5864 = vpop.f32.mrb[0].mxu0
    %5865 = vmatprep.mubr.f32.mxu0 0.0
    %5866 = vmatmul.mubr.f32.gmra.mrb[0].mxu0 %v5350
    %v5867 = vpop.f32.mrb[0].mxu0
    %v5868 = vadd.f32 %v5245, %v5867
    %v5869 = vpop.f32.mrb[0].mxu0
    %5870 = vmatprep.mubr.f32.mxu0 0.0
    %5871 = vmatmul.mubr.f32.gmra.mrb[0].mxu0 %v5353
    %v5872 = vpop.f32.mrb[0].mxu0
    %v5873 = vadd.f32 %v5245, %v5872
    %v5874 = vpop.f32.mrb[0].mxu0
    %5875 = vmatprep.mubr.f32.mxu0 0.0
    %5876 = vmatmul.mubr.f32.gmra.mrb[0].mxu0 %v5356
    %v5877 = vpop.f32.mrb[0].mxu0
    %v5878 = vadd.f32 %v5245, %v5877
    %v5879 = vpop.f32.mrb[0].mxu0
    %5880 = vmatprep.mubr.f32.mxu0 0.0
    %5881 = vmatmul.mubr.f32.gmra.mrb[0].mxu0 %v5359
    %v5882 = vpop.f32.mrb[0].mxu0
    %v5883 = vadd.f32 %v5245, %v5882
    %v5884 = vpop.f32.mrb[0].mxu0
    %5885 = vmatprep.mubr.f32.mxu0 0.0
    %5886 = vmatmul.mubr.f32.gmra.mrb[0].mxu0 %v5362
    %v5887 = vpop.f32.mrb[0].mxu0
    %v5888 = vadd.f32 %v5245, %v5887
    %v5889 = vpop.f32.mrb[0].mxu0
    %5890 = vmatprep.mubr.f32.mxu0 0.0
    %5891 = vmatmul.mubr.f32.gmra.mrb[0].mxu0 %v5365
    %v5892 = vpop.f32.mrb[0].mxu0
    %v5893 = vadd.f32 %v5245, %v5892
    %v5894 = vpop.f32.mrb[0].mxu0
    %5895 = vmatprep.mubr.f32.mxu0 0.0
    %5896 = vmatmul.mubr.f32.gmra.mrb[0].mxu0 %v5368
    %v5897 = vpop.f32.mrb[0].mxu0
    %v5898 = vadd.f32 %v5245, %v5897
    %v5899 = vpop.f32.mrb[0].mxu0
    %5900 = vmatprep.mubr.f32.mxu0 0.0
    %5901 = vmatmul.mubr.f32.gmra.mrb[0].mxu0 %v5371
    %v5902 = vpop.f32.mrb[0].mxu0
    %v5903 = vadd.f32 %v5245, %v5902
    %v5904 = vpop.f32.mrb[0].mxu0
    %5905 = vmatprep.mubr.f32.mxu0 0.0
    %5906 = vmatmul.mubr.f32.gmra.mrb[0].mxu0 %v5374
    %v5907 = vpop.f32.mrb[0].mxu0
    %v5908 = vadd.f32 %v5245, %v5907
    %v5909 = vpop.f32.mrb[0].mxu0
    %5910 = vmatprep.mubr.f32.mxu0 0.0
    %5911 = vmatmul.mubr.f32.gmra.mrb[0].mxu0 %v5377
    %v5912 = vpop.f32.mrb[0].mxu0
    %v5913 = vadd.f32 %v5245, %v5912
    %v5914 = vpop.f32.mrb[0].mxu0
    %5915 = vmatprep.mubr.f32.mxu0 0.0
    %5916 = vmatmul.mubr.f32.gmra.mrb[0].mxu0 %v5380
    %v5917 = vpop.f32.mrb[0].mxu0
    %v5918 = vadd.f32 %v5245, %v5917
    %v5919 = vpop.f32.mrb[0].mxu0
    %5920 = vmatprep.mubr.f32.mxu0 0.0
    %5921 = vmatmul.mubr.f32.gmra.mrb[0].mxu0 %v5383
    %v5922 = vpop.f32.mrb[0].mxu0
    %v5923 = vadd.f32 %v5245, %v5922
    %v5924 = vpop.f32.mrb[0].mxu0
    %5925 = vmatprep.mubr.f32.mxu0 0.0
    %5926 = vmatmul.mubr.f32.gmra.mrb[0].mxu0 %v5386
    %v5927 = vpop.f32.mrb[0].mxu0
    %v5928 = vadd.f32 %v5245, %v5927
    %v5929 = vpop.f32.mrb[0].mxu0
    %5930 = vmatprep.mubr.f32.mxu0 0.0
    %5931 = vmatmul.mubr.f32.gmra.mrb[0].mxu0 %v5389
    %v5932 = vpop.f32.mrb[0].mxu0
    %v5933 = vadd.f32 %v5245, %v5932
    %v5934 = vpop.f32.mrb[0].mxu0
    %5935 = vmatprep.mubr.f32.mxu0 0.0
    %5936 = vmatmul.mubr.f32.gmra.mrb[0].mxu0 %v5392
    %v5937 = vpop.f32.mrb[0].mxu0
    %v5938 = vadd.f32 %v5245, %v5937
    %v5939 = vpop.f32.mrb[0].mxu0
    %5940 = vmatprep.mubr.f32.mxu0 0.0
    %5941 = vmatmul.mubr.f32.gmra.mrb[0].mxu0 %v5395
    %v5942 = vpop.f32.mrb[0].mxu0
    %v5943 = vadd.f32 %v5245, %v5942
    %v5944 = vpop.f32.mrb[0].mxu0
    %5945 = vmatprep.mubr.f32.mxu0 0.0
    %5946 = vmatmul.mubr.f32.gmra.mrb[0].mxu0 %v5398
    %v5947 = vpop.f32.mrb[0].mxu0
    %v5948 = vadd.f32 %v5245, %v5947
    %v5949 = vpop.f32.mrb[0].mxu0
    %5950 = vmatprep.mubr.f32.mxu0 0.0
    %5951 = vmatmul.mubr.f32.gmra.mrb[0].mxu0 %v5401
    %v5952 = vpop.f32.mrb[0].mxu0
    %v5953 = vadd.f32 %v5245, %v5952
    %v5954 = vpop.f32.mrb[0].mxu0
    %5955 = vmatprep.mubr.f32.mxu0 0.0
    %5956 = vmatmul.mubr.f32.gmra.mrb[0].mxu0 %v5404
    %v5957 = vpop.f32.mrb[0].mxu0
    %v5958 = vadd.f32 %v5245, %v5957
    %v5959 = vpop.f32.mrb[0].mxu0
    %5960 = vmatprep.mubr.f32.mxu0 0.0
    %5961 = vmatmul.mubr.f32.gmra.mrb[0].mxu0 %v5407
    %v5962 = vpop.f32.mrb[0].mxu0
    %v5963 = vadd.f32 %v5245, %v5962
    %v5964 = vpop.f32.mrb[0].mxu0
    %5965 = vmatprep.mubr.f32.mxu0 0.0
    %5966 = vmatmul.mubr.f32.gmra.mrb[0].mxu0 %v5410
    %v5967 = vpop.f32.mrb[0].mxu0
    %v5968 = vadd.f32 %v5245, %v5967
    %v5969 = vpop.f32.mrb[0].mxu0
    %5970 = vmatprep.mubr.f32.mxu0 0.0
    %5971 = vmatmul.mubr.f32.gmra.mrb[0].mxu0 %v5413
    %v5972 = vpop.f32.mrb[0].mxu0
    %v5973 = vadd.f32 %v5245, %v5972
    %v5974 = vpop.f32.mrb[0].mxu0
    %5975 = vmatprep.mubr.f32.mxu0 0.0
    %5976 = vmatmul.mubr.f32.gmra.mrb[0].mxu0 %v5416
    %v5977 = vpop.f32.mrb[0].mxu0
    %v5978 = vadd.f32 %v5245, %v5977
    %v5979 = vpop.f32.mrb[0].mxu0
    %5980 = vmatprep.mubr.f32.mxu0 0.0
    %5981 = vmatmul.mubr.f32.gmra.mrb[0].mxu0 %v5419
    %v5982 = vpop.f32.mrb[0].mxu0
    %v5983 = vadd.f32 %v5245, %v5982
    %v5984 = vpop.f32.mrb[0].mxu0
    %5985 = vmatprep.mubr.f32.mxu0 0.0
    %5986 = vmatmul.mubr.f32.gmra.mrb[0].mxu0 %v5422
    %v5987 = vpop.f32.mrb[0].mxu0
    %v5988 = vadd.f32 %v5245, %v5987
    %v5989 = vpop.f32.mrb[0].mxu0
    %5990 = vmatprep.mubr.f32.mxu0 0.0
    %5991 = vmatmul.mubr.f32.gmra.mrb[0].mxu0 %v5425
    %v5992 = vpop.f32.mrb[0].mxu0
    %v5993 = vadd.f32 %v5245, %v5992
    %v5994 = vpop.f32.mrb[0].mxu0
    %5995 = vmatprep.mubr.f32.mxu0 0.0
    %5996 = vmatmul.mubr.f32.gmra.mrb[0].mxu0 %v5428
    %v5997 = vpop.f32.mrb[0].mxu0
    %v5998 = vadd.f32 %v5245, %v5997
    %v5999 = vpop.f32.mrb[0].mxu0
    %6000 = vmatprep.mubr.f32.mxu0 0.0
    %6001 = vmatmul.mubr.f32.gmra.mrb[0].mxu0 %v5431
    %v6002 = vpop.f32.mrb[0].mxu0
    %v6003 = vadd.f32 %v5245, %v6002
    %v6004 = vpop.f32.mrb[0].mxu0
    %6005 = vmatprep.mubr.f32.mxu0 0.0
    %6006 = vmatmul.mubr.f32.gmra.mrb[0].mxu0 %v5434
    %v6007 = vpop.f32.mrb[0].mxu0
    %v6008 = vadd.f32 %v5245, %v6007
    %v6009 = vpop.f32.mrb[0].mxu0
    %6010 = vmatprep.mubr.f32.mxu0 0.0
    %6011 = vmatmul.mubr.f32.gmra.mrb[0].mxu0 %v5437
    %v6012 = vpop.f32.mrb[0].mxu0
    %v6013 = vadd.f32 %v5245, %v6012
    %v6014 = vpop.f32.mrb[0].mxu0
    %6015 = vmatprep.mubr.f32.mxu0 0.0
    %6016 = vmatmul.mubr.f32.gmra.mrb[0].mxu0 %v5440
    %v6017 = vpop.f32.mrb[0].mxu0
    %v6018 = vadd.f32 %v5245, %v6017
    %v6019 = vpop.f32.mrb[0].mxu0
    %6020 = vmatprep.mubr.f32.mxu0 0.0
    %6021 = vmatmul.mubr.f32.gmra.mrb[0].mxu0 %v5443
    %v6022 = vpop.f32.mrb[0].mxu0
    %v6023 = vadd.f32 %v5245, %v6022
    %v6024 = vpop.f32.mrb[0].mxu0
    %6025 = vmatprep.mubr.f32.mxu0 0.0
    %6026 = vmatmul.mubr.f32.gmra.mrb[0].mxu0 %v5446
    %v6027 = vpop.f32.mrb[0].mxu0
    %v6028 = vadd.f32 %v5245, %v6027
    %v6029 = vpop.f32.mrb[0].mxu0
    %6030 = vmatprep.mubr.f32.mxu0 0.0
    %6031 = vmatmul.mubr.f32.gmra.mrb[0].mxu0 %v5449
    %v6032 = vpop.f32.mrb[0].mxu0
    %v6033 = vadd.f32 %v5245, %v6032
    %v6034 = vpop.f32.mrb[0].mxu0
    %6035 = vmatprep.mubr.f32.mxu0 0.0
    %6036 = vmatmul.mubr.f32.gmra.mrb[0].mxu0 %v5452
    %v6037 = vpop.f32.mrb[0].mxu0
    %v6038 = vadd.f32 %v5245, %v6037
    %v6039 = vpop.f32.mrb[0].mxu0
    %6040 = vmatprep.mubr.f32.mxu0 0.0
    %6041 = vmatmul.mubr.f32.gmra.mrb[0].mxu0 %v5455
    %v6042 = vpop.f32.mrb[0].mxu0
    %v6043 = vadd.f32 %v5245, %v6042
    %v6044 = vpop.f32.mrb[0].mxu0
    %6045 = vmatprep.mubr.f32.mxu0 0.0
    %6046 = vmatmul.mubr.f32.gmra.mrb[0].mxu0 %v5458
    %v6047 = vpop.f32.mrb[0].mxu0
    %v6048 = vadd.f32 %v5245, %v6047
    %v6049 = vpop.f32.mrb[0].mxu0
    %6050 = vmatprep.mubr.f32.mxu0 0.0
    %6051 = vmatmul.mubr.f32.gmra.mrb[0].mxu0 %v5461
    %v6052 = vpop.f32.mrb[0].mxu0
    %v6053 = vadd.f32 %v5245, %v6052
    %v6054 = vpop.f32.mrb[0].mxu0
    %6055 = vmatprep.mubr.f32.mxu0 0.0
    %6056 = vmatmul.mubr.f32.gmra.mrb[0].mxu0 %v5464
    %v6057 = vpop.f32.mrb[0].mxu0
    %v6058 = vadd.f32 %v5245, %v6057
    %v6059 = vpop.f32.mrb[0].mxu0
    %6060 = vmatprep.mubr.f32.mxu0 0.0
    %6061 = vmatmul.mubr.f32.gmra.mrb[0].mxu0 %v5467
    %v6062 = vpop.f32.mrb[0].mxu0
    %v6063 = vadd.f32 %v5245, %v6062
    %v6064 = vpop.f32.mrb[0].mxu0
    %6065 = vmatprep.mubr.f32.mxu0 0.0
    %6066 = vmatmul.mubr.f32.gmra.mrb[0].mxu0 %v5470
    %v6067 = vpop.f32.mrb[0].mxu0
    %v6068 = vadd.f32 %v5245, %v6067
    %v6069 = vpop.f32.mrb[0].mxu0
    %6070 = vmatprep.mubr.f32.mxu0 0.0
    %6071 = vmatmul.mubr.f32.gmra.mrb[0].mxu0 %v5473
    %v6072 = vpop.f32.mrb[0].mxu0
    %v6073 = vadd.f32 %v5245, %v6072
    %v6074 = vpop.f32.mrb[0].mxu0
    %6075 = vmatprep.mubr.f32.mxu0 0.0
    %6076 = vmatmul.mubr.f32.gmra.mrb[0].mxu0 %v5476
    %v6077 = vpop.f32.mrb[0].mxu0
    %v6078 = vadd.f32 %v5245, %v6077
    %v6079 = vpop.f32.mrb[0].mxu0
    %6080 = vmatprep.mubr.f32.mxu0 0.0
    %6081 = vmatmul.mubr.f32.gmra.mrb[0].mxu0 %v5479
    %v6082 = vpop.f32.mrb[0].mxu0
    %v6083 = vadd.f32 %v5245, %v6082
    %v6084 = vpop.f32.mrb[0].mxu0
    %6085 = vmatprep.mubr.f32.mxu0 0.0
    %6086 = vmatmul.mubr.f32.gmra.mrb[0].mxu0 %v5482
    %v6087 = vpop.f32.mrb[0].mxu0
    %v6088 = vadd.f32 %v5245, %v6087
    %v6089 = vpop.f32.mrb[0].mxu0
    %6090 = vmatprep.mubr.f32.mxu0 0.0
    %6091 = vmatmul.mubr.f32.gmra.mrb[0].mxu0 %v5485
    %v6092 = vpop.f32.mrb[0].mxu0
    %v6093 = vadd.f32 %v5245, %v6092
    %v6094 = vpop.f32.mrb[0].mxu0
    %6095 = vmatprep.mubr.f32.mxu0 0.0
    %6096 = vmatmul.mubr.f32.gmra.mrb[0].mxu0 %v5488
    %v6097 = vpop.f32.mrb[0].mxu0
    %v6098 = vadd.f32 %v5245, %v6097
    %v6099 = vpop.f32.mrb[0].mxu0
    %6100 = vmatprep.mubr.f32.mxu0 0.0
    %6101 = vmatmul.mubr.f32.gmra.mrb[0].mxu0 %v5491
    %v6102 = vpop.f32.mrb[0].mxu0
    %v6103 = vadd.f32 %v5245, %v6102
    %v6104 = vpop.f32.mrb[0].mxu0
    %6105 = vmatprep.mubr.f32.mxu0 0.0
    %6106 = vmatmul.mubr.f32.gmra.mrb[0].mxu0 %v5494
    %v6107 = vpop.f32.mrb[0].mxu0
    %v6108 = vadd.f32 %v5245, %v6107
    %v6109 = vpop.f32.mrb[0].mxu0
    %6110 = vmatprep.mubr.f32.mxu0 0.0
    %6111 = vmatmul.mubr.f32.gmra.mrb[0].mxu0 %v5497
    %v6112 = vpop.f32.mrb[0].mxu0
    %v6113 = vadd.f32 %v5245, %v6112
    %v6114 = vpop.f32.mrb[0].mxu0
    %6115 = vmatprep.mubr.f32.mxu0 0.0
    %6116 = vmatmul.mubr.f32.gmra.mrb[0].mxu0 %v5500
    %v6117 = vpop.f32.mrb[0].mxu0
    %v6118 = vadd.f32 %v5245, %v6117
    %v6119 = vpop.f32.mrb[0].mxu0
    %6120 = vmatprep.mubr.f32.mxu0 0.0
    %6121 = vmatmul.mubr.f32.gmra.mrb[0].mxu0 %v5503
    %v6122 = vpop.f32.mrb[0].mxu0
    %v6123 = vadd.f32 %v5245, %v6122
    %v6124 = vpop.f32.mrb[0].mxu0
    %6125 = vmatprep.mubr.f32.mxu0 0.0
    %6126 = vmatmul.mubr.f32.gmra.mrb[0].mxu0 %v5506
    %v6127 = vpop.f32.mrb[0].mxu0
    %v6128 = vadd.f32 %v5245, %v6127
    %v6129 = vpop.f32.mrb[0].mxu0
    %6130 = vmatprep.mubr.f32.mxu0 0.0
    %6131 = vmatmul.mubr.f32.gmra.mrb[0].mxu0 %v5509
    %v6132 = vpop.f32.mrb[0].mxu0
    %v6133 = vadd.f32 %v5245, %v6132
    %v6134 = vpop.f32.mrb[0].mxu0
    %6135 = vmatprep.mubr.f32.mxu0 0.0
    %6136 = vmatmul.mubr.f32.gmra.mrb[0].mxu0 %v5512
    %v6137 = vpop.f32.mrb[0].mxu0
    %v6138 = vadd.f32 %v5245, %v6137
    %v6139 = vpop.f32.mrb[0].mxu0
    %6140 = vmatprep.mubr.f32.mxu0 0.0
    %6141 = vmatmul.mubr.f32.gmra.mrb[0].mxu0 %v5515
    %v6142 = vpop.f32.mrb[0].mxu0
    %v6143 = vadd.f32 %v5245, %v6142
    %v6144 = vpop.f32.mrb[0].mxu0
    %6145 = vmatprep.mubr.f32.mxu0 0.0
    %6146 = vmatmul.mubr.f32.gmra.mrb[0].mxu0 %v5518
    %v6147 = vpop.f32.mrb[0].mxu0
    %v6148 = vadd.f32 %v5245, %v6147
    %v6149 = vpop.f32.mrb[0].mxu0
    %6150 = vmatprep.mubr.f32.mxu0 0.0
    %6151 = vmatmul.mubr.f32.gmra.mrb[0].mxu0 %v5521
    %v6152 = vpop.f32.mrb[0].mxu0
    %v6153 = vadd.f32 %v5245, %v6152
    %v6154 = vpop.f32.mrb[0].mxu0
    %6155 = vmatprep.mubr.f32.mxu0 0.0
    %6156 = vmatmul.mubr.f32.gmra.mrb[0].mxu0 %v5524
    %v6157 = vpop.f32.mrb[0].mxu0
    %v6158 = vadd.f32 %v5245, %v6157
    %v6159 = vpop.f32.mrb[0].mxu0
    %6160 = vmatprep.mubr.f32.mxu0 0.0
    %6161 = vmatmul.mubr.f32.gmra.mrb[0].mxu0 %v5527
    %v6162 = vpop.f32.mrb[0].mxu0
    %v6163 = vadd.f32 %v5245, %v6162
    %v6164 = vpop.f32.mrb[0].mxu0
    %6165 = vmatprep.mubr.f32.mxu0 0.0
    %6166 = vmatmul.mubr.f32.gmra.mrb[0].mxu0 %v5530
    %v6167 = vpop.f32.mrb[0].mxu0
    %v6168 = vadd.f32 %v5245, %v6167
    %v6169 = vpop.f32.mrb[0].mxu0
    %6170 = vmatprep.mubr.f32.mxu0 0.0
    %6171 = vmatmul.mubr.f32.gmra.mrb[0].mxu0 %v5533
    %v6172 = vpop.f32.mrb[0].mxu0
    %v6173 = vadd.f32 %v5245, %v6172
    %v6174 = vpop.f32.mrb[0].mxu0
    %6175 = vmatprep.mubr.f32.mxu0 0.0
    %6176 = vmatmul.mubr.f32.gmra.mrb[0].mxu0 %v5536
    %v6177 = vpop.f32.mrb[0].mxu0
    %v6178 = vadd.f32 %v5245, %v6177
    %v6179 = vpop.f32.mrb[0].mxu0
    %6180 = vmatprep.mubr.f32.mxu0 0.0
    %6181 = vmatmul.mubr.f32.gmra.mrb[0].mxu0 %v5539
    %v6182 = vpop.f32.mrb[0].mxu0
    %v6183 = vadd.f32 %v5245, %v6182
    %v6184 = vpop.f32.mrb[0].mxu0
    %6185 = vmatprep.mubr.f32.mxu0 0.0
    %6186 = vmatmul.mubr.f32.gmra.mrb[0].mxu0 %v5542
    %v6187 = vpop.f32.mrb[0].mxu0
    %v6188 = vadd.f32 %v5245, %v6187
    %v6189 = vpop.f32.mrb[0].mxu0
    %6190 = vmatprep.mubr.f32.mxu0 0.0
    %6191 = vmatmul.mubr.f32.gmra.mrb[0].mxu0 %v5545
    %v6192 = vpop.f32.mrb[0].mxu0
    %v6193 = vadd.f32 %v5245, %v6192
    %v6194 = vpop.f32.mrb[0].mxu0
    %6195 = vmatprep.mubr.f32.mxu0 0.0
    %6196 = vmatmul.mubr.f32.gmra.mrb[0].mxu0 %v5548
    %v6197 = vpop.f32.mrb[0].mxu0
    %v6198 = vadd.f32 %v5245, %v6197
    %v6199 = vpop.f32.mrb[0].mxu0
    %6200 = vmatprep.mubr.f32.mxu0 0.0
    %6201 = vmatmul.mubr.f32.gmra.mrb[0].mxu0 %v5551
    %v6202 = vpop.f32.mrb[0].mxu0
    %v6203 = vadd.f32 %v5245, %v6202
    %v6204 = vpop.f32.mrb[0].mxu0
    %6205 = vmatprep.mubr.f32.mxu0 0.0
    %6206 = vmatmul.mubr.f32.gmra.mrb[0].mxu0 %v5554
    %v6207 = vpop.f32.mrb[0].mxu0
    %v6208 = vadd.f32 %v5245, %v6207
    %v6209 = vpop.f32.mrb[0].mxu0
    %6210 = vmatprep.mubr.f32.mxu0 0.0
    %6211 = vmatmul.mubr.f32.gmra.mrb[0].mxu0 %v5557
    %v6212 = vpop.f32.mrb[0].mxu0
    %v6213 = vadd.f32 %v5245, %v6212
    %v6214 = vpop.f32.mrb[0].mxu0
    %6215 = vmatprep.mubr.f32.mxu0 0.0
    %6216 = vmatmul.mubr.f32.gmra.mrb[0].mxu0 %v5560
    %v6217 = vpop.f32.mrb[0].mxu0
    %v6218 = vadd.f32 %v5245, %v6217
    %v6219 = vpop.f32.mrb[0].mxu0
    %6220 = vmatprep.mubr.f32.mxu0 0.0
    %6221 = vmatmul.mubr.f32.gmra.mrb[0].mxu0 %v5563
    %v6222 = vpop.f32.mrb[0].mxu0
    %v6223 = vadd.f32 %v5245, %v6222
    %v6224 = vpop.f32.mrb[0].mxu0
    %6225 = vmatprep.mubr.f32.mxu0 0.0
    %6226 = vmatmul.mubr.f32.gmra.mrb[0].mxu0 %v5566
    %v6227 = vpop.f32.mrb[0].mxu0
    %v6228 = vadd.f32 %v5245, %v6227
    %v6229 = vpop.f32.mrb[0].mxu0
    %6230 = vmatprep.mubr.f32.mxu0 0.0
    %6231 = vmatmul.mubr.f32.gmra.mrb[0].mxu0 %v5569
    %v6232 = vpop.f32.mrb[0].mxu0
    %v6233 = vadd.f32 %v5245, %v6232
    %v6234 = vpop.f32.mrb[0].mxu0
    %6235 = vmatprep.mubr.f32.mxu0 0.0
    %6236 = vmatmul.mubr.f32.gmra.mrb[0].mxu0 %v5572
    %v6237 = vpop.f32.mrb[0].mxu0
    %v6238 = vadd.f32 %v5245, %v6237
    %v6239 = vpop.f32.mrb[0].mxu0
    %6240 = vmatprep.mubr.f32.mxu0 0.0
    %6241 = vmatmul.mubr.f32.gmra.mrb[0].mxu0 %v5575
    %v6242 = vpop.f32.mrb[0].mxu0
    %v6243 = vadd.f32 %v5245, %v6242
    %v6244 = vpop.f32.mrb[0].mxu0
    %6245 = vmatprep.mubr.f32.mxu0 0.0
    %6246 = vmatmul.mubr.f32.gmra.mrb[0].mxu0 %v5578
    %v6247 = vpop.f32.mrb[0].mxu0
    %v6248 = vadd.f32 %v5245, %v6247
    %v6249 = vpop.f32.mrb[0].mxu0
    %6250 = vmatprep.mubr.f32.mxu0 0.0
    %6251 = vmatmul.mubr.f32.gmra.mrb[0].mxu0 %v5581
    %v6252 = vpop.f32.mrb[0].mxu0
    %v6253 = vadd.f32 %v5245, %v6252
    %v6254 = vpop.f32.mrb[0].mxu0
    %6255 = vmatprep.mubr.f32.mxu0 0.0
    %6256 = vmatmul.mubr.f32.gmra.mrb[0].mxu0 %v5584
    %v6257 = vpop.f32.mrb[0].mxu0
    %v6258 = vadd.f32 %v5245, %v6257
    %v6259 = vpop.f32.mrb[0].mxu0
    %6260 = vmatprep.mubr.f32.mxu0 0.0
    %6261 = vmatmul.mubr.f32.gmra.mrb[0].mxu0 %v5587
    %v6262 = vpop.f32.mrb[0].mxu0
    %v6263 = vadd.f32 %v5245, %v6262
    %v6264 = vpop.f32.mrb[0].mxu0
    %6265 = vmatprep.mubr.f32.mxu0 0.0
    %6266 = vmatmul.mubr.f32.gmra.mrb[0].mxu0 %v5590
    %v6267 = vpop.f32.mrb[0].mxu0
    %v6268 = vadd.f32 %v5245, %v6267
    %v6269 = vpop.f32.mrb[0].mxu0
    %6270 = vmatprep.mubr.f32.mxu0 0.0
    %6271 = vmatmul.mubr.f32.gmra.mrb[0].mxu0 %v5593
    %v6272 = vpop.f32.mrb[0].mxu0
    %v6273 = vadd.f32 %v5245, %v6272
    %v6274 = vpop.f32.mrb[0].mxu0
    %6275 = vmatprep.mubr.f32.mxu0 0.0
    %6276 = vmatmul.mubr.f32.gmra.mrb[0].mxu0 %v5596
    %v6277 = vpop.f32.mrb[0].mxu0
    %v6278 = vadd.f32 %v5245, %v6277
    %v6279 = vpop.f32.mrb[0].mxu0
    %6280 = vmatprep.mubr.f32.mxu0 0.0
    %6281 = vmatmul.mubr.f32.gmra.mrb[0].mxu0 %v5599
    %v6282 = vpop.f32.mrb[0].mxu0
    %v6283 = vadd.f32 %v5245, %v6282
    %v6284 = vpop.f32.mrb[0].mxu0
    %6285 = vmatprep.mubr.f32.mxu0 0.0
    %6286 = vmatmul.mubr.f32.gmra.mrb[0].mxu0 %v5602
    %v6287 = vpop.f32.mrb[0].mxu0
    %v6288 = vadd.f32 %v5245, %v6287
    %v6289 = vpop.f32.mrb[0].mxu0
    %6290 = vmatprep.mubr.f32.mxu0 0.0
    %6291 = vmatmul.mubr.f32.gmra.mrb[0].mxu0 %v5605
    %v6292 = vpop.f32.mrb[0].mxu0
    %v6293 = vadd.f32 %v5245, %v6292
    %v6294 = vpop.f32.mrb[0].mxu0
    %6295 = vmatprep.mubr.f32.mxu0 0.0
    %6296 = vmatmul.mubr.f32.gmra.mrb[0].mxu0 %v5608
    %v6297 = vpop.f32.mrb[0].mxu0
    %v6298 = vadd.f32 %v5245, %v6297
    %v6299 = vpop.f32.mrb[0].mxu0
    %6300 = vmatprep.mubr.f32.mxu0 0.0
    %6301 = vmatmul.mubr.f32.gmra.mrb[0].mxu0 %v5611
    %v6302 = vpop.f32.mrb[0].mxu0
    %v6303 = vadd.f32 %v5245, %v6302
    %v6304 = vpop.f32.mrb[0].mxu0
    %6305 = vmatprep.mubr.f32.mxu0 0.0
    %6306 = vmatmul.mubr.f32.gmra.mrb[0].mxu0 %v5614
    %v6307 = vpop.f32.mrb[0].mxu0
    %v6308 = vadd.f32 %v5245, %v6307
    %v6309 = vpop.f32.mrb[0].mxu0
    %6310 = vmatprep.mubr.f32.mxu0 0.0
    %6311 = vmatmul.mubr.f32.gmra.mrb[0].mxu0 %v5617
    %v6312 = vpop.f32.mrb[0].mxu0
    %v6313 = vadd.f32 %v5245, %v6312
    %v6314 = vpop.f32.mrb[0].mxu0
    %6315 = vmatprep.mubr.f32.mxu0 0.0
    %6316 = vmatmul.mubr.f32.gmra.mrb[0].mxu0 %v5620
    %v6317 = vpop.f32.mrb[0].mxu0
    %v6318 = vadd.f32 %v5245, %v6317
    %v6319 = vpop.f32.mrb[0].mxu0
    %6320 = vmatprep.mubr.f32.mxu0 0.0
    %6321 = vmatmul.mubr.f32.gmra.mrb[0].mxu0 %v5623
    %v6322 = vpop.f32.mrb[0].mxu0
    %v6323 = vadd.f32 %v5245, %v6322
    %v6324 = vpop.f32.mrb[0].mxu0
    %6325 = vmatprep.mubr.f32.mxu0 0.0
    %6326 = vmatmul.mubr.f32.gmra.mrb[0].mxu0 %v5626
    %v6327 = vpop.f32.mrb[0].mxu0
    %v6328 = vadd.f32 %v5245, %v6327
    %v6329 = vpop.f32.mrb[0].mxu0
    %6330 = vmatprep.mubr.f32.mxu0 0.0
    %6331 = vmatmul.mubr.f32.gmra.mrb[0].mxu0 %v5629
    %v6332 = vpop.f32.mrb[0].mxu0
    %v6333 = vadd.f32 %v5245, %v6332
    %v6334 = vpop.f32.mrb[0].mxu0
    %6335 = vdwg.mxu0
    %v6336 = vtanh.pop %v5698
    %v6337 = vtanh.pop %v5703
    %v6338 = vtanh.pop %v5708
    %v6339 = vtanh.pop %v5713
    %v6340 = vtanh.pop %v5718
    %v6341 = vtanh.pop %v5723
    %v6342 = vtanh.pop %v5728
    %v6343 = vtanh.pop %v5733
    %v6344 = vtanh.pop %v5738
    %v6345 = vtanh.pop %v5743
    %v6346 = vtanh.pop %v5748
    %v6347 = vtanh.pop %v5753
    %v6348 = vtanh.pop %v5758
    %v6349 = vtanh.pop %v5763
    %v6350 = vtanh.pop %v5768
    %v6351 = vtanh.pop %v5773
    %v6352 = vtanh.pop %v5778
    %v6353 = vtanh.pop %v5783
    %v6354 = vtanh.pop %v5788
    %v6355 = vtanh.pop %v5793
    %v6356 = vtanh.pop %v5798
    %v6357 = vtanh.pop %v5803
    %v6358 = vtanh.pop %v5808
    %v6359 = vtanh.pop %v5813
    %v6360 = vtanh.pop %v5818
    %v6361 = vtanh.pop %v5823
    %v6362 = vtanh.pop %v5828
    %v6363 = vtanh.pop %v5833
    %v6364 = vtanh.pop %v5838
    %v6365 = vtanh.pop %v5843
    %v6366 = vtanh.pop %v5848
    %v6367 = vtanh.pop %v5853
    %v6368 = vtanh.pop %v5858
    %v6369 = vtanh.pop %v5863
    %v6370 = vtanh.pop %v5868
    %v6371 = vtanh.pop %v5873
    %v6372 = vtanh.pop %v5878
    %v6373 = vtanh.pop %v5883
    %v6374 = vtanh.pop %v5888
    %v6375 = vtanh.pop %v5893
    %v6376 = vtanh.pop %v5898
    %v6377 = vtanh.pop %v5903
    %v6378 = vtanh.pop %v5908
    %v6379 = vtanh.pop %v5913
    %v6380 = vtanh.pop %v5918
    %v6381 = vtanh.pop %v5923
    %v6382 = vtanh.pop %v5928
    %v6383 = vtanh.pop %v5933
    %v6384 = vtanh.pop %v5938
    %v6385 = vtanh.pop %v5943
    %v6386 = vtanh.pop %v5948
    %v6387 = vtanh.pop %v5953
    %v6388 = vtanh.pop %v5958
    %v6389 = vtanh.pop %v5963
    %v6390 = vtanh.pop %v5968
    %v6391 = vtanh.pop %v5973
    %v6392 = vtanh.pop %v5978
    %v6393 = vtanh.pop %v5983
    %v6394 = vtanh.pop %v5988
    %v6395 = vtanh.pop %v5993
    %v6396 = vtanh.pop %v5998
    %v6397 = vtanh.pop %v6003
    %v6398 = vtanh.pop %v6008
    %v6399 = vtanh.pop %v6013
    %v6400 = vtanh.pop %v6018
    %v6401 = vtanh.pop %v6023
    %v6402 = vtanh.pop %v6028
    %v6403 = vtanh.pop %v6033
    %v6404 = vtanh.pop %v6038
    %v6405 = vtanh.pop %v6043
    %v6406 = vtanh.pop %v6048
    %v6407 = vtanh.pop %v6053
    %v6408 = vtanh.pop %v6058
    %v6409 = vtanh.pop %v6063
    %v6410 = vtanh.pop %v6068
    %v6411 = vtanh.pop %v6073
    %v6412 = vtanh.pop %v6078
    %v6413 = vtanh.pop %v6083
    %v6414 = vtanh.pop %v6088
    %v6415 = vtanh.pop %v6093
    %v6416 = vtanh.pop %v6098
    %v6417 = vtanh.pop %v6103
    %v6418 = vtanh.pop %v6108
    %v6419 = vtanh.pop %v6113
    %v6420 = vtanh.pop %v6118
    %v6421 = vtanh.pop %v6123
    %v6422 = vtanh.pop %v6128
    %v6423 = vtanh.pop %v6133
    %v6424 = vtanh.pop %v6138
    %v6425 = vtanh.pop %v6143
    %v6426 = vtanh.pop %v6148
    %v6427 = vtanh.pop %v6153
    %v6428 = vtanh.pop %v6158
    %v6429 = vtanh.pop %v6163
    %v6430 = vtanh.pop %v6168
    %v6431 = vtanh.pop %v6173
    %v6432 = vtanh.pop %v6178
    %v6433 = vtanh.pop %v6183
    %v6434 = vtanh.pop %v6188
    %v6435 = vtanh.pop %v6193
    %v6436 = vtanh.pop %v6198
    %v6437 = vtanh.pop %v6203
    %v6438 = vtanh.pop %v6208
    %v6439 = vtanh.pop %v6213
    %v6440 = vtanh.pop %v6218
    %v6441 = vtanh.pop %v6223
    %v6442 = vtanh.pop %v6228
    %v6443 = vtanh.pop %v6233
    %v6444 = vtanh.pop %v6238
    %v6445 = vtanh.pop %v6243
    %v6446 = vtanh.pop %v6248
    %v6447 = vtanh.pop %v6253
    %v6448 = vtanh.pop %v6258
    %v6449 = vtanh.pop %v6263
    %v6450 = vtanh.pop %v6268
    %v6451 = vtanh.pop %v6273
    %v6452 = vtanh.pop %v6278
    %v6453 = vtanh.pop %v6283
    %v6454 = vtanh.pop %v6288
    %v6455 = vtanh.pop %v6293
    %v6456 = vtanh.pop %v6298
    %v6457 = vtanh.pop %v6303
    %v6458 = vtanh.pop %v6308
    %v6459 = vtanh.pop %v6313
    %v6460 = vtanh.pop %v6318
    %v6461 = vtanh.pop %v6323
    %v6462 = vtanh.pop %v6328
    %v6463 = vtanh.pop %v6333
    %vm6464 = vcmask 31744
    %6465 = vst.msk [vmem:[%s25] sm:$0xff] %vm6464, %v6336
    %6466 = vst.msk [vmem:[%s25 + $0x8] sm:$0xff] %vm6464, %v6337
    %6467 = vst.msk [vmem:[%s25 + $0x10] sm:$0xff] %vm6464, %v6338
    %6468 = vst.msk [vmem:[%s25 + $0x18] sm:$0xff] %vm6464, %v6339
    %6469 = vst.msk [vmem:[%s25 + $0x20] sm:$0xff] %vm6464, %v6340
    %6470 = vst.msk [vmem:[%s25 + $0x28] sm:$0xff] %vm6464, %v6341
    %6471 = vst.msk [vmem:[%s25 + $0x30] sm:$0xff] %vm6464, %v6342
    %6472 = vst.msk [vmem:[%s25 + $0x38] sm:$0xff] %vm6464, %v6343
    %6473 = vst.msk [vmem:[%s25 + $0x40] sm:$0xff] %vm6464, %v6344
    %6474 = vst.msk [vmem:[%s25 + $0x48] sm:$0xff] %vm6464, %v6345
    %6475 = vst.msk [vmem:[%s25 + $0x50] sm:$0xff] %vm6464, %v6346
    %6476 = vst.msk [vmem:[%s25 + $0x58] sm:$0xff] %vm6464, %v6347
    %6477 = vst.msk [vmem:[%s25 + $0x60] sm:$0xff] %vm6464, %v6348
    %6478 = vst.msk [vmem:[%s25 + $0x68] sm:$0xff] %vm6464, %v6349
    %6479 = vst.msk [vmem:[%s25 + $0x70] sm:$0xff] %vm6464, %v6350
    %6480 = vst.msk [vmem:[%s25 + $0x78] sm:$0xff] %vm6464, %v6351
    %6481 = vst.msk [vmem:[%s25 + $0x80] sm:$0xff] %vm6464, %v6352
    %6482 = vst.msk [vmem:[%s25 + $0x88] sm:$0xff] %vm6464, %v6353
    %6483 = vst.msk [vmem:[%s25 + $0x90] sm:$0xff] %vm6464, %v6354
    %6484 = vst.msk [vmem:[%s25 + $0x98] sm:$0xff] %vm6464, %v6355
    %6485 = vst.msk [vmem:[%s25 + $0xa0] sm:$0xff] %vm6464, %v6356
    %6486 = vst.msk [vmem:[%s25 + $0xa8] sm:$0xff] %vm6464, %v6357
    %6487 = vst.msk [vmem:[%s25 + $0xb0] sm:$0xff] %vm6464, %v6358
    %6488 = vst.msk [vmem:[%s25 + $0xb8] sm:$0xff] %vm6464, %v6359
    %6489 = vst.msk [vmem:[%s25 + $0xc0] sm:$0xff] %vm6464, %v6360
    %6490 = vst.msk [vmem:[%s25 + $0xc8] sm:$0xff] %vm6464, %v6361
    %6491 = vst.msk [vmem:[%s25 + $0xd0] sm:$0xff] %vm6464, %v6362
    %6492 = vst.msk [vmem:[%s25 + $0xd8] sm:$0xff] %vm6464, %v6363
    %6493 = vst.msk [vmem:[%s25 + $0xe0] sm:$0xff] %vm6464, %v6364
    %6494 = vst.msk [vmem:[%s25 + $0xe8] sm:$0xff] %vm6464, %v6365
    %6495 = vst.msk [vmem:[%s25 + $0xf0] sm:$0xff] %vm6464, %v6366
    %6496 = vst.msk [vmem:[%s25 + $0xf8] sm:$0xff] %vm6464, %v6367
    %6497 = vst.msk [vmem:[%s25 + $0x100] sm:$0xff] %vm6464, %v6368
    %6498 = vst.msk [vmem:[%s25 + $0x108] sm:$0xff] %vm6464, %v6369
    %6499 = vst.msk [vmem:[%s25 + $0x110] sm:$0xff] %vm6464, %v6370
    %6500 = vst.msk [vmem:[%s25 + $0x118] sm:$0xff] %vm6464, %v6371
    %6501 = vst.msk [vmem:[%s25 + $0x120] sm:$0xff] %vm6464, %v6372
    %6502 = vst.msk [vmem:[%s25 + $0x128] sm:$0xff] %vm6464, %v6373
    %6503 = vst.msk [vmem:[%s25 + $0x130] sm:$0xff] %vm6464, %v6374
    %6504 = vst.msk [vmem:[%s25 + $0x138] sm:$0xff] %vm6464, %v6375
    %6505 = vst.msk [vmem:[%s25 + $0x140] sm:$0xff] %vm6464, %v6376
    %6506 = vst.msk [vmem:[%s25 + $0x148] sm:$0xff] %vm6464, %v6377
    %6507 = vst.msk [vmem:[%s25 + $0x150] sm:$0xff] %vm6464, %v6378
    %6508 = vst.msk [vmem:[%s25 + $0x158] sm:$0xff] %vm6464, %v6379
    %6509 = vst.msk [vmem:[%s25 + $0x160] sm:$0xff] %vm6464, %v6380
    %6510 = vst.msk [vmem:[%s25 + $0x168] sm:$0xff] %vm6464, %v6381
    %6511 = vst.msk [vmem:[%s25 + $0x170] sm:$0xff] %vm6464, %v6382
    %6512 = vst.msk [vmem:[%s25 + $0x178] sm:$0xff] %vm6464, %v6383
    %6513 = vst.msk [vmem:[%s25 + $0x180] sm:$0xff] %vm6464, %v6384
    %6514 = vst.msk [vmem:[%s25 + $0x188] sm:$0xff] %vm6464, %v6385
    %6515 = vst.msk [vmem:[%s25 + $0x190] sm:$0xff] %vm6464, %v6386
    %6516 = vst.msk [vmem:[%s25 + $0x198] sm:$0xff] %vm6464, %v6387
    %6517 = vst.msk [vmem:[%s25 + $0x1a0] sm:$0xff] %vm6464, %v6388
    %6518 = vst.msk [vmem:[%s25 + $0x1a8] sm:$0xff] %vm6464, %v6389
    %6519 = vst.msk [vmem:[%s25 + $0x1b0] sm:$0xff] %vm6464, %v6390
    %6520 = vst.msk [vmem:[%s25 + $0x1b8] sm:$0xff] %vm6464, %v6391
    %6521 = vst.msk [vmem:[%s25 + $0x1c0] sm:$0xff] %vm6464, %v6392
    %6522 = vst.msk [vmem:[%s25 + $0x1c8] sm:$0xff] %vm6464, %v6393
    %6523 = vst.msk [vmem:[%s25 + $0x1d0] sm:$0xff] %vm6464, %v6394
    %6524 = vst.msk [vmem:[%s25 + $0x1d8] sm:$0xff] %vm6464, %v6395
    %6525 = vst.msk [vmem:[%s25 + $0x1e0] sm:$0xff] %vm6464, %v6396
    %6526 = vst.msk [vmem:[%s25 + $0x1e8] sm:$0xff] %vm6464, %v6397
    %6527 = vst.msk [vmem:[%s25 + $0x1f0] sm:$0xff] %vm6464, %v6398
    %6528 = vst.msk [vmem:[%s25 + $0x1f8] sm:$0xff] %vm6464, %v6399
    %6529 = vst.msk [vmem:[%s25 + $0x200] sm:$0xff] %vm6464, %v6400
    %6530 = vst.msk [vmem:[%s25 + $0x208] sm:$0xff] %vm6464, %v6401
    %6531 = vst.msk [vmem:[%s25 + $0x210] sm:$0xff] %vm6464, %v6402
    %6532 = vst.msk [vmem:[%s25 + $0x218] sm:$0xff] %vm6464, %v6403
    %6533 = vst.msk [vmem:[%s25 + $0x220] sm:$0xff] %vm6464, %v6404
    %6534 = vst.msk [vmem:[%s25 + $0x228] sm:$0xff] %vm6464, %v6405
    %6535 = vst.msk [vmem:[%s25 + $0x230] sm:$0xff] %vm6464, %v6406
    %6536 = vst.msk [vmem:[%s25 + $0x238] sm:$0xff] %vm6464, %v6407
    %6537 = vst.msk [vmem:[%s25 + $0x240] sm:$0xff] %vm6464, %v6408
    %6538 = vst.msk [vmem:[%s25 + $0x248] sm:$0xff] %vm6464, %v6409
    %6539 = vst.msk [vmem:[%s25 + $0x250] sm:$0xff] %vm6464, %v6410
    %6540 = vst.msk [vmem:[%s25 + $0x258] sm:$0xff] %vm6464, %v6411
    %6541 = vst.msk [vmem:[%s25 + $0x260] sm:$0xff] %vm6464, %v6412
    %6542 = vst.msk [vmem:[%s25 + $0x268] sm:$0xff] %vm6464, %v6413
    %6543 = vst.msk [vmem:[%s25 + $0x270] sm:$0xff] %vm6464, %v6414
    %6544 = vst.msk [vmem:[%s25 + $0x278] sm:$0xff] %vm6464, %v6415
    %6545 = vst.msk [vmem:[%s25 + $0x280] sm:$0xff] %vm6464, %v6416
    %6546 = vst.msk [vmem:[%s25 + $0x288] sm:$0xff] %vm6464, %v6417
    %6547 = vst.msk [vmem:[%s25 + $0x290] sm:$0xff] %vm6464, %v6418
    %6548 = vst.msk [vmem:[%s25 + $0x298] sm:$0xff] %vm6464, %v6419
    %6549 = vst.msk [vmem:[%s25 + $0x2a0] sm:$0xff] %vm6464, %v6420
    %6550 = vst.msk [vmem:[%s25 + $0x2a8] sm:$0xff] %vm6464, %v6421
    %6551 = vst.msk [vmem:[%s25 + $0x2b0] sm:$0xff] %vm6464, %v6422
    %6552 = vst.msk [vmem:[%s25 + $0x2b8] sm:$0xff] %vm6464, %v6423
    %6553 = vst.msk [vmem:[%s25 + $0x2c0] sm:$0xff] %vm6464, %v6424
    %6554 = vst.msk [vmem:[%s25 + $0x2c8] sm:$0xff] %vm6464, %v6425
    %6555 = vst.msk [vmem:[%s25 + $0x2d0] sm:$0xff] %vm6464, %v6426
    %6556 = vst.msk [vmem:[%s25 + $0x2d8] sm:$0xff] %vm6464, %v6427
    %6557 = vst.msk [vmem:[%s25 + $0x2e0] sm:$0xff] %vm6464, %v6428
    %6558 = vst.msk [vmem:[%s25 + $0x2e8] sm:$0xff] %vm6464, %v6429
    %6559 = vst.msk [vmem:[%s25 + $0x2f0] sm:$0xff] %vm6464, %v6430
    %6560 = vst.msk [vmem:[%s25 + $0x2f8] sm:$0xff] %vm6464, %v6431
    %6561 = vst.msk [vmem:[%s25 + $0x300] sm:$0xff] %vm6464, %v6432
    %6562 = vst.msk [vmem:[%s25 + $0x308] sm:$0xff] %vm6464, %v6433
    %6563 = vst.msk [vmem:[%s25 + $0x310] sm:$0xff] %vm6464, %v6434
    %6564 = vst.msk [vmem:[%s25 + $0x318] sm:$0xff] %vm6464, %v6435
    %6565 = vst.msk [vmem:[%s25 + $0x320] sm:$0xff] %vm6464, %v6436
    %6566 = vst.msk [vmem:[%s25 + $0x328] sm:$0xff] %vm6464, %v6437
    %6567 = vst.msk [vmem:[%s25 + $0x330] sm:$0xff] %vm6464, %v6438
    %6568 = vst.msk [vmem:[%s25 + $0x338] sm:$0xff] %vm6464, %v6439
    %6569 = vst.msk [vmem:[%s25 + $0x340] sm:$0xff] %vm6464, %v6440
    %6570 = vst.msk [vmem:[%s25 + $0x348] sm:$0xff] %vm6464, %v6441
    %6571 = vst.msk [vmem:[%s25 + $0x350] sm:$0xff] %vm6464, %v6442
    %6572 = vst.msk [vmem:[%s25 + $0x358] sm:$0xff] %vm6464, %v6443
    %6573 = vst.msk [vmem:[%s25 + $0x360] sm:$0xff] %vm6464, %v6444
    %6574 = vst.msk [vmem:[%s25 + $0x368] sm:$0xff] %vm6464, %v6445
    %6575 = vst.msk [vmem:[%s25 + $0x370] sm:$0xff] %vm6464, %v6446
    %6576 = vst.msk [vmem:[%s25 + $0x378] sm:$0xff] %vm6464, %v6447
    %6577 = vst.msk [vmem:[%s25 + $0x380] sm:$0xff] %vm6464, %v6448
    %6578 = vst.msk [vmem:[%s25 + $0x388] sm:$0xff] %vm6464, %v6449
    %6579 = vst.msk [vmem:[%s25 + $0x390] sm:$0xff] %vm6464, %v6450
    %6580 = vst.msk [vmem:[%s25 + $0x398] sm:$0xff] %vm6464, %v6451
    %6581 = vst.msk [vmem:[%s25 + $0x3a0] sm:$0xff] %vm6464, %v6452
    %6582 = vst.msk [vmem:[%s25 + $0x3a8] sm:$0xff] %vm6464, %v6453
    %6583 = vst.msk [vmem:[%s25 + $0x3b0] sm:$0xff] %vm6464, %v6454
    %6584 = vst.msk [vmem:[%s25 + $0x3b8] sm:$0xff] %vm6464, %v6455
    %6585 = vst.msk [vmem:[%s25 + $0x3c0] sm:$0xff] %vm6464, %v6456
    %6586 = vst.msk [vmem:[%s25 + $0x3c8] sm:$0xff] %vm6464, %v6457
    %6587 = vst.msk [vmem:[%s25 + $0x3d0] sm:$0xff] %vm6464, %v6458
    %6588 = vst.msk [vmem:[%s25 + $0x3d8] sm:$0xff] %vm6464, %v6459
    %6589 = vst.msk [vmem:[%s25 + $0x3e0] sm:$0xff] %vm6464, %v6460
    %6590 = vst.msk [vmem:[%s25 + $0x3e8] sm:$0xff] %vm6464, %v6461
    %6591 = vst.msk [vmem:[%s25 + $0x3f0] sm:$0xff] %vm6464, %v6462
    %6592 = vst.msk [vmem:[%s25 + $0x3f8] sm:$0xff] %vm6464, %v6463
    // Predicated region
    $region106: #{generator_forward.1} parent=1 // pred_check
      _
    $region107: #{generator_forward.1} parent=1 // pred_check_branch
      %6594 = sbr.rel (0) target = $region109
    $region108: #{generator_forward.1} parent=1 // pred_region
      _
    $region109: #{generator_forward.1} parent=1 // pred_fallthru
      _
    // Predicated region
    $region110: #{generator_forward.1} parent=1 // pred_check
      _
    $region111: #{generator_forward.1} parent=1 // pred_check_branch
      %6596 = sbr.rel (0) target = $region113
    $region112: #{generator_forward.1} parent=1 // pred_region
      _
    $region113: #{generator_forward.1} parent=1 // pred_fallthru
      _
    %6597 = vsyncpa [#allocation8], 1

</llo_original>
